<compile_context>
chip_gen: v7x
topology: tpu7x:2x2x1
jax: 0.10.0
libtpu: 0.0.40
codegen_flags: <defaults>
</compile_context>

<pallas_src>
import functools
import math

import jax
import jax.numpy as jnp
from jax.experimental import pallas as pl
from jax.experimental.pallas import tpu as pltpu


CFG = dict(
    vocab_size=64,
    max_pos=32,
    type_vocab=2,
    hidden=128,
    heads=4,
    layers=2,
    intermediate=256,
    fc1_dim=512,
    num_labels=2,
)

MASK_NEG = -1e9
LN_EPS = 1e-12


# ------------------------- in-kernel math helpers --------------------------

def _erf_f32(x):
    # Abramowitz & Stegun 7.1.26 rational approximation, |err| < 1.5e-7
    # (effectively exact in f32).  Uses only exp/mul/add/div/select so it
    # lowers cleanly on all TPU generations.
    a1, a2, a3, a4, a5 = (0.254829592, -0.284496736, 1.421413741,
                          -1.453152027, 1.061405429)
    p = 0.3275911
    ax = jnp.abs(x)
    t = 1.0 / (1.0 + p * ax)
    poly = ((((a5 * t + a4) * t + a3) * t + a2) * t + a1) * t
    y = 1.0 - poly * jnp.exp(-ax * ax)
    return jnp.where(x < 0.0, -y, y)


def _gelu_exact(x):
    # Matches PyTorch nn.GELU default (erf form), unlike tanh-approx GELU.
    return 0.5 * x * (1.0 + _erf_f32(x * 0.7071067811865476))


# --------------------------- fused forward kernel ---------------------------

def _bert_fused_kernel(emb_ref, maskb_ref, eln_g_ref, eln_b_ref,
                       wqkv_ref, bqkv_ref, wo_ref, bo_ref,
                       ln1g_ref, ln1b_ref, w1_ref, b1_ref,
                       w2_ref, b2_ref, ln2g_ref, ln2b_ref,
                       fc1w_ref, fc1b_ref, fc2w_ref, fc2b_ref,
                       logits_ref, *, B, S, heads, layers):
    H = eln_g_ref.shape[-1]
    Dh = H // heads
    scale = 1.0 / math.sqrt(Dh)

    def layer_norm(x, g, b):
        # g, b: [1, H] f32 (broadcast over rows).
        mean = jnp.mean(x, axis=-1, keepdims=True)
        var = jnp.mean((x - mean) ** 2, axis=-1, keepdims=True)
        return (x - mean) * jax.lax.rsqrt(var + LN_EPS) * g + b

    def mm(x_f32, w_bf16):
        # bf16 MXU inputs, f32 accumulation.
        return jnp.dot(x_f32.astype(jnp.bfloat16), w_bf16,
                       preferred_element_type=jnp.float32)

    # Embedding LayerNorm (residual-free).
    x = layer_norm(emb_ref[...], eln_g_ref[...], eln_b_ref[...])    # [B*S, H] f32
    mask_bias = maskb_ref[...]                                      # [B, S] f32 additive

    for l in range(layers):  # static unroll (layers == 2)
        wqkv_l = wqkv_ref[l]                                        # [H, 3H] bf16
        bqkv_l = bqkv_ref[l]                                        # [3H]    f32
        wo_l = wo_ref[l]                                            # [H, H]  bf16
        bo_l = bo_ref[l]                                            # [H]     f32

        # -------- fused QKV projection: one [B*S,H] @ [H,3H] matmul --------
        qkv = mm(x, wqkv_l) + bqkv_l[None, :]                       # [B*S, 3H] f32

        # -------- attention + output projection (lane-dense, in-register) --
        batch_attn = []
        for b in range(B):
            r0 = b * S
            m_b = mask_bias[b:b + 1, :]                             # [1, S]
            attn_b = None
            for h in range(heads):
                c = h * Dh
                q_bh = qkv[r0:r0 + S, c:c + Dh].astype(jnp.bfloat16)
                k_bh = qkv[r0:r0 + S, H + c:H + c + Dh].astype(jnp.bfloat16)
                v_bh = qkv[r0:r0 + S, 2 * H + c:2 * H + c + Dh].astype(jnp.bfloat16)
                # scores = Q K^T * scale + mask  (contract last dims -> no transpose)
                s_bh = jax.lax.dot_general(
                    q_bh, k_bh, (((1,), (1,)), ((), ())),
                    preferred_element_type=jnp.float32) * scale + m_b
                s_bh = s_bh - jnp.max(s_bh, axis=-1, keepdims=True)
                p_bh = jnp.exp(s_bh)
                p_bh = p_bh * pl.reciprocal(
                    jnp.sum(p_bh, axis=-1, keepdims=True), approx=True)
                ctx_bh = jnp.dot(p_bh.astype(jnp.bfloat16), v_bh,
                                 preferred_element_type=jnp.float32)  # [S, Dh]
                # Fold the per-head slice of the output projection:
                #   sum_h ctx_h @ Wo[h*Dh:(h+1)*Dh, :] == concat_h(ctx_h) @ Wo
                part = jnp.dot(ctx_bh.astype(jnp.bfloat16),
                               wo_l[c:c + Dh, :],
                               preferred_element_type=jnp.float32)    # [S, H]
                attn_b = part if attn_b is None else attn_b + part
            batch_attn.append(attn_b)                                # [S, H]
        attn_out = jnp.concatenate(batch_attn, axis=0) + bo_l[None, :]

        # -------- residual + LN1 -------------------------------------------
        x = layer_norm(x + attn_out,
                       ln1g_ref[l][None, :], ln1b_ref[l][None, :])

        # -------- FFN (exact-erf GELU) + residual + LN2 ----------------------
        ff = mm(x, w1_ref[l]) + b1_ref[l][None, :]
        ff = _gelu_exact(ff)
        ff = mm(ff, w2_ref[l]) + b2_ref[l][None, :]
        x = layer_norm(x + ff,
                       ln2g_ref[l][None, :], ln2b_ref[l][None, :])

    # -------- classifier head on CLS tokens (rows b*S) ----------------------
    # Select CLS rows with a tiny one-hot f32 matmul (exact copy; avoids
    # unaligned row gathers / concats and stays general in S).
    col_ids = jax.lax.broadcasted_iota(jnp.int32, (B, B * S), 1)
    row_ids = jax.lax.broadcasted_iota(jnp.int32, (B, B * S), 0)
    sel = (col_ids == row_ids * S).astype(jnp.float32)               # [B, B*S]
    cls = jnp.dot(sel, x, preferred_element_type=jnp.float32)        # [B, H]

    hcls = jnp.maximum(mm(cls, fc1w_ref[...]) + fc1b_ref[...], 0.0)  # [B, 512]
    logits_ref[...] = mm(hcls, fc2w_ref[...]) + fc2b_ref[...]        # [B, NL]


# ------------------------- parameter initialization -------------------------

def init_params(key, cfg):
    H = cfg["hidden"]
    I = cfg["intermediate"]
    L = cfg["layers"]
    F1 = cfg["fc1_dim"]
    NL = cfg["num_labels"]

    def nrm(k, shape, dtype=jnp.float32):
        return (0.02 * jax.random.normal(k, shape, dtype=jnp.float32)).astype(dtype)

    keys = iter(jax.random.split(key, 16))
    return {
        "word_emb": nrm(next(keys), (cfg["vocab_size"], H)),
        "pos_emb": nrm(next(keys), (cfg["max_pos"], H)),
        "type_emb": nrm(next(keys), (cfg["type_vocab"], H)),
        # All vector-shaped params are stored [1, N] so every kernel operand
        # has a clean (sublane, lane) VMEM layout.
        "emb_ln_g": jnp.ones((1, H), jnp.float32),
        "emb_ln_b": jnp.zeros((1, H), jnp.float32),
        # Per-layer weights stacked on a leading L axis.  Matmul weights are
        # stored in bf16 (MXU-native); biases / LN params stay f32.
        # Q|K|V are pre-fused into a single [H, 3H] projection.
        "wqkv": nrm(next(keys), (L, H, 3 * H), jnp.bfloat16),
        "bqkv": jnp.zeros((L, 3 * H), jnp.float32),
        "wo": nrm(next(keys), (L, H, H), jnp.bfloat16),
        "bo": jnp.zeros((L, H), jnp.float32),
        "ln1_g": jnp.ones((L, H), jnp.float32),
        "ln1_b": jnp.zeros((L, H), jnp.float32),
        "w1": nrm(next(keys), (L, H, I), jnp.bfloat16),
        "b1": jnp.zeros((L, I), jnp.float32),
        "w2": nrm(next(keys), (L, I, H), jnp.bfloat16),
        "b2": jnp.zeros((L, H), jnp.float32),
        "ln2_g": jnp.ones((L, H), jnp.float32),
        "ln2_b": jnp.zeros((L, H), jnp.float32),
        "fc1_w": nrm(next(keys), (H, F1), jnp.bfloat16),
        "fc1_b": jnp.zeros((1, F1), jnp.float32),
        "fc2_w": nrm(next(keys), (F1, NL), jnp.bfloat16),
        "fc2_b": jnp.zeros((1, NL), jnp.float32),
    }


# ------------------------------- forward pass -------------------------------

def bert_classifier_forward(params, input_ids, attention_mask=None,
                            token_type_ids=None, cfg=CFG):
    B, S = input_ids.shape
    H = cfg["hidden"]

    if attention_mask is None:
        attention_mask = jnp.ones((B, S), jnp.int32)
    if token_type_ids is None:
        token_type_ids = jnp.zeros((B, S), jnp.int32)

    # Embedding gathers stay in plain JAX (glue); everything downstream runs
    # inside a single fused Pallas kernel.
    emb = (jnp.take(params["word_emb"], input_ids, axis=0)
           + params["pos_emb"][None, :S, :]
           + jnp.take(params["type_emb"], token_type_ids, axis=0)
           ).reshape(B * S, H).astype(jnp.float32)
    # Additive mask kept at [B, S]; never expanded to [B*H, S, S] in HBM.
    mask_bias = (1.0 - attention_mask.astype(jnp.float32)) * MASK_NEG

    vmem = pl.BlockSpec(memory_space=pltpu.MemorySpace.VMEM)
    kernel = functools.partial(_bert_fused_kernel, B=B, S=S,
                               heads=cfg["heads"], layers=cfg["layers"])
    # TODO(synk): for larger B*S add a 'parallel' batch grid axis
    #             (dimension_semantics) to use v7x's second TensorCore, and
    #             switch attention to flash-style [tq, tk] tiles so scores
    #             stay within v7x's 64 MiB VMEM when S grows.
    logits = pl.pallas_call(
        kernel,
        out_shape=jax.ShapeDtypeStruct((B, cfg["num_labels"]), jnp.float32),
        in_specs=[vmem] * 20,
        out_specs=vmem,
    )(emb, mask_bias, params["emb_ln_g"], params["emb_ln_b"],
      params["wqkv"], params["bqkv"], params["wo"], params["bo"],
      params["ln1_g"], params["ln1_b"], params["w1"], params["b1"],
      params["w2"], params["b2"], params["ln2_g"], params["ln2_b"],
      params["fc1_w"], params["fc1_b"], params["fc2_w"], params["fc2_b"])
    return logits


# ----------------------------------- main -----------------------------------

if __name__ == "__main__":
    key = jax.random.PRNGKey(0)
    k_param, k_ids = jax.random.split(key, 2)

    B, S = 2, 16
    params = init_params(k_param, CFG)
    input_ids = jax.random.randint(k_ids, (B, S), 0, CFG["vocab_size"], dtype=jnp.int32)
    attention_mask = jnp.ones((B, S), jnp.int32).at[:, S - 3:].set(0)  # some padding
    token_type_ids = jnp.zeros((B, S), jnp.int32)

    fwd = jax.jit(functools.partial(bert_classifier_forward, cfg=CFG))
    logits = fwd(params, input_ids, attention_mask, token_type_ids)
    jax.block_until_ready(logits)
    assert logits.shape == (B, CFG["num_labels"])
    print("KERNEL_OK")
</pallas_src>

<mosaic_0001>
module attributes {stable_mosaic.version = 11 : i64} {
  func.func @_bert_fused_kernel(%arg0: memref<32x128xf32, #tpu.memory_space<vmem>>, %arg1: memref<2x16xf32, #tpu.memory_space<vmem>>, %arg2: memref<1x128xf32, #tpu.memory_space<vmem>>, %arg3: memref<1x128xf32, #tpu.memory_space<vmem>>, %arg4: memref<2x128x384xbf16, #tpu.memory_space<vmem>>, %arg5: memref<2x384xf32, #tpu.memory_space<vmem>>, %arg6: memref<2x128x128xbf16, #tpu.memory_space<vmem>>, %arg7: memref<2x128xf32, #tpu.memory_space<vmem>>, %arg8: memref<2x128xf32, #tpu.memory_space<vmem>>, %arg9: memref<2x128xf32, #tpu.memory_space<vmem>>, %arg10: memref<2x128x256xbf16, #tpu.memory_space<vmem>>, %arg11: memref<2x256xf32, #tpu.memory_space<vmem>>, %arg12: memref<2x256x128xbf16, #tpu.memory_space<vmem>>, %arg13: memref<2x128xf32, #tpu.memory_space<vmem>>, %arg14: memref<2x128xf32, #tpu.memory_space<vmem>>, %arg15: memref<2x128xf32, #tpu.memory_space<vmem>>, %arg16: memref<128x512xbf16, #tpu.memory_space<vmem>>, %arg17: memref<1x512xf32, #tpu.memory_space<vmem>>, %arg18: memref<512x2xbf16, #tpu.memory_space<vmem>>, %arg19: memref<1x2xf32, #tpu.memory_space<vmem>>, %arg20: memref<2x2xf32, #tpu.memory_space<vmem>>) attributes {dimension_semantics = [], scalar_prefetch = 0 : i64, scratch_operands = 0 : i64, tpu.core_type = #tpu.core_type<tc>} {
    %c0 = arith.constant 0 : index
    %c0_0 = arith.constant 0 : index
    %0 = vector.load %arg0[%c0, %c0_0] : memref<32x128xf32, #tpu.memory_space<vmem>>, vector<32x128xf32>
    %c0_1 = arith.constant 0 : index
    %c0_2 = arith.constant 0 : index
    %1 = vector.load %arg2[%c0_1, %c0_2] : memref<1x128xf32, #tpu.memory_space<vmem>>, vector<1x128xf32>
    %c0_3 = arith.constant 0 : index
    %c0_4 = arith.constant 0 : index
    %2 = vector.load %arg3[%c0_3, %c0_4] : memref<1x128xf32, #tpu.memory_space<vmem>>, vector<1x128xf32>
    %cst = arith.constant dense<0.000000e+00> : vector<32xf32>
    %3 = vector.multi_reduction <add>, %0, %cst [1] : vector<32x128xf32> to vector<32xf32>
    %4 = vector.shape_cast %3 : vector<32xf32> to vector<32x1xf32>
    %cst_5 = arith.constant 1.280000e+02 : f32
    %5 = vector.broadcast %cst_5 : f32 to vector<32x1xf32>
    %6 = arith.divf %4, %5 : vector<32x1xf32>
    %7 = vector.broadcast %6 : vector<32x1xf32> to vector<32x128xf32>
    %8 = arith.subf %0, %7 : vector<32x128xf32>
    %9 = arith.mulf %8, %8 : vector<32x128xf32>
    %cst_6 = arith.constant dense<0.000000e+00> : vector<32xf32>
    %10 = vector.multi_reduction <add>, %9, %cst_6 [1] : vector<32x128xf32> to vector<32xf32>
    %11 = vector.shape_cast %10 : vector<32xf32> to vector<32x1xf32>
    %cst_7 = arith.constant 1.280000e+02 : f32
    %12 = vector.broadcast %cst_7 : f32 to vector<32x1xf32>
    %13 = arith.divf %11, %12 : vector<32x1xf32>
    %14 = vector.broadcast %6 : vector<32x1xf32> to vector<32x128xf32>
    %15 = arith.subf %0, %14 : vector<32x128xf32>
    %cst_8 = arith.constant 9.99999996E-13 : f32
    %16 = vector.broadcast %cst_8 : f32 to vector<32x1xf32>
    %17 = arith.addf %13, %16 : vector<32x1xf32>
    %18 = math.rsqrt %17 : vector<32x1xf32>
    %19 = vector.broadcast %18 : vector<32x1xf32> to vector<32x128xf32>
    %20 = arith.mulf %15, %19 : vector<32x128xf32>
    %21 = vector.broadcast %1 : vector<1x128xf32> to vector<32x128xf32>
    %22 = arith.mulf %20, %21 : vector<32x128xf32>
    %23 = vector.broadcast %2 : vector<1x128xf32> to vector<32x128xf32>
    %24 = arith.addf %22, %23 : vector<32x128xf32>
    %c0_9 = arith.constant 0 : index
    %c0_10 = arith.constant 0 : index
    %25 = vector.load %arg1[%c0_9, %c0_10] : memref<2x16xf32, #tpu.memory_space<vmem>>, vector<2x16xf32>
    %c0_11 = arith.constant 0 : index
    %c0_12 = arith.constant 0 : index
    %c0_13 = arith.constant 0 : index
    %26 = vector.load %arg4[%c0_11, %c0_12, %c0_13] : memref<2x128x384xbf16, #tpu.memory_space<vmem>>, vector<1x128x384xbf16>
    %27 = vector.shape_cast %26 : vector<1x128x384xbf16> to vector<128x384xbf16>
    %c0_14 = arith.constant 0 : index
    %c0_15 = arith.constant 0 : index
    %28 = vector.load %arg5[%c0_14, %c0_15] : memref<2x384xf32, #tpu.memory_space<vmem>>, vector<1x384xf32>
    %29 = vector.shape_cast %28 : vector<1x384xf32> to vector<384xf32>
    %c0_16 = arith.constant 0 : index
    %c0_17 = arith.constant 0 : index
    %c0_18 = arith.constant 0 : index
    %30 = vector.load %arg6[%c0_16, %c0_17, %c0_18] : memref<2x128x128xbf16, #tpu.memory_space<vmem>>, vector<1x128x128xbf16>
    %31 = vector.shape_cast %30 : vector<1x128x128xbf16> to vector<128x128xbf16>
    %c0_19 = arith.constant 0 : index
    %c0_20 = arith.constant 0 : index
    %32 = vector.load %arg7[%c0_19, %c0_20] : memref<2x128xf32, #tpu.memory_space<vmem>>, vector<1x128xf32>
    %33 = vector.shape_cast %32 : vector<1x128xf32> to vector<128xf32>
    %34 = arith.truncf %24 : vector<32x128xf32> to vector<32x128xbf16>
    %cst_21 = arith.constant dense<0.000000e+00> : vector<32x384xf32>
    %35 = tpu.matmul %34, %27, %cst_21 {dimension_numbers = #tpu.dot_dimension_numbers<[1], [0], [0], [1], [0, 0, 1, 1], [], []>} : vector<32x128xbf16>, vector<128x384xbf16>, vector<32x384xf32> -> vector<32x384xf32>
    %36 = vector.shape_cast %29 : vector<384xf32> to vector<1x384xf32>
    %37 = vector.broadcast %36 : vector<1x384xf32> to vector<32x384xf32>
    %38 = arith.addf %35, %37 : vector<32x384xf32>
    %39 = vector.extract_strided_slice %25 {offsets = [0, 0], sizes = [1, 16], strides = [1, 1]} : vector<2x16xf32> to vector<1x16xf32>
    %40 = vector.extract_strided_slice %38 {offsets = [0, 0], sizes = [16, 32], strides = [1, 1]} : vector<32x384xf32> to vector<16x32xf32>
    %41 = arith.truncf %40 : vector<16x32xf32> to vector<16x32xbf16>
    %42 = vector.extract_strided_slice %38 {offsets = [0, 128], sizes = [16, 32], strides = [1, 1]} : vector<32x384xf32> to vector<16x32xf32>
    %43 = arith.truncf %42 : vector<16x32xf32> to vector<16x32xbf16>
    %44 = vector.extract_strided_slice %38 {offsets = [0, 256], sizes = [16, 32], strides = [1, 1]} : vector<32x384xf32> to vector<16x32xf32>
    %45 = arith.truncf %44 : vector<16x32xf32> to vector<16x32xbf16>
    %cst_22 = arith.constant dense<0.000000e+00> : vector<16x16xf32>
    %46 = tpu.matmul %41, %43, %cst_22 {dimension_numbers = #tpu.dot_dimension_numbers<[1], [1], [0], [0], [0, 0, 1, 0], [], []>} : vector<16x32xbf16>, vector<16x32xbf16>, vector<16x16xf32> -> vector<16x16xf32>
    %cst_23 = arith.constant 0.176776692 : f32
    %47 = vector.broadcast %cst_23 : f32 to vector<16x16xf32>
    %48 = arith.mulf %46, %47 : vector<16x16xf32>
    %49 = vector.broadcast %39 : vector<1x16xf32> to vector<16x16xf32>
    %50 = arith.addf %48, %49 : vector<16x16xf32>
    %cst_24 = arith.constant dense<0xFF800000> : vector<16xf32>
    %51 = vector.multi_reduction <maximumf>, %50, %cst_24 [1] : vector<16x16xf32> to vector<16xf32>
    %52 = vector.shape_cast %51 : vector<16xf32> to vector<16x1xf32>
    %53 = vector.broadcast %52 : vector<16x1xf32> to vector<16x16xf32>
    %54 = arith.subf %50, %53 : vector<16x16xf32>
    %55 = math.exp %54 : vector<16x16xf32>
    %cst_25 = arith.constant dense<0.000000e+00> : vector<16xf32>
    %56 = vector.multi_reduction <add>, %55, %cst_25 [1] : vector<16x16xf32> to vector<16xf32>
    %57 = vector.shape_cast %56 : vector<16xf32> to vector<16x1xf32>
    %58 = tpu.reciprocal %57 {approx = true} : vector<16x1xf32> -> vector<16x1xf32>
    %59 = vector.broadcast %58 : vector<16x1xf32> to vector<16x16xf32>
    %60 = arith.mulf %55, %59 : vector<16x16xf32>
    %61 = arith.truncf %60 : vector<16x16xf32> to vector<16x16xbf16>
    %cst_26 = arith.constant dense<0.000000e+00> : vector<16x32xf32>
    %62 = tpu.matmul %61, %45, %cst_26 {dimension_numbers = #tpu.dot_dimension_numbers<[1], [0], [0], [1], [0, 0, 1, 1], [], []>} : vector<16x16xbf16>, vector<16x32xbf16>, vector<16x32xf32> -> vector<16x32xf32>
    %63 = arith.truncf %62 : vector<16x32xf32> to vector<16x32xbf16>
    %64 = vector.extract_strided_slice %31 {offsets = [0, 0], sizes = [32, 128], strides = [1, 1]} : vector<128x128xbf16> to vector<32x128xbf16>
    %cst_27 = arith.constant dense<0.000000e+00> : vector<16x128xf32>
    %65 = tpu.matmul %63, %64, %cst_27 {dimension_numbers = #tpu.dot_dimension_numbers<[1], [0], [0], [1], [0, 0, 1, 1], [], []>} : vector<16x32xbf16>, vector<32x128xbf16>, vector<16x128xf32> -> vector<16x128xf32>
    %66 = vector.extract_strided_slice %38 {offsets = [0, 32], sizes = [16, 32], strides = [1, 1]} : vector<32x384xf32> to vector<16x32xf32>
    %67 = arith.truncf %66 : vector<16x32xf32> to vector<16x32xbf16>
    %68 = vector.extract_strided_slice %38 {offsets = [0, 160], sizes = [16, 32], strides = [1, 1]} : vector<32x384xf32> to vector<16x32xf32>
    %69 = arith.truncf %68 : vector<16x32xf32> to vector<16x32xbf16>
    %70 = vector.extract_strided_slice %38 {offsets = [0, 288], sizes = [16, 32], strides = [1, 1]} : vector<32x384xf32> to vector<16x32xf32>
    %71 = arith.truncf %70 : vector<16x32xf32> to vector<16x32xbf16>
    %cst_28 = arith.constant dense<0.000000e+00> : vector<16x16xf32>
    %72 = tpu.matmul %67, %69, %cst_28 {dimension_numbers = #tpu.dot_dimension_numbers<[1], [1], [0], [0], [0, 0, 1, 0], [], []>} : vector<16x32xbf16>, vector<16x32xbf16>, vector<16x16xf32> -> vector<16x16xf32>
    %cst_29 = arith.constant 0.176776692 : f32
    %73 = vector.broadcast %cst_29 : f32 to vector<16x16xf32>
    %74 = arith.mulf %72, %73 : vector<16x16xf32>
    %75 = vector.broadcast %39 : vector<1x16xf32> to vector<16x16xf32>
    %76 = arith.addf %74, %75 : vector<16x16xf32>
    %cst_30 = arith.constant dense<0xFF800000> : vector<16xf32>
    %77 = vector.multi_reduction <maximumf>, %76, %cst_30 [1] : vector<16x16xf32> to vector<16xf32>
    %78 = vector.shape_cast %77 : vector<16xf32> to vector<16x1xf32>
    %79 = vector.broadcast %78 : vector<16x1xf32> to vector<16x16xf32>
    %80 = arith.subf %76, %79 : vector<16x16xf32>
    %81 = math.exp %80 : vector<16x16xf32>
    %cst_31 = arith.constant dense<0.000000e+00> : vector<16xf32>
    %82 = vector.multi_reduction <add>, %81, %cst_31 [1] : vector<16x16xf32> to vector<16xf32>
    %83 = vector.shape_cast %82 : vector<16xf32> to vector<16x1xf32>
    %84 = tpu.reciprocal %83 {approx = true} : vector<16x1xf32> -> vector<16x1xf32>
    %85 = vector.broadcast %84 : vector<16x1xf32> to vector<16x16xf32>
    %86 = arith.mulf %81, %85 : vector<16x16xf32>
    %87 = arith.truncf %86 : vector<16x16xf32> to vector<16x16xbf16>
    %cst_32 = arith.constant dense<0.000000e+00> : vector<16x32xf32>
    %88 = tpu.matmul %87, %71, %cst_32 {dimension_numbers = #tpu.dot_dimension_numbers<[1], [0], [0], [1], [0, 0, 1, 1], [], []>} : vector<16x16xbf16>, vector<16x32xbf16>, vector<16x32xf32> -> vector<16x32xf32>
    %89 = arith.truncf %88 : vector<16x32xf32> to vector<16x32xbf16>
    %90 = vector.extract_strided_slice %31 {offsets = [32, 0], sizes = [32, 128], strides = [1, 1]} : vector<128x128xbf16> to vector<32x128xbf16>
    %cst_33 = arith.constant dense<0.000000e+00> : vector<16x128xf32>
    %91 = tpu.matmul %89, %90, %cst_33 {dimension_numbers = #tpu.dot_dimension_numbers<[1], [0], [0], [1], [0, 0, 1, 1], [], []>} : vector<16x32xbf16>, vector<32x128xbf16>, vector<16x128xf32> -> vector<16x128xf32>
    %92 = arith.addf %65, %91 : vector<16x128xf32>
    %93 = vector.extract_strided_slice %38 {offsets = [0, 64], sizes = [16, 32], strides = [1, 1]} : vector<32x384xf32> to vector<16x32xf32>
    %94 = arith.truncf %93 : vector<16x32xf32> to vector<16x32xbf16>
    %95 = vector.extract_strided_slice %38 {offsets = [0, 192], sizes = [16, 32], strides = [1, 1]} : vector<32x384xf32> to vector<16x32xf32>
    %96 = arith.truncf %95 : vector<16x32xf32> to vector<16x32xbf16>
    %97 = vector.extract_strided_slice %38 {offsets = [0, 320], sizes = [16, 32], strides = [1, 1]} : vector<32x384xf32> to vector<16x32xf32>
    %98 = arith.truncf %97 : vector<16x32xf32> to vector<16x32xbf16>
    %cst_34 = arith.constant dense<0.000000e+00> : vector<16x16xf32>
    %99 = tpu.matmul %94, %96, %cst_34 {dimension_numbers = #tpu.dot_dimension_numbers<[1], [1], [0], [0], [0, 0, 1, 0], [], []>} : vector<16x32xbf16>, vector<16x32xbf16>, vector<16x16xf32> -> vector<16x16xf32>
    %cst_35 = arith.constant 0.176776692 : f32
    %100 = vector.broadcast %cst_35 : f32 to vector<16x16xf32>
    %101 = arith.mulf %99, %100 : vector<16x16xf32>
    %102 = vector.broadcast %39 : vector<1x16xf32> to vector<16x16xf32>
    %103 = arith.addf %101, %102 : vector<16x16xf32>
    %cst_36 = arith.constant dense<0xFF800000> : vector<16xf32>
    %104 = vector.multi_reduction <maximumf>, %103, %cst_36 [1] : vector<16x16xf32> to vector<16xf32>
    %105 = vector.shape_cast %104 : vector<16xf32> to vector<16x1xf32>
    %106 = vector.broadcast %105 : vector<16x1xf32> to vector<16x16xf32>
    %107 = arith.subf %103, %106 : vector<16x16xf32>
    %108 = math.exp %107 : vector<16x16xf32>
    %cst_37 = arith.constant dense<0.000000e+00> : vector<16xf32>
    %109 = vector.multi_reduction <add>, %108, %cst_37 [1] : vector<16x16xf32> to vector<16xf32>
    %110 = vector.shape_cast %109 : vector<16xf32> to vector<16x1xf32>
    %111 = tpu.reciprocal %110 {approx = true} : vector<16x1xf32> -> vector<16x1xf32>
    %112 = vector.broadcast %111 : vector<16x1xf32> to vector<16x16xf32>
    %113 = arith.mulf %108, %112 : vector<16x16xf32>
    %114 = arith.truncf %113 : vector<16x16xf32> to vector<16x16xbf16>
    %cst_38 = arith.constant dense<0.000000e+00> : vector<16x32xf32>
    %115 = tpu.matmul %114, %98, %cst_38 {dimension_numbers = #tpu.dot_dimension_numbers<[1], [0], [0], [1], [0, 0, 1, 1], [], []>} : vector<16x16xbf16>, vector<16x32xbf16>, vector<16x32xf32> -> vector<16x32xf32>
    %116 = arith.truncf %115 : vector<16x32xf32> to vector<16x32xbf16>
    %117 = vector.extract_strided_slice %31 {offsets = [64, 0], sizes = [32, 128], strides = [1, 1]} : vector<128x128xbf16> to vector<32x128xbf16>
    %cst_39 = arith.constant dense<0.000000e+00> : vector<16x128xf32>
    %118 = tpu.matmul %116, %117, %cst_39 {dimension_numbers = #tpu.dot_dimension_numbers<[1], [0], [0], [1], [0, 0, 1, 1], [], []>} : vector<16x32xbf16>, vector<32x128xbf16>, vector<16x128xf32> -> vector<16x128xf32>
    %119 = arith.addf %92, %118 : vector<16x128xf32>
    %120 = vector.extract_strided_slice %38 {offsets = [0, 96], sizes = [16, 32], strides = [1, 1]} : vector<32x384xf32> to vector<16x32xf32>
    %121 = arith.truncf %120 : vector<16x32xf32> to vector<16x32xbf16>
    %122 = vector.extract_strided_slice %38 {offsets = [0, 224], sizes = [16, 32], strides = [1, 1]} : vector<32x384xf32> to vector<16x32xf32>
    %123 = arith.truncf %122 : vector<16x32xf32> to vector<16x32xbf16>
    %124 = vector.extract_strided_slice %38 {offsets = [0, 352], sizes = [16, 32], strides = [1, 1]} : vector<32x384xf32> to vector<16x32xf32>
    %125 = arith.truncf %124 : vector<16x32xf32> to vector<16x32xbf16>
    %cst_40 = arith.constant dense<0.000000e+00> : vector<16x16xf32>
    %126 = tpu.matmul %121, %123, %cst_40 {dimension_numbers = #tpu.dot_dimension_numbers<[1], [1], [0], [0], [0, 0, 1, 0], [], []>} : vector<16x32xbf16>, vector<16x32xbf16>, vector<16x16xf32> -> vector<16x16xf32>
    %cst_41 = arith.constant 0.176776692 : f32
    %127 = vector.broadcast %cst_41 : f32 to vector<16x16xf32>
    %128 = arith.mulf %126, %127 : vector<16x16xf32>
    %129 = vector.broadcast %39 : vector<1x16xf32> to vector<16x16xf32>
    %130 = arith.addf %128, %129 : vector<16x16xf32>
    %cst_42 = arith.constant dense<0xFF800000> : vector<16xf32>
    %131 = vector.multi_reduction <maximumf>, %130, %cst_42 [1] : vector<16x16xf32> to vector<16xf32>
    %132 = vector.shape_cast %131 : vector<16xf32> to vector<16x1xf32>
    %133 = vector.broadcast %132 : vector<16x1xf32> to vector<16x16xf32>
    %134 = arith.subf %130, %133 : vector<16x16xf32>
    %135 = math.exp %134 : vector<16x16xf32>
    %cst_43 = arith.constant dense<0.000000e+00> : vector<16xf32>
    %136 = vector.multi_reduction <add>, %135, %cst_43 [1] : vector<16x16xf32> to vector<16xf32>
    %137 = vector.shape_cast %136 : vector<16xf32> to vector<16x1xf32>
    %138 = tpu.reciprocal %137 {approx = true} : vector<16x1xf32> -> vector<16x1xf32>
    %139 = vector.broadcast %138 : vector<16x1xf32> to vector<16x16xf32>
    %140 = arith.mulf %135, %139 : vector<16x16xf32>
    %141 = arith.truncf %140 : vector<16x16xf32> to vector<16x16xbf16>
    %cst_44 = arith.constant dense<0.000000e+00> : vector<16x32xf32>
    %142 = tpu.matmul %141, %125, %cst_44 {dimension_numbers = #tpu.dot_dimension_numbers<[1], [0], [0], [1], [0, 0, 1, 1], [], []>} : vector<16x16xbf16>, vector<16x32xbf16>, vector<16x32xf32> -> vector<16x32xf32>
    %143 = arith.truncf %142 : vector<16x32xf32> to vector<16x32xbf16>
    %144 = vector.extract_strided_slice %31 {offsets = [96, 0], sizes = [32, 128], strides = [1, 1]} : vector<128x128xbf16> to vector<32x128xbf16>
    %cst_45 = arith.constant dense<0.000000e+00> : vector<16x128xf32>
    %145 = tpu.matmul %143, %144, %cst_45 {dimension_numbers = #tpu.dot_dimension_numbers<[1], [0], [0], [1], [0, 0, 1, 1], [], []>} : vector<16x32xbf16>, vector<32x128xbf16>, vector<16x128xf32> -> vector<16x128xf32>
    %146 = arith.addf %119, %145 : vector<16x128xf32>
    %147 = vector.extract_strided_slice %25 {offsets = [1, 0], sizes = [1, 16], strides = [1, 1]} : vector<2x16xf32> to vector<1x16xf32>
    %148 = vector.extract_strided_slice %38 {offsets = [16, 0], sizes = [16, 32], strides = [1, 1]} : vector<32x384xf32> to vector<16x32xf32>
    %149 = arith.truncf %148 : vector<16x32xf32> to vector<16x32xbf16>
    %150 = vector.extract_strided_slice %38 {offsets = [16, 128], sizes = [16, 32], strides = [1, 1]} : vector<32x384xf32> to vector<16x32xf32>
    %151 = arith.truncf %150 : vector<16x32xf32> to vector<16x32xbf16>
    %152 = vector.extract_strided_slice %38 {offsets = [16, 256], sizes = [16, 32], strides = [1, 1]} : vector<32x384xf32> to vector<16x32xf32>
    %153 = arith.truncf %152 : vector<16x32xf32> to vector<16x32xbf16>
    %cst_46 = arith.constant dense<0.000000e+00> : vector<16x16xf32>
    %154 = tpu.matmul %149, %151, %cst_46 {dimension_numbers = #tpu.dot_dimension_numbers<[1], [1], [0], [0], [0, 0, 1, 0], [], []>} : vector<16x32xbf16>, vector<16x32xbf16>, vector<16x16xf32> -> vector<16x16xf32>
    %cst_47 = arith.constant 0.176776692 : f32
    %155 = vector.broadcast %cst_47 : f32 to vector<16x16xf32>
    %156 = arith.mulf %154, %155 : vector<16x16xf32>
    %157 = vector.broadcast %147 : vector<1x16xf32> to vector<16x16xf32>
    %158 = arith.addf %156, %157 : vector<16x16xf32>
    %cst_48 = arith.constant dense<0xFF800000> : vector<16xf32>
    %159 = vector.multi_reduction <maximumf>, %158, %cst_48 [1] : vector<16x16xf32> to vector<16xf32>
    %160 = vector.shape_cast %159 : vector<16xf32> to vector<16x1xf32>
    %161 = vector.broadcast %160 : vector<16x1xf32> to vector<16x16xf32>
    %162 = arith.subf %158, %161 : vector<16x16xf32>
    %163 = math.exp %162 : vector<16x16xf32>
    %cst_49 = arith.constant dense<0.000000e+00> : vector<16xf32>
    %164 = vector.multi_reduction <add>, %163, %cst_49 [1] : vector<16x16xf32> to vector<16xf32>
    %165 = vector.shape_cast %164 : vector<16xf32> to vector<16x1xf32>
    %166 = tpu.reciprocal %165 {approx = true} : vector<16x1xf32> -> vector<16x1xf32>
    %167 = vector.broadcast %166 : vector<16x1xf32> to vector<16x16xf32>
    %168 = arith.mulf %163, %167 : vector<16x16xf32>
    %169 = arith.truncf %168 : vector<16x16xf32> to vector<16x16xbf16>
    %cst_50 = arith.constant dense<0.000000e+00> : vector<16x32xf32>
    %170 = tpu.matmul %169, %153, %cst_50 {dimension_numbers = #tpu.dot_dimension_numbers<[1], [0], [0], [1], [0, 0, 1, 1], [], []>} : vector<16x16xbf16>, vector<16x32xbf16>, vector<16x32xf32> -> vector<16x32xf32>
    %171 = arith.truncf %170 : vector<16x32xf32> to vector<16x32xbf16>
    %172 = vector.extract_strided_slice %31 {offsets = [0, 0], sizes = [32, 128], strides = [1, 1]} : vector<128x128xbf16> to vector<32x128xbf16>
    %cst_51 = arith.constant dense<0.000000e+00> : vector<16x128xf32>
    %173 = tpu.matmul %171, %172, %cst_51 {dimension_numbers = #tpu.dot_dimension_numbers<[1], [0], [0], [1], [0, 0, 1, 1], [], []>} : vector<16x32xbf16>, vector<32x128xbf16>, vector<16x128xf32> -> vector<16x128xf32>
    %174 = vector.extract_strided_slice %38 {offsets = [16, 32], sizes = [16, 32], strides = [1, 1]} : vector<32x384xf32> to vector<16x32xf32>
    %175 = arith.truncf %174 : vector<16x32xf32> to vector<16x32xbf16>
    %176 = vector.extract_strided_slice %38 {offsets = [16, 160], sizes = [16, 32], strides = [1, 1]} : vector<32x384xf32> to vector<16x32xf32>
    %177 = arith.truncf %176 : vector<16x32xf32> to vector<16x32xbf16>
    %178 = vector.extract_strided_slice %38 {offsets = [16, 288], sizes = [16, 32], strides = [1, 1]} : vector<32x384xf32> to vector<16x32xf32>
    %179 = arith.truncf %178 : vector<16x32xf32> to vector<16x32xbf16>
    %cst_52 = arith.constant dense<0.000000e+00> : vector<16x16xf32>
    %180 = tpu.matmul %175, %177, %cst_52 {dimension_numbers = #tpu.dot_dimension_numbers<[1], [1], [0], [0], [0, 0, 1, 0], [], []>} : vector<16x32xbf16>, vector<16x32xbf16>, vector<16x16xf32> -> vector<16x16xf32>
    %cst_53 = arith.constant 0.176776692 : f32
    %181 = vector.broadcast %cst_53 : f32 to vector<16x16xf32>
    %182 = arith.mulf %180, %181 : vector<16x16xf32>
    %183 = vector.broadcast %147 : vector<1x16xf32> to vector<16x16xf32>
    %184 = arith.addf %182, %183 : vector<16x16xf32>
    %cst_54 = arith.constant dense<0xFF800000> : vector<16xf32>
    %185 = vector.multi_reduction <maximumf>, %184, %cst_54 [1] : vector<16x16xf32> to vector<16xf32>
    %186 = vector.shape_cast %185 : vector<16xf32> to vector<16x1xf32>
    %187 = vector.broadcast %186 : vector<16x1xf32> to vector<16x16xf32>
    %188 = arith.subf %184, %187 : vector<16x16xf32>
    %189 = math.exp %188 : vector<16x16xf32>
    %cst_55 = arith.constant dense<0.000000e+00> : vector<16xf32>
    %190 = vector.multi_reduction <add>, %189, %cst_55 [1] : vector<16x16xf32> to vector<16xf32>
    %191 = vector.shape_cast %190 : vector<16xf32> to vector<16x1xf32>
    %192 = tpu.reciprocal %191 {approx = true} : vector<16x1xf32> -> vector<16x1xf32>
    %193 = vector.broadcast %192 : vector<16x1xf32> to vector<16x16xf32>
    %194 = arith.mulf %189, %193 : vector<16x16xf32>
    %195 = arith.truncf %194 : vector<16x16xf32> to vector<16x16xbf16>
    %cst_56 = arith.constant dense<0.000000e+00> : vector<16x32xf32>
    %196 = tpu.matmul %195, %179, %cst_56 {dimension_numbers = #tpu.dot_dimension_numbers<[1], [0], [0], [1], [0, 0, 1, 1], [], []>} : vector<16x16xbf16>, vector<16x32xbf16>, vector<16x32xf32> -> vector<16x32xf32>
    %197 = arith.truncf %196 : vector<16x32xf32> to vector<16x32xbf16>
    %198 = vector.extract_strided_slice %31 {offsets = [32, 0], sizes = [32, 128], strides = [1, 1]} : vector<128x128xbf16> to vector<32x128xbf16>
    %cst_57 = arith.constant dense<0.000000e+00> : vector<16x128xf32>
    %199 = tpu.matmul %197, %198, %cst_57 {dimension_numbers = #tpu.dot_dimension_numbers<[1], [0], [0], [1], [0, 0, 1, 1], [], []>} : vector<16x32xbf16>, vector<32x128xbf16>, vector<16x128xf32> -> vector<16x128xf32>
    %200 = arith.addf %173, %199 : vector<16x128xf32>
    %201 = vector.extract_strided_slice %38 {offsets = [16, 64], sizes = [16, 32], strides = [1, 1]} : vector<32x384xf32> to vector<16x32xf32>
    %202 = arith.truncf %201 : vector<16x32xf32> to vector<16x32xbf16>
    %203 = vector.extract_strided_slice %38 {offsets = [16, 192], sizes = [16, 32], strides = [1, 1]} : vector<32x384xf32> to vector<16x32xf32>
    %204 = arith.truncf %203 : vector<16x32xf32> to vector<16x32xbf16>
    %205 = vector.extract_strided_slice %38 {offsets = [16, 320], sizes = [16, 32], strides = [1, 1]} : vector<32x384xf32> to vector<16x32xf32>
    %206 = arith.truncf %205 : vector<16x32xf32> to vector<16x32xbf16>
    %cst_58 = arith.constant dense<0.000000e+00> : vector<16x16xf32>
    %207 = tpu.matmul %202, %204, %cst_58 {dimension_numbers = #tpu.dot_dimension_numbers<[1], [1], [0], [0], [0, 0, 1, 0], [], []>} : vector<16x32xbf16>, vector<16x32xbf16>, vector<16x16xf32> -> vector<16x16xf32>
    %cst_59 = arith.constant 0.176776692 : f32
    %208 = vector.broadcast %cst_59 : f32 to vector<16x16xf32>
    %209 = arith.mulf %207, %208 : vector<16x16xf32>
    %210 = vector.broadcast %147 : vector<1x16xf32> to vector<16x16xf32>
    %211 = arith.addf %209, %210 : vector<16x16xf32>
    %cst_60 = arith.constant dense<0xFF800000> : vector<16xf32>
    %212 = vector.multi_reduction <maximumf>, %211, %cst_60 [1] : vector<16x16xf32> to vector<16xf32>
    %213 = vector.shape_cast %212 : vector<16xf32> to vector<16x1xf32>
    %214 = vector.broadcast %213 : vector<16x1xf32> to vector<16x16xf32>
    %215 = arith.subf %211, %214 : vector<16x16xf32>
    %216 = math.exp %215 : vector<16x16xf32>
    %cst_61 = arith.constant dense<0.000000e+00> : vector<16xf32>
    %217 = vector.multi_reduction <add>, %216, %cst_61 [1] : vector<16x16xf32> to vector<16xf32>
    %218 = vector.shape_cast %217 : vector<16xf32> to vector<16x1xf32>
    %219 = tpu.reciprocal %218 {approx = true} : vector<16x1xf32> -> vector<16x1xf32>
    %220 = vector.broadcast %219 : vector<16x1xf32> to vector<16x16xf32>
    %221 = arith.mulf %216, %220 : vector<16x16xf32>
    %222 = arith.truncf %221 : vector<16x16xf32> to vector<16x16xbf16>
    %cst_62 = arith.constant dense<0.000000e+00> : vector<16x32xf32>
    %223 = tpu.matmul %222, %206, %cst_62 {dimension_numbers = #tpu.dot_dimension_numbers<[1], [0], [0], [1], [0, 0, 1, 1], [], []>} : vector<16x16xbf16>, vector<16x32xbf16>, vector<16x32xf32> -> vector<16x32xf32>
    %224 = arith.truncf %223 : vector<16x32xf32> to vector<16x32xbf16>
    %225 = vector.extract_strided_slice %31 {offsets = [64, 0], sizes = [32, 128], strides = [1, 1]} : vector<128x128xbf16> to vector<32x128xbf16>
    %cst_63 = arith.constant dense<0.000000e+00> : vector<16x128xf32>
    %226 = tpu.matmul %224, %225, %cst_63 {dimension_numbers = #tpu.dot_dimension_numbers<[1], [0], [0], [1], [0, 0, 1, 1], [], []>} : vector<16x32xbf16>, vector<32x128xbf16>, vector<16x128xf32> -> vector<16x128xf32>
    %227 = arith.addf %200, %226 : vector<16x128xf32>
    %228 = vector.extract_strided_slice %38 {offsets = [16, 96], sizes = [16, 32], strides = [1, 1]} : vector<32x384xf32> to vector<16x32xf32>
    %229 = arith.truncf %228 : vector<16x32xf32> to vector<16x32xbf16>
    %230 = vector.extract_strided_slice %38 {offsets = [16, 224], sizes = [16, 32], strides = [1, 1]} : vector<32x384xf32> to vector<16x32xf32>
    %231 = arith.truncf %230 : vector<16x32xf32> to vector<16x32xbf16>
    %232 = vector.extract_strided_slice %38 {offsets = [16, 352], sizes = [16, 32], strides = [1, 1]} : vector<32x384xf32> to vector<16x32xf32>
    %233 = arith.truncf %232 : vector<16x32xf32> to vector<16x32xbf16>
    %cst_64 = arith.constant dense<0.000000e+00> : vector<16x16xf32>
    %234 = tpu.matmul %229, %231, %cst_64 {dimension_numbers = #tpu.dot_dimension_numbers<[1], [1], [0], [0], [0, 0, 1, 0], [], []>} : vector<16x32xbf16>, vector<16x32xbf16>, vector<16x16xf32> -> vector<16x16xf32>
    %cst_65 = arith.constant 0.176776692 : f32
    %235 = vector.broadcast %cst_65 : f32 to vector<16x16xf32>
    %236 = arith.mulf %234, %235 : vector<16x16xf32>
    %237 = vector.broadcast %147 : vector<1x16xf32> to vector<16x16xf32>
    %238 = arith.addf %236, %237 : vector<16x16xf32>
    %cst_66 = arith.constant dense<0xFF800000> : vector<16xf32>
    %239 = vector.multi_reduction <maximumf>, %238, %cst_66 [1] : vector<16x16xf32> to vector<16xf32>
    %240 = vector.shape_cast %239 : vector<16xf32> to vector<16x1xf32>
    %241 = vector.broadcast %240 : vector<16x1xf32> to vector<16x16xf32>
    %242 = arith.subf %238, %241 : vector<16x16xf32>
    %243 = math.exp %242 : vector<16x16xf32>
    %cst_67 = arith.constant dense<0.000000e+00> : vector<16xf32>
    %244 = vector.multi_reduction <add>, %243, %cst_67 [1] : vector<16x16xf32> to vector<16xf32>
    %245 = vector.shape_cast %244 : vector<16xf32> to vector<16x1xf32>
    %246 = tpu.reciprocal %245 {approx = true} : vector<16x1xf32> -> vector<16x1xf32>
    %247 = vector.broadcast %246 : vector<16x1xf32> to vector<16x16xf32>
    %248 = arith.mulf %243, %247 : vector<16x16xf32>
    %249 = arith.truncf %248 : vector<16x16xf32> to vector<16x16xbf16>
    %cst_68 = arith.constant dense<0.000000e+00> : vector<16x32xf32>
    %250 = tpu.matmul %249, %233, %cst_68 {dimension_numbers = #tpu.dot_dimension_numbers<[1], [0], [0], [1], [0, 0, 1, 1], [], []>} : vector<16x16xbf16>, vector<16x32xbf16>, vector<16x32xf32> -> vector<16x32xf32>
    %251 = arith.truncf %250 : vector<16x32xf32> to vector<16x32xbf16>
    %252 = vector.extract_strided_slice %31 {offsets = [96, 0], sizes = [32, 128], strides = [1, 1]} : vector<128x128xbf16> to vector<32x128xbf16>
    %cst_69 = arith.constant dense<0.000000e+00> : vector<16x128xf32>
    %253 = tpu.matmul %251, %252, %cst_69 {dimension_numbers = #tpu.dot_dimension_numbers<[1], [0], [0], [1], [0, 0, 1, 1], [], []>} : vector<16x32xbf16>, vector<32x128xbf16>, vector<16x128xf32> -> vector<16x128xf32>
    %254 = arith.addf %227, %253 : vector<16x128xf32>
    %255 = tpu.concatenate %146, %254 in 0 : vector<16x128xf32>, vector<16x128xf32> -> vector<32x128xf32>
    %256 = vector.shape_cast %33 : vector<128xf32> to vector<1x128xf32>
    %257 = vector.broadcast %256 : vector<1x128xf32> to vector<32x128xf32>
    %258 = arith.addf %255, %257 : vector<32x128xf32>
    %259 = arith.addf %24, %258 : vector<32x128xf32>
    %c0_70 = arith.constant 0 : index
    %c0_71 = arith.constant 0 : index
    %260 = vector.load %arg8[%c0_70, %c0_71] : memref<2x128xf32, #tpu.memory_space<vmem>>, vector<1x128xf32>
    %261 = vector.shape_cast %260 : vector<1x128xf32> to vector<128xf32>
    %262 = vector.shape_cast %261 : vector<128xf32> to vector<1x128xf32>
    %c0_72 = arith.constant 0 : index
    %c0_73 = arith.constant 0 : index
    %263 = vector.load %arg9[%c0_72, %c0_73] : memref<2x128xf32, #tpu.memory_space<vmem>>, vector<1x128xf32>
    %264 = vector.shape_cast %263 : vector<1x128xf32> to vector<128xf32>
    %265 = vector.shape_cast %264 : vector<128xf32> to vector<1x128xf32>
    %cst_74 = arith.constant dense<0.000000e+00> : vector<32xf32>
    %266 = vector.multi_reduction <add>, %259, %cst_74 [1] : vector<32x128xf32> to vector<32xf32>
    %267 = vector.shape_cast %266 : vector<32xf32> to vector<32x1xf32>
    %cst_75 = arith.constant 1.280000e+02 : f32
    %268 = vector.broadcast %cst_75 : f32 to vector<32x1xf32>
    %269 = arith.divf %267, %268 : vector<32x1xf32>
    %270 = vector.broadcast %269 : vector<32x1xf32> to vector<32x128xf32>
    %271 = arith.subf %259, %270 : vector<32x128xf32>
    %272 = arith.mulf %271, %271 : vector<32x128xf32>
    %cst_76 = arith.constant dense<0.000000e+00> : vector<32xf32>
    %273 = vector.multi_reduction <add>, %272, %cst_76 [1] : vector<32x128xf32> to vector<32xf32>
    %274 = vector.shape_cast %273 : vector<32xf32> to vector<32x1xf32>
    %cst_77 = arith.constant 1.280000e+02 : f32
    %275 = vector.broadcast %cst_77 : f32 to vector<32x1xf32>
    %276 = arith.divf %274, %275 : vector<32x1xf32>
    %277 = vector.broadcast %269 : vector<32x1xf32> to vector<32x128xf32>
    %278 = arith.subf %259, %277 : vector<32x128xf32>
    %cst_78 = arith.constant 9.99999996E-13 : f32
    %279 = vector.broadcast %cst_78 : f32 to vector<32x1xf32>
    %280 = arith.addf %276, %279 : vector<32x1xf32>
    %281 = math.rsqrt %280 : vector<32x1xf32>
    %282 = vector.broadcast %281 : vector<32x1xf32> to vector<32x128xf32>
    %283 = arith.mulf %278, %282 : vector<32x128xf32>
    %284 = vector.broadcast %262 : vector<1x128xf32> to vector<32x128xf32>
    %285 = arith.mulf %283, %284 : vector<32x128xf32>
    %286 = vector.broadcast %265 : vector<1x128xf32> to vector<32x128xf32>
    %287 = arith.addf %285, %286 : vector<32x128xf32>
    %c0_79 = arith.constant 0 : index
    %c0_80 = arith.constant 0 : index
    %c0_81 = arith.constant 0 : index
    %288 = vector.load %arg10[%c0_79, %c0_80, %c0_81] : memref<2x128x256xbf16, #tpu.memory_space<vmem>>, vector<1x128x256xbf16>
    %289 = vector.shape_cast %288 : vector<1x128x256xbf16> to vector<128x256xbf16>
    %290 = arith.truncf %287 : vector<32x128xf32> to vector<32x128xbf16>
    %cst_82 = arith.constant dense<0.000000e+00> : vector<32x256xf32>
    %291 = tpu.matmul %290, %289, %cst_82 {dimension_numbers = #tpu.dot_dimension_numbers<[1], [0], [0], [1], [0, 0, 1, 1], [], []>} : vector<32x128xbf16>, vector<128x256xbf16>, vector<32x256xf32> -> vector<32x256xf32>
    %c0_83 = arith.constant 0 : index
    %c0_84 = arith.constant 0 : index
    %292 = vector.load %arg11[%c0_83, %c0_84] : memref<2x256xf32, #tpu.memory_space<vmem>>, vector<1x256xf32>
    %293 = vector.shape_cast %292 : vector<1x256xf32> to vector<256xf32>
    %294 = vector.shape_cast %293 : vector<256xf32> to vector<1x256xf32>
    %295 = vector.broadcast %294 : vector<1x256xf32> to vector<32x256xf32>
    %296 = arith.addf %291, %295 : vector<32x256xf32>
    %cst_85 = arith.constant 5.000000e-01 : f32
    %297 = vector.broadcast %cst_85 : f32 to vector<32x256xf32>
    %298 = arith.mulf %297, %296 : vector<32x256xf32>
    %cst_86 = arith.constant 0.707106769 : f32
    %299 = vector.broadcast %cst_86 : f32 to vector<32x256xf32>
    %300 = arith.mulf %296, %299 : vector<32x256xf32>
    %301 = math.absf %300 : vector<32x256xf32>
    %cst_87 = arith.constant 0.327591091 : f32
    %302 = vector.broadcast %cst_87 : f32 to vector<32x256xf32>
    %303 = arith.mulf %302, %301 : vector<32x256xf32>
    %cst_88 = arith.constant 1.000000e+00 : f32
    %304 = vector.broadcast %cst_88 : f32 to vector<32x256xf32>
    %305 = arith.addf %304, %303 : vector<32x256xf32>
    %cst_89 = arith.constant 1.000000e+00 : f32
    %306 = vector.broadcast %cst_89 : f32 to vector<32x256xf32>
    %307 = arith.divf %306, %305 : vector<32x256xf32>
    %cst_90 = arith.constant 1.06140542 : f32
    %308 = vector.broadcast %cst_90 : f32 to vector<32x256xf32>
    %309 = arith.mulf %308, %307 : vector<32x256xf32>
    %cst_91 = arith.constant -1.45315206 : f32
    %310 = vector.broadcast %cst_91 : f32 to vector<32x256xf32>
    %311 = arith.addf %309, %310 : vector<32x256xf32>
    %312 = arith.mulf %311, %307 : vector<32x256xf32>
    %cst_92 = arith.constant 1.42141378 : f32
    %313 = vector.broadcast %cst_92 : f32 to vector<32x256xf32>
    %314 = arith.addf %312, %313 : vector<32x256xf32>
    %315 = arith.mulf %314, %307 : vector<32x256xf32>
    %cst_93 = arith.constant -0.284496725 : f32
    %316 = vector.broadcast %cst_93 : f32 to vector<32x256xf32>
    %317 = arith.addf %315, %316 : vector<32x256xf32>
    %318 = arith.mulf %317, %307 : vector<32x256xf32>
    %cst_94 = arith.constant 0.254829586 : f32
    %319 = vector.broadcast %cst_94 : f32 to vector<32x256xf32>
    %320 = arith.addf %318, %319 : vector<32x256xf32>
    %321 = arith.mulf %320, %307 : vector<32x256xf32>
    %cst_95 = arith.constant 0.000000e+00 : f32
    %322 = vector.broadcast %cst_95 : f32 to vector<32x256xf32>
    %323 = arith.subf %322, %301 : vector<32x256xf32>
    %324 = arith.mulf %323, %301 : vector<32x256xf32>
    %325 = math.exp %324 : vector<32x256xf32>
    %326 = arith.mulf %321, %325 : vector<32x256xf32>
    %cst_96 = arith.constant 1.000000e+00 : f32
    %327 = vector.broadcast %cst_96 : f32 to vector<32x256xf32>
    %328 = arith.subf %327, %326 : vector<32x256xf32>
    %cst_97 = arith.constant 0.000000e+00 : f32
    %329 = vector.broadcast %cst_97 : f32 to vector<32x256xf32>
    %330 = arith.cmpf olt, %300, %329 : vector<32x256xf32>
    %cst_98 = arith.constant 0.000000e+00 : f32
    %331 = vector.broadcast %cst_98 : f32 to vector<32x256xf32>
    %332 = arith.subf %331, %328 : vector<32x256xf32>
    %333 = arith.select %330, %332, %328 : vector<32x256xi1>, vector<32x256xf32>
    %cst_99 = arith.constant 1.000000e+00 : f32
    %334 = vector.broadcast %cst_99 : f32 to vector<32x256xf32>
    %335 = arith.addf %334, %333 : vector<32x256xf32>
    %336 = arith.mulf %298, %335 : vector<32x256xf32>
    %c0_100 = arith.constant 0 : index
    %c0_101 = arith.constant 0 : index
    %c0_102 = arith.constant 0 : index
    %337 = vector.load %arg12[%c0_100, %c0_101, %c0_102] : memref<2x256x128xbf16, #tpu.memory_space<vmem>>, vector<1x256x128xbf16>
    %338 = vector.shape_cast %337 : vector<1x256x128xbf16> to vector<256x128xbf16>
    %339 = arith.truncf %336 : vector<32x256xf32> to vector<32x256xbf16>
    %cst_103 = arith.constant dense<0.000000e+00> : vector<32x128xf32>
    %340 = tpu.matmul %339, %338, %cst_103 {dimension_numbers = #tpu.dot_dimension_numbers<[1], [0], [0], [1], [0, 0, 1, 1], [], []>} : vector<32x256xbf16>, vector<256x128xbf16>, vector<32x128xf32> -> vector<32x128xf32>
    %c0_104 = arith.constant 0 : index
    %c0_105 = arith.constant 0 : index
    %341 = vector.load %arg13[%c0_104, %c0_105] : memref<2x128xf32, #tpu.memory_space<vmem>>, vector<1x128xf32>
    %342 = vector.shape_cast %341 : vector<1x128xf32> to vector<128xf32>
    %343 = vector.shape_cast %342 : vector<128xf32> to vector<1x128xf32>
    %344 = vector.broadcast %343 : vector<1x128xf32> to vector<32x128xf32>
    %345 = arith.addf %340, %344 : vector<32x128xf32>
    %346 = arith.addf %287, %345 : vector<32x128xf32>
    %c0_106 = arith.constant 0 : index
    %c0_107 = arith.constant 0 : index
    %347 = vector.load %arg14[%c0_106, %c0_107] : memref<2x128xf32, #tpu.memory_space<vmem>>, vector<1x128xf32>
    %348 = vector.shape_cast %347 : vector<1x128xf32> to vector<128xf32>
    %349 = vector.shape_cast %348 : vector<128xf32> to vector<1x128xf32>
    %c0_108 = arith.constant 0 : index
    %c0_109 = arith.constant 0 : index
    %350 = vector.load %arg15[%c0_108, %c0_109] : memref<2x128xf32, #tpu.memory_space<vmem>>, vector<1x128xf32>
    %351 = vector.shape_cast %350 : vector<1x128xf32> to vector<128xf32>
    %352 = vector.shape_cast %351 : vector<128xf32> to vector<1x128xf32>
    %cst_110 = arith.constant dense<0.000000e+00> : vector<32xf32>
    %353 = vector.multi_reduction <add>, %346, %cst_110 [1] : vector<32x128xf32> to vector<32xf32>
    %354 = vector.shape_cast %353 : vector<32xf32> to vector<32x1xf32>
    %cst_111 = arith.constant 1.280000e+02 : f32
    %355 = vector.broadcast %cst_111 : f32 to vector<32x1xf32>
    %356 = arith.divf %354, %355 : vector<32x1xf32>
    %357 = vector.broadcast %356 : vector<32x1xf32> to vector<32x128xf32>
    %358 = arith.subf %346, %357 : vector<32x128xf32>
    %359 = arith.mulf %358, %358 : vector<32x128xf32>
    %cst_112 = arith.constant dense<0.000000e+00> : vector<32xf32>
    %360 = vector.multi_reduction <add>, %359, %cst_112 [1] : vector<32x128xf32> to vector<32xf32>
    %361 = vector.shape_cast %360 : vector<32xf32> to vector<32x1xf32>
    %cst_113 = arith.constant 1.280000e+02 : f32
    %362 = vector.broadcast %cst_113 : f32 to vector<32x1xf32>
    %363 = arith.divf %361, %362 : vector<32x1xf32>
    %364 = vector.broadcast %356 : vector<32x1xf32> to vector<32x128xf32>
    %365 = arith.subf %346, %364 : vector<32x128xf32>
    %cst_114 = arith.constant 9.99999996E-13 : f32
    %366 = vector.broadcast %cst_114 : f32 to vector<32x1xf32>
    %367 = arith.addf %363, %366 : vector<32x1xf32>
    %368 = math.rsqrt %367 : vector<32x1xf32>
    %369 = vector.broadcast %368 : vector<32x1xf32> to vector<32x128xf32>
    %370 = arith.mulf %365, %369 : vector<32x128xf32>
    %371 = vector.broadcast %349 : vector<1x128xf32> to vector<32x128xf32>
    %372 = arith.mulf %370, %371 : vector<32x128xf32>
    %373 = vector.broadcast %352 : vector<1x128xf32> to vector<32x128xf32>
    %374 = arith.addf %372, %373 : vector<32x128xf32>
    %c1 = arith.constant 1 : index
    %c0_115 = arith.constant 0 : index
    %c0_116 = arith.constant 0 : index
    %375 = vector.load %arg4[%c1, %c0_115, %c0_116] : memref<2x128x384xbf16, #tpu.memory_space<vmem>>, vector<1x128x384xbf16>
    %376 = vector.shape_cast %375 : vector<1x128x384xbf16> to vector<128x384xbf16>
    %c1_117 = arith.constant 1 : index
    %c0_118 = arith.constant 0 : index
    %377 = vector.load %arg5[%c1_117, %c0_118] : memref<2x384xf32, #tpu.memory_space<vmem>>, vector<1x384xf32>
    %378 = vector.shape_cast %377 : vector<1x384xf32> to vector<384xf32>
    %c1_119 = arith.constant 1 : index
    %c0_120 = arith.constant 0 : index
    %c0_121 = arith.constant 0 : index
    %379 = vector.load %arg6[%c1_119, %c0_120, %c0_121] : memref<2x128x128xbf16, #tpu.memory_space<vmem>>, vector<1x128x128xbf16>
    %380 = vector.shape_cast %379 : vector<1x128x128xbf16> to vector<128x128xbf16>
    %c1_122 = arith.constant 1 : index
    %c0_123 = arith.constant 0 : index
    %381 = vector.load %arg7[%c1_122, %c0_123] : memref<2x128xf32, #tpu.memory_space<vmem>>, vector<1x128xf32>
    %382 = vector.shape_cast %381 : vector<1x128xf32> to vector<128xf32>
    %383 = arith.truncf %374 : vector<32x128xf32> to vector<32x128xbf16>
    %cst_124 = arith.constant dense<0.000000e+00> : vector<32x384xf32>
    %384 = tpu.matmul %383, %376, %cst_124 {dimension_numbers = #tpu.dot_dimension_numbers<[1], [0], [0], [1], [0, 0, 1, 1], [], []>} : vector<32x128xbf16>, vector<128x384xbf16>, vector<32x384xf32> -> vector<32x384xf32>
    %385 = vector.shape_cast %378 : vector<384xf32> to vector<1x384xf32>
    %386 = vector.broadcast %385 : vector<1x384xf32> to vector<32x384xf32>
    %387 = arith.addf %384, %386 : vector<32x384xf32>
    %388 = vector.extract_strided_slice %25 {offsets = [0, 0], sizes = [1, 16], strides = [1, 1]} : vector<2x16xf32> to vector<1x16xf32>
    %389 = vector.extract_strided_slice %387 {offsets = [0, 0], sizes = [16, 32], strides = [1, 1]} : vector<32x384xf32> to vector<16x32xf32>
    %390 = arith.truncf %389 : vector<16x32xf32> to vector<16x32xbf16>
    %391 = vector.extract_strided_slice %387 {offsets = [0, 128], sizes = [16, 32], strides = [1, 1]} : vector<32x384xf32> to vector<16x32xf32>
    %392 = arith.truncf %391 : vector<16x32xf32> to vector<16x32xbf16>
    %393 = vector.extract_strided_slice %387 {offsets = [0, 256], sizes = [16, 32], strides = [1, 1]} : vector<32x384xf32> to vector<16x32xf32>
    %394 = arith.truncf %393 : vector<16x32xf32> to vector<16x32xbf16>
    %cst_125 = arith.constant dense<0.000000e+00> : vector<16x16xf32>
    %395 = tpu.matmul %390, %392, %cst_125 {dimension_numbers = #tpu.dot_dimension_numbers<[1], [1], [0], [0], [0, 0, 1, 0], [], []>} : vector<16x32xbf16>, vector<16x32xbf16>, vector<16x16xf32> -> vector<16x16xf32>
    %cst_126 = arith.constant 0.176776692 : f32
    %396 = vector.broadcast %cst_126 : f32 to vector<16x16xf32>
    %397 = arith.mulf %395, %396 : vector<16x16xf32>
    %398 = vector.broadcast %388 : vector<1x16xf32> to vector<16x16xf32>
    %399 = arith.addf %397, %398 : vector<16x16xf32>
    %cst_127 = arith.constant dense<0xFF800000> : vector<16xf32>
    %400 = vector.multi_reduction <maximumf>, %399, %cst_127 [1] : vector<16x16xf32> to vector<16xf32>
    %401 = vector.shape_cast %400 : vector<16xf32> to vector<16x1xf32>
    %402 = vector.broadcast %401 : vector<16x1xf32> to vector<16x16xf32>
    %403 = arith.subf %399, %402 : vector<16x16xf32>
    %404 = math.exp %403 : vector<16x16xf32>
    %cst_128 = arith.constant dense<0.000000e+00> : vector<16xf32>
    %405 = vector.multi_reduction <add>, %404, %cst_128 [1] : vector<16x16xf32> to vector<16xf32>
    %406 = vector.shape_cast %405 : vector<16xf32> to vector<16x1xf32>
    %407 = tpu.reciprocal %406 {approx = true} : vector<16x1xf32> -> vector<16x1xf32>
    %408 = vector.broadcast %407 : vector<16x1xf32> to vector<16x16xf32>
    %409 = arith.mulf %404, %408 : vector<16x16xf32>
    %410 = arith.truncf %409 : vector<16x16xf32> to vector<16x16xbf16>
    %cst_129 = arith.constant dense<0.000000e+00> : vector<16x32xf32>
    %411 = tpu.matmul %410, %394, %cst_129 {dimension_numbers = #tpu.dot_dimension_numbers<[1], [0], [0], [1], [0, 0, 1, 1], [], []>} : vector<16x16xbf16>, vector<16x32xbf16>, vector<16x32xf32> -> vector<16x32xf32>
    %412 = arith.truncf %411 : vector<16x32xf32> to vector<16x32xbf16>
    %413 = vector.extract_strided_slice %380 {offsets = [0, 0], sizes = [32, 128], strides = [1, 1]} : vector<128x128xbf16> to vector<32x128xbf16>
    %cst_130 = arith.constant dense<0.000000e+00> : vector<16x128xf32>
    %414 = tpu.matmul %412, %413, %cst_130 {dimension_numbers = #tpu.dot_dimension_numbers<[1], [0], [0], [1], [0, 0, 1, 1], [], []>} : vector<16x32xbf16>, vector<32x128xbf16>, vector<16x128xf32> -> vector<16x128xf32>
    %415 = vector.extract_strided_slice %387 {offsets = [0, 32], sizes = [16, 32], strides = [1, 1]} : vector<32x384xf32> to vector<16x32xf32>
    %416 = arith.truncf %415 : vector<16x32xf32> to vector<16x32xbf16>
    %417 = vector.extract_strided_slice %387 {offsets = [0, 160], sizes = [16, 32], strides = [1, 1]} : vector<32x384xf32> to vector<16x32xf32>
    %418 = arith.truncf %417 : vector<16x32xf32> to vector<16x32xbf16>
    %419 = vector.extract_strided_slice %387 {offsets = [0, 288], sizes = [16, 32], strides = [1, 1]} : vector<32x384xf32> to vector<16x32xf32>
    %420 = arith.truncf %419 : vector<16x32xf32> to vector<16x32xbf16>
    %cst_131 = arith.constant dense<0.000000e+00> : vector<16x16xf32>
    %421 = tpu.matmul %416, %418, %cst_131 {dimension_numbers = #tpu.dot_dimension_numbers<[1], [1], [0], [0], [0, 0, 1, 0], [], []>} : vector<16x32xbf16>, vector<16x32xbf16>, vector<16x16xf32> -> vector<16x16xf32>
    %cst_132 = arith.constant 0.176776692 : f32
    %422 = vector.broadcast %cst_132 : f32 to vector<16x16xf32>
    %423 = arith.mulf %421, %422 : vector<16x16xf32>
    %424 = vector.broadcast %388 : vector<1x16xf32> to vector<16x16xf32>
    %425 = arith.addf %423, %424 : vector<16x16xf32>
    %cst_133 = arith.constant dense<0xFF800000> : vector<16xf32>
    %426 = vector.multi_reduction <maximumf>, %425, %cst_133 [1] : vector<16x16xf32> to vector<16xf32>
    %427 = vector.shape_cast %426 : vector<16xf32> to vector<16x1xf32>
    %428 = vector.broadcast %427 : vector<16x1xf32> to vector<16x16xf32>
    %429 = arith.subf %425, %428 : vector<16x16xf32>
    %430 = math.exp %429 : vector<16x16xf32>
    %cst_134 = arith.constant dense<0.000000e+00> : vector<16xf32>
    %431 = vector.multi_reduction <add>, %430, %cst_134 [1] : vector<16x16xf32> to vector<16xf32>
    %432 = vector.shape_cast %431 : vector<16xf32> to vector<16x1xf32>
    %433 = tpu.reciprocal %432 {approx = true} : vector<16x1xf32> -> vector<16x1xf32>
    %434 = vector.broadcast %433 : vector<16x1xf32> to vector<16x16xf32>
    %435 = arith.mulf %430, %434 : vector<16x16xf32>
    %436 = arith.truncf %435 : vector<16x16xf32> to vector<16x16xbf16>
    %cst_135 = arith.constant dense<0.000000e+00> : vector<16x32xf32>
    %437 = tpu.matmul %436, %420, %cst_135 {dimension_numbers = #tpu.dot_dimension_numbers<[1], [0], [0], [1], [0, 0, 1, 1], [], []>} : vector<16x16xbf16>, vector<16x32xbf16>, vector<16x32xf32> -> vector<16x32xf32>
    %438 = arith.truncf %437 : vector<16x32xf32> to vector<16x32xbf16>
    %439 = vector.extract_strided_slice %380 {offsets = [32, 0], sizes = [32, 128], strides = [1, 1]} : vector<128x128xbf16> to vector<32x128xbf16>
    %cst_136 = arith.constant dense<0.000000e+00> : vector<16x128xf32>
    %440 = tpu.matmul %438, %439, %cst_136 {dimension_numbers = #tpu.dot_dimension_numbers<[1], [0], [0], [1], [0, 0, 1, 1], [], []>} : vector<16x32xbf16>, vector<32x128xbf16>, vector<16x128xf32> -> vector<16x128xf32>
    %441 = arith.addf %414, %440 : vector<16x128xf32>
    %442 = vector.extract_strided_slice %387 {offsets = [0, 64], sizes = [16, 32], strides = [1, 1]} : vector<32x384xf32> to vector<16x32xf32>
    %443 = arith.truncf %442 : vector<16x32xf32> to vector<16x32xbf16>
    %444 = vector.extract_strided_slice %387 {offsets = [0, 192], sizes = [16, 32], strides = [1, 1]} : vector<32x384xf32> to vector<16x32xf32>
    %445 = arith.truncf %444 : vector<16x32xf32> to vector<16x32xbf16>
    %446 = vector.extract_strided_slice %387 {offsets = [0, 320], sizes = [16, 32], strides = [1, 1]} : vector<32x384xf32> to vector<16x32xf32>
    %447 = arith.truncf %446 : vector<16x32xf32> to vector<16x32xbf16>
    %cst_137 = arith.constant dense<0.000000e+00> : vector<16x16xf32>
    %448 = tpu.matmul %443, %445, %cst_137 {dimension_numbers = #tpu.dot_dimension_numbers<[1], [1], [0], [0], [0, 0, 1, 0], [], []>} : vector<16x32xbf16>, vector<16x32xbf16>, vector<16x16xf32> -> vector<16x16xf32>
    %cst_138 = arith.constant 0.176776692 : f32
    %449 = vector.broadcast %cst_138 : f32 to vector<16x16xf32>
    %450 = arith.mulf %448, %449 : vector<16x16xf32>
    %451 = vector.broadcast %388 : vector<1x16xf32> to vector<16x16xf32>
    %452 = arith.addf %450, %451 : vector<16x16xf32>
    %cst_139 = arith.constant dense<0xFF800000> : vector<16xf32>
    %453 = vector.multi_reduction <maximumf>, %452, %cst_139 [1] : vector<16x16xf32> to vector<16xf32>
    %454 = vector.shape_cast %453 : vector<16xf32> to vector<16x1xf32>
    %455 = vector.broadcast %454 : vector<16x1xf32> to vector<16x16xf32>
    %456 = arith.subf %452, %455 : vector<16x16xf32>
    %457 = math.exp %456 : vector<16x16xf32>
    %cst_140 = arith.constant dense<0.000000e+00> : vector<16xf32>
    %458 = vector.multi_reduction <add>, %457, %cst_140 [1] : vector<16x16xf32> to vector<16xf32>
    %459 = vector.shape_cast %458 : vector<16xf32> to vector<16x1xf32>
    %460 = tpu.reciprocal %459 {approx = true} : vector<16x1xf32> -> vector<16x1xf32>
    %461 = vector.broadcast %460 : vector<16x1xf32> to vector<16x16xf32>
    %462 = arith.mulf %457, %461 : vector<16x16xf32>
    %463 = arith.truncf %462 : vector<16x16xf32> to vector<16x16xbf16>
    %cst_141 = arith.constant dense<0.000000e+00> : vector<16x32xf32>
    %464 = tpu.matmul %463, %447, %cst_141 {dimension_numbers = #tpu.dot_dimension_numbers<[1], [0], [0], [1], [0, 0, 1, 1], [], []>} : vector<16x16xbf16>, vector<16x32xbf16>, vector<16x32xf32> -> vector<16x32xf32>
    %465 = arith.truncf %464 : vector<16x32xf32> to vector<16x32xbf16>
    %466 = vector.extract_strided_slice %380 {offsets = [64, 0], sizes = [32, 128], strides = [1, 1]} : vector<128x128xbf16> to vector<32x128xbf16>
    %cst_142 = arith.constant dense<0.000000e+00> : vector<16x128xf32>
    %467 = tpu.matmul %465, %466, %cst_142 {dimension_numbers = #tpu.dot_dimension_numbers<[1], [0], [0], [1], [0, 0, 1, 1], [], []>} : vector<16x32xbf16>, vector<32x128xbf16>, vector<16x128xf32> -> vector<16x128xf32>
    %468 = arith.addf %441, %467 : vector<16x128xf32>
    %469 = vector.extract_strided_slice %387 {offsets = [0, 96], sizes = [16, 32], strides = [1, 1]} : vector<32x384xf32> to vector<16x32xf32>
    %470 = arith.truncf %469 : vector<16x32xf32> to vector<16x32xbf16>
    %471 = vector.extract_strided_slice %387 {offsets = [0, 224], sizes = [16, 32], strides = [1, 1]} : vector<32x384xf32> to vector<16x32xf32>
    %472 = arith.truncf %471 : vector<16x32xf32> to vector<16x32xbf16>
    %473 = vector.extract_strided_slice %387 {offsets = [0, 352], sizes = [16, 32], strides = [1, 1]} : vector<32x384xf32> to vector<16x32xf32>
    %474 = arith.truncf %473 : vector<16x32xf32> to vector<16x32xbf16>
    %cst_143 = arith.constant dense<0.000000e+00> : vector<16x16xf32>
    %475 = tpu.matmul %470, %472, %cst_143 {dimension_numbers = #tpu.dot_dimension_numbers<[1], [1], [0], [0], [0, 0, 1, 0], [], []>} : vector<16x32xbf16>, vector<16x32xbf16>, vector<16x16xf32> -> vector<16x16xf32>
    %cst_144 = arith.constant 0.176776692 : f32
    %476 = vector.broadcast %cst_144 : f32 to vector<16x16xf32>
    %477 = arith.mulf %475, %476 : vector<16x16xf32>
    %478 = vector.broadcast %388 : vector<1x16xf32> to vector<16x16xf32>
    %479 = arith.addf %477, %478 : vector<16x16xf32>
    %cst_145 = arith.constant dense<0xFF800000> : vector<16xf32>
    %480 = vector.multi_reduction <maximumf>, %479, %cst_145 [1] : vector<16x16xf32> to vector<16xf32>
    %481 = vector.shape_cast %480 : vector<16xf32> to vector<16x1xf32>
    %482 = vector.broadcast %481 : vector<16x1xf32> to vector<16x16xf32>
    %483 = arith.subf %479, %482 : vector<16x16xf32>
    %484 = math.exp %483 : vector<16x16xf32>
    %cst_146 = arith.constant dense<0.000000e+00> : vector<16xf32>
    %485 = vector.multi_reduction <add>, %484, %cst_146 [1] : vector<16x16xf32> to vector<16xf32>
    %486 = vector.shape_cast %485 : vector<16xf32> to vector<16x1xf32>
    %487 = tpu.reciprocal %486 {approx = true} : vector<16x1xf32> -> vector<16x1xf32>
    %488 = vector.broadcast %487 : vector<16x1xf32> to vector<16x16xf32>
    %489 = arith.mulf %484, %488 : vector<16x16xf32>
    %490 = arith.truncf %489 : vector<16x16xf32> to vector<16x16xbf16>
    %cst_147 = arith.constant dense<0.000000e+00> : vector<16x32xf32>
    %491 = tpu.matmul %490, %474, %cst_147 {dimension_numbers = #tpu.dot_dimension_numbers<[1], [0], [0], [1], [0, 0, 1, 1], [], []>} : vector<16x16xbf16>, vector<16x32xbf16>, vector<16x32xf32> -> vector<16x32xf32>
    %492 = arith.truncf %491 : vector<16x32xf32> to vector<16x32xbf16>
    %493 = vector.extract_strided_slice %380 {offsets = [96, 0], sizes = [32, 128], strides = [1, 1]} : vector<128x128xbf16> to vector<32x128xbf16>
    %cst_148 = arith.constant dense<0.000000e+00> : vector<16x128xf32>
    %494 = tpu.matmul %492, %493, %cst_148 {dimension_numbers = #tpu.dot_dimension_numbers<[1], [0], [0], [1], [0, 0, 1, 1], [], []>} : vector<16x32xbf16>, vector<32x128xbf16>, vector<16x128xf32> -> vector<16x128xf32>
    %495 = arith.addf %468, %494 : vector<16x128xf32>
    %496 = vector.extract_strided_slice %25 {offsets = [1, 0], sizes = [1, 16], strides = [1, 1]} : vector<2x16xf32> to vector<1x16xf32>
    %497 = vector.extract_strided_slice %387 {offsets = [16, 0], sizes = [16, 32], strides = [1, 1]} : vector<32x384xf32> to vector<16x32xf32>
    %498 = arith.truncf %497 : vector<16x32xf32> to vector<16x32xbf16>
    %499 = vector.extract_strided_slice %387 {offsets = [16, 128], sizes = [16, 32], strides = [1, 1]} : vector<32x384xf32> to vector<16x32xf32>
    %500 = arith.truncf %499 : vector<16x32xf32> to vector<16x32xbf16>
    %501 = vector.extract_strided_slice %387 {offsets = [16, 256], sizes = [16, 32], strides = [1, 1]} : vector<32x384xf32> to vector<16x32xf32>
    %502 = arith.truncf %501 : vector<16x32xf32> to vector<16x32xbf16>
    %cst_149 = arith.constant dense<0.000000e+00> : vector<16x16xf32>
    %503 = tpu.matmul %498, %500, %cst_149 {dimension_numbers = #tpu.dot_dimension_numbers<[1], [1], [0], [0], [0, 0, 1, 0], [], []>} : vector<16x32xbf16>, vector<16x32xbf16>, vector<16x16xf32> -> vector<16x16xf32>
    %cst_150 = arith.constant 0.176776692 : f32
    %504 = vector.broadcast %cst_150 : f32 to vector<16x16xf32>
    %505 = arith.mulf %503, %504 : vector<16x16xf32>
    %506 = vector.broadcast %496 : vector<1x16xf32> to vector<16x16xf32>
    %507 = arith.addf %505, %506 : vector<16x16xf32>
    %cst_151 = arith.constant dense<0xFF800000> : vector<16xf32>
    %508 = vector.multi_reduction <maximumf>, %507, %cst_151 [1] : vector<16x16xf32> to vector<16xf32>
    %509 = vector.shape_cast %508 : vector<16xf32> to vector<16x1xf32>
    %510 = vector.broadcast %509 : vector<16x1xf32> to vector<16x16xf32>
    %511 = arith.subf %507, %510 : vector<16x16xf32>
    %512 = math.exp %511 : vector<16x16xf32>
    %cst_152 = arith.constant dense<0.000000e+00> : vector<16xf32>
    %513 = vector.multi_reduction <add>, %512, %cst_152 [1] : vector<16x16xf32> to vector<16xf32>
    %514 = vector.shape_cast %513 : vector<16xf32> to vector<16x1xf32>
    %515 = tpu.reciprocal %514 {approx = true} : vector<16x1xf32> -> vector<16x1xf32>
    %516 = vector.broadcast %515 : vector<16x1xf32> to vector<16x16xf32>
    %517 = arith.mulf %512, %516 : vector<16x16xf32>
    %518 = arith.truncf %517 : vector<16x16xf32> to vector<16x16xbf16>
    %cst_153 = arith.constant dense<0.000000e+00> : vector<16x32xf32>
    %519 = tpu.matmul %518, %502, %cst_153 {dimension_numbers = #tpu.dot_dimension_numbers<[1], [0], [0], [1], [0, 0, 1, 1], [], []>} : vector<16x16xbf16>, vector<16x32xbf16>, vector<16x32xf32> -> vector<16x32xf32>
    %520 = arith.truncf %519 : vector<16x32xf32> to vector<16x32xbf16>
    %521 = vector.extract_strided_slice %380 {offsets = [0, 0], sizes = [32, 128], strides = [1, 1]} : vector<128x128xbf16> to vector<32x128xbf16>
    %cst_154 = arith.constant dense<0.000000e+00> : vector<16x128xf32>
    %522 = tpu.matmul %520, %521, %cst_154 {dimension_numbers = #tpu.dot_dimension_numbers<[1], [0], [0], [1], [0, 0, 1, 1], [], []>} : vector<16x32xbf16>, vector<32x128xbf16>, vector<16x128xf32> -> vector<16x128xf32>
    %523 = vector.extract_strided_slice %387 {offsets = [16, 32], sizes = [16, 32], strides = [1, 1]} : vector<32x384xf32> to vector<16x32xf32>
    %524 = arith.truncf %523 : vector<16x32xf32> to vector<16x32xbf16>
    %525 = vector.extract_strided_slice %387 {offsets = [16, 160], sizes = [16, 32], strides = [1, 1]} : vector<32x384xf32> to vector<16x32xf32>
    %526 = arith.truncf %525 : vector<16x32xf32> to vector<16x32xbf16>
    %527 = vector.extract_strided_slice %387 {offsets = [16, 288], sizes = [16, 32], strides = [1, 1]} : vector<32x384xf32> to vector<16x32xf32>
    %528 = arith.truncf %527 : vector<16x32xf32> to vector<16x32xbf16>
    %cst_155 = arith.constant dense<0.000000e+00> : vector<16x16xf32>
    %529 = tpu.matmul %524, %526, %cst_155 {dimension_numbers = #tpu.dot_dimension_numbers<[1], [1], [0], [0], [0, 0, 1, 0], [], []>} : vector<16x32xbf16>, vector<16x32xbf16>, vector<16x16xf32> -> vector<16x16xf32>
    %cst_156 = arith.constant 0.176776692 : f32
    %530 = vector.broadcast %cst_156 : f32 to vector<16x16xf32>
    %531 = arith.mulf %529, %530 : vector<16x16xf32>
    %532 = vector.broadcast %496 : vector<1x16xf32> to vector<16x16xf32>
    %533 = arith.addf %531, %532 : vector<16x16xf32>
    %cst_157 = arith.constant dense<0xFF800000> : vector<16xf32>
    %534 = vector.multi_reduction <maximumf>, %533, %cst_157 [1] : vector<16x16xf32> to vector<16xf32>
    %535 = vector.shape_cast %534 : vector<16xf32> to vector<16x1xf32>
    %536 = vector.broadcast %535 : vector<16x1xf32> to vector<16x16xf32>
    %537 = arith.subf %533, %536 : vector<16x16xf32>
    %538 = math.exp %537 : vector<16x16xf32>
    %cst_158 = arith.constant dense<0.000000e+00> : vector<16xf32>
    %539 = vector.multi_reduction <add>, %538, %cst_158 [1] : vector<16x16xf32> to vector<16xf32>
    %540 = vector.shape_cast %539 : vector<16xf32> to vector<16x1xf32>
    %541 = tpu.reciprocal %540 {approx = true} : vector<16x1xf32> -> vector<16x1xf32>
    %542 = vector.broadcast %541 : vector<16x1xf32> to vector<16x16xf32>
    %543 = arith.mulf %538, %542 : vector<16x16xf32>
    %544 = arith.truncf %543 : vector<16x16xf32> to vector<16x16xbf16>
    %cst_159 = arith.constant dense<0.000000e+00> : vector<16x32xf32>
    %545 = tpu.matmul %544, %528, %cst_159 {dimension_numbers = #tpu.dot_dimension_numbers<[1], [0], [0], [1], [0, 0, 1, 1], [], []>} : vector<16x16xbf16>, vector<16x32xbf16>, vector<16x32xf32> -> vector<16x32xf32>
    %546 = arith.truncf %545 : vector<16x32xf32> to vector<16x32xbf16>
    %547 = vector.extract_strided_slice %380 {offsets = [32, 0], sizes = [32, 128], strides = [1, 1]} : vector<128x128xbf16> to vector<32x128xbf16>
    %cst_160 = arith.constant dense<0.000000e+00> : vector<16x128xf32>
    %548 = tpu.matmul %546, %547, %cst_160 {dimension_numbers = #tpu.dot_dimension_numbers<[1], [0], [0], [1], [0, 0, 1, 1], [], []>} : vector<16x32xbf16>, vector<32x128xbf16>, vector<16x128xf32> -> vector<16x128xf32>
    %549 = arith.addf %522, %548 : vector<16x128xf32>
    %550 = vector.extract_strided_slice %387 {offsets = [16, 64], sizes = [16, 32], strides = [1, 1]} : vector<32x384xf32> to vector<16x32xf32>
    %551 = arith.truncf %550 : vector<16x32xf32> to vector<16x32xbf16>
    %552 = vector.extract_strided_slice %387 {offsets = [16, 192], sizes = [16, 32], strides = [1, 1]} : vector<32x384xf32> to vector<16x32xf32>
    %553 = arith.truncf %552 : vector<16x32xf32> to vector<16x32xbf16>
    %554 = vector.extract_strided_slice %387 {offsets = [16, 320], sizes = [16, 32], strides = [1, 1]} : vector<32x384xf32> to vector<16x32xf32>
    %555 = arith.truncf %554 : vector<16x32xf32> to vector<16x32xbf16>
    %cst_161 = arith.constant dense<0.000000e+00> : vector<16x16xf32>
    %556 = tpu.matmul %551, %553, %cst_161 {dimension_numbers = #tpu.dot_dimension_numbers<[1], [1], [0], [0], [0, 0, 1, 0], [], []>} : vector<16x32xbf16>, vector<16x32xbf16>, vector<16x16xf32> -> vector<16x16xf32>
    %cst_162 = arith.constant 0.176776692 : f32
    %557 = vector.broadcast %cst_162 : f32 to vector<16x16xf32>
    %558 = arith.mulf %556, %557 : vector<16x16xf32>
    %559 = vector.broadcast %496 : vector<1x16xf32> to vector<16x16xf32>
    %560 = arith.addf %558, %559 : vector<16x16xf32>
    %cst_163 = arith.constant dense<0xFF800000> : vector<16xf32>
    %561 = vector.multi_reduction <maximumf>, %560, %cst_163 [1] : vector<16x16xf32> to vector<16xf32>
    %562 = vector.shape_cast %561 : vector<16xf32> to vector<16x1xf32>
    %563 = vector.broadcast %562 : vector<16x1xf32> to vector<16x16xf32>
    %564 = arith.subf %560, %563 : vector<16x16xf32>
    %565 = math.exp %564 : vector<16x16xf32>
    %cst_164 = arith.constant dense<0.000000e+00> : vector<16xf32>
    %566 = vector.multi_reduction <add>, %565, %cst_164 [1] : vector<16x16xf32> to vector<16xf32>
    %567 = vector.shape_cast %566 : vector<16xf32> to vector<16x1xf32>
    %568 = tpu.reciprocal %567 {approx = true} : vector<16x1xf32> -> vector<16x1xf32>
    %569 = vector.broadcast %568 : vector<16x1xf32> to vector<16x16xf32>
    %570 = arith.mulf %565, %569 : vector<16x16xf32>
    %571 = arith.truncf %570 : vector<16x16xf32> to vector<16x16xbf16>
    %cst_165 = arith.constant dense<0.000000e+00> : vector<16x32xf32>
    %572 = tpu.matmul %571, %555, %cst_165 {dimension_numbers = #tpu.dot_dimension_numbers<[1], [0], [0], [1], [0, 0, 1, 1], [], []>} : vector<16x16xbf16>, vector<16x32xbf16>, vector<16x32xf32> -> vector<16x32xf32>
    %573 = arith.truncf %572 : vector<16x32xf32> to vector<16x32xbf16>
    %574 = vector.extract_strided_slice %380 {offsets = [64, 0], sizes = [32, 128], strides = [1, 1]} : vector<128x128xbf16> to vector<32x128xbf16>
    %cst_166 = arith.constant dense<0.000000e+00> : vector<16x128xf32>
    %575 = tpu.matmul %573, %574, %cst_166 {dimension_numbers = #tpu.dot_dimension_numbers<[1], [0], [0], [1], [0, 0, 1, 1], [], []>} : vector<16x32xbf16>, vector<32x128xbf16>, vector<16x128xf32> -> vector<16x128xf32>
    %576 = arith.addf %549, %575 : vector<16x128xf32>
    %577 = vector.extract_strided_slice %387 {offsets = [16, 96], sizes = [16, 32], strides = [1, 1]} : vector<32x384xf32> to vector<16x32xf32>
    %578 = arith.truncf %577 : vector<16x32xf32> to vector<16x32xbf16>
    %579 = vector.extract_strided_slice %387 {offsets = [16, 224], sizes = [16, 32], strides = [1, 1]} : vector<32x384xf32> to vector<16x32xf32>
    %580 = arith.truncf %579 : vector<16x32xf32> to vector<16x32xbf16>
    %581 = vector.extract_strided_slice %387 {offsets = [16, 352], sizes = [16, 32], strides = [1, 1]} : vector<32x384xf32> to vector<16x32xf32>
    %582 = arith.truncf %581 : vector<16x32xf32> to vector<16x32xbf16>
    %cst_167 = arith.constant dense<0.000000e+00> : vector<16x16xf32>
    %583 = tpu.matmul %578, %580, %cst_167 {dimension_numbers = #tpu.dot_dimension_numbers<[1], [1], [0], [0], [0, 0, 1, 0], [], []>} : vector<16x32xbf16>, vector<16x32xbf16>, vector<16x16xf32> -> vector<16x16xf32>
    %cst_168 = arith.constant 0.176776692 : f32
    %584 = vector.broadcast %cst_168 : f32 to vector<16x16xf32>
    %585 = arith.mulf %583, %584 : vector<16x16xf32>
    %586 = vector.broadcast %496 : vector<1x16xf32> to vector<16x16xf32>
    %587 = arith.addf %585, %586 : vector<16x16xf32>
    %cst_169 = arith.constant dense<0xFF800000> : vector<16xf32>
    %588 = vector.multi_reduction <maximumf>, %587, %cst_169 [1] : vector<16x16xf32> to vector<16xf32>
    %589 = vector.shape_cast %588 : vector<16xf32> to vector<16x1xf32>
    %590 = vector.broadcast %589 : vector<16x1xf32> to vector<16x16xf32>
    %591 = arith.subf %587, %590 : vector<16x16xf32>
    %592 = math.exp %591 : vector<16x16xf32>
    %cst_170 = arith.constant dense<0.000000e+00> : vector<16xf32>
    %593 = vector.multi_reduction <add>, %592, %cst_170 [1] : vector<16x16xf32> to vector<16xf32>
    %594 = vector.shape_cast %593 : vector<16xf32> to vector<16x1xf32>
    %595 = tpu.reciprocal %594 {approx = true} : vector<16x1xf32> -> vector<16x1xf32>
    %596 = vector.broadcast %595 : vector<16x1xf32> to vector<16x16xf32>
    %597 = arith.mulf %592, %596 : vector<16x16xf32>
    %598 = arith.truncf %597 : vector<16x16xf32> to vector<16x16xbf16>
    %cst_171 = arith.constant dense<0.000000e+00> : vector<16x32xf32>
    %599 = tpu.matmul %598, %582, %cst_171 {dimension_numbers = #tpu.dot_dimension_numbers<[1], [0], [0], [1], [0, 0, 1, 1], [], []>} : vector<16x16xbf16>, vector<16x32xbf16>, vector<16x32xf32> -> vector<16x32xf32>
    %600 = arith.truncf %599 : vector<16x32xf32> to vector<16x32xbf16>
    %601 = vector.extract_strided_slice %380 {offsets = [96, 0], sizes = [32, 128], strides = [1, 1]} : vector<128x128xbf16> to vector<32x128xbf16>
    %cst_172 = arith.constant dense<0.000000e+00> : vector<16x128xf32>
    %602 = tpu.matmul %600, %601, %cst_172 {dimension_numbers = #tpu.dot_dimension_numbers<[1], [0], [0], [1], [0, 0, 1, 1], [], []>} : vector<16x32xbf16>, vector<32x128xbf16>, vector<16x128xf32> -> vector<16x128xf32>
    %603 = arith.addf %576, %602 : vector<16x128xf32>
    %604 = tpu.concatenate %495, %603 in 0 : vector<16x128xf32>, vector<16x128xf32> -> vector<32x128xf32>
    %605 = vector.shape_cast %382 : vector<128xf32> to vector<1x128xf32>
    %606 = vector.broadcast %605 : vector<1x128xf32> to vector<32x128xf32>
    %607 = arith.addf %604, %606 : vector<32x128xf32>
    %608 = arith.addf %374, %607 : vector<32x128xf32>
    %c1_173 = arith.constant 1 : index
    %c0_174 = arith.constant 0 : index
    %609 = vector.load %arg8[%c1_173, %c0_174] : memref<2x128xf32, #tpu.memory_space<vmem>>, vector<1x128xf32>
    %610 = vector.shape_cast %609 : vector<1x128xf32> to vector<128xf32>
    %611 = vector.shape_cast %610 : vector<128xf32> to vector<1x128xf32>
    %c1_175 = arith.constant 1 : index
    %c0_176 = arith.constant 0 : index
    %612 = vector.load %arg9[%c1_175, %c0_176] : memref<2x128xf32, #tpu.memory_space<vmem>>, vector<1x128xf32>
    %613 = vector.shape_cast %612 : vector<1x128xf32> to vector<128xf32>
    %614 = vector.shape_cast %613 : vector<128xf32> to vector<1x128xf32>
    %cst_177 = arith.constant dense<0.000000e+00> : vector<32xf32>
    %615 = vector.multi_reduction <add>, %608, %cst_177 [1] : vector<32x128xf32> to vector<32xf32>
    %616 = vector.shape_cast %615 : vector<32xf32> to vector<32x1xf32>
    %cst_178 = arith.constant 1.280000e+02 : f32
    %617 = vector.broadcast %cst_178 : f32 to vector<32x1xf32>
    %618 = arith.divf %616, %617 : vector<32x1xf32>
    %619 = vector.broadcast %618 : vector<32x1xf32> to vector<32x128xf32>
    %620 = arith.subf %608, %619 : vector<32x128xf32>
    %621 = arith.mulf %620, %620 : vector<32x128xf32>
    %cst_179 = arith.constant dense<0.000000e+00> : vector<32xf32>
    %622 = vector.multi_reduction <add>, %621, %cst_179 [1] : vector<32x128xf32> to vector<32xf32>
    %623 = vector.shape_cast %622 : vector<32xf32> to vector<32x1xf32>
    %cst_180 = arith.constant 1.280000e+02 : f32
    %624 = vector.broadcast %cst_180 : f32 to vector<32x1xf32>
    %625 = arith.divf %623, %624 : vector<32x1xf32>
    %626 = vector.broadcast %618 : vector<32x1xf32> to vector<32x128xf32>
    %627 = arith.subf %608, %626 : vector<32x128xf32>
    %cst_181 = arith.constant 9.99999996E-13 : f32
    %628 = vector.broadcast %cst_181 : f32 to vector<32x1xf32>
    %629 = arith.addf %625, %628 : vector<32x1xf32>
    %630 = math.rsqrt %629 : vector<32x1xf32>
    %631 = vector.broadcast %630 : vector<32x1xf32> to vector<32x128xf32>
    %632 = arith.mulf %627, %631 : vector<32x128xf32>
    %633 = vector.broadcast %611 : vector<1x128xf32> to vector<32x128xf32>
    %634 = arith.mulf %632, %633 : vector<32x128xf32>
    %635 = vector.broadcast %614 : vector<1x128xf32> to vector<32x128xf32>
    %636 = arith.addf %634, %635 : vector<32x128xf32>
    %c1_182 = arith.constant 1 : index
    %c0_183 = arith.constant 0 : index
    %c0_184 = arith.constant 0 : index
    %637 = vector.load %arg10[%c1_182, %c0_183, %c0_184] : memref<2x128x256xbf16, #tpu.memory_space<vmem>>, vector<1x128x256xbf16>
    %638 = vector.shape_cast %637 : vector<1x128x256xbf16> to vector<128x256xbf16>
    %639 = arith.truncf %636 : vector<32x128xf32> to vector<32x128xbf16>
    %cst_185 = arith.constant dense<0.000000e+00> : vector<32x256xf32>
    %640 = tpu.matmul %639, %638, %cst_185 {dimension_numbers = #tpu.dot_dimension_numbers<[1], [0], [0], [1], [0, 0, 1, 1], [], []>} : vector<32x128xbf16>, vector<128x256xbf16>, vector<32x256xf32> -> vector<32x256xf32>
    %c1_186 = arith.constant 1 : index
    %c0_187 = arith.constant 0 : index
    %641 = vector.load %arg11[%c1_186, %c0_187] : memref<2x256xf32, #tpu.memory_space<vmem>>, vector<1x256xf32>
    %642 = vector.shape_cast %641 : vector<1x256xf32> to vector<256xf32>
    %643 = vector.shape_cast %642 : vector<256xf32> to vector<1x256xf32>
    %644 = vector.broadcast %643 : vector<1x256xf32> to vector<32x256xf32>
    %645 = arith.addf %640, %644 : vector<32x256xf32>
    %cst_188 = arith.constant 5.000000e-01 : f32
    %646 = vector.broadcast %cst_188 : f32 to vector<32x256xf32>
    %647 = arith.mulf %646, %645 : vector<32x256xf32>
    %cst_189 = arith.constant 0.707106769 : f32
    %648 = vector.broadcast %cst_189 : f32 to vector<32x256xf32>
    %649 = arith.mulf %645, %648 : vector<32x256xf32>
    %650 = math.absf %649 : vector<32x256xf32>
    %cst_190 = arith.constant 0.327591091 : f32
    %651 = vector.broadcast %cst_190 : f32 to vector<32x256xf32>
    %652 = arith.mulf %651, %650 : vector<32x256xf32>
    %cst_191 = arith.constant 1.000000e+00 : f32
    %653 = vector.broadcast %cst_191 : f32 to vector<32x256xf32>
    %654 = arith.addf %653, %652 : vector<32x256xf32>
    %cst_192 = arith.constant 1.000000e+00 : f32
    %655 = vector.broadcast %cst_192 : f32 to vector<32x256xf32>
    %656 = arith.divf %655, %654 : vector<32x256xf32>
    %cst_193 = arith.constant 1.06140542 : f32
    %657 = vector.broadcast %cst_193 : f32 to vector<32x256xf32>
    %658 = arith.mulf %657, %656 : vector<32x256xf32>
    %cst_194 = arith.constant -1.45315206 : f32
    %659 = vector.broadcast %cst_194 : f32 to vector<32x256xf32>
    %660 = arith.addf %658, %659 : vector<32x256xf32>
    %661 = arith.mulf %660, %656 : vector<32x256xf32>
    %cst_195 = arith.constant 1.42141378 : f32
    %662 = vector.broadcast %cst_195 : f32 to vector<32x256xf32>
    %663 = arith.addf %661, %662 : vector<32x256xf32>
    %664 = arith.mulf %663, %656 : vector<32x256xf32>
    %cst_196 = arith.constant -0.284496725 : f32
    %665 = vector.broadcast %cst_196 : f32 to vector<32x256xf32>
    %666 = arith.addf %664, %665 : vector<32x256xf32>
    %667 = arith.mulf %666, %656 : vector<32x256xf32>
    %cst_197 = arith.constant 0.254829586 : f32
    %668 = vector.broadcast %cst_197 : f32 to vector<32x256xf32>
    %669 = arith.addf %667, %668 : vector<32x256xf32>
    %670 = arith.mulf %669, %656 : vector<32x256xf32>
    %cst_198 = arith.constant 0.000000e+00 : f32
    %671 = vector.broadcast %cst_198 : f32 to vector<32x256xf32>
    %672 = arith.subf %671, %650 : vector<32x256xf32>
    %673 = arith.mulf %672, %650 : vector<32x256xf32>
    %674 = math.exp %673 : vector<32x256xf32>
    %675 = arith.mulf %670, %674 : vector<32x256xf32>
    %cst_199 = arith.constant 1.000000e+00 : f32
    %676 = vector.broadcast %cst_199 : f32 to vector<32x256xf32>
    %677 = arith.subf %676, %675 : vector<32x256xf32>
    %cst_200 = arith.constant 0.000000e+00 : f32
    %678 = vector.broadcast %cst_200 : f32 to vector<32x256xf32>
    %679 = arith.cmpf olt, %649, %678 : vector<32x256xf32>
    %cst_201 = arith.constant 0.000000e+00 : f32
    %680 = vector.broadcast %cst_201 : f32 to vector<32x256xf32>
    %681 = arith.subf %680, %677 : vector<32x256xf32>
    %682 = arith.select %679, %681, %677 : vector<32x256xi1>, vector<32x256xf32>
    %cst_202 = arith.constant 1.000000e+00 : f32
    %683 = vector.broadcast %cst_202 : f32 to vector<32x256xf32>
    %684 = arith.addf %683, %682 : vector<32x256xf32>
    %685 = arith.mulf %647, %684 : vector<32x256xf32>
    %c1_203 = arith.constant 1 : index
    %c0_204 = arith.constant 0 : index
    %c0_205 = arith.constant 0 : index
    %686 = vector.load %arg12[%c1_203, %c0_204, %c0_205] : memref<2x256x128xbf16, #tpu.memory_space<vmem>>, vector<1x256x128xbf16>
    %687 = vector.shape_cast %686 : vector<1x256x128xbf16> to vector<256x128xbf16>
    %688 = arith.truncf %685 : vector<32x256xf32> to vector<32x256xbf16>
    %cst_206 = arith.constant dense<0.000000e+00> : vector<32x128xf32>
    %689 = tpu.matmul %688, %687, %cst_206 {dimension_numbers = #tpu.dot_dimension_numbers<[1], [0], [0], [1], [0, 0, 1, 1], [], []>} : vector<32x256xbf16>, vector<256x128xbf16>, vector<32x128xf32> -> vector<32x128xf32>
    %c1_207 = arith.constant 1 : index
    %c0_208 = arith.constant 0 : index
    %690 = vector.load %arg13[%c1_207, %c0_208] : memref<2x128xf32, #tpu.memory_space<vmem>>, vector<1x128xf32>
    %691 = vector.shape_cast %690 : vector<1x128xf32> to vector<128xf32>
    %692 = vector.shape_cast %691 : vector<128xf32> to vector<1x128xf32>
    %693 = vector.broadcast %692 : vector<1x128xf32> to vector<32x128xf32>
    %694 = arith.addf %689, %693 : vector<32x128xf32>
    %695 = arith.addf %636, %694 : vector<32x128xf32>
    %c1_209 = arith.constant 1 : index
    %c0_210 = arith.constant 0 : index
    %696 = vector.load %arg14[%c1_209, %c0_210] : memref<2x128xf32, #tpu.memory_space<vmem>>, vector<1x128xf32>
    %697 = vector.shape_cast %696 : vector<1x128xf32> to vector<128xf32>
    %698 = vector.shape_cast %697 : vector<128xf32> to vector<1x128xf32>
    %c1_211 = arith.constant 1 : index
    %c0_212 = arith.constant 0 : index
    %699 = vector.load %arg15[%c1_211, %c0_212] : memref<2x128xf32, #tpu.memory_space<vmem>>, vector<1x128xf32>
    %700 = vector.shape_cast %699 : vector<1x128xf32> to vector<128xf32>
    %701 = vector.shape_cast %700 : vector<128xf32> to vector<1x128xf32>
    %cst_213 = arith.constant dense<0.000000e+00> : vector<32xf32>
    %702 = vector.multi_reduction <add>, %695, %cst_213 [1] : vector<32x128xf32> to vector<32xf32>
    %703 = vector.shape_cast %702 : vector<32xf32> to vector<32x1xf32>
    %cst_214 = arith.constant 1.280000e+02 : f32
    %704 = vector.broadcast %cst_214 : f32 to vector<32x1xf32>
    %705 = arith.divf %703, %704 : vector<32x1xf32>
    %706 = vector.broadcast %705 : vector<32x1xf32> to vector<32x128xf32>
    %707 = arith.subf %695, %706 : vector<32x128xf32>
    %708 = arith.mulf %707, %707 : vector<32x128xf32>
    %cst_215 = arith.constant dense<0.000000e+00> : vector<32xf32>
    %709 = vector.multi_reduction <add>, %708, %cst_215 [1] : vector<32x128xf32> to vector<32xf32>
    %710 = vector.shape_cast %709 : vector<32xf32> to vector<32x1xf32>
    %cst_216 = arith.constant 1.280000e+02 : f32
    %711 = vector.broadcast %cst_216 : f32 to vector<32x1xf32>
    %712 = arith.divf %710, %711 : vector<32x1xf32>
    %713 = vector.broadcast %705 : vector<32x1xf32> to vector<32x128xf32>
    %714 = arith.subf %695, %713 : vector<32x128xf32>
    %cst_217 = arith.constant 9.99999996E-13 : f32
    %715 = vector.broadcast %cst_217 : f32 to vector<32x1xf32>
    %716 = arith.addf %712, %715 : vector<32x1xf32>
    %717 = math.rsqrt %716 : vector<32x1xf32>
    %718 = vector.broadcast %717 : vector<32x1xf32> to vector<32x128xf32>
    %719 = arith.mulf %714, %718 : vector<32x128xf32>
    %720 = vector.broadcast %698 : vector<1x128xf32> to vector<32x128xf32>
    %721 = arith.mulf %719, %720 : vector<32x128xf32>
    %722 = vector.broadcast %701 : vector<1x128xf32> to vector<32x128xf32>
    %723 = arith.addf %721, %722 : vector<32x128xf32>
    %724 = tpu.iota {dimensions = array<i32: 1>} : vector<2x32xi32>
    %725 = tpu.iota {dimensions = array<i32: 0>} : vector<2x32xi32>
    %c16_i32 = arith.constant 16 : i32
    %726 = vector.broadcast %c16_i32 : i32 to vector<2x32xi32>
    %727 = arith.muli %725, %726 : vector<2x32xi32>
    %728 = arith.cmpi eq, %724, %727 : vector<2x32xi32>
    %729 = arith.extui %728 : vector<2x32xi1> to vector<2x32xi32>
    %730 = arith.sitofp %729 : vector<2x32xi32> to vector<2x32xf32>
    %cst_218 = arith.constant dense<0.000000e+00> : vector<2x128xf32>
    %731 = tpu.matmul %730, %723, %cst_218 {dimension_numbers = #tpu.dot_dimension_numbers<[1], [0], [0], [1], [0, 0, 1, 1], [], []>} : vector<2x32xf32>, vector<32x128xf32>, vector<2x128xf32> -> vector<2x128xf32>
    %c0_219 = arith.constant 0 : index
    %c0_220 = arith.constant 0 : index
    %732 = vector.load %arg16[%c0_219, %c0_220] : memref<128x512xbf16, #tpu.memory_space<vmem>>, vector<128x512xbf16>
    %733 = arith.truncf %731 : vector<2x128xf32> to vector<2x128xbf16>
    %cst_221 = arith.constant dense<0.000000e+00> : vector<2x512xf32>
    %734 = tpu.matmul %733, %732, %cst_221 {dimension_numbers = #tpu.dot_dimension_numbers<[1], [0], [0], [1], [0, 0, 1, 1], [], []>} : vector<2x128xbf16>, vector<128x512xbf16>, vector<2x512xf32> -> vector<2x512xf32>
    %c0_222 = arith.constant 0 : index
    %c0_223 = arith.constant 0 : index
    %735 = vector.load %arg17[%c0_222, %c0_223] : memref<1x512xf32, #tpu.memory_space<vmem>>, vector<1x512xf32>
    %736 = vector.broadcast %735 : vector<1x512xf32> to vector<2x512xf32>
    %737 = arith.addf %734, %736 : vector<2x512xf32>
    %cst_224 = arith.constant 0.000000e+00 : f32
    %738 = vector.broadcast %cst_224 : f32 to vector<2x512xf32>
    %739 = arith.maximumf %737, %738 : vector<2x512xf32>
    %c0_225 = arith.constant 0 : index
    %c0_226 = arith.constant 0 : index
    %740 = vector.load %arg18[%c0_225, %c0_226] : memref<512x2xbf16, #tpu.memory_space<vmem>>, vector<512x2xbf16>
    %741 = arith.truncf %739 : vector<2x512xf32> to vector<2x512xbf16>
    %cst_227 = arith.constant dense<0.000000e+00> : vector<2x2xf32>
    %742 = tpu.matmul %741, %740, %cst_227 {dimension_numbers = #tpu.dot_dimension_numbers<[1], [0], [0], [1], [0, 0, 1, 1], [], []>} : vector<2x512xbf16>, vector<512x2xbf16>, vector<2x2xf32> -> vector<2x2xf32>
    %c0_228 = arith.constant 0 : index
    %c0_229 = arith.constant 0 : index
    %743 = vector.load %arg19[%c0_228, %c0_229] : memref<1x2xf32, #tpu.memory_space<vmem>>, vector<1x2xf32>
    %744 = vector.broadcast %743 : vector<1x2xf32> to vector<2x2xf32>
    %745 = arith.addf %742, %744 : vector<2x2xf32>
    %c0_230 = arith.constant 0 : index
    %c0_231 = arith.constant 0 : index
    %746 = vector.load %arg20[%c0_230, %c0_231] : memref<2x2xf32, #tpu.memory_space<vmem>>, vector<2x2xf32>
    tpu.vector_store %arg20[%c0_230, %c0_231], %745 {strides = array<i32>} : memref<2x2xf32, #tpu.memory_space<vmem>>, vector<2x2xf32>,
    return
  }
}

</mosaic_0001>

<llo_original>
// kernel: bert_classifier_forward.1
$region0: #{bert_classifier_forward.1}
  #allocation0 [shape = 'u32[]', space=smem, size = 0x4, offset = 0x4, fixed_abs, tag = 'smem constant byte address 0x4 - core index']
  #allocation1 [shape = 'u32[144,128]{1,0:T(1,128)}', space=vmem, size = 0x12000, scoped, tag = 'internal scratch']
  %s0 = inlined_call_operand.vmem [shape: f32[32,128], index: 0, kind: input, shape index: {}]
  %s1 = inlined_call_operand.vmem [shape: f32[2,16], index: 1, kind: input, shape index: {}]
  %s2 = inlined_call_operand.vmem [shape: f32[1,128], index: 2, kind: input, shape index: {}]
  %s3 = inlined_call_operand.vmem [shape: f32[1,128], index: 3, kind: input, shape index: {}]
  %s4 = inlined_call_operand.vmem [shape: bf16[2,128,384], index: 4, kind: input, shape index: {}]
  %s5 = inlined_call_operand.vmem [shape: f32[2,384], index: 5, kind: input, shape index: {}]
  %s6 = inlined_call_operand.vmem [shape: bf16[2,128,128], index: 6, kind: input, shape index: {}]
  %s7 = inlined_call_operand.vmem [shape: f32[2,128], index: 7, kind: input, shape index: {}]
  %s8 = inlined_call_operand.vmem [shape: f32[2,128], index: 8, kind: input, shape index: {}]
  %s9 = inlined_call_operand.vmem [shape: f32[2,128], index: 9, kind: input, shape index: {}]
  %s10 = inlined_call_operand.vmem [shape: bf16[2,128,256], index: 10, kind: input, shape index: {}]
  %s11 = inlined_call_operand.vmem [shape: f32[2,256], index: 11, kind: input, shape index: {}]
  %s12 = inlined_call_operand.vmem [shape: bf16[2,256,128], index: 12, kind: input, shape index: {}]
  %s13 = inlined_call_operand.vmem [shape: f32[2,128], index: 13, kind: input, shape index: {}]
  %s14 = inlined_call_operand.vmem [shape: f32[2,128], index: 14, kind: input, shape index: {}]
  %s15 = inlined_call_operand.vmem [shape: f32[2,128], index: 15, kind: input, shape index: {}]
  %s16 = inlined_call_operand.hbm [shape: bf16[128,512], index: 16, kind: input, shape index: {}]
  %s17 = inlined_call_operand.vmem [shape: f32[1,512], index: 17, kind: input, shape index: {}]
  %s18 = inlined_call_operand.vmem [shape: bf16[512,2], index: 18, kind: input, shape index: {}]
  %s19 = inlined_call_operand.vmem [shape: f32[1,2], index: 19, kind: input, shape index: {}]
  %s20 = inlined_call_operand.hbm [shape: f32[2,2], index: 20, kind: output, shape index: {}]
  %s21 = sld [smem:[#allocation0]]
  $region94: #{bert_classifier_forward.1} parent=0
    _
  %s23 = ssub.s32 1, %s21
  %s24 = scalar_select 0, %s23, %s21
  $region1: #{bert_classifier_forward.1} parent=0
    #allocation2 [shape = 'u8[131072]{0}', space=vmem, size = 0x20000, scoped, tag = 'input window, operand 16, single buffered']
    #allocation3 [shape = 's32[1]{0}', space=sflag, size = 0x4, scoped, tag = 'scoped memory for bert_classifier_forward.1']
    #allocation4 [shape = 's32[1]{0}', space=sflag, size = 0x4, scoped, tag = 'scoped memory for bert_classifier_forward.1']
    #allocation5 [shape = 'u8[1024]{0}', space=vmem, size = 0x400, scoped, tag = 'output window, operand 0, single buffered']
    %25 = vsyncpa [#allocation3], 0
    %26 = vsyncpa [#allocation4], 0
    // Predicated region
    $region2: #{bert_classifier_forward.1} parent=1 // pred_check
      _
    $region3: #{bert_classifier_forward.1} parent=1 // pred_check_branch
      %28 = sbr.rel (0) target = $region5
    $region4: #{bert_classifier_forward.1} parent=1 // pred_region
      _
    $region5: #{bert_classifier_forward.1} parent=1 // pred_fallthru
      _
    // Predicated region
    $region6: #{bert_classifier_forward.1} parent=1 // pred_check
      _
    $region7: #{bert_classifier_forward.1} parent=1 // pred_check_branch
      %30 = sbr.rel (0) target = $region9
    $region8: #{bert_classifier_forward.1} parent=1 // pred_region
      _
    $region9: #{bert_classifier_forward.1} parent=1 // pred_fallthru
      _
    // Predicated region
    $region10: #{bert_classifier_forward.1} parent=1 // pred_check
      _
    $region11: #{bert_classifier_forward.1} parent=1 // pred_check_branch
      %32 = sbr.rel (0) target = $region13
    $region12: #{bert_classifier_forward.1} parent=1 // pred_region
      _
    $region13: #{bert_classifier_forward.1} parent=1 // pred_fallthru
      _
    // Predicated region
    $region14: #{bert_classifier_forward.1} parent=1 // pred_check
      _
    $region15: #{bert_classifier_forward.1} parent=1 // pred_check_branch
      %34 = sbr.rel (0) target = $region17
    $region16: #{bert_classifier_forward.1} parent=1 // pred_region
      _
    $region17: #{bert_classifier_forward.1} parent=1 // pred_fallthru
      _
    // Predicated region
    $region18: #{bert_classifier_forward.1} parent=1 // pred_check
      _
    $region19: #{bert_classifier_forward.1} parent=1 // pred_check_branch
      %36 = sbr.rel (0) target = $region21
    $region20: #{bert_classifier_forward.1} parent=1 // pred_region
      _
    $region21: #{bert_classifier_forward.1} parent=1 // pred_fallthru
      _
    // Predicated region
    $region22: #{bert_classifier_forward.1} parent=1 // pred_check
      _
    $region23: #{bert_classifier_forward.1} parent=1 // pred_check_branch
      %38 = sbr.rel (0) target = $region25
    $region24: #{bert_classifier_forward.1} parent=1 // pred_region
      _
    $region25: #{bert_classifier_forward.1} parent=1 // pred_fallthru
      _
    // Predicated region
    $region26: #{bert_classifier_forward.1} parent=1 // pred_check
      _
    $region27: #{bert_classifier_forward.1} parent=1 // pred_check_branch
      %40 = sbr.rel (0) target = $region29
    $region28: #{bert_classifier_forward.1} parent=1 // pred_region
      _
    $region29: #{bert_classifier_forward.1} parent=1 // pred_fallthru
      _
    // Predicated region
    $region30: #{bert_classifier_forward.1} parent=1 // pred_check
      _
    $region31: #{bert_classifier_forward.1} parent=1 // pred_check_branch
      %42 = sbr.rel (0) target = $region33
    $region32: #{bert_classifier_forward.1} parent=1 // pred_region
      _
    $region33: #{bert_classifier_forward.1} parent=1 // pred_fallthru
      _
    // Predicated region
    $region34: #{bert_classifier_forward.1} parent=1 // pred_check
      _
    $region35: #{bert_classifier_forward.1} parent=1 // pred_check_branch
      %44 = sbr.rel (0) target = $region37
    $region36: #{bert_classifier_forward.1} parent=1 // pred_region
      _
    $region37: #{bert_classifier_forward.1} parent=1 // pred_fallthru
      _
    // Predicated region
    $region38: #{bert_classifier_forward.1} parent=1 // pred_check
      _
    $region39: #{bert_classifier_forward.1} parent=1 // pred_check_branch
      %46 = sbr.rel (0) target = $region41
    $region40: #{bert_classifier_forward.1} parent=1 // pred_region
      _
    $region41: #{bert_classifier_forward.1} parent=1 // pred_fallthru
      _
    // Predicated region
    $region42: #{bert_classifier_forward.1} parent=1 // pred_check
      _
    $region43: #{bert_classifier_forward.1} parent=1 // pred_check_branch
      %48 = sbr.rel (0) target = $region45
    $region44: #{bert_classifier_forward.1} parent=1 // pred_region
      _
    $region45: #{bert_classifier_forward.1} parent=1 // pred_fallthru
      _
    // Predicated region
    $region46: #{bert_classifier_forward.1} parent=1 // pred_check
      _
    $region47: #{bert_classifier_forward.1} parent=1 // pred_check_branch
      %50 = sbr.rel (0) target = $region49
    $region48: #{bert_classifier_forward.1} parent=1 // pred_region
      _
    $region49: #{bert_classifier_forward.1} parent=1 // pred_fallthru
      _
    // Predicated region
    $region50: #{bert_classifier_forward.1} parent=1 // pred_check
      _
    $region51: #{bert_classifier_forward.1} parent=1 // pred_check_branch
      %52 = sbr.rel (0) target = $region53
    $region52: #{bert_classifier_forward.1} parent=1 // pred_region
      _
    $region53: #{bert_classifier_forward.1} parent=1 // pred_fallthru
      _
    // Predicated region
    $region54: #{bert_classifier_forward.1} parent=1 // pred_check
      _
    $region55: #{bert_classifier_forward.1} parent=1 // pred_check_branch
      %54 = sbr.rel (0) target = $region57
    $region56: #{bert_classifier_forward.1} parent=1 // pred_region
      _
    $region57: #{bert_classifier_forward.1} parent=1 // pred_fallthru
      _
    // Predicated region
    $region58: #{bert_classifier_forward.1} parent=1 // pred_check
      _
    $region59: #{bert_classifier_forward.1} parent=1 // pred_check_branch
      %56 = sbr.rel (0) target = $region61
    $region60: #{bert_classifier_forward.1} parent=1 // pred_region
      _
    $region61: #{bert_classifier_forward.1} parent=1 // pred_fallthru
      _
    // Predicated region
    $region62: #{bert_classifier_forward.1} parent=1 // pred_check
      _
    $region63: #{bert_classifier_forward.1} parent=1 // pred_check_branch
      %58 = sbr.rel (0) target = $region65
    $region64: #{bert_classifier_forward.1} parent=1 // pred_region
      _
    $region65: #{bert_classifier_forward.1} parent=1 // pred_fallthru
      _
    // Predicated region
    $region66: #{bert_classifier_forward.1} parent=1 // pred_check
      _
    $region67: #{bert_classifier_forward.1} parent=1 // pred_check_branch
      %60 = sbr.rel (0) target = $region69
    $region68: #{bert_classifier_forward.1} parent=1 // pred_region
      %s62 = ssub.s32 4096, 4096
      %63 = vsyncadd [#allocation3], %s62
      %s64 = sshll.u32 [#allocation2], 4
      %s65 = int_to_ptr.vmem [resolvable:$true] %s64
      %70 = dma.hbm_to_vmem [thread:$0]  %s16, 4096, %s65, [#allocation3], 256, 256, 16
    $region69: #{bert_classifier_forward.1} parent=1 // pred_fallthru
      _
    // Predicated region
    $region70: #{bert_classifier_forward.1} parent=1 // pred_check
      _
    $region71: #{bert_classifier_forward.1} parent=1 // pred_check_branch
      %72 = sbr.rel (0) target = $region73
    $region72: #{bert_classifier_forward.1} parent=1 // pred_region
      _
    $region73: #{bert_classifier_forward.1} parent=1 // pred_fallthru
      _
    // Predicated region
    $region74: #{bert_classifier_forward.1} parent=1 // pred_check
      _
    $region75: #{bert_classifier_forward.1} parent=1 // pred_check_branch
      %74 = sbr.rel (0) target = $region77
    $region76: #{bert_classifier_forward.1} parent=1 // pred_region
      _
    $region77: #{bert_classifier_forward.1} parent=1 // pred_fallthru
      _
    // Predicated region
    $region78: #{bert_classifier_forward.1} parent=1 // pred_check
      _
    $region79: #{bert_classifier_forward.1} parent=1 // pred_check_branch
      %76 = sbr.rel (0) target = $region81
    $region80: #{bert_classifier_forward.1} parent=1 // pred_region
      _
    $region81: #{bert_classifier_forward.1} parent=1 // pred_fallthru
      _
    // Predicated region
    $region82: #{bert_classifier_forward.1} parent=1 // pred_check
      _
    $region83: #{bert_classifier_forward.1} parent=1 // pred_check_branch
      %78 = sbr.rel (0) target = $region85
    $region84: #{bert_classifier_forward.1} parent=1 // pred_region
      %79 = dma.done [#allocation3], 4096
    $region85: #{bert_classifier_forward.1} parent=1 // pred_fallthru
      _
    %v81 = vld [vmem:[%s0] sm:$0xff]
    %v82 = vld [vmem:[%s0 + $0x8] sm:$0xff]
    %v83 = vld [vmem:[%s0 + $0x10] sm:$0xff]
    %v84 = vld [vmem:[%s0 + $0x18] sm:$0xff]
    %v85 = vld [vmem:[%s2] sm:$0x1]
    %v86 = vld [vmem:[%s3] sm:$0x1]
    %87 = vadd.xlane.f32.xlu0 %v81
    %v88 = vpop.xlane.xlu0 %87
    %89 = vadd.xlane.f32.xlu0 %v82
    %v90 = vpop.xlane.xlu0 %89
    %91 = vadd.xlane.f32.xlu0 %v83
    %v92 = vpop.xlane.xlu0 %91
    %93 = vadd.xlane.f32.xlu0 %v84
    %v94 = vpop.xlane.xlu0 %93
    %v95 = vrcp.pop 128.0
    %v96 = vmul.f32 %v88, %v95
    %v97 = vmul.f32 %v90, %v95
    %v98 = vmul.f32 %v92, %v95
    %v99 = vmul.f32 %v94, %v95
    %v100 = vsub.f32 %v81, %v96
    %v101 = vsub.f32 %v82, %v97
    %v102 = vsub.f32 %v83, %v98
    %v103 = vsub.f32 %v84, %v99
    %v104 = vmul.f32 %v100, %v100
    %v105 = vmul.f32 %v101, %v101
    %v106 = vmul.f32 %v102, %v102
    %v107 = vmul.f32 %v103, %v103
    %108 = vadd.xlane.f32.xlu0 %v104
    %v109 = vpop.xlane.xlu0 %108
    %110 = vadd.xlane.f32.xlu0 %v105
    %v111 = vpop.xlane.xlu0 %110
    %112 = vadd.xlane.f32.xlu0 %v106
    %v113 = vpop.xlane.xlu0 %112
    %114 = vadd.xlane.f32.xlu0 %v107
    %v115 = vpop.xlane.xlu0 %114
    %v116 = vmul.f32 %v109, %v95
    %v117 = vmul.f32 %v111, %v95
    %v118 = vmul.f32 %v113, %v95
    %v119 = vmul.f32 %v115, %v95
    %v120 = vadd.f32 %v116, 1e-12
    %v121 = vadd.f32 %v117, 1e-12
    %v122 = vadd.f32 %v118, 1e-12
    %v123 = vadd.f32 %v119, 1e-12
    %v124 = vrsqrt.pop %v120
    %v125 = vrsqrt.pop %v121
    %v126 = vrsqrt.pop %v122
    %v127 = vrsqrt.pop %v123
    %v128 = vmul.f32 %v100, %v124
    %v129 = vmul.f32 %v101, %v125
    %v130 = vmul.f32 %v102, %v126
    %v131 = vmul.f32 %v103, %v127
    %v133 = vlaneseq
    %v134 = vshrl.u32 %v133, 7
    %v135 = vsub.s32 0, %v134
    %v136 = vrot.slane %v85, %v135
    %v138 = vmul.f32 %v128, %v136
    %v139 = vmul.f32 %v129, %v136
    %v140 = vmul.f32 %v130, %v136
    %v141 = vmul.f32 %v131, %v136
    %v143 = vlaneseq
    %v144 = vshrl.u32 %v143, 7
    %v145 = vsub.s32 0, %v144
    %v146 = vrot.slane %v86, %v145
    %v148 = vadd.f32 %v138, %v146
    %v149 = vadd.f32 %v139, %v146
    %v150 = vadd.f32 %v140, %v146
    %v151 = vadd.f32 %v141, %v146
    %v152 = vld [vmem:[%s1] sm:$0x3]
    %v153 = vld [vmem:[%s4] sm:$0xff]
    %v154 = vld [vmem:[%s4 + $0x8] sm:$0xf]
    %v155 = vld [vmem:[%s4 + $0xc] sm:$0xff]
    %v156 = vld [vmem:[%s4 + $0x14] sm:$0xf]
    %v157 = vld [vmem:[%s4 + $0x18] sm:$0xff]
    %v158 = vld [vmem:[%s4 + $0x20] sm:$0xf]
    %v159 = vld [vmem:[%s4 + $0x24] sm:$0xff]
    %v160 = vld [vmem:[%s4 + $0x2c] sm:$0xf]
    %v161 = vld [vmem:[%s4 + $0x30] sm:$0xff]
    %v162 = vld [vmem:[%s4 + $0x38] sm:$0xf]
    %v163 = vld [vmem:[%s4 + $0x3c] sm:$0xff]
    %v164 = vld [vmem:[%s4 + $0x44] sm:$0xf]
    %v165 = vld [vmem:[%s4 + $0x48] sm:$0xff]
    %v166 = vld [vmem:[%s4 + $0x50] sm:$0xf]
    %v167 = vld [vmem:[%s4 + $0x54] sm:$0xff]
    %v168 = vld [vmem:[%s4 + $0x5c] sm:$0xf]
    %v169 = vld [vmem:[%s4 + $0x60] sm:$0xff]
    %v170 = vld [vmem:[%s4 + $0x68] sm:$0xf]
    %v171 = vld [vmem:[%s4 + $0x6c] sm:$0xff]
    %v172 = vld [vmem:[%s4 + $0x74] sm:$0xf]
    %v173 = vld [vmem:[%s4 + $0x78] sm:$0xff]
    %v174 = vld [vmem:[%s4 + $0x80] sm:$0xf]
    %v175 = vld [vmem:[%s4 + $0x84] sm:$0xff]
    %v176 = vld [vmem:[%s4 + $0x8c] sm:$0xf]
    %v177 = vld [vmem:[%s4 + $0x90] sm:$0xff]
    %v178 = vld [vmem:[%s4 + $0x98] sm:$0xf]
    %v179 = vld [vmem:[%s4 + $0x9c] sm:$0xff]
    %v180 = vld [vmem:[%s4 + $0xa4] sm:$0xf]
    %v181 = vld [vmem:[%s4 + $0xa8] sm:$0xff]
    %v182 = vld [vmem:[%s4 + $0xb0] sm:$0xf]
    %v183 = vld [vmem:[%s4 + $0xb4] sm:$0xff]
    %v184 = vld [vmem:[%s4 + $0xbc] sm:$0xf]
    %v185 = vld [vmem:[%s5] ss:$2 sm:$0x7]
    %v186 = vld [vmem:[%s6] sm:$0xf]
    %v187 = vld [vmem:[%s6 + $0x4] sm:$0xf]
    %v188 = vld [vmem:[%s6 + $0x8] sm:$0xf]
    %v189 = vld [vmem:[%s6 + $0xc] sm:$0xf]
    %v190 = vld [vmem:[%s6 + $0x10] sm:$0xf]
    %v191 = vld [vmem:[%s6 + $0x14] sm:$0xf]
    %v192 = vld [vmem:[%s6 + $0x18] sm:$0xf]
    %v193 = vld [vmem:[%s6 + $0x1c] sm:$0xf]
    %v194 = vld [vmem:[%s6 + $0x20] sm:$0xf]
    %v195 = vld [vmem:[%s6 + $0x24] sm:$0xf]
    %v196 = vld [vmem:[%s6 + $0x28] sm:$0xf]
    %v197 = vld [vmem:[%s6 + $0x2c] sm:$0xf]
    %v198 = vld [vmem:[%s6 + $0x30] sm:$0xf]
    %v199 = vld [vmem:[%s6 + $0x34] sm:$0xf]
    %v200 = vld [vmem:[%s6 + $0x38] sm:$0xf]
    %v201 = vld [vmem:[%s6 + $0x3c] sm:$0xf]
    %v202 = vld [vmem:[%s7] sm:$0x1]
    %v203 = vpack.c.bf16 %v149, %v148
    %v204 = vpack.c.bf16 %v151, %v150
    %v206 = vlaneseq
    %v207 = vshrl.u32 %v206, 7
    %v208 = vsub.s32 0, %v207
    %v209 = vrot.slane %v185, %v208
    %v210 = vlaneseq
    %v211 = vshrl.u32 %v210, 7
    %v212 = vsub.s32 1, %v211
    %v213 = vrot.slane %v185, %v212
    %v214 = vlaneseq
    %v215 = vshrl.u32 %v214, 7
    %v216 = vsub.s32 2, %v215
    %v217 = vrot.slane %v185, %v216
    %v253 = vunpack.c.l.b16 %v153
    %v254 = vunpack.c.h.b16 %v153
    %v255 = vunpack.c.l.b16 %v154
    %v256 = vunpack.c.l.b16 %v155
    %v257 = vunpack.c.h.b16 %v155
    %v258 = vunpack.c.l.b16 %v156
    %v259 = vunpack.c.l.b16 %v157
    %v260 = vunpack.c.h.b16 %v157
    %v261 = vunpack.c.l.b16 %v158
    %v262 = vunpack.c.l.b16 %v159
    %v263 = vunpack.c.h.b16 %v159
    %v264 = vunpack.c.l.b16 %v160
    %v265 = vunpack.c.l.b16 %v161
    %v266 = vunpack.c.h.b16 %v161
    %v267 = vunpack.c.l.b16 %v162
    %v268 = vunpack.c.l.b16 %v163
    %v269 = vunpack.c.h.b16 %v163
    %v270 = vunpack.c.l.b16 %v164
    %v271 = vunpack.c.l.b16 %v165
    %v272 = vunpack.c.h.b16 %v165
    %v273 = vunpack.c.l.b16 %v166
    %v274 = vunpack.c.l.b16 %v167
    %v275 = vunpack.c.h.b16 %v167
    %v276 = vunpack.c.l.b16 %v168
    %v277 = vunpack.c.l.b16 %v169
    %v278 = vunpack.c.h.b16 %v169
    %v279 = vunpack.c.l.b16 %v170
    %v280 = vunpack.c.l.b16 %v171
    %v281 = vunpack.c.h.b16 %v171
    %v282 = vunpack.c.l.b16 %v172
    %v283 = vunpack.c.l.b16 %v173
    %v284 = vunpack.c.h.b16 %v173
    %v285 = vunpack.c.l.b16 %v174
    %v286 = vunpack.c.l.b16 %v175
    %v287 = vunpack.c.h.b16 %v175
    %v288 = vunpack.c.l.b16 %v176
    %v289 = vunpack.c.l.b16 %v177
    %v290 = vunpack.c.h.b16 %v177
    %v291 = vunpack.c.l.b16 %v178
    %v292 = vunpack.c.l.b16 %v179
    %v293 = vunpack.c.h.b16 %v179
    %v294 = vunpack.c.l.b16 %v180
    %v295 = vunpack.c.l.b16 %v181
    %v296 = vunpack.c.h.b16 %v181
    %v297 = vunpack.c.l.b16 %v182
    %v298 = vunpack.c.l.b16 %v183
    %v299 = vunpack.c.h.b16 %v183
    %v300 = vunpack.c.l.b16 %v184
    %v301 = vpack.c.b16 %v256, %v253
    %v302 = vpack.c.b16 %v257, %v254
    %v303 = vpack.c.b16 %v258, %v255
    %v304 = vpack.c.b16 %v262, %v259
    %v305 = vpack.c.b16 %v263, %v260
    %v306 = vpack.c.b16 %v264, %v261
    %v307 = vpack.c.b16 %v268, %v265
    %v308 = vpack.c.b16 %v269, %v266
    %v309 = vpack.c.b16 %v270, %v267
    %v310 = vpack.c.b16 %v274, %v271
    %v311 = vpack.c.b16 %v275, %v272
    %v312 = vpack.c.b16 %v276, %v273
    %v313 = vpack.c.b16 %v280, %v277
    %v314 = vpack.c.b16 %v281, %v278
    %v315 = vpack.c.b16 %v282, %v279
    %v316 = vpack.c.b16 %v286, %v283
    %v317 = vpack.c.b16 %v287, %v284
    %v318 = vpack.c.b16 %v288, %v285
    %v319 = vpack.c.b16 %v292, %v289
    %v320 = vpack.c.b16 %v293, %v290
    %v321 = vpack.c.b16 %v294, %v291
    %v322 = vpack.c.b16 %v298, %v295
    %v323 = vpack.c.b16 %v299, %v296
    %v324 = vpack.c.b16 %v300, %v297
    %349 = vmatprep.subr.bf16.mxu0 %v302
    %350 = vmatpush1.bf16.msra.mxu0 %v301
    %351 = vmatprep.subr.bf16.mxu0 %v305
    %352 = vmatpush1.bf16.msra.mxu0 %v304
    %353 = vmatprep.subr.bf16.mxu0 %v308
    %354 = vmatpush1.bf16.msra.mxu0 %v307
    %355 = vmatprep.subr.bf16.mxu0 %v311
    %356 = vmatpush1.bf16.msra.mxu0 %v310
    %357 = vmatprep.subr.bf16.mxu0 %v314
    %358 = vmatpush1.bf16.msra.mxu0 %v313
    %359 = vmatprep.subr.bf16.mxu0 %v317
    %360 = vmatpush1.bf16.msra.mxu0 %v316
    %361 = vmatprep.subr.bf16.mxu0 %v320
    %362 = vmatpush1.bf16.msra.mxu0 %v319
    %363 = vmatprep.subr.bf16.mxu0 %v323
    %364 = vmatpush1.bf16.msra.mxu0 %v322
    %365 = vmatprep.subr.bf16.mxu0 0
    %366 = vmatpush1.bf16.msra.mxu0 0
    %367 = vmatprep.subr.bf16.mxu0 0
    %368 = vmatpush1.bf16.msra.mxu0 0
    %369 = vmatprep.subr.bf16.mxu0 0
    %370 = vmatpush1.bf16.msra.mxu0 0
    %371 = vmatprep.subr.bf16.mxu0 0
    %372 = vmatpush1.bf16.msra.mxu0 0
    %373 = vmatprep.subr.bf16.mxu0 0
    %374 = vmatpush1.bf16.msra.mxu0 0
    %375 = vmatprep.subr.bf16.mxu0 0
    %376 = vmatpush1.bf16.msra.mxu0 0
    %377 = vmatprep.subr.bf16.mxu0 0
    %378 = vmatpush1.bf16.msra.mxu0 0
    %379 = vmatprep.subr.bf16.mxu0 0
    %380 = vmatpush1.bf16.msra.mxu0 0
    %381 = vmatprep.mubr.bf16.mxu0 0
    %382 = vmatmul.mubr.bf16.gmra.mrb[0].mxu0 %v203
    %v383 = vpop.f32.mrb[0].mxu0
    %v384 = vadd.f32 %v209, %v383
    %v385 = vpop.f32.mrb[0].mxu0
    %v386 = vadd.f32 %v213, %v385
    %v387 = vpop.f32.mrb[0].mxu0
    %v388 = vadd.f32 %v209, %v387
    %v389 = vpop.f32.mrb[0].mxu0
    %v390 = vadd.f32 %v213, %v389
    %391 = vmatprep.mubr.bf16.mxu0 0
    %392 = vmatmul.mubr.bf16.gmra.mrb[0].mxu0 %v204
    %v393 = vpop.f32.mrb[0].mxu0
    %v394 = vadd.f32 %v209, %v393
    %v395 = vpop.f32.mrb[0].mxu0
    %v396 = vadd.f32 %v213, %v395
    %v397 = vpop.f32.mrb[0].mxu0
    %v398 = vadd.f32 %v209, %v397
    %v399 = vpop.f32.mrb[0].mxu0
    %v400 = vadd.f32 %v213, %v399
    %401 = vdwg.mxu0
    %402 = vmatprep.subr.bf16.mxu0 0
    %403 = vmatpush1.bf16.msra.mxu0 %v303
    %404 = vmatprep.subr.bf16.mxu0 0
    %405 = vmatpush1.bf16.msra.mxu0 %v306
    %406 = vmatprep.subr.bf16.mxu0 0
    %407 = vmatpush1.bf16.msra.mxu0 %v309
    %408 = vmatprep.subr.bf16.mxu0 0
    %409 = vmatpush1.bf16.msra.mxu0 %v312
    %410 = vmatprep.subr.bf16.mxu0 0
    %411 = vmatpush1.bf16.msra.mxu0 %v315
    %412 = vmatprep.subr.bf16.mxu0 0
    %413 = vmatpush1.bf16.msra.mxu0 %v318
    %414 = vmatprep.subr.bf16.mxu0 0
    %415 = vmatpush1.bf16.msra.mxu0 %v321
    %416 = vmatprep.subr.bf16.mxu0 0
    %417 = vmatpush1.bf16.msra.mxu0 %v324
    %418 = vmatprep.subr.bf16.mxu0 0
    %419 = vmatpush1.bf16.msra.mxu0 0
    %420 = vmatprep.subr.bf16.mxu0 0
    %421 = vmatpush1.bf16.msra.mxu0 0
    %422 = vmatprep.subr.bf16.mxu0 0
    %423 = vmatpush1.bf16.msra.mxu0 0
    %424 = vmatprep.subr.bf16.mxu0 0
    %425 = vmatpush1.bf16.msra.mxu0 0
    %426 = vmatprep.subr.bf16.mxu0 0
    %427 = vmatpush1.bf16.msra.mxu0 0
    %428 = vmatprep.subr.bf16.mxu0 0
    %429 = vmatpush1.bf16.msra.mxu0 0
    %430 = vmatprep.subr.bf16.mxu0 0
    %431 = vmatpush1.bf16.msra.mxu0 0
    %432 = vmatprep.subr.bf16.mxu0 0
    %433 = vmatpush1.bf16.msra.mxu0 0
    %434 = vmatprep.mubr.bf16.mxu0 0
    %435 = vmatmul.mubr.bf16.gmra.mrb[0].mxu0 %v203
    %v436 = vpop.f32.mrb[0].mxu0
    %v437 = vadd.f32 %v217, %v436
    %v438 = vpop.f32.mrb[0].mxu0
    %v439 = vpop.f32.mrb[0].mxu0
    %v440 = vadd.f32 %v217, %v439
    %v441 = vpop.f32.mrb[0].mxu0
    %442 = vmatprep.mubr.bf16.mxu0 0
    %443 = vmatmul.mubr.bf16.gmra.mrb[0].mxu0 %v204
    %v444 = vpop.f32.mrb[0].mxu0
    %v445 = vadd.f32 %v217, %v444
    %v446 = vpop.f32.mrb[0].mxu0
    %v447 = vpop.f32.mrb[0].mxu0
    %v448 = vadd.f32 %v217, %v447
    %v449 = vpop.f32.mrb[0].mxu0
    %450 = vdwg.mxu0
    %v451 = vpack.c.bf16 %v388, %v384
    %v452 = vpack.c.bf16 %v390, %v386
    %v453 = vpack.c.bf16 %v440, %v437
    %vm454 = vcmask 261120
    %v456 = vsel %vm454, %v451, 0
    %v459 = vsel %vm454, %v452, 0
    %461 = vmatprep.subr.bf16.mxu0 0
    %462 = vmatpush1.bf16.xpose.msra.mxu0 %v459
    %463 = vmatprep.subr.bf16.mxu0 0
    %464 = vmatpush1.bf16.xpose.msra.mxu0 0
    %465 = vmatprep.subr.bf16.mxu0 0
    %466 = vmatpush1.bf16.xpose.msra.mxu0 0
    %467 = vmatprep.subr.bf16.mxu0 0
    %468 = vmatpush1.bf16.xpose.msra.mxu0 0
    %469 = vmatprep.subr.bf16.mxu0 0
    %470 = vmatpush1.bf16.xpose.msra.mxu0 0
    %471 = vmatprep.subr.bf16.mxu0 0
    %472 = vmatpush1.bf16.xpose.msra.mxu0 0
    %473 = vmatprep.subr.bf16.mxu0 0
    %474 = vmatpush1.bf16.xpose.msra.mxu0 0
    %475 = vmatprep.subr.bf16.mxu0 0
    %476 = vmatpush1.bf16.xpose.msra.mxu0 0
    %477 = vmatprep.subr.bf16.mxu0 0
    %478 = vmatpush1.bf16.xpose.msra.mxu0 0
    %479 = vmatprep.subr.bf16.mxu0 0
    %480 = vmatpush1.bf16.xpose.msra.mxu0 0
    %481 = vmatprep.subr.bf16.mxu0 0
    %482 = vmatpush1.bf16.xpose.msra.mxu0 0
    %483 = vmatprep.subr.bf16.mxu0 0
    %484 = vmatpush1.bf16.xpose.msra.mxu0 0
    %485 = vmatprep.subr.bf16.mxu0 0
    %486 = vmatpush1.bf16.xpose.msra.mxu0 0
    %487 = vmatprep.subr.bf16.mxu0 0
    %488 = vmatpush1.bf16.xpose.msra.mxu0 0
    %489 = vmatprep.subr.bf16.mxu0 0
    %490 = vmatpush1.bf16.xpose.msra.mxu0 0
    %491 = vmatprep.subr.bf16.mxu0 0
    %492 = vmatpush1.bf16.xpose.msra.mxu0 0
    %493 = vmatprep.mubr.bf16.mxu0 0
    %494 = vmatmul.mubr.bf16.gmra.mrb[0].mxu0 %v456
    %v495 = vpop.f32.mrb[0].mxu0
    %v496 = vadd.f32 0.0, %v495
    %v497 = vpop.f32.mrb[0].mxu0
    %v498 = vpop.f32.mrb[0].mxu0
    %v499 = vadd.f32 0.0, %v498
    %v500 = vpop.f32.mrb[0].mxu0
    %501 = vdwg.mxu0
    %v502 = vmul.f32 %v496, 0.17677669
    %v503 = vmul.f32 %v499, 0.17677669
    %v504 = vlaneseq
    %v505 = vshrl.u32 %v504, 7
    %v506 = vsub.s32 0, %v505
    %v507 = vrot.slane %v152, %v506
    %v508 = vadd.f32 %v502, %v507
    %v509 = vadd.f32 %v503, %v507
    %vm510 = vcmask 130048
    %v511 = vsel %vm510, %v508, -inf
    %512 = vmax.xlane.f32.xlu0 %v511
    %v513 = vpop.xlane.xlu0 %512
    %v514 = vsel %vm510, %v509, -inf
    %515 = vmax.xlane.f32.xlu0 %v514
    %v516 = vpop.xlane.xlu0 %515
    %v517 = vsub.f32 %v508, %v513
    %v518 = vsub.f32 %v509, %v516
    %v519 = vmul.f32 %v517, 1.442695
    %v520 = vpow.pop %v519
    %v521 = vmul.f32 %v518, 1.442695
    %v522 = vpow.pop %v521
    %v523 = vsel %vm510, %v520, 0.0
    %524 = vadd.xlane.f32.xlu0 %v523
    %v525 = vpop.xlane.xlu0 %524
    %v526 = vsel %vm510, %v522, 0.0
    %527 = vadd.xlane.f32.xlu0 %v526
    %v528 = vpop.xlane.xlu0 %527
    %v529 = vrcp.pop %v525
    %v530 = vrcp.pop %v528
    %v531 = vmul.f32 %v520, %v529
    %v532 = vmul.f32 %v522, %v530
    %v533 = vpack.c.bf16 %v532, %v531
    %v535 = vsel %vm510, %v533, 0
    %537 = vmatprep.subr.bf16.mxu0 0
    %538 = vmatpush1.bf16.msra.mxu0 %v453
    %539 = vmatprep.subr.bf16.mxu0 0
    %540 = vmatpush1.bf16.msra.mxu0 0
    %541 = vmatprep.subr.bf16.mxu0 0
    %542 = vmatpush1.bf16.msra.mxu0 0
    %543 = vmatprep.subr.bf16.mxu0 0
    %544 = vmatpush1.bf16.msra.mxu0 0
    %545 = vmatprep.subr.bf16.mxu0 0
    %546 = vmatpush1.bf16.msra.mxu0 0
    %547 = vmatprep.subr.bf16.mxu0 0
    %548 = vmatpush1.bf16.msra.mxu0 0
    %549 = vmatprep.subr.bf16.mxu0 0
    %550 = vmatpush1.bf16.msra.mxu0 0
    %551 = vmatprep.subr.bf16.mxu0 0
    %552 = vmatpush1.bf16.msra.mxu0 0
    %553 = vmatprep.subr.bf16.mxu0 0
    %554 = vmatpush1.bf16.msra.mxu0 0
    %555 = vmatprep.subr.bf16.mxu0 0
    %556 = vmatpush1.bf16.msra.mxu0 0
    %557 = vmatprep.subr.bf16.mxu0 0
    %558 = vmatpush1.bf16.msra.mxu0 0
    %559 = vmatprep.subr.bf16.mxu0 0
    %560 = vmatpush1.bf16.msra.mxu0 0
    %561 = vmatprep.subr.bf16.mxu0 0
    %562 = vmatpush1.bf16.msra.mxu0 0
    %563 = vmatprep.subr.bf16.mxu0 0
    %564 = vmatpush1.bf16.msra.mxu0 0
    %565 = vmatprep.subr.bf16.mxu0 0
    %566 = vmatpush1.bf16.msra.mxu0 0
    %567 = vmatprep.subr.bf16.mxu0 0
    %568 = vmatpush1.bf16.msra.mxu0 0
    %569 = vmatprep.mubr.bf16.mxu0 0
    %570 = vmatmul.mubr.bf16.gmra.mrb[0].mxu0 %v535
    %v571 = vpop.f32.mrb[0].mxu0
    %v572 = vadd.f32 0.0, %v571
    %v573 = vpop.f32.mrb[0].mxu0
    %v574 = vpop.f32.mrb[0].mxu0
    %v575 = vadd.f32 0.0, %v574
    %v576 = vpop.f32.mrb[0].mxu0
    %577 = vdwg.mxu0
    %v578 = vpack.c.bf16 %v575, %v572
    %580 = vrot.lane.b32.xlu0 %v451, 96
    %v581 = vpop.permute.xlu0 %580
    %583 = vrot.lane.b32.xlu0 %v452, 96
    %v584 = vpop.permute.xlu0 %583
    %v586 = vsel %vm454, %v581, 0
    %v589 = vsel %vm454, %v584, 0
    %591 = vmatprep.subr.bf16.mxu0 0
    %592 = vmatpush1.bf16.xpose.msra.mxu0 %v589
    %593 = vmatprep.subr.bf16.mxu0 0
    %594 = vmatpush1.bf16.xpose.msra.mxu0 0
    %595 = vmatprep.subr.bf16.mxu0 0
    %596 = vmatpush1.bf16.xpose.msra.mxu0 0
    %597 = vmatprep.subr.bf16.mxu0 0
    %598 = vmatpush1.bf16.xpose.msra.mxu0 0
    %599 = vmatprep.subr.bf16.mxu0 0
    %600 = vmatpush1.bf16.xpose.msra.mxu0 0
    %601 = vmatprep.subr.bf16.mxu0 0
    %602 = vmatpush1.bf16.xpose.msra.mxu0 0
    %603 = vmatprep.subr.bf16.mxu0 0
    %604 = vmatpush1.bf16.xpose.msra.mxu0 0
    %605 = vmatprep.subr.bf16.mxu0 0
    %606 = vmatpush1.bf16.xpose.msra.mxu0 0
    %607 = vmatprep.subr.bf16.mxu0 0
    %608 = vmatpush1.bf16.xpose.msra.mxu0 0
    %609 = vmatprep.subr.bf16.mxu0 0
    %610 = vmatpush1.bf16.xpose.msra.mxu0 0
    %611 = vmatprep.subr.bf16.mxu0 0
    %612 = vmatpush1.bf16.xpose.msra.mxu0 0
    %613 = vmatprep.subr.bf16.mxu0 0
    %614 = vmatpush1.bf16.xpose.msra.mxu0 0
    %615 = vmatprep.subr.bf16.mxu0 0
    %616 = vmatpush1.bf16.xpose.msra.mxu0 0
    %617 = vmatprep.subr.bf16.mxu0 0
    %618 = vmatpush1.bf16.xpose.msra.mxu0 0
    %619 = vmatprep.subr.bf16.mxu0 0
    %620 = vmatpush1.bf16.xpose.msra.mxu0 0
    %621 = vmatprep.subr.bf16.mxu0 0
    %622 = vmatpush1.bf16.xpose.msra.mxu0 0
    %623 = vmatprep.mubr.bf16.mxu0 0
    %624 = vmatmul.mubr.bf16.gmra.mrb[0].mxu0 %v586
    %v625 = vpop.f32.mrb[0].mxu0
    %v626 = vadd.f32 0.0, %v625
    %v627 = vpop.f32.mrb[0].mxu0
    %v628 = vpop.f32.mrb[0].mxu0
    %v629 = vadd.f32 0.0, %v628
    %v630 = vpop.f32.mrb[0].mxu0
    %631 = vdwg.mxu0
    %v632 = vmul.f32 %v626, 0.17677669
    %v633 = vmul.f32 %v629, 0.17677669
    %v634 = vadd.f32 %v632, %v507
    %v635 = vadd.f32 %v633, %v507
    %v636 = vsel %vm510, %v634, -inf
    %637 = vmax.xlane.f32.xlu0 %v636
    %v638 = vpop.xlane.xlu0 %637
    %v639 = vsel %vm510, %v635, -inf
    %640 = vmax.xlane.f32.xlu0 %v639
    %v641 = vpop.xlane.xlu0 %640
    %v642 = vsub.f32 %v634, %v638
    %v643 = vsub.f32 %v635, %v641
    %v644 = vmul.f32 %v642, 1.442695
    %v645 = vpow.pop %v644
    %v646 = vmul.f32 %v643, 1.442695
    %v647 = vpow.pop %v646
    %v648 = vsel %vm510, %v645, 0.0
    %649 = vadd.xlane.f32.xlu0 %v648
    %v650 = vpop.xlane.xlu0 %649
    %v651 = vsel %vm510, %v647, 0.0
    %652 = vadd.xlane.f32.xlu0 %v651
    %v653 = vpop.xlane.xlu0 %652
    %v654 = vrcp.pop %v650
    %v655 = vrcp.pop %v653
    %v656 = vmul.f32 %v645, %v654
    %v657 = vmul.f32 %v647, %v655
    %v658 = vpack.c.bf16 %v657, %v656
    %660 = vrot.lane.b32.xlu0 %v453, 96
    %v661 = vpop.permute.xlu0 %660
    %v664 = vsel %vm510, %v658, 0
    %666 = vmatprep.subr.bf16.mxu0 0
    %667 = vmatpush1.bf16.msra.mxu0 %v661
    %668 = vmatprep.subr.bf16.mxu0 0
    %669 = vmatpush1.bf16.msra.mxu0 0
    %670 = vmatprep.subr.bf16.mxu0 0
    %671 = vmatpush1.bf16.msra.mxu0 0
    %672 = vmatprep.subr.bf16.mxu0 0
    %673 = vmatpush1.bf16.msra.mxu0 0
    %674 = vmatprep.subr.bf16.mxu0 0
    %675 = vmatpush1.bf16.msra.mxu0 0
    %676 = vmatprep.subr.bf16.mxu0 0
    %677 = vmatpush1.bf16.msra.mxu0 0
    %678 = vmatprep.subr.bf16.mxu0 0
    %679 = vmatpush1.bf16.msra.mxu0 0
    %680 = vmatprep.subr.bf16.mxu0 0
    %681 = vmatpush1.bf16.msra.mxu0 0
    %682 = vmatprep.subr.bf16.mxu0 0
    %683 = vmatpush1.bf16.msra.mxu0 0
    %684 = vmatprep.subr.bf16.mxu0 0
    %685 = vmatpush1.bf16.msra.mxu0 0
    %686 = vmatprep.subr.bf16.mxu0 0
    %687 = vmatpush1.bf16.msra.mxu0 0
    %688 = vmatprep.subr.bf16.mxu0 0
    %689 = vmatpush1.bf16.msra.mxu0 0
    %690 = vmatprep.subr.bf16.mxu0 0
    %691 = vmatpush1.bf16.msra.mxu0 0
    %692 = vmatprep.subr.bf16.mxu0 0
    %693 = vmatpush1.bf16.msra.mxu0 0
    %694 = vmatprep.subr.bf16.mxu0 0
    %695 = vmatpush1.bf16.msra.mxu0 0
    %696 = vmatprep.subr.bf16.mxu0 0
    %697 = vmatpush1.bf16.msra.mxu0 0
    %698 = vmatprep.mubr.bf16.mxu0 0
    %699 = vmatmul.mubr.bf16.gmra.mrb[0].mxu0 %v664
    %v700 = vpop.f32.mrb[0].mxu0
    %v701 = vadd.f32 0.0, %v700
    %v702 = vpop.f32.mrb[0].mxu0
    %v703 = vpop.f32.mrb[0].mxu0
    %v704 = vadd.f32 0.0, %v703
    %v705 = vpop.f32.mrb[0].mxu0
    %706 = vdwg.mxu0
    %v707 = vpack.c.bf16 %v704, %v701
    %v712 = vunpack.c.l.b16 %v190
    %v713 = vunpack.c.l.b16 %v191
    %v714 = vunpack.c.l.b16 %v192
    %v715 = vunpack.c.l.b16 %v193
    %v716 = vpack.c.b16 %v713, %v712
    %v717 = vpack.c.b16 %v715, %v714
    %v721 = vsel %vm454, %v707, 0
    %723 = vmatprep.subr.bf16.mxu0 0
    %724 = vmatpush1.bf16.msra.mxu0 %v716
    %725 = vmatprep.subr.bf16.mxu0 0
    %726 = vmatpush1.bf16.msra.mxu0 %v717
    %727 = vmatprep.subr.bf16.mxu0 0
    %728 = vmatpush1.bf16.msra.mxu0 0
    %729 = vmatprep.subr.bf16.mxu0 0
    %730 = vmatpush1.bf16.msra.mxu0 0
    %731 = vmatprep.subr.bf16.mxu0 0
    %732 = vmatpush1.bf16.msra.mxu0 0
    %733 = vmatprep.subr.bf16.mxu0 0
    %734 = vmatpush1.bf16.msra.mxu0 0
    %735 = vmatprep.subr.bf16.mxu0 0
    %736 = vmatpush1.bf16.msra.mxu0 0
    %737 = vmatprep.subr.bf16.mxu0 0
    %738 = vmatpush1.bf16.msra.mxu0 0
    %739 = vmatprep.subr.bf16.mxu0 0
    %740 = vmatpush1.bf16.msra.mxu0 0
    %741 = vmatprep.subr.bf16.mxu0 0
    %742 = vmatpush1.bf16.msra.mxu0 0
    %743 = vmatprep.subr.bf16.mxu0 0
    %744 = vmatpush1.bf16.msra.mxu0 0
    %745 = vmatprep.subr.bf16.mxu0 0
    %746 = vmatpush1.bf16.msra.mxu0 0
    %747 = vmatprep.subr.bf16.mxu0 0
    %748 = vmatpush1.bf16.msra.mxu0 0
    %749 = vmatprep.subr.bf16.mxu0 0
    %750 = vmatpush1.bf16.msra.mxu0 0
    %751 = vmatprep.subr.bf16.mxu0 0
    %752 = vmatpush1.bf16.msra.mxu0 0
    %753 = vmatprep.subr.bf16.mxu0 0
    %754 = vmatpush1.bf16.msra.mxu0 0
    %755 = vmatprep.mubr.bf16.mxu0 0
    %756 = vmatmul.mubr.bf16.gmra.mrb[0].mxu0 %v721
    %v757 = vpop.f32.mrb[0].mxu0
    %v758 = vadd.f32 0.0, %v757
    %v759 = vpop.f32.mrb[0].mxu0
    %v760 = vpop.f32.mrb[0].mxu0
    %v761 = vadd.f32 0.0, %v760
    %v762 = vpop.f32.mrb[0].mxu0
    %763 = vdwg.mxu0
    %v768 = vunpack.c.l.b16 %v186
    %v769 = vunpack.c.l.b16 %v187
    %v770 = vunpack.c.l.b16 %v188
    %v771 = vunpack.c.l.b16 %v189
    %v772 = vpack.c.b16 %v769, %v768
    %v773 = vpack.c.b16 %v771, %v770
    %v777 = vsel %vm454, %v578, 0
    %779 = vmatprep.subr.bf16.mxu0 0
    %780 = vmatpush1.bf16.msra.mxu0 %v772
    %781 = vmatprep.subr.bf16.mxu0 0
    %782 = vmatpush1.bf16.msra.mxu0 %v773
    %783 = vmatprep.subr.bf16.mxu0 0
    %784 = vmatpush1.bf16.msra.mxu0 0
    %785 = vmatprep.subr.bf16.mxu0 0
    %786 = vmatpush1.bf16.msra.mxu0 0
    %787 = vmatprep.subr.bf16.mxu0 0
    %788 = vmatpush1.bf16.msra.mxu0 0
    %789 = vmatprep.subr.bf16.mxu0 0
    %790 = vmatpush1.bf16.msra.mxu0 0
    %791 = vmatprep.subr.bf16.mxu0 0
    %792 = vmatpush1.bf16.msra.mxu0 0
    %793 = vmatprep.subr.bf16.mxu0 0
    %794 = vmatpush1.bf16.msra.mxu0 0
    %795 = vmatprep.subr.bf16.mxu0 0
    %796 = vmatpush1.bf16.msra.mxu0 0
    %797 = vmatprep.subr.bf16.mxu0 0
    %798 = vmatpush1.bf16.msra.mxu0 0
    %799 = vmatprep.subr.bf16.mxu0 0
    %800 = vmatpush1.bf16.msra.mxu0 0
    %801 = vmatprep.subr.bf16.mxu0 0
    %802 = vmatpush1.bf16.msra.mxu0 0
    %803 = vmatprep.subr.bf16.mxu0 0
    %804 = vmatpush1.bf16.msra.mxu0 0
    %805 = vmatprep.subr.bf16.mxu0 0
    %806 = vmatpush1.bf16.msra.mxu0 0
    %807 = vmatprep.subr.bf16.mxu0 0
    %808 = vmatpush1.bf16.msra.mxu0 0
    %809 = vmatprep.subr.bf16.mxu0 0
    %810 = vmatpush1.bf16.msra.mxu0 0
    %811 = vmatprep.mubr.bf16.mxu0 0
    %812 = vmatmul.mubr.bf16.gmra.mrb[0].mxu0 %v777
    %v813 = vpop.f32.mrb[0].mxu0
    %v814 = vadd.f32 %v758, %v813
    %v815 = vpop.f32.mrb[0].mxu0
    %v816 = vpop.f32.mrb[0].mxu0
    %v817 = vadd.f32 %v761, %v816
    %v818 = vpop.f32.mrb[0].mxu0
    %819 = vdwg.mxu0
    %820 = vrot.lane.b32.xlu0 %v451, 64
    %v821 = vpop.permute.xlu0 %820
    %822 = vrot.lane.b32.xlu0 %v452, 64
    %v823 = vpop.permute.xlu0 %822
    %v825 = vsel %vm454, %v821, 0
    %v828 = vsel %vm454, %v823, 0
    %830 = vmatprep.subr.bf16.mxu0 0
    %831 = vmatpush1.bf16.xpose.msra.mxu0 %v828
    %832 = vmatprep.subr.bf16.mxu0 0
    %833 = vmatpush1.bf16.xpose.msra.mxu0 0
    %834 = vmatprep.subr.bf16.mxu0 0
    %835 = vmatpush1.bf16.xpose.msra.mxu0 0
    %836 = vmatprep.subr.bf16.mxu0 0
    %837 = vmatpush1.bf16.xpose.msra.mxu0 0
    %838 = vmatprep.subr.bf16.mxu0 0
    %839 = vmatpush1.bf16.xpose.msra.mxu0 0
    %840 = vmatprep.subr.bf16.mxu0 0
    %841 = vmatpush1.bf16.xpose.msra.mxu0 0
    %842 = vmatprep.subr.bf16.mxu0 0
    %843 = vmatpush1.bf16.xpose.msra.mxu0 0
    %844 = vmatprep.subr.bf16.mxu0 0
    %845 = vmatpush1.bf16.xpose.msra.mxu0 0
    %846 = vmatprep.subr.bf16.mxu0 0
    %847 = vmatpush1.bf16.xpose.msra.mxu0 0
    %848 = vmatprep.subr.bf16.mxu0 0
    %849 = vmatpush1.bf16.xpose.msra.mxu0 0
    %850 = vmatprep.subr.bf16.mxu0 0
    %851 = vmatpush1.bf16.xpose.msra.mxu0 0
    %852 = vmatprep.subr.bf16.mxu0 0
    %853 = vmatpush1.bf16.xpose.msra.mxu0 0
    %854 = vmatprep.subr.bf16.mxu0 0
    %855 = vmatpush1.bf16.xpose.msra.mxu0 0
    %856 = vmatprep.subr.bf16.mxu0 0
    %857 = vmatpush1.bf16.xpose.msra.mxu0 0
    %858 = vmatprep.subr.bf16.mxu0 0
    %859 = vmatpush1.bf16.xpose.msra.mxu0 0
    %860 = vmatprep.subr.bf16.mxu0 0
    %861 = vmatpush1.bf16.xpose.msra.mxu0 0
    %862 = vmatprep.mubr.bf16.mxu0 0
    %863 = vmatmul.mubr.bf16.gmra.mrb[0].mxu0 %v825
    %v864 = vpop.f32.mrb[0].mxu0
    %v865 = vadd.f32 0.0, %v864
    %v866 = vpop.f32.mrb[0].mxu0
    %v867 = vpop.f32.mrb[0].mxu0
    %v868 = vadd.f32 0.0, %v867
    %v869 = vpop.f32.mrb[0].mxu0
    %870 = vdwg.mxu0
    %v871 = vmul.f32 %v865, 0.17677669
    %v872 = vmul.f32 %v868, 0.17677669
    %v873 = vadd.f32 %v871, %v507
    %v874 = vadd.f32 %v872, %v507
    %v875 = vsel %vm510, %v873, -inf
    %876 = vmax.xlane.f32.xlu0 %v875
    %v877 = vpop.xlane.xlu0 %876
    %v878 = vsel %vm510, %v874, -inf
    %879 = vmax.xlane.f32.xlu0 %v878
    %v880 = vpop.xlane.xlu0 %879
    %v881 = vsub.f32 %v873, %v877
    %v882 = vsub.f32 %v874, %v880
    %v883 = vmul.f32 %v881, 1.442695
    %v884 = vpow.pop %v883
    %v885 = vmul.f32 %v882, 1.442695
    %v886 = vpow.pop %v885
    %v887 = vsel %vm510, %v884, 0.0
    %888 = vadd.xlane.f32.xlu0 %v887
    %v889 = vpop.xlane.xlu0 %888
    %v890 = vsel %vm510, %v886, 0.0
    %891 = vadd.xlane.f32.xlu0 %v890
    %v892 = vpop.xlane.xlu0 %891
    %v893 = vrcp.pop %v889
    %v894 = vrcp.pop %v892
    %v895 = vmul.f32 %v884, %v893
    %v896 = vmul.f32 %v886, %v894
    %v897 = vpack.c.bf16 %v896, %v895
    %898 = vrot.lane.b32.xlu0 %v453, 64
    %v899 = vpop.permute.xlu0 %898
    %v902 = vsel %vm510, %v897, 0
    %904 = vmatprep.subr.bf16.mxu0 0
    %905 = vmatpush1.bf16.msra.mxu0 %v899
    %906 = vmatprep.subr.bf16.mxu0 0
    %907 = vmatpush1.bf16.msra.mxu0 0
    %908 = vmatprep.subr.bf16.mxu0 0
    %909 = vmatpush1.bf16.msra.mxu0 0
    %910 = vmatprep.subr.bf16.mxu0 0
    %911 = vmatpush1.bf16.msra.mxu0 0
    %912 = vmatprep.subr.bf16.mxu0 0
    %913 = vmatpush1.bf16.msra.mxu0 0
    %914 = vmatprep.subr.bf16.mxu0 0
    %915 = vmatpush1.bf16.msra.mxu0 0
    %916 = vmatprep.subr.bf16.mxu0 0
    %917 = vmatpush1.bf16.msra.mxu0 0
    %918 = vmatprep.subr.bf16.mxu0 0
    %919 = vmatpush1.bf16.msra.mxu0 0
    %920 = vmatprep.subr.bf16.mxu0 0
    %921 = vmatpush1.bf16.msra.mxu0 0
    %922 = vmatprep.subr.bf16.mxu0 0
    %923 = vmatpush1.bf16.msra.mxu0 0
    %924 = vmatprep.subr.bf16.mxu0 0
    %925 = vmatpush1.bf16.msra.mxu0 0
    %926 = vmatprep.subr.bf16.mxu0 0
    %927 = vmatpush1.bf16.msra.mxu0 0
    %928 = vmatprep.subr.bf16.mxu0 0
    %929 = vmatpush1.bf16.msra.mxu0 0
    %930 = vmatprep.subr.bf16.mxu0 0
    %931 = vmatpush1.bf16.msra.mxu0 0
    %932 = vmatprep.subr.bf16.mxu0 0
    %933 = vmatpush1.bf16.msra.mxu0 0
    %934 = vmatprep.subr.bf16.mxu0 0
    %935 = vmatpush1.bf16.msra.mxu0 0
    %936 = vmatprep.mubr.bf16.mxu0 0
    %937 = vmatmul.mubr.bf16.gmra.mrb[0].mxu0 %v902
    %v938 = vpop.f32.mrb[0].mxu0
    %v939 = vadd.f32 0.0, %v938
    %v940 = vpop.f32.mrb[0].mxu0
    %v941 = vpop.f32.mrb[0].mxu0
    %v942 = vadd.f32 0.0, %v941
    %v943 = vpop.f32.mrb[0].mxu0
    %944 = vdwg.mxu0
    %v945 = vpack.c.bf16 %v942, %v939
    %v950 = vunpack.c.l.b16 %v194
    %v951 = vunpack.c.l.b16 %v195
    %v952 = vunpack.c.l.b16 %v196
    %v953 = vunpack.c.l.b16 %v197
    %v954 = vpack.c.b16 %v951, %v950
    %v955 = vpack.c.b16 %v953, %v952
    %v959 = vsel %vm454, %v945, 0
    %961 = vmatprep.subr.bf16.mxu0 0
    %962 = vmatpush1.bf16.msra.mxu0 %v954
    %963 = vmatprep.subr.bf16.mxu0 0
    %964 = vmatpush1.bf16.msra.mxu0 %v955
    %965 = vmatprep.subr.bf16.mxu0 0
    %966 = vmatpush1.bf16.msra.mxu0 0
    %967 = vmatprep.subr.bf16.mxu0 0
    %968 = vmatpush1.bf16.msra.mxu0 0
    %969 = vmatprep.subr.bf16.mxu0 0
    %970 = vmatpush1.bf16.msra.mxu0 0
    %971 = vmatprep.subr.bf16.mxu0 0
    %972 = vmatpush1.bf16.msra.mxu0 0
    %973 = vmatprep.subr.bf16.mxu0 0
    %974 = vmatpush1.bf16.msra.mxu0 0
    %975 = vmatprep.subr.bf16.mxu0 0
    %976 = vmatpush1.bf16.msra.mxu0 0
    %977 = vmatprep.subr.bf16.mxu0 0
    %978 = vmatpush1.bf16.msra.mxu0 0
    %979 = vmatprep.subr.bf16.mxu0 0
    %980 = vmatpush1.bf16.msra.mxu0 0
    %981 = vmatprep.subr.bf16.mxu0 0
    %982 = vmatpush1.bf16.msra.mxu0 0
    %983 = vmatprep.subr.bf16.mxu0 0
    %984 = vmatpush1.bf16.msra.mxu0 0
    %985 = vmatprep.subr.bf16.mxu0 0
    %986 = vmatpush1.bf16.msra.mxu0 0
    %987 = vmatprep.subr.bf16.mxu0 0
    %988 = vmatpush1.bf16.msra.mxu0 0
    %989 = vmatprep.subr.bf16.mxu0 0
    %990 = vmatpush1.bf16.msra.mxu0 0
    %991 = vmatprep.subr.bf16.mxu0 0
    %992 = vmatpush1.bf16.msra.mxu0 0
    %993 = vmatprep.mubr.bf16.mxu0 0
    %994 = vmatmul.mubr.bf16.gmra.mrb[0].mxu0 %v959
    %v995 = vpop.f32.mrb[0].mxu0
    %v996 = vadd.f32 0.0, %v995
    %v997 = vpop.f32.mrb[0].mxu0
    %v998 = vpop.f32.mrb[0].mxu0
    %v999 = vadd.f32 0.0, %v998
    %v1000 = vpop.f32.mrb[0].mxu0
    %1001 = vdwg.mxu0
    %v1002 = vadd.f32 %v814, %v996
    %v1003 = vadd.f32 %v817, %v999
    %1004 = vrot.lane.b32.xlu0 %v451, 32
    %v1005 = vpop.permute.xlu0 %1004
    %1006 = vrot.lane.b32.xlu0 %v452, 32
    %v1007 = vpop.permute.xlu0 %1006
    %v1009 = vsel %vm454, %v1005, 0
    %v1012 = vsel %vm454, %v1007, 0
    %1014 = vmatprep.subr.bf16.mxu0 0
    %1015 = vmatpush1.bf16.xpose.msra.mxu0 %v1012
    %1016 = vmatprep.subr.bf16.mxu0 0
    %1017 = vmatpush1.bf16.xpose.msra.mxu0 0
    %1018 = vmatprep.subr.bf16.mxu0 0
    %1019 = vmatpush1.bf16.xpose.msra.mxu0 0
    %1020 = vmatprep.subr.bf16.mxu0 0
    %1021 = vmatpush1.bf16.xpose.msra.mxu0 0
    %1022 = vmatprep.subr.bf16.mxu0 0
    %1023 = vmatpush1.bf16.xpose.msra.mxu0 0
    %1024 = vmatprep.subr.bf16.mxu0 0
    %1025 = vmatpush1.bf16.xpose.msra.mxu0 0
    %1026 = vmatprep.subr.bf16.mxu0 0
    %1027 = vmatpush1.bf16.xpose.msra.mxu0 0
    %1028 = vmatprep.subr.bf16.mxu0 0
    %1029 = vmatpush1.bf16.xpose.msra.mxu0 0
    %1030 = vmatprep.subr.bf16.mxu0 0
    %1031 = vmatpush1.bf16.xpose.msra.mxu0 0
    %1032 = vmatprep.subr.bf16.mxu0 0
    %1033 = vmatpush1.bf16.xpose.msra.mxu0 0
    %1034 = vmatprep.subr.bf16.mxu0 0
    %1035 = vmatpush1.bf16.xpose.msra.mxu0 0
    %1036 = vmatprep.subr.bf16.mxu0 0
    %1037 = vmatpush1.bf16.xpose.msra.mxu0 0
    %1038 = vmatprep.subr.bf16.mxu0 0
    %1039 = vmatpush1.bf16.xpose.msra.mxu0 0
    %1040 = vmatprep.subr.bf16.mxu0 0
    %1041 = vmatpush1.bf16.xpose.msra.mxu0 0
    %1042 = vmatprep.subr.bf16.mxu0 0
    %1043 = vmatpush1.bf16.xpose.msra.mxu0 0
    %1044 = vmatprep.subr.bf16.mxu0 0
    %1045 = vmatpush1.bf16.xpose.msra.mxu0 0
    %1046 = vmatprep.mubr.bf16.mxu0 0
    %1047 = vmatmul.mubr.bf16.gmra.mrb[0].mxu0 %v1009
    %v1048 = vpop.f32.mrb[0].mxu0
    %v1049 = vadd.f32 0.0, %v1048
    %v1050 = vpop.f32.mrb[0].mxu0
    %v1051 = vpop.f32.mrb[0].mxu0
    %v1052 = vadd.f32 0.0, %v1051
    %v1053 = vpop.f32.mrb[0].mxu0
    %1054 = vdwg.mxu0
    %v1055 = vmul.f32 %v1049, 0.17677669
    %v1056 = vmul.f32 %v1052, 0.17677669
    %v1057 = vadd.f32 %v1055, %v507
    %v1058 = vadd.f32 %v1056, %v507
    %v1059 = vsel %vm510, %v1057, -inf
    %1060 = vmax.xlane.f32.xlu0 %v1059
    %v1061 = vpop.xlane.xlu0 %1060
    %v1062 = vsel %vm510, %v1058, -inf
    %1063 = vmax.xlane.f32.xlu0 %v1062
    %v1064 = vpop.xlane.xlu0 %1063
    %v1065 = vsub.f32 %v1057, %v1061
    %v1066 = vsub.f32 %v1058, %v1064
    %v1067 = vmul.f32 %v1065, 1.442695
    %v1068 = vpow.pop %v1067
    %v1069 = vmul.f32 %v1066, 1.442695
    %v1070 = vpow.pop %v1069
    %v1071 = vsel %vm510, %v1068, 0.0
    %1072 = vadd.xlane.f32.xlu0 %v1071
    %v1073 = vpop.xlane.xlu0 %1072
    %v1074 = vsel %vm510, %v1070, 0.0
    %1075 = vadd.xlane.f32.xlu0 %v1074
    %v1076 = vpop.xlane.xlu0 %1075
    %v1077 = vrcp.pop %v1073
    %v1078 = vrcp.pop %v1076
    %v1079 = vmul.f32 %v1068, %v1077
    %v1080 = vmul.f32 %v1070, %v1078
    %v1081 = vpack.c.bf16 %v1080, %v1079
    %1082 = vrot.lane.b32.xlu0 %v453, 32
    %v1083 = vpop.permute.xlu0 %1082
    %v1086 = vsel %vm510, %v1081, 0
    %1088 = vmatprep.subr.bf16.mxu0 0
    %1089 = vmatpush1.bf16.msra.mxu0 %v1083
    %1090 = vmatprep.subr.bf16.mxu0 0
    %1091 = vmatpush1.bf16.msra.mxu0 0
    %1092 = vmatprep.subr.bf16.mxu0 0
    %1093 = vmatpush1.bf16.msra.mxu0 0
    %1094 = vmatprep.subr.bf16.mxu0 0
    %1095 = vmatpush1.bf16.msra.mxu0 0
    %1096 = vmatprep.subr.bf16.mxu0 0
    %1097 = vmatpush1.bf16.msra.mxu0 0
    %1098 = vmatprep.subr.bf16.mxu0 0
    %1099 = vmatpush1.bf16.msra.mxu0 0
    %1100 = vmatprep.subr.bf16.mxu0 0
    %1101 = vmatpush1.bf16.msra.mxu0 0
    %1102 = vmatprep.subr.bf16.mxu0 0
    %1103 = vmatpush1.bf16.msra.mxu0 0
    %1104 = vmatprep.subr.bf16.mxu0 0
    %1105 = vmatpush1.bf16.msra.mxu0 0
    %1106 = vmatprep.subr.bf16.mxu0 0
    %1107 = vmatpush1.bf16.msra.mxu0 0
    %1108 = vmatprep.subr.bf16.mxu0 0
    %1109 = vmatpush1.bf16.msra.mxu0 0
    %1110 = vmatprep.subr.bf16.mxu0 0
    %1111 = vmatpush1.bf16.msra.mxu0 0
    %1112 = vmatprep.subr.bf16.mxu0 0
    %1113 = vmatpush1.bf16.msra.mxu0 0
    %1114 = vmatprep.subr.bf16.mxu0 0
    %1115 = vmatpush1.bf16.msra.mxu0 0
    %1116 = vmatprep.subr.bf16.mxu0 0
    %1117 = vmatpush1.bf16.msra.mxu0 0
    %1118 = vmatprep.subr.bf16.mxu0 0
    %1119 = vmatpush1.bf16.msra.mxu0 0
    %1120 = vmatprep.mubr.bf16.mxu0 0
    %1121 = vmatmul.mubr.bf16.gmra.mrb[0].mxu0 %v1086
    %v1122 = vpop.f32.mrb[0].mxu0
    %v1123 = vadd.f32 0.0, %v1122
    %v1124 = vpop.f32.mrb[0].mxu0
    %v1125 = vpop.f32.mrb[0].mxu0
    %v1126 = vadd.f32 0.0, %v1125
    %v1127 = vpop.f32.mrb[0].mxu0
    %1128 = vdwg.mxu0
    %v1129 = vpack.c.bf16 %v1126, %v1123
    %v1134 = vunpack.c.l.b16 %v198
    %v1135 = vunpack.c.l.b16 %v199
    %v1136 = vunpack.c.l.b16 %v200
    %v1137 = vunpack.c.l.b16 %v201
    %v1138 = vpack.c.b16 %v1135, %v1134
    %v1139 = vpack.c.b16 %v1137, %v1136
    %v1143 = vsel %vm454, %v1129, 0
    %1145 = vmatprep.subr.bf16.mxu0 0
    %1146 = vmatpush1.bf16.msra.mxu0 %v1138
    %1147 = vmatprep.subr.bf16.mxu0 0
    %1148 = vmatpush1.bf16.msra.mxu0 %v1139
    %1149 = vmatprep.subr.bf16.mxu0 0
    %1150 = vmatpush1.bf16.msra.mxu0 0
    %1151 = vmatprep.subr.bf16.mxu0 0
    %1152 = vmatpush1.bf16.msra.mxu0 0
    %1153 = vmatprep.subr.bf16.mxu0 0
    %1154 = vmatpush1.bf16.msra.mxu0 0
    %1155 = vmatprep.subr.bf16.mxu0 0
    %1156 = vmatpush1.bf16.msra.mxu0 0
    %1157 = vmatprep.subr.bf16.mxu0 0
    %1158 = vmatpush1.bf16.msra.mxu0 0
    %1159 = vmatprep.subr.bf16.mxu0 0
    %1160 = vmatpush1.bf16.msra.mxu0 0
    %1161 = vmatprep.subr.bf16.mxu0 0
    %1162 = vmatpush1.bf16.msra.mxu0 0
    %1163 = vmatprep.subr.bf16.mxu0 0
    %1164 = vmatpush1.bf16.msra.mxu0 0
    %1165 = vmatprep.subr.bf16.mxu0 0
    %1166 = vmatpush1.bf16.msra.mxu0 0
    %1167 = vmatprep.subr.bf16.mxu0 0
    %1168 = vmatpush1.bf16.msra.mxu0 0
    %1169 = vmatprep.subr.bf16.mxu0 0
    %1170 = vmatpush1.bf16.msra.mxu0 0
    %1171 = vmatprep.subr.bf16.mxu0 0
    %1172 = vmatpush1.bf16.msra.mxu0 0
    %1173 = vmatprep.subr.bf16.mxu0 0
    %1174 = vmatpush1.bf16.msra.mxu0 0
    %1175 = vmatprep.subr.bf16.mxu0 0
    %1176 = vmatpush1.bf16.msra.mxu0 0
    %1177 = vmatprep.mubr.bf16.mxu0 0
    %1178 = vmatmul.mubr.bf16.gmra.mrb[0].mxu0 %v1143
    %v1179 = vpop.f32.mrb[0].mxu0
    %v1180 = vadd.f32 0.0, %v1179
    %v1181 = vpop.f32.mrb[0].mxu0
    %v1182 = vpop.f32.mrb[0].mxu0
    %v1183 = vadd.f32 0.0, %v1182
    %v1184 = vpop.f32.mrb[0].mxu0
    %1185 = vdwg.mxu0
    %v1186 = vadd.f32 %v1002, %v1180
    %v1187 = vadd.f32 %v1003, %v1183
    %v1188 = vpack.c.bf16 %v398, %v394
    %v1189 = vpack.c.bf16 %v400, %v396
    %v1190 = vpack.c.bf16 %v448, %v445
    %v1192 = vsel %vm454, %v1188, 0
    %v1195 = vsel %vm454, %v1189, 0
    %1197 = vmatprep.subr.bf16.mxu0 0
    %1198 = vmatpush1.bf16.xpose.msra.mxu0 %v1195
    %1199 = vmatprep.subr.bf16.mxu0 0
    %1200 = vmatpush1.bf16.xpose.msra.mxu0 0
    %1201 = vmatprep.subr.bf16.mxu0 0
    %1202 = vmatpush1.bf16.xpose.msra.mxu0 0
    %1203 = vmatprep.subr.bf16.mxu0 0
    %1204 = vmatpush1.bf16.xpose.msra.mxu0 0
    %1205 = vmatprep.subr.bf16.mxu0 0
    %1206 = vmatpush1.bf16.xpose.msra.mxu0 0
    %1207 = vmatprep.subr.bf16.mxu0 0
    %1208 = vmatpush1.bf16.xpose.msra.mxu0 0
    %1209 = vmatprep.subr.bf16.mxu0 0
    %1210 = vmatpush1.bf16.xpose.msra.mxu0 0
    %1211 = vmatprep.subr.bf16.mxu0 0
    %1212 = vmatpush1.bf16.xpose.msra.mxu0 0
    %1213 = vmatprep.subr.bf16.mxu0 0
    %1214 = vmatpush1.bf16.xpose.msra.mxu0 0
    %1215 = vmatprep.subr.bf16.mxu0 0
    %1216 = vmatpush1.bf16.xpose.msra.mxu0 0
    %1217 = vmatprep.subr.bf16.mxu0 0
    %1218 = vmatpush1.bf16.xpose.msra.mxu0 0
    %1219 = vmatprep.subr.bf16.mxu0 0
    %1220 = vmatpush1.bf16.xpose.msra.mxu0 0
    %1221 = vmatprep.subr.bf16.mxu0 0
    %1222 = vmatpush1.bf16.xpose.msra.mxu0 0
    %1223 = vmatprep.subr.bf16.mxu0 0
    %1224 = vmatpush1.bf16.xpose.msra.mxu0 0
    %1225 = vmatprep.subr.bf16.mxu0 0
    %1226 = vmatpush1.bf16.xpose.msra.mxu0 0
    %1227 = vmatprep.subr.bf16.mxu0 0
    %1228 = vmatpush1.bf16.xpose.msra.mxu0 0
    %1229 = vmatprep.mubr.bf16.mxu0 0
    %1230 = vmatmul.mubr.bf16.gmra.mrb[0].mxu0 %v1192
    %v1231 = vpop.f32.mrb[0].mxu0
    %v1232 = vadd.f32 0.0, %v1231
    %v1233 = vpop.f32.mrb[0].mxu0
    %v1234 = vpop.f32.mrb[0].mxu0
    %v1235 = vadd.f32 0.0, %v1234
    %v1236 = vpop.f32.mrb[0].mxu0
    %1237 = vdwg.mxu0
    %v1238 = vmul.f32 %v1232, 0.17677669
    %v1239 = vmul.f32 %v1235, 0.17677669
    %v1240 = vlaneseq
    %v1241 = vshrl.u32 %v1240, 7
    %v1242 = vsub.s32 1, %v1241
    %v1243 = vrot.slane %v152, %v1242
    %v1244 = vadd.f32 %v1238, %v1243
    %v1245 = vadd.f32 %v1239, %v1243
    %v1246 = vsel %vm510, %v1244, -inf
    %1247 = vmax.xlane.f32.xlu0 %v1246
    %v1248 = vpop.xlane.xlu0 %1247
    %v1249 = vsel %vm510, %v1245, -inf
    %1250 = vmax.xlane.f32.xlu0 %v1249
    %v1251 = vpop.xlane.xlu0 %1250
    %v1252 = vsub.f32 %v1244, %v1248
    %v1253 = vsub.f32 %v1245, %v1251
    %v1254 = vmul.f32 %v1252, 1.442695
    %v1255 = vpow.pop %v1254
    %v1256 = vmul.f32 %v1253, 1.442695
    %v1257 = vpow.pop %v1256
    %v1258 = vsel %vm510, %v1255, 0.0
    %1259 = vadd.xlane.f32.xlu0 %v1258
    %v1260 = vpop.xlane.xlu0 %1259
    %v1261 = vsel %vm510, %v1257, 0.0
    %1262 = vadd.xlane.f32.xlu0 %v1261
    %v1263 = vpop.xlane.xlu0 %1262
    %v1264 = vrcp.pop %v1260
    %v1265 = vrcp.pop %v1263
    %v1266 = vmul.f32 %v1255, %v1264
    %v1267 = vmul.f32 %v1257, %v1265
    %v1268 = vpack.c.bf16 %v1267, %v1266
    %v1270 = vsel %vm510, %v1268, 0
    %1272 = vmatprep.subr.bf16.mxu0 0
    %1273 = vmatpush1.bf16.msra.mxu0 %v1190
    %1274 = vmatprep.subr.bf16.mxu0 0
    %1275 = vmatpush1.bf16.msra.mxu0 0
    %1276 = vmatprep.subr.bf16.mxu0 0
    %1277 = vmatpush1.bf16.msra.mxu0 0
    %1278 = vmatprep.subr.bf16.mxu0 0
    %1279 = vmatpush1.bf16.msra.mxu0 0
    %1280 = vmatprep.subr.bf16.mxu0 0
    %1281 = vmatpush1.bf16.msra.mxu0 0
    %1282 = vmatprep.subr.bf16.mxu0 0
    %1283 = vmatpush1.bf16.msra.mxu0 0
    %1284 = vmatprep.subr.bf16.mxu0 0
    %1285 = vmatpush1.bf16.msra.mxu0 0
    %1286 = vmatprep.subr.bf16.mxu0 0
    %1287 = vmatpush1.bf16.msra.mxu0 0
    %1288 = vmatprep.subr.bf16.mxu0 0
    %1289 = vmatpush1.bf16.msra.mxu0 0
    %1290 = vmatprep.subr.bf16.mxu0 0
    %1291 = vmatpush1.bf16.msra.mxu0 0
    %1292 = vmatprep.subr.bf16.mxu0 0
    %1293 = vmatpush1.bf16.msra.mxu0 0
    %1294 = vmatprep.subr.bf16.mxu0 0
    %1295 = vmatpush1.bf16.msra.mxu0 0
    %1296 = vmatprep.subr.bf16.mxu0 0
    %1297 = vmatpush1.bf16.msra.mxu0 0
    %1298 = vmatprep.subr.bf16.mxu0 0
    %1299 = vmatpush1.bf16.msra.mxu0 0
    %1300 = vmatprep.subr.bf16.mxu0 0
    %1301 = vmatpush1.bf16.msra.mxu0 0
    %1302 = vmatprep.subr.bf16.mxu0 0
    %1303 = vmatpush1.bf16.msra.mxu0 0
    %1304 = vmatprep.mubr.bf16.mxu0 0
    %1305 = vmatmul.mubr.bf16.gmra.mrb[0].mxu0 %v1270
    %v1306 = vpop.f32.mrb[0].mxu0
    %v1307 = vadd.f32 0.0, %v1306
    %v1308 = vpop.f32.mrb[0].mxu0
    %v1309 = vpop.f32.mrb[0].mxu0
    %v1310 = vadd.f32 0.0, %v1309
    %v1311 = vpop.f32.mrb[0].mxu0
    %1312 = vdwg.mxu0
    %v1313 = vpack.c.bf16 %v1310, %v1307
    %1315 = vrot.lane.b32.xlu0 %v1188, 96
    %v1316 = vpop.permute.xlu0 %1315
    %1318 = vrot.lane.b32.xlu0 %v1189, 96
    %v1319 = vpop.permute.xlu0 %1318
    %v1321 = vsel %vm454, %v1316, 0
    %v1324 = vsel %vm454, %v1319, 0
    %1326 = vmatprep.subr.bf16.mxu0 0
    %1327 = vmatpush1.bf16.xpose.msra.mxu0 %v1324
    %1328 = vmatprep.subr.bf16.mxu0 0
    %1329 = vmatpush1.bf16.xpose.msra.mxu0 0
    %1330 = vmatprep.subr.bf16.mxu0 0
    %1331 = vmatpush1.bf16.xpose.msra.mxu0 0
    %1332 = vmatprep.subr.bf16.mxu0 0
    %1333 = vmatpush1.bf16.xpose.msra.mxu0 0
    %1334 = vmatprep.subr.bf16.mxu0 0
    %1335 = vmatpush1.bf16.xpose.msra.mxu0 0
    %1336 = vmatprep.subr.bf16.mxu0 0
    %1337 = vmatpush1.bf16.xpose.msra.mxu0 0
    %1338 = vmatprep.subr.bf16.mxu0 0
    %1339 = vmatpush1.bf16.xpose.msra.mxu0 0
    %1340 = vmatprep.subr.bf16.mxu0 0
    %1341 = vmatpush1.bf16.xpose.msra.mxu0 0
    %1342 = vmatprep.subr.bf16.mxu0 0
    %1343 = vmatpush1.bf16.xpose.msra.mxu0 0
    %1344 = vmatprep.subr.bf16.mxu0 0
    %1345 = vmatpush1.bf16.xpose.msra.mxu0 0
    %1346 = vmatprep.subr.bf16.mxu0 0
    %1347 = vmatpush1.bf16.xpose.msra.mxu0 0
    %1348 = vmatprep.subr.bf16.mxu0 0
    %1349 = vmatpush1.bf16.xpose.msra.mxu0 0
    %1350 = vmatprep.subr.bf16.mxu0 0
    %1351 = vmatpush1.bf16.xpose.msra.mxu0 0
    %1352 = vmatprep.subr.bf16.mxu0 0
    %1353 = vmatpush1.bf16.xpose.msra.mxu0 0
    %1354 = vmatprep.subr.bf16.mxu0 0
    %1355 = vmatpush1.bf16.xpose.msra.mxu0 0
    %1356 = vmatprep.subr.bf16.mxu0 0
    %1357 = vmatpush1.bf16.xpose.msra.mxu0 0
    %1358 = vmatprep.mubr.bf16.mxu0 0
    %1359 = vmatmul.mubr.bf16.gmra.mrb[0].mxu0 %v1321
    %v1360 = vpop.f32.mrb[0].mxu0
    %v1361 = vadd.f32 0.0, %v1360
    %v1362 = vpop.f32.mrb[0].mxu0
    %v1363 = vpop.f32.mrb[0].mxu0
    %v1364 = vadd.f32 0.0, %v1363
    %v1365 = vpop.f32.mrb[0].mxu0
    %1366 = vdwg.mxu0
    %v1367 = vmul.f32 %v1361, 0.17677669
    %v1368 = vmul.f32 %v1364, 0.17677669
    %v1369 = vadd.f32 %v1367, %v1243
    %v1370 = vadd.f32 %v1368, %v1243
    %v1371 = vsel %vm510, %v1369, -inf
    %1372 = vmax.xlane.f32.xlu0 %v1371
    %v1373 = vpop.xlane.xlu0 %1372
    %v1374 = vsel %vm510, %v1370, -inf
    %1375 = vmax.xlane.f32.xlu0 %v1374
    %v1376 = vpop.xlane.xlu0 %1375
    %v1377 = vsub.f32 %v1369, %v1373
    %v1378 = vsub.f32 %v1370, %v1376
    %v1379 = vmul.f32 %v1377, 1.442695
    %v1380 = vpow.pop %v1379
    %v1381 = vmul.f32 %v1378, 1.442695
    %v1382 = vpow.pop %v1381
    %v1383 = vsel %vm510, %v1380, 0.0
    %1384 = vadd.xlane.f32.xlu0 %v1383
    %v1385 = vpop.xlane.xlu0 %1384
    %v1386 = vsel %vm510, %v1382, 0.0
    %1387 = vadd.xlane.f32.xlu0 %v1386
    %v1388 = vpop.xlane.xlu0 %1387
    %v1389 = vrcp.pop %v1385
    %v1390 = vrcp.pop %v1388
    %v1391 = vmul.f32 %v1380, %v1389
    %v1392 = vmul.f32 %v1382, %v1390
    %v1393 = vpack.c.bf16 %v1392, %v1391
    %1395 = vrot.lane.b32.xlu0 %v1190, 96
    %v1396 = vpop.permute.xlu0 %1395
    %v1399 = vsel %vm510, %v1393, 0
    %1401 = vmatprep.subr.bf16.mxu0 0
    %1402 = vmatpush1.bf16.msra.mxu0 %v1396
    %1403 = vmatprep.subr.bf16.mxu0 0
    %1404 = vmatpush1.bf16.msra.mxu0 0
    %1405 = vmatprep.subr.bf16.mxu0 0
    %1406 = vmatpush1.bf16.msra.mxu0 0
    %1407 = vmatprep.subr.bf16.mxu0 0
    %1408 = vmatpush1.bf16.msra.mxu0 0
    %1409 = vmatprep.subr.bf16.mxu0 0
    %1410 = vmatpush1.bf16.msra.mxu0 0
    %1411 = vmatprep.subr.bf16.mxu0 0
    %1412 = vmatpush1.bf16.msra.mxu0 0
    %1413 = vmatprep.subr.bf16.mxu0 0
    %1414 = vmatpush1.bf16.msra.mxu0 0
    %1415 = vmatprep.subr.bf16.mxu0 0
    %1416 = vmatpush1.bf16.msra.mxu0 0
    %1417 = vmatprep.subr.bf16.mxu0 0
    %1418 = vmatpush1.bf16.msra.mxu0 0
    %1419 = vmatprep.subr.bf16.mxu0 0
    %1420 = vmatpush1.bf16.msra.mxu0 0
    %1421 = vmatprep.subr.bf16.mxu0 0
    %1422 = vmatpush1.bf16.msra.mxu0 0
    %1423 = vmatprep.subr.bf16.mxu0 0
    %1424 = vmatpush1.bf16.msra.mxu0 0
    %1425 = vmatprep.subr.bf16.mxu0 0
    %1426 = vmatpush1.bf16.msra.mxu0 0
    %1427 = vmatprep.subr.bf16.mxu0 0
    %1428 = vmatpush1.bf16.msra.mxu0 0
    %1429 = vmatprep.subr.bf16.mxu0 0
    %1430 = vmatpush1.bf16.msra.mxu0 0
    %1431 = vmatprep.subr.bf16.mxu0 0
    %1432 = vmatpush1.bf16.msra.mxu0 0
    %1433 = vmatprep.mubr.bf16.mxu0 0
    %1434 = vmatmul.mubr.bf16.gmra.mrb[0].mxu0 %v1399
    %v1435 = vpop.f32.mrb[0].mxu0
    %v1436 = vadd.f32 0.0, %v1435
    %v1437 = vpop.f32.mrb[0].mxu0
    %v1438 = vpop.f32.mrb[0].mxu0
    %v1439 = vadd.f32 0.0, %v1438
    %v1440 = vpop.f32.mrb[0].mxu0
    %1441 = vdwg.mxu0
    %v1442 = vpack.c.bf16 %v1439, %v1436
    %v1444 = vsel %vm454, %v1442, 0
    %1446 = vmatprep.subr.bf16.mxu0 0
    %1447 = vmatpush1.bf16.msra.mxu0 %v716
    %1448 = vmatprep.subr.bf16.mxu0 0
    %1449 = vmatpush1.bf16.msra.mxu0 %v717
    %1450 = vmatprep.subr.bf16.mxu0 0
    %1451 = vmatpush1.bf16.msra.mxu0 0
    %1452 = vmatprep.subr.bf16.mxu0 0
    %1453 = vmatpush1.bf16.msra.mxu0 0
    %1454 = vmatprep.subr.bf16.mxu0 0
    %1455 = vmatpush1.bf16.msra.mxu0 0
    %1456 = vmatprep.subr.bf16.mxu0 0
    %1457 = vmatpush1.bf16.msra.mxu0 0
    %1458 = vmatprep.subr.bf16.mxu0 0
    %1459 = vmatpush1.bf16.msra.mxu0 0
    %1460 = vmatprep.subr.bf16.mxu0 0
    %1461 = vmatpush1.bf16.msra.mxu0 0
    %1462 = vmatprep.subr.bf16.mxu0 0
    %1463 = vmatpush1.bf16.msra.mxu0 0
    %1464 = vmatprep.subr.bf16.mxu0 0
    %1465 = vmatpush1.bf16.msra.mxu0 0
    %1466 = vmatprep.subr.bf16.mxu0 0
    %1467 = vmatpush1.bf16.msra.mxu0 0
    %1468 = vmatprep.subr.bf16.mxu0 0
    %1469 = vmatpush1.bf16.msra.mxu0 0
    %1470 = vmatprep.subr.bf16.mxu0 0
    %1471 = vmatpush1.bf16.msra.mxu0 0
    %1472 = vmatprep.subr.bf16.mxu0 0
    %1473 = vmatpush1.bf16.msra.mxu0 0
    %1474 = vmatprep.subr.bf16.mxu0 0
    %1475 = vmatpush1.bf16.msra.mxu0 0
    %1476 = vmatprep.subr.bf16.mxu0 0
    %1477 = vmatpush1.bf16.msra.mxu0 0
    %1478 = vmatprep.mubr.bf16.mxu0 0
    %1479 = vmatmul.mubr.bf16.gmra.mrb[0].mxu0 %v1444
    %v1480 = vpop.f32.mrb[0].mxu0
    %v1481 = vadd.f32 0.0, %v1480
    %v1482 = vpop.f32.mrb[0].mxu0
    %v1483 = vpop.f32.mrb[0].mxu0
    %v1484 = vadd.f32 0.0, %v1483
    %v1485 = vpop.f32.mrb[0].mxu0
    %1486 = vdwg.mxu0
    %v1488 = vsel %vm454, %v1313, 0
    %1490 = vmatprep.subr.bf16.mxu0 0
    %1491 = vmatpush1.bf16.msra.mxu0 %v772
    %1492 = vmatprep.subr.bf16.mxu0 0
    %1493 = vmatpush1.bf16.msra.mxu0 %v773
    %1494 = vmatprep.subr.bf16.mxu0 0
    %1495 = vmatpush1.bf16.msra.mxu0 0
    %1496 = vmatprep.subr.bf16.mxu0 0
    %1497 = vmatpush1.bf16.msra.mxu0 0
    %1498 = vmatprep.subr.bf16.mxu0 0
    %1499 = vmatpush1.bf16.msra.mxu0 0
    %1500 = vmatprep.subr.bf16.mxu0 0
    %1501 = vmatpush1.bf16.msra.mxu0 0
    %1502 = vmatprep.subr.bf16.mxu0 0
    %1503 = vmatpush1.bf16.msra.mxu0 0
    %1504 = vmatprep.subr.bf16.mxu0 0
    %1505 = vmatpush1.bf16.msra.mxu0 0
    %1506 = vmatprep.subr.bf16.mxu0 0
    %1507 = vmatpush1.bf16.msra.mxu0 0
    %1508 = vmatprep.subr.bf16.mxu0 0
    %1509 = vmatpush1.bf16.msra.mxu0 0
    %1510 = vmatprep.subr.bf16.mxu0 0
    %1511 = vmatpush1.bf16.msra.mxu0 0
    %1512 = vmatprep.subr.bf16.mxu0 0
    %1513 = vmatpush1.bf16.msra.mxu0 0
    %1514 = vmatprep.subr.bf16.mxu0 0
    %1515 = vmatpush1.bf16.msra.mxu0 0
    %1516 = vmatprep.subr.bf16.mxu0 0
    %1517 = vmatpush1.bf16.msra.mxu0 0
    %1518 = vmatprep.subr.bf16.mxu0 0
    %1519 = vmatpush1.bf16.msra.mxu0 0
    %1520 = vmatprep.subr.bf16.mxu0 0
    %1521 = vmatpush1.bf16.msra.mxu0 0
    %1522 = vmatprep.mubr.bf16.mxu0 0
    %1523 = vmatmul.mubr.bf16.gmra.mrb[0].mxu0 %v1488
    %v1524 = vpop.f32.mrb[0].mxu0
    %v1525 = vadd.f32 %v1481, %v1524
    %v1526 = vpop.f32.mrb[0].mxu0
    %v1527 = vpop.f32.mrb[0].mxu0
    %v1528 = vadd.f32 %v1484, %v1527
    %v1529 = vpop.f32.mrb[0].mxu0
    %1530 = vdwg.mxu0
    %1531 = vrot.lane.b32.xlu0 %v1188, 64
    %v1532 = vpop.permute.xlu0 %1531
    %1533 = vrot.lane.b32.xlu0 %v1189, 64
    %v1534 = vpop.permute.xlu0 %1533
    %v1536 = vsel %vm454, %v1532, 0
    %v1539 = vsel %vm454, %v1534, 0
    %1541 = vmatprep.subr.bf16.mxu0 0
    %1542 = vmatpush1.bf16.xpose.msra.mxu0 %v1539
    %1543 = vmatprep.subr.bf16.mxu0 0
    %1544 = vmatpush1.bf16.xpose.msra.mxu0 0
    %1545 = vmatprep.subr.bf16.mxu0 0
    %1546 = vmatpush1.bf16.xpose.msra.mxu0 0
    %1547 = vmatprep.subr.bf16.mxu0 0
    %1548 = vmatpush1.bf16.xpose.msra.mxu0 0
    %1549 = vmatprep.subr.bf16.mxu0 0
    %1550 = vmatpush1.bf16.xpose.msra.mxu0 0
    %1551 = vmatprep.subr.bf16.mxu0 0
    %1552 = vmatpush1.bf16.xpose.msra.mxu0 0
    %1553 = vmatprep.subr.bf16.mxu0 0
    %1554 = vmatpush1.bf16.xpose.msra.mxu0 0
    %1555 = vmatprep.subr.bf16.mxu0 0
    %1556 = vmatpush1.bf16.xpose.msra.mxu0 0
    %1557 = vmatprep.subr.bf16.mxu0 0
    %1558 = vmatpush1.bf16.xpose.msra.mxu0 0
    %1559 = vmatprep.subr.bf16.mxu0 0
    %1560 = vmatpush1.bf16.xpose.msra.mxu0 0
    %1561 = vmatprep.subr.bf16.mxu0 0
    %1562 = vmatpush1.bf16.xpose.msra.mxu0 0
    %1563 = vmatprep.subr.bf16.mxu0 0
    %1564 = vmatpush1.bf16.xpose.msra.mxu0 0
    %1565 = vmatprep.subr.bf16.mxu0 0
    %1566 = vmatpush1.bf16.xpose.msra.mxu0 0
    %1567 = vmatprep.subr.bf16.mxu0 0
    %1568 = vmatpush1.bf16.xpose.msra.mxu0 0
    %1569 = vmatprep.subr.bf16.mxu0 0
    %1570 = vmatpush1.bf16.xpose.msra.mxu0 0
    %1571 = vmatprep.subr.bf16.mxu0 0
    %1572 = vmatpush1.bf16.xpose.msra.mxu0 0
    %1573 = vmatprep.mubr.bf16.mxu0 0
    %1574 = vmatmul.mubr.bf16.gmra.mrb[0].mxu0 %v1536
    %v1575 = vpop.f32.mrb[0].mxu0
    %v1576 = vadd.f32 0.0, %v1575
    %v1577 = vpop.f32.mrb[0].mxu0
    %v1578 = vpop.f32.mrb[0].mxu0
    %v1579 = vadd.f32 0.0, %v1578
    %v1580 = vpop.f32.mrb[0].mxu0
    %1581 = vdwg.mxu0
    %v1582 = vmul.f32 %v1576, 0.17677669
    %v1583 = vmul.f32 %v1579, 0.17677669
    %v1584 = vadd.f32 %v1582, %v1243
    %v1585 = vadd.f32 %v1583, %v1243
    %v1586 = vsel %vm510, %v1584, -inf
    %1587 = vmax.xlane.f32.xlu0 %v1586
    %v1588 = vpop.xlane.xlu0 %1587
    %v1589 = vsel %vm510, %v1585, -inf
    %1590 = vmax.xlane.f32.xlu0 %v1589
    %v1591 = vpop.xlane.xlu0 %1590
    %v1592 = vsub.f32 %v1584, %v1588
    %v1593 = vsub.f32 %v1585, %v1591
    %v1594 = vmul.f32 %v1592, 1.442695
    %v1595 = vpow.pop %v1594
    %v1596 = vmul.f32 %v1593, 1.442695
    %v1597 = vpow.pop %v1596
    %v1598 = vsel %vm510, %v1595, 0.0
    %1599 = vadd.xlane.f32.xlu0 %v1598
    %v1600 = vpop.xlane.xlu0 %1599
    %v1601 = vsel %vm510, %v1597, 0.0
    %1602 = vadd.xlane.f32.xlu0 %v1601
    %v1603 = vpop.xlane.xlu0 %1602
    %v1604 = vrcp.pop %v1600
    %v1605 = vrcp.pop %v1603
    %v1606 = vmul.f32 %v1595, %v1604
    %v1607 = vmul.f32 %v1597, %v1605
    %v1608 = vpack.c.bf16 %v1607, %v1606
    %1609 = vrot.lane.b32.xlu0 %v1190, 64
    %v1610 = vpop.permute.xlu0 %1609
    %v1613 = vsel %vm510, %v1608, 0
    %1615 = vmatprep.subr.bf16.mxu0 0
    %1616 = vmatpush1.bf16.msra.mxu0 %v1610
    %1617 = vmatprep.subr.bf16.mxu0 0
    %1618 = vmatpush1.bf16.msra.mxu0 0
    %1619 = vmatprep.subr.bf16.mxu0 0
    %1620 = vmatpush1.bf16.msra.mxu0 0
    %1621 = vmatprep.subr.bf16.mxu0 0
    %1622 = vmatpush1.bf16.msra.mxu0 0
    %1623 = vmatprep.subr.bf16.mxu0 0
    %1624 = vmatpush1.bf16.msra.mxu0 0
    %1625 = vmatprep.subr.bf16.mxu0 0
    %1626 = vmatpush1.bf16.msra.mxu0 0
    %1627 = vmatprep.subr.bf16.mxu0 0
    %1628 = vmatpush1.bf16.msra.mxu0 0
    %1629 = vmatprep.subr.bf16.mxu0 0
    %1630 = vmatpush1.bf16.msra.mxu0 0
    %1631 = vmatprep.subr.bf16.mxu0 0
    %1632 = vmatpush1.bf16.msra.mxu0 0
    %1633 = vmatprep.subr.bf16.mxu0 0
    %1634 = vmatpush1.bf16.msra.mxu0 0
    %1635 = vmatprep.subr.bf16.mxu0 0
    %1636 = vmatpush1.bf16.msra.mxu0 0
    %1637 = vmatprep.subr.bf16.mxu0 0
    %1638 = vmatpush1.bf16.msra.mxu0 0
    %1639 = vmatprep.subr.bf16.mxu0 0
    %1640 = vmatpush1.bf16.msra.mxu0 0
    %1641 = vmatprep.subr.bf16.mxu0 0
    %1642 = vmatpush1.bf16.msra.mxu0 0
    %1643 = vmatprep.subr.bf16.mxu0 0
    %1644 = vmatpush1.bf16.msra.mxu0 0
    %1645 = vmatprep.subr.bf16.mxu0 0
    %1646 = vmatpush1.bf16.msra.mxu0 0
    %1647 = vmatprep.mubr.bf16.mxu0 0
    %1648 = vmatmul.mubr.bf16.gmra.mrb[0].mxu0 %v1613
    %v1649 = vpop.f32.mrb[0].mxu0
    %v1650 = vadd.f32 0.0, %v1649
    %v1651 = vpop.f32.mrb[0].mxu0
    %v1652 = vpop.f32.mrb[0].mxu0
    %v1653 = vadd.f32 0.0, %v1652
    %v1654 = vpop.f32.mrb[0].mxu0
    %1655 = vdwg.mxu0
    %v1656 = vpack.c.bf16 %v1653, %v1650
    %v1658 = vsel %vm454, %v1656, 0
    %1660 = vmatprep.subr.bf16.mxu0 0
    %1661 = vmatpush1.bf16.msra.mxu0 %v954
    %1662 = vmatprep.subr.bf16.mxu0 0
    %1663 = vmatpush1.bf16.msra.mxu0 %v955
    %1664 = vmatprep.subr.bf16.mxu0 0
    %1665 = vmatpush1.bf16.msra.mxu0 0
    %1666 = vmatprep.subr.bf16.mxu0 0
    %1667 = vmatpush1.bf16.msra.mxu0 0
    %1668 = vmatprep.subr.bf16.mxu0 0
    %1669 = vmatpush1.bf16.msra.mxu0 0
    %1670 = vmatprep.subr.bf16.mxu0 0
    %1671 = vmatpush1.bf16.msra.mxu0 0
    %1672 = vmatprep.subr.bf16.mxu0 0
    %1673 = vmatpush1.bf16.msra.mxu0 0
    %1674 = vmatprep.subr.bf16.mxu0 0
    %1675 = vmatpush1.bf16.msra.mxu0 0
    %1676 = vmatprep.subr.bf16.mxu0 0
    %1677 = vmatpush1.bf16.msra.mxu0 0
    %1678 = vmatprep.subr.bf16.mxu0 0
    %1679 = vmatpush1.bf16.msra.mxu0 0
    %1680 = vmatprep.subr.bf16.mxu0 0
    %1681 = vmatpush1.bf16.msra.mxu0 0
    %1682 = vmatprep.subr.bf16.mxu0 0
    %1683 = vmatpush1.bf16.msra.mxu0 0
    %1684 = vmatprep.subr.bf16.mxu0 0
    %1685 = vmatpush1.bf16.msra.mxu0 0
    %1686 = vmatprep.subr.bf16.mxu0 0
    %1687 = vmatpush1.bf16.msra.mxu0 0
    %1688 = vmatprep.subr.bf16.mxu0 0
    %1689 = vmatpush1.bf16.msra.mxu0 0
    %1690 = vmatprep.subr.bf16.mxu0 0
    %1691 = vmatpush1.bf16.msra.mxu0 0
    %1692 = vmatprep.mubr.bf16.mxu0 0
    %1693 = vmatmul.mubr.bf16.gmra.mrb[0].mxu0 %v1658
    %v1694 = vpop.f32.mrb[0].mxu0
    %v1695 = vadd.f32 0.0, %v1694
    %v1696 = vpop.f32.mrb[0].mxu0
    %v1697 = vpop.f32.mrb[0].mxu0
    %v1698 = vadd.f32 0.0, %v1697
    %v1699 = vpop.f32.mrb[0].mxu0
    %1700 = vdwg.mxu0
    %v1701 = vadd.f32 %v1525, %v1695
    %v1702 = vadd.f32 %v1528, %v1698
    %1703 = vrot.lane.b32.xlu0 %v1188, 32
    %v1704 = vpop.permute.xlu0 %1703
    %1705 = vrot.lane.b32.xlu0 %v1189, 32
    %v1706 = vpop.permute.xlu0 %1705
    %v1708 = vsel %vm454, %v1704, 0
    %v1711 = vsel %vm454, %v1706, 0
    %1713 = vmatprep.subr.bf16.mxu0 0
    %1714 = vmatpush1.bf16.xpose.msra.mxu0 %v1711
    %1715 = vmatprep.subr.bf16.mxu0 0
    %1716 = vmatpush1.bf16.xpose.msra.mxu0 0
    %1717 = vmatprep.subr.bf16.mxu0 0
    %1718 = vmatpush1.bf16.xpose.msra.mxu0 0
    %1719 = vmatprep.subr.bf16.mxu0 0
    %1720 = vmatpush1.bf16.xpose.msra.mxu0 0
    %1721 = vmatprep.subr.bf16.mxu0 0
    %1722 = vmatpush1.bf16.xpose.msra.mxu0 0
    %1723 = vmatprep.subr.bf16.mxu0 0
    %1724 = vmatpush1.bf16.xpose.msra.mxu0 0
    %1725 = vmatprep.subr.bf16.mxu0 0
    %1726 = vmatpush1.bf16.xpose.msra.mxu0 0
    %1727 = vmatprep.subr.bf16.mxu0 0
    %1728 = vmatpush1.bf16.xpose.msra.mxu0 0
    %1729 = vmatprep.subr.bf16.mxu0 0
    %1730 = vmatpush1.bf16.xpose.msra.mxu0 0
    %1731 = vmatprep.subr.bf16.mxu0 0
    %1732 = vmatpush1.bf16.xpose.msra.mxu0 0
    %1733 = vmatprep.subr.bf16.mxu0 0
    %1734 = vmatpush1.bf16.xpose.msra.mxu0 0
    %1735 = vmatprep.subr.bf16.mxu0 0
    %1736 = vmatpush1.bf16.xpose.msra.mxu0 0
    %1737 = vmatprep.subr.bf16.mxu0 0
    %1738 = vmatpush1.bf16.xpose.msra.mxu0 0
    %1739 = vmatprep.subr.bf16.mxu0 0
    %1740 = vmatpush1.bf16.xpose.msra.mxu0 0
    %1741 = vmatprep.subr.bf16.mxu0 0
    %1742 = vmatpush1.bf16.xpose.msra.mxu0 0
    %1743 = vmatprep.subr.bf16.mxu0 0
    %1744 = vmatpush1.bf16.xpose.msra.mxu0 0
    %1745 = vmatprep.mubr.bf16.mxu0 0
    %1746 = vmatmul.mubr.bf16.gmra.mrb[0].mxu0 %v1708
    %v1747 = vpop.f32.mrb[0].mxu0
    %v1748 = vadd.f32 0.0, %v1747
    %v1749 = vpop.f32.mrb[0].mxu0
    %v1750 = vpop.f32.mrb[0].mxu0
    %v1751 = vadd.f32 0.0, %v1750
    %v1752 = vpop.f32.mrb[0].mxu0
    %1753 = vdwg.mxu0
    %v1754 = vmul.f32 %v1748, 0.17677669
    %v1755 = vmul.f32 %v1751, 0.17677669
    %v1756 = vadd.f32 %v1754, %v1243
    %v1757 = vadd.f32 %v1755, %v1243
    %v1758 = vsel %vm510, %v1756, -inf
    %1759 = vmax.xlane.f32.xlu0 %v1758
    %v1760 = vpop.xlane.xlu0 %1759
    %v1761 = vsel %vm510, %v1757, -inf
    %1762 = vmax.xlane.f32.xlu0 %v1761
    %v1763 = vpop.xlane.xlu0 %1762
    %v1764 = vsub.f32 %v1756, %v1760
    %v1765 = vsub.f32 %v1757, %v1763
    %v1766 = vmul.f32 %v1764, 1.442695
    %v1767 = vpow.pop %v1766
    %v1768 = vmul.f32 %v1765, 1.442695
    %v1769 = vpow.pop %v1768
    %v1770 = vsel %vm510, %v1767, 0.0
    %1771 = vadd.xlane.f32.xlu0 %v1770
    %v1772 = vpop.xlane.xlu0 %1771
    %v1773 = vsel %vm510, %v1769, 0.0
    %1774 = vadd.xlane.f32.xlu0 %v1773
    %v1775 = vpop.xlane.xlu0 %1774
    %v1776 = vrcp.pop %v1772
    %v1777 = vrcp.pop %v1775
    %v1778 = vmul.f32 %v1767, %v1776
    %v1779 = vmul.f32 %v1769, %v1777
    %v1780 = vpack.c.bf16 %v1779, %v1778
    %1781 = vrot.lane.b32.xlu0 %v1190, 32
    %v1782 = vpop.permute.xlu0 %1781
    %v1785 = vsel %vm510, %v1780, 0
    %1787 = vmatprep.subr.bf16.mxu0 0
    %1788 = vmatpush1.bf16.msra.mxu0 %v1782
    %1789 = vmatprep.subr.bf16.mxu0 0
    %1790 = vmatpush1.bf16.msra.mxu0 0
    %1791 = vmatprep.subr.bf16.mxu0 0
    %1792 = vmatpush1.bf16.msra.mxu0 0
    %1793 = vmatprep.subr.bf16.mxu0 0
    %1794 = vmatpush1.bf16.msra.mxu0 0
    %1795 = vmatprep.subr.bf16.mxu0 0
    %1796 = vmatpush1.bf16.msra.mxu0 0
    %1797 = vmatprep.subr.bf16.mxu0 0
    %1798 = vmatpush1.bf16.msra.mxu0 0
    %1799 = vmatprep.subr.bf16.mxu0 0
    %1800 = vmatpush1.bf16.msra.mxu0 0
    %1801 = vmatprep.subr.bf16.mxu0 0
    %1802 = vmatpush1.bf16.msra.mxu0 0
    %1803 = vmatprep.subr.bf16.mxu0 0
    %1804 = vmatpush1.bf16.msra.mxu0 0
    %1805 = vmatprep.subr.bf16.mxu0 0
    %1806 = vmatpush1.bf16.msra.mxu0 0
    %1807 = vmatprep.subr.bf16.mxu0 0
    %1808 = vmatpush1.bf16.msra.mxu0 0
    %1809 = vmatprep.subr.bf16.mxu0 0
    %1810 = vmatpush1.bf16.msra.mxu0 0
    %1811 = vmatprep.subr.bf16.mxu0 0
    %1812 = vmatpush1.bf16.msra.mxu0 0
    %1813 = vmatprep.subr.bf16.mxu0 0
    %1814 = vmatpush1.bf16.msra.mxu0 0
    %1815 = vmatprep.subr.bf16.mxu0 0
    %1816 = vmatpush1.bf16.msra.mxu0 0
    %1817 = vmatprep.subr.bf16.mxu0 0
    %1818 = vmatpush1.bf16.msra.mxu0 0
    %1819 = vmatprep.mubr.bf16.mxu0 0
    %1820 = vmatmul.mubr.bf16.gmra.mrb[0].mxu0 %v1785
    %v1821 = vpop.f32.mrb[0].mxu0
    %v1822 = vadd.f32 0.0, %v1821
    %v1823 = vpop.f32.mrb[0].mxu0
    %v1824 = vpop.f32.mrb[0].mxu0
    %v1825 = vadd.f32 0.0, %v1824
    %v1826 = vpop.f32.mrb[0].mxu0
    %1827 = vdwg.mxu0
    %v1828 = vpack.c.bf16 %v1825, %v1822
    %v1830 = vsel %vm454, %v1828, 0
    %1832 = vmatprep.subr.bf16.mxu0 0
    %1833 = vmatpush1.bf16.msra.mxu0 %v1138
    %1834 = vmatprep.subr.bf16.mxu0 0
    %1835 = vmatpush1.bf16.msra.mxu0 %v1139
    %1836 = vmatprep.subr.bf16.mxu0 0
    %1837 = vmatpush1.bf16.msra.mxu0 0
    %1838 = vmatprep.subr.bf16.mxu0 0
    %1839 = vmatpush1.bf16.msra.mxu0 0
    %1840 = vmatprep.subr.bf16.mxu0 0
    %1841 = vmatpush1.bf16.msra.mxu0 0
    %1842 = vmatprep.subr.bf16.mxu0 0
    %1843 = vmatpush1.bf16.msra.mxu0 0
    %1844 = vmatprep.subr.bf16.mxu0 0
    %1845 = vmatpush1.bf16.msra.mxu0 0
    %1846 = vmatprep.subr.bf16.mxu0 0
    %1847 = vmatpush1.bf16.msra.mxu0 0
    %1848 = vmatprep.subr.bf16.mxu0 0
    %1849 = vmatpush1.bf16.msra.mxu0 0
    %1850 = vmatprep.subr.bf16.mxu0 0
    %1851 = vmatpush1.bf16.msra.mxu0 0
    %1852 = vmatprep.subr.bf16.mxu0 0
    %1853 = vmatpush1.bf16.msra.mxu0 0
    %1854 = vmatprep.subr.bf16.mxu0 0
    %1855 = vmatpush1.bf16.msra.mxu0 0
    %1856 = vmatprep.subr.bf16.mxu0 0
    %1857 = vmatpush1.bf16.msra.mxu0 0
    %1858 = vmatprep.subr.bf16.mxu0 0
    %1859 = vmatpush1.bf16.msra.mxu0 0
    %1860 = vmatprep.subr.bf16.mxu0 0
    %1861 = vmatpush1.bf16.msra.mxu0 0
    %1862 = vmatprep.subr.bf16.mxu0 0
    %1863 = vmatpush1.bf16.msra.mxu0 0
    %1864 = vmatprep.mubr.bf16.mxu0 0
    %1865 = vmatmul.mubr.bf16.gmra.mrb[0].mxu0 %v1830
    %v1866 = vpop.f32.mrb[0].mxu0
    %v1867 = vadd.f32 0.0, %v1866
    %v1868 = vpop.f32.mrb[0].mxu0
    %v1869 = vpop.f32.mrb[0].mxu0
    %v1870 = vadd.f32 0.0, %v1869
    %v1871 = vpop.f32.mrb[0].mxu0
    %1872 = vdwg.mxu0
    %v1873 = vadd.f32 %v1701, %v1867
    %v1874 = vadd.f32 %v1702, %v1870
    %v1875 = vlaneseq
    %v1876 = vshrl.u32 %v1875, 7
    %v1877 = vsub.s32 0, %v1876
    %v1878 = vrot.slane %v202, %v1877
    %v1879 = vadd.f32 %v1186, %v1878
    %v1880 = vadd.f32 %v1187, %v1878
    %v1881 = vadd.f32 %v1873, %v1878
    %v1882 = vadd.f32 %v1874, %v1878
    %v1883 = vadd.f32 %v148, %v1879
    %v1884 = vadd.f32 %v149, %v1880
    %v1885 = vadd.f32 %v150, %v1881
    %v1886 = vadd.f32 %v151, %v1882
    %v1887 = vld [vmem:[%s8] sm:$0x1]
    %v1888 = vld [vmem:[%s9] sm:$0x1]
    %1889 = vadd.xlane.f32.xlu0 %v1883
    %v1890 = vpop.xlane.xlu0 %1889
    %1891 = vadd.xlane.f32.xlu0 %v1884
    %v1892 = vpop.xlane.xlu0 %1891
    %1893 = vadd.xlane.f32.xlu0 %v1885
    %v1894 = vpop.xlane.xlu0 %1893
    %1895 = vadd.xlane.f32.xlu0 %v1886
    %v1896 = vpop.xlane.xlu0 %1895
    %v1897 = vmul.f32 %v1890, %v95
    %v1898 = vmul.f32 %v1892, %v95
    %v1899 = vmul.f32 %v1894, %v95
    %v1900 = vmul.f32 %v1896, %v95
    %v1901 = vsub.f32 %v1883, %v1897
    %v1902 = vsub.f32 %v1884, %v1898
    %v1903 = vsub.f32 %v1885, %v1899
    %v1904 = vsub.f32 %v1886, %v1900
    %v1905 = vmul.f32 %v1901, %v1901
    %v1906 = vmul.f32 %v1902, %v1902
    %v1907 = vmul.f32 %v1903, %v1903
    %v1908 = vmul.f32 %v1904, %v1904
    %1909 = vadd.xlane.f32.xlu0 %v1905
    %v1910 = vpop.xlane.xlu0 %1909
    %1911 = vadd.xlane.f32.xlu0 %v1906
    %v1912 = vpop.xlane.xlu0 %1911
    %1913 = vadd.xlane.f32.xlu0 %v1907
    %v1914 = vpop.xlane.xlu0 %1913
    %1915 = vadd.xlane.f32.xlu0 %v1908
    %v1916 = vpop.xlane.xlu0 %1915
    %v1917 = vmul.f32 %v1910, %v95
    %v1918 = vmul.f32 %v1912, %v95
    %v1919 = vmul.f32 %v1914, %v95
    %v1920 = vmul.f32 %v1916, %v95
    %v1921 = vadd.f32 %v1917, 1e-12
    %v1922 = vadd.f32 %v1918, 1e-12
    %v1923 = vadd.f32 %v1919, 1e-12
    %v1924 = vadd.f32 %v1920, 1e-12
    %v1925 = vrsqrt.pop %v1921
    %v1926 = vrsqrt.pop %v1922
    %v1927 = vrsqrt.pop %v1923
    %v1928 = vrsqrt.pop %v1924
    %v1929 = vmul.f32 %v1901, %v1925
    %v1930 = vmul.f32 %v1902, %v1926
    %v1931 = vmul.f32 %v1903, %v1927
    %v1932 = vmul.f32 %v1904, %v1928
    %v1933 = vlaneseq
    %v1934 = vshrl.u32 %v1933, 7
    %v1935 = vsub.s32 0, %v1934
    %v1936 = vrot.slane %v1887, %v1935
    %v1937 = vmul.f32 %v1929, %v1936
    %v1938 = vmul.f32 %v1930, %v1936
    %v1939 = vmul.f32 %v1931, %v1936
    %v1940 = vmul.f32 %v1932, %v1936
    %v1941 = vlaneseq
    %v1942 = vshrl.u32 %v1941, 7
    %v1943 = vsub.s32 0, %v1942
    %v1944 = vrot.slane %v1888, %v1943
    %v1945 = vadd.f32 %v1937, %v1944
    %v1946 = vadd.f32 %v1938, %v1944
    %v1947 = vadd.f32 %v1939, %v1944
    %v1948 = vadd.f32 %v1940, %v1944
    %v1949 = vld [vmem:[%s10] sm:$0xff]
    %v1950 = vld [vmem:[%s10 + $0x8] sm:$0xff]
    %v1951 = vld [vmem:[%s10 + $0x10] sm:$0xff]
    %v1952 = vld [vmem:[%s10 + $0x18] sm:$0xff]
    %v1953 = vld [vmem:[%s10 + $0x20] sm:$0xff]
    %v1954 = vld [vmem:[%s10 + $0x28] sm:$0xff]
    %v1955 = vld [vmem:[%s10 + $0x30] sm:$0xff]
    %v1956 = vld [vmem:[%s10 + $0x38] sm:$0xff]
    %v1957 = vld [vmem:[%s10 + $0x40] sm:$0xff]
    %v1958 = vld [vmem:[%s10 + $0x48] sm:$0xff]
    %v1959 = vld [vmem:[%s10 + $0x50] sm:$0xff]
    %v1960 = vld [vmem:[%s10 + $0x58] sm:$0xff]
    %v1961 = vld [vmem:[%s10 + $0x60] sm:$0xff]
    %v1962 = vld [vmem:[%s10 + $0x68] sm:$0xff]
    %v1963 = vld [vmem:[%s10 + $0x70] sm:$0xff]
    %v1964 = vld [vmem:[%s10 + $0x78] sm:$0xff]
    %v1965 = vpack.c.bf16 %v1946, %v1945
    %v1966 = vpack.c.bf16 %v1948, %v1947
    %v1967 = vld [vmem:[%s11] ss:$2 sm:$0x3]
    %v1969 = vlaneseq
    %v1970 = vshrl.u32 %v1969, 7
    %v1971 = vsub.s32 0, %v1970
    %v1972 = vrot.slane %v1967, %v1971
    %v1973 = vlaneseq
    %v1974 = vshrl.u32 %v1973, 7
    %v1975 = vsub.s32 1, %v1974
    %v1976 = vrot.slane %v1967, %v1975
    %v1995 = vunpack.c.l.b16 %v1949
    %v1996 = vunpack.c.h.b16 %v1949
    %v1997 = vunpack.c.l.b16 %v1950
    %v1998 = vunpack.c.h.b16 %v1950
    %v1999 = vunpack.c.l.b16 %v1951
    %v2000 = vunpack.c.h.b16 %v1951
    %v2001 = vunpack.c.l.b16 %v1952
    %v2002 = vunpack.c.h.b16 %v1952
    %v2003 = vunpack.c.l.b16 %v1953
    %v2004 = vunpack.c.h.b16 %v1953
    %v2005 = vunpack.c.l.b16 %v1954
    %v2006 = vunpack.c.h.b16 %v1954
    %v2007 = vunpack.c.l.b16 %v1955
    %v2008 = vunpack.c.h.b16 %v1955
    %v2009 = vunpack.c.l.b16 %v1956
    %v2010 = vunpack.c.h.b16 %v1956
    %v2011 = vunpack.c.l.b16 %v1957
    %v2012 = vunpack.c.h.b16 %v1957
    %v2013 = vunpack.c.l.b16 %v1958
    %v2014 = vunpack.c.h.b16 %v1958
    %v2015 = vunpack.c.l.b16 %v1959
    %v2016 = vunpack.c.h.b16 %v1959
    %v2017 = vunpack.c.l.b16 %v1960
    %v2018 = vunpack.c.h.b16 %v1960
    %v2019 = vunpack.c.l.b16 %v1961
    %v2020 = vunpack.c.h.b16 %v1961
    %v2021 = vunpack.c.l.b16 %v1962
    %v2022 = vunpack.c.h.b16 %v1962
    %v2023 = vunpack.c.l.b16 %v1963
    %v2024 = vunpack.c.h.b16 %v1963
    %v2025 = vunpack.c.l.b16 %v1964
    %v2026 = vunpack.c.h.b16 %v1964
    %v2027 = vpack.c.b16 %v1997, %v1995
    %v2028 = vpack.c.b16 %v1998, %v1996
    %v2029 = vpack.c.b16 %v2001, %v1999
    %v2030 = vpack.c.b16 %v2002, %v2000
    %v2031 = vpack.c.b16 %v2005, %v2003
    %v2032 = vpack.c.b16 %v2006, %v2004
    %v2033 = vpack.c.b16 %v2009, %v2007
    %v2034 = vpack.c.b16 %v2010, %v2008
    %v2035 = vpack.c.b16 %v2013, %v2011
    %v2036 = vpack.c.b16 %v2014, %v2012
    %v2037 = vpack.c.b16 %v2017, %v2015
    %v2038 = vpack.c.b16 %v2018, %v2016
    %v2039 = vpack.c.b16 %v2021, %v2019
    %v2040 = vpack.c.b16 %v2022, %v2020
    %v2041 = vpack.c.b16 %v2025, %v2023
    %v2042 = vpack.c.b16 %v2026, %v2024
    %2059 = vmatprep.subr.bf16.mxu0 %v2028
    %2060 = vmatpush1.bf16.msra.mxu0 %v2027
    %2061 = vmatprep.subr.bf16.mxu0 %v2030
    %2062 = vmatpush1.bf16.msra.mxu0 %v2029
    %2063 = vmatprep.subr.bf16.mxu0 %v2032
    %2064 = vmatpush1.bf16.msra.mxu0 %v2031
    %2065 = vmatprep.subr.bf16.mxu0 %v2034
    %2066 = vmatpush1.bf16.msra.mxu0 %v2033
    %2067 = vmatprep.subr.bf16.mxu0 %v2036
    %2068 = vmatpush1.bf16.msra.mxu0 %v2035
    %2069 = vmatprep.subr.bf16.mxu0 %v2038
    %2070 = vmatpush1.bf16.msra.mxu0 %v2037
    %2071 = vmatprep.subr.bf16.mxu0 %v2040
    %2072 = vmatpush1.bf16.msra.mxu0 %v2039
    %2073 = vmatprep.subr.bf16.mxu0 %v2042
    %2074 = vmatpush1.bf16.msra.mxu0 %v2041
    %2075 = vmatprep.subr.bf16.mxu0 0
    %2076 = vmatpush1.bf16.msra.mxu0 0
    %2077 = vmatprep.subr.bf16.mxu0 0
    %2078 = vmatpush1.bf16.msra.mxu0 0
    %2079 = vmatprep.subr.bf16.mxu0 0
    %2080 = vmatpush1.bf16.msra.mxu0 0
    %2081 = vmatprep.subr.bf16.mxu0 0
    %2082 = vmatpush1.bf16.msra.mxu0 0
    %2083 = vmatprep.subr.bf16.mxu0 0
    %2084 = vmatpush1.bf16.msra.mxu0 0
    %2085 = vmatprep.subr.bf16.mxu0 0
    %2086 = vmatpush1.bf16.msra.mxu0 0
    %2087 = vmatprep.subr.bf16.mxu0 0
    %2088 = vmatpush1.bf16.msra.mxu0 0
    %2089 = vmatprep.subr.bf16.mxu0 0
    %2090 = vmatpush1.bf16.msra.mxu0 0
    %2091 = vmatprep.mubr.bf16.mxu0 0
    %2092 = vmatmul.mubr.bf16.gmra.mrb[0].mxu0 %v1965
    %v2093 = vpop.f32.mrb[0].mxu0
    %v2094 = vadd.f32 %v1972, %v2093
    %v2095 = vpop.f32.mrb[0].mxu0
    %v2096 = vadd.f32 %v1976, %v2095
    %v2097 = vpop.f32.mrb[0].mxu0
    %v2098 = vadd.f32 %v1972, %v2097
    %v2099 = vpop.f32.mrb[0].mxu0
    %v2100 = vadd.f32 %v1976, %v2099
    %2101 = vmatprep.mubr.bf16.mxu0 0
    %2102 = vmatmul.mubr.bf16.gmra.mrb[0].mxu0 %v1966
    %v2103 = vpop.f32.mrb[0].mxu0
    %v2104 = vadd.f32 %v1972, %v2103
    %v2105 = vpop.f32.mrb[0].mxu0
    %v2106 = vadd.f32 %v1976, %v2105
    %v2107 = vpop.f32.mrb[0].mxu0
    %v2108 = vadd.f32 %v1972, %v2107
    %v2109 = vpop.f32.mrb[0].mxu0
    %v2110 = vadd.f32 %v1976, %v2109
    %2111 = vdwg.mxu0
    %v2112 = vmul.f32 %v2094, 0.5
    %v2113 = vmul.f32 %v2096, 0.5
    %v2114 = vmul.f32 %v2098, 0.5
    %v2115 = vmul.f32 %v2100, 0.5
    %v2116 = vmul.f32 %v2104, 0.5
    %v2117 = vmul.f32 %v2106, 0.5
    %v2118 = vmul.f32 %v2108, 0.5
    %v2119 = vmul.f32 %v2110, 0.5
    %v2120 = vmul.f32 %v2094, 0.70710677
    %v2121 = vmul.f32 %v2096, 0.70710677
    %v2122 = vmul.f32 %v2098, 0.70710677
    %v2123 = vmul.f32 %v2100, 0.70710677
    %v2124 = vmul.f32 %v2104, 0.70710677
    %v2125 = vmul.f32 %v2106, 0.70710677
    %v2126 = vmul.f32 %v2108, 0.70710677
    %v2127 = vmul.f32 %v2110, 0.70710677
    %v2128 = vand.u32 2147483647, %v2120
    %v2129 = vand.u32 2147483647, %v2121
    %v2130 = vand.u32 2147483647, %v2122
    %v2131 = vand.u32 2147483647, %v2123
    %v2132 = vand.u32 2147483647, %v2124
    %v2133 = vand.u32 2147483647, %v2125
    %v2134 = vand.u32 2147483647, %v2126
    %v2135 = vand.u32 2147483647, %v2127
    %v2136 = vmul.f32 %v2128, 0.3275911
    %v2137 = vmul.f32 %v2129, 0.3275911
    %v2138 = vmul.f32 %v2130, 0.3275911
    %v2139 = vmul.f32 %v2131, 0.3275911
    %v2140 = vmul.f32 %v2132, 0.3275911
    %v2141 = vmul.f32 %v2133, 0.3275911
    %v2142 = vmul.f32 %v2134, 0.3275911
    %v2143 = vmul.f32 %v2135, 0.3275911
    %v2144 = vadd.f32 %v2136, 1.0
    %v2145 = vadd.f32 %v2137, 1.0
    %v2146 = vadd.f32 %v2138, 1.0
    %v2147 = vadd.f32 %v2139, 1.0
    %v2148 = vadd.f32 %v2140, 1.0
    %v2149 = vadd.f32 %v2141, 1.0
    %v2150 = vadd.f32 %v2142, 1.0
    %v2151 = vadd.f32 %v2143, 1.0
    %v2152 = vrcp.pop %v2144
    %v2153 = vmul.f32 1.0, %v2152
    %v2154 = vrcp.pop %v2145
    %v2155 = vmul.f32 1.0, %v2154
    %v2156 = vrcp.pop %v2146
    %v2157 = vmul.f32 1.0, %v2156
    %v2158 = vrcp.pop %v2147
    %v2159 = vmul.f32 1.0, %v2158
    %v2160 = vrcp.pop %v2148
    %v2161 = vmul.f32 1.0, %v2160
    %v2162 = vrcp.pop %v2149
    %v2163 = vmul.f32 1.0, %v2162
    %v2164 = vrcp.pop %v2150
    %v2165 = vmul.f32 1.0, %v2164
    %v2166 = vrcp.pop %v2151
    %v2167 = vmul.f32 1.0, %v2166
    %v2168 = vmul.f32 %v2153, 1.0614054
    %v2169 = vmul.f32 %v2155, 1.0614054
    %v2170 = vmul.f32 %v2157, 1.0614054
    %v2171 = vmul.f32 %v2159, 1.0614054
    %v2172 = vmul.f32 %v2161, 1.0614054
    %v2173 = vmul.f32 %v2163, 1.0614054
    %v2174 = vmul.f32 %v2165, 1.0614054
    %v2175 = vmul.f32 %v2167, 1.0614054
    %v2176 = vadd.f32 %v2168, -1.4531521
    %v2177 = vadd.f32 %v2169, -1.4531521
    %v2178 = vadd.f32 %v2170, -1.4531521
    %v2179 = vadd.f32 %v2171, -1.4531521
    %v2180 = vadd.f32 %v2172, -1.4531521
    %v2181 = vadd.f32 %v2173, -1.4531521
    %v2182 = vadd.f32 %v2174, -1.4531521
    %v2183 = vadd.f32 %v2175, -1.4531521
    %v2184 = vmul.f32 %v2176, %v2153
    %v2185 = vmul.f32 %v2177, %v2155
    %v2186 = vmul.f32 %v2178, %v2157
    %v2187 = vmul.f32 %v2179, %v2159
    %v2188 = vmul.f32 %v2180, %v2161
    %v2189 = vmul.f32 %v2181, %v2163
    %v2190 = vmul.f32 %v2182, %v2165
    %v2191 = vmul.f32 %v2183, %v2167
    %v2192 = vadd.f32 %v2184, 1.4214138
    %v2193 = vadd.f32 %v2185, 1.4214138
    %v2194 = vadd.f32 %v2186, 1.4214138
    %v2195 = vadd.f32 %v2187, 1.4214138
    %v2196 = vadd.f32 %v2188, 1.4214138
    %v2197 = vadd.f32 %v2189, 1.4214138
    %v2198 = vadd.f32 %v2190, 1.4214138
    %v2199 = vadd.f32 %v2191, 1.4214138
    %v2200 = vmul.f32 %v2192, %v2153
    %v2201 = vmul.f32 %v2193, %v2155
    %v2202 = vmul.f32 %v2194, %v2157
    %v2203 = vmul.f32 %v2195, %v2159
    %v2204 = vmul.f32 %v2196, %v2161
    %v2205 = vmul.f32 %v2197, %v2163
    %v2206 = vmul.f32 %v2198, %v2165
    %v2207 = vmul.f32 %v2199, %v2167
    %v2208 = vadd.f32 %v2200, -0.28449672
    %v2209 = vadd.f32 %v2201, -0.28449672
    %v2210 = vadd.f32 %v2202, -0.28449672
    %v2211 = vadd.f32 %v2203, -0.28449672
    %v2212 = vadd.f32 %v2204, -0.28449672
    %v2213 = vadd.f32 %v2205, -0.28449672
    %v2214 = vadd.f32 %v2206, -0.28449672
    %v2215 = vadd.f32 %v2207, -0.28449672
    %v2216 = vmul.f32 %v2208, %v2153
    %v2217 = vmul.f32 %v2209, %v2155
    %v2218 = vmul.f32 %v2210, %v2157
    %v2219 = vmul.f32 %v2211, %v2159
    %v2220 = vmul.f32 %v2212, %v2161
    %v2221 = vmul.f32 %v2213, %v2163
    %v2222 = vmul.f32 %v2214, %v2165
    %v2223 = vmul.f32 %v2215, %v2167
    %v2224 = vadd.f32 %v2216, 0.2548296
    %v2225 = vadd.f32 %v2217, 0.2548296
    %v2226 = vadd.f32 %v2218, 0.2548296
    %v2227 = vadd.f32 %v2219, 0.2548296
    %v2228 = vadd.f32 %v2220, 0.2548296
    %v2229 = vadd.f32 %v2221, 0.2548296
    %v2230 = vadd.f32 %v2222, 0.2548296
    %v2231 = vadd.f32 %v2223, 0.2548296
    %v2232 = vmul.f32 %v2224, %v2153
    %v2233 = vmul.f32 %v2225, %v2155
    %v2234 = vmul.f32 %v2226, %v2157
    %v2235 = vmul.f32 %v2227, %v2159
    %v2236 = vmul.f32 %v2228, %v2161
    %v2237 = vmul.f32 %v2229, %v2163
    %v2238 = vmul.f32 %v2230, %v2165
    %v2239 = vmul.f32 %v2231, %v2167
    %v2240 = vsub.f32 0.0, %v2128
    %v2241 = vsub.f32 0.0, %v2129
    %v2242 = vsub.f32 0.0, %v2130
    %v2243 = vsub.f32 0.0, %v2131
    %v2244 = vsub.f32 0.0, %v2132
    %v2245 = vsub.f32 0.0, %v2133
    %v2246 = vsub.f32 0.0, %v2134
    %v2247 = vsub.f32 0.0, %v2135
    %v2248 = vmul.f32 %v2240, %v2128
    %v2249 = vmul.f32 %v2241, %v2129
    %v2250 = vmul.f32 %v2242, %v2130
    %v2251 = vmul.f32 %v2243, %v2131
    %v2252 = vmul.f32 %v2244, %v2132
    %v2253 = vmul.f32 %v2245, %v2133
    %v2254 = vmul.f32 %v2246, %v2134
    %v2255 = vmul.f32 %v2247, %v2135
    %v2256 = vmul.f32 %v2248, 1.442695
    %v2257 = vpow.pop %v2256
    %v2258 = vmul.f32 %v2249, 1.442695
    %v2259 = vpow.pop %v2258
    %v2260 = vmul.f32 %v2250, 1.442695
    %v2261 = vpow.pop %v2260
    %v2262 = vmul.f32 %v2251, 1.442695
    %v2263 = vpow.pop %v2262
    %v2264 = vmul.f32 %v2252, 1.442695
    %v2265 = vpow.pop %v2264
    %v2266 = vmul.f32 %v2253, 1.442695
    %v2267 = vpow.pop %v2266
    %v2268 = vmul.f32 %v2254, 1.442695
    %v2269 = vpow.pop %v2268
    %v2270 = vmul.f32 %v2255, 1.442695
    %v2271 = vpow.pop %v2270
    %v2272 = vmul.f32 %v2232, %v2257
    %v2273 = vmul.f32 %v2233, %v2259
    %v2274 = vmul.f32 %v2234, %v2261
    %v2275 = vmul.f32 %v2235, %v2263
    %v2276 = vmul.f32 %v2236, %v2265
    %v2277 = vmul.f32 %v2237, %v2267
    %v2278 = vmul.f32 %v2238, %v2269
    %v2279 = vmul.f32 %v2239, %v2271
    %v2280 = vsub.f32 1.0, %v2272
    %v2281 = vsub.f32 1.0, %v2273
    %v2282 = vsub.f32 1.0, %v2274
    %v2283 = vsub.f32 1.0, %v2275
    %v2284 = vsub.f32 1.0, %v2276
    %v2285 = vsub.f32 1.0, %v2277
    %v2286 = vsub.f32 1.0, %v2278
    %v2287 = vsub.f32 1.0, %v2279
    %vm2288 = vcmp.lt.f32.partialorder %v2120, 0.0
    %vm2289 = vcmp.lt.f32.partialorder %v2121, 0.0
    %vm2290 = vcmp.lt.f32.partialorder %v2122, 0.0
    %vm2291 = vcmp.lt.f32.partialorder %v2123, 0.0
    %vm2292 = vcmp.lt.f32.partialorder %v2124, 0.0
    %vm2293 = vcmp.lt.f32.partialorder %v2125, 0.0
    %vm2294 = vcmp.lt.f32.partialorder %v2126, 0.0
    %vm2295 = vcmp.lt.f32.partialorder %v2127, 0.0
    %v2296 = vsub.f32 0.0, %v2280
    %v2297 = vsub.f32 0.0, %v2281
    %v2298 = vsub.f32 0.0, %v2282
    %v2299 = vsub.f32 0.0, %v2283
    %v2300 = vsub.f32 0.0, %v2284
    %v2301 = vsub.f32 0.0, %v2285
    %v2302 = vsub.f32 0.0, %v2286
    %v2303 = vsub.f32 0.0, %v2287
    %v2304 = vsel %vm2288, %v2296, %v2280
    %v2305 = vsel %vm2289, %v2297, %v2281
    %v2306 = vsel %vm2290, %v2298, %v2282
    %v2307 = vsel %vm2291, %v2299, %v2283
    %v2308 = vsel %vm2292, %v2300, %v2284
    %v2309 = vsel %vm2293, %v2301, %v2285
    %v2310 = vsel %vm2294, %v2302, %v2286
    %v2311 = vsel %vm2295, %v2303, %v2287
    %v2312 = vadd.f32 %v2304, 1.0
    %v2313 = vadd.f32 %v2305, 1.0
    %v2314 = vadd.f32 %v2306, 1.0
    %v2315 = vadd.f32 %v2307, 1.0
    %v2316 = vadd.f32 %v2308, 1.0
    %v2317 = vadd.f32 %v2309, 1.0
    %v2318 = vadd.f32 %v2310, 1.0
    %v2319 = vadd.f32 %v2311, 1.0
    %v2320 = vmul.f32 %v2112, %v2312
    %v2321 = vmul.f32 %v2113, %v2313
    %v2322 = vmul.f32 %v2114, %v2314
    %v2323 = vmul.f32 %v2115, %v2315
    %v2324 = vmul.f32 %v2116, %v2316
    %v2325 = vmul.f32 %v2117, %v2317
    %v2326 = vmul.f32 %v2118, %v2318
    %v2327 = vmul.f32 %v2119, %v2319
    %v2328 = vld [vmem:[%s12] sm:$0xf]
    %v2329 = vld [vmem:[%s12 + $0x4] sm:$0xf]
    %v2330 = vld [vmem:[%s12 + $0x8] sm:$0xf]
    %v2331 = vld [vmem:[%s12 + $0xc] sm:$0xf]
    %v2332 = vld [vmem:[%s12 + $0x10] sm:$0xf]
    %v2333 = vld [vmem:[%s12 + $0x14] sm:$0xf]
    %v2334 = vld [vmem:[%s12 + $0x18] sm:$0xf]
    %v2335 = vld [vmem:[%s12 + $0x1c] sm:$0xf]
    %v2336 = vld [vmem:[%s12 + $0x20] sm:$0xf]
    %v2337 = vld [vmem:[%s12 + $0x24] sm:$0xf]
    %v2338 = vld [vmem:[%s12 + $0x28] sm:$0xf]
    %v2339 = vld [vmem:[%s12 + $0x2c] sm:$0xf]
    %v2340 = vld [vmem:[%s12 + $0x30] sm:$0xf]
    %v2341 = vld [vmem:[%s12 + $0x34] sm:$0xf]
    %v2342 = vld [vmem:[%s12 + $0x38] sm:$0xf]
    %v2343 = vld [vmem:[%s12 + $0x3c] sm:$0xf]
    %v2344 = vld [vmem:[%s12 + $0x40] sm:$0xf]
    %v2345 = vld [vmem:[%s12 + $0x44] sm:$0xf]
    %v2346 = vld [vmem:[%s12 + $0x48] sm:$0xf]
    %v2347 = vld [vmem:[%s12 + $0x4c] sm:$0xf]
    %v2348 = vld [vmem:[%s12 + $0x50] sm:$0xf]
    %v2349 = vld [vmem:[%s12 + $0x54] sm:$0xf]
    %v2350 = vld [vmem:[%s12 + $0x58] sm:$0xf]
    %v2351 = vld [vmem:[%s12 + $0x5c] sm:$0xf]
    %v2352 = vld [vmem:[%s12 + $0x60] sm:$0xf]
    %v2353 = vld [vmem:[%s12 + $0x64] sm:$0xf]
    %v2354 = vld [vmem:[%s12 + $0x68] sm:$0xf]
    %v2355 = vld [vmem:[%s12 + $0x6c] sm:$0xf]
    %v2356 = vld [vmem:[%s12 + $0x70] sm:$0xf]
    %v2357 = vld [vmem:[%s12 + $0x74] sm:$0xf]
    %v2358 = vld [vmem:[%s12 + $0x78] sm:$0xf]
    %v2359 = vld [vmem:[%s12 + $0x7c] sm:$0xf]
    %v2360 = vpack.c.bf16 %v2322, %v2320
    %v2361 = vpack.c.bf16 %v2323, %v2321
    %v2362 = vpack.c.bf16 %v2326, %v2324
    %v2363 = vpack.c.bf16 %v2327, %v2325
    %v2364 = vld [vmem:[%s13] sm:$0x1]
    %v2365 = vlaneseq
    %v2366 = vshrl.u32 %v2365, 7
    %v2367 = vsub.s32 0, %v2366
    %v2368 = vrot.slane %v2364, %v2367
    %v2401 = vunpack.c.l.b16 %v2328
    %v2402 = vunpack.c.l.b16 %v2329
    %v2403 = vunpack.c.l.b16 %v2330
    %v2404 = vunpack.c.l.b16 %v2331
    %v2405 = vunpack.c.l.b16 %v2332
    %v2406 = vunpack.c.l.b16 %v2333
    %v2407 = vunpack.c.l.b16 %v2334
    %v2408 = vunpack.c.l.b16 %v2335
    %v2409 = vunpack.c.l.b16 %v2336
    %v2410 = vunpack.c.l.b16 %v2337
    %v2411 = vunpack.c.l.b16 %v2338
    %v2412 = vunpack.c.l.b16 %v2339
    %v2413 = vunpack.c.l.b16 %v2340
    %v2414 = vunpack.c.l.b16 %v2341
    %v2415 = vunpack.c.l.b16 %v2342
    %v2416 = vunpack.c.l.b16 %v2343
    %v2417 = vunpack.c.l.b16 %v2344
    %v2418 = vunpack.c.l.b16 %v2345
    %v2419 = vunpack.c.l.b16 %v2346
    %v2420 = vunpack.c.l.b16 %v2347
    %v2421 = vunpack.c.l.b16 %v2348
    %v2422 = vunpack.c.l.b16 %v2349
    %v2423 = vunpack.c.l.b16 %v2350
    %v2424 = vunpack.c.l.b16 %v2351
    %v2425 = vunpack.c.l.b16 %v2352
    %v2426 = vunpack.c.l.b16 %v2353
    %v2427 = vunpack.c.l.b16 %v2354
    %v2428 = vunpack.c.l.b16 %v2355
    %v2429 = vunpack.c.l.b16 %v2356
    %v2430 = vunpack.c.l.b16 %v2357
    %v2431 = vunpack.c.l.b16 %v2358
    %v2432 = vunpack.c.l.b16 %v2359
    %v2433 = vpack.c.b16 %v2402, %v2401
    %v2434 = vpack.c.b16 %v2404, %v2403
    %v2435 = vpack.c.b16 %v2406, %v2405
    %v2436 = vpack.c.b16 %v2408, %v2407
    %v2437 = vpack.c.b16 %v2410, %v2409
    %v2438 = vpack.c.b16 %v2412, %v2411
    %v2439 = vpack.c.b16 %v2414, %v2413
    %v2440 = vpack.c.b16 %v2416, %v2415
    %v2441 = vpack.c.b16 %v2418, %v2417
    %v2442 = vpack.c.b16 %v2420, %v2419
    %v2443 = vpack.c.b16 %v2422, %v2421
    %v2444 = vpack.c.b16 %v2424, %v2423
    %v2445 = vpack.c.b16 %v2426, %v2425
    %v2446 = vpack.c.b16 %v2428, %v2427
    %v2447 = vpack.c.b16 %v2430, %v2429
    %v2448 = vpack.c.b16 %v2432, %v2431
    %2465 = vmatprep.subr.bf16.mxu0 0
    %2466 = vmatpush1.bf16.msra.mxu0 %v2433
    %2467 = vmatprep.subr.bf16.mxu0 0
    %2468 = vmatpush1.bf16.msra.mxu0 %v2434
    %2469 = vmatprep.subr.bf16.mxu0 0
    %2470 = vmatpush1.bf16.msra.mxu0 %v2435
    %2471 = vmatprep.subr.bf16.mxu0 0
    %2472 = vmatpush1.bf16.msra.mxu0 %v2436
    %2473 = vmatprep.subr.bf16.mxu0 0
    %2474 = vmatpush1.bf16.msra.mxu0 %v2437
    %2475 = vmatprep.subr.bf16.mxu0 0
    %2476 = vmatpush1.bf16.msra.mxu0 %v2438
    %2477 = vmatprep.subr.bf16.mxu0 0
    %2478 = vmatpush1.bf16.msra.mxu0 %v2439
    %2479 = vmatprep.subr.bf16.mxu0 0
    %2480 = vmatpush1.bf16.msra.mxu0 %v2440
    %2481 = vmatprep.subr.bf16.mxu0 0
    %2482 = vmatpush1.bf16.msra.mxu0 %v2441
    %2483 = vmatprep.subr.bf16.mxu0 0
    %2484 = vmatpush1.bf16.msra.mxu0 %v2442
    %2485 = vmatprep.subr.bf16.mxu0 0
    %2486 = vmatpush1.bf16.msra.mxu0 %v2443
    %2487 = vmatprep.subr.bf16.mxu0 0
    %2488 = vmatpush1.bf16.msra.mxu0 %v2444
    %2489 = vmatprep.subr.bf16.mxu0 0
    %2490 = vmatpush1.bf16.msra.mxu0 %v2445
    %2491 = vmatprep.subr.bf16.mxu0 0
    %2492 = vmatpush1.bf16.msra.mxu0 %v2446
    %2493 = vmatprep.subr.bf16.mxu0 0
    %2494 = vmatpush1.bf16.msra.mxu0 %v2447
    %2495 = vmatprep.subr.bf16.mxu0 0
    %2496 = vmatpush1.bf16.msra.mxu0 %v2448
    %2497 = vmatprep.mubr.bf16.mxu0 %v2361
    %2498 = vmatmul.mubr.bf16.gmra.mrb[0].mxu0 %v2360
    %v2499 = vpop.f32.mrb[0].mxu0
    %v2500 = vadd.f32 %v2368, %v2499
    %v2501 = vpop.f32.mrb[0].mxu0
    %v2502 = vpop.f32.mrb[0].mxu0
    %v2503 = vadd.f32 %v2368, %v2502
    %v2504 = vpop.f32.mrb[0].mxu0
    %2505 = vmatprep.mubr.bf16.mxu0 %v2363
    %2506 = vmatmul.mubr.bf16.gmra.mrb[0].mxu0 %v2362
    %v2507 = vpop.f32.mrb[0].mxu0
    %v2508 = vadd.f32 %v2368, %v2507
    %v2509 = vpop.f32.mrb[0].mxu0
    %v2510 = vpop.f32.mrb[0].mxu0
    %v2511 = vadd.f32 %v2368, %v2510
    %v2512 = vpop.f32.mrb[0].mxu0
    %2513 = vdwg.mxu0
    %v2514 = vadd.f32 %v1945, %v2500
    %v2515 = vadd.f32 %v1946, %v2503
    %v2516 = vadd.f32 %v1947, %v2508
    %v2517 = vadd.f32 %v1948, %v2511
    %v2518 = vld [vmem:[%s14] sm:$0x1]
    %v2519 = vld [vmem:[%s15] sm:$0x1]
    %2520 = vadd.xlane.f32.xlu0 %v2514
    %v2521 = vpop.xlane.xlu0 %2520
    %2522 = vadd.xlane.f32.xlu0 %v2515
    %v2523 = vpop.xlane.xlu0 %2522
    %2524 = vadd.xlane.f32.xlu0 %v2516
    %v2525 = vpop.xlane.xlu0 %2524
    %2526 = vadd.xlane.f32.xlu0 %v2517
    %v2527 = vpop.xlane.xlu0 %2526
    %v2528 = vmul.f32 %v2521, %v95
    %v2529 = vmul.f32 %v2523, %v95
    %v2530 = vmul.f32 %v2525, %v95
    %v2531 = vmul.f32 %v2527, %v95
    %v2532 = vsub.f32 %v2514, %v2528
    %v2533 = vsub.f32 %v2515, %v2529
    %v2534 = vsub.f32 %v2516, %v2530
    %v2535 = vsub.f32 %v2517, %v2531
    %v2536 = vmul.f32 %v2532, %v2532
    %v2537 = vmul.f32 %v2533, %v2533
    %v2538 = vmul.f32 %v2534, %v2534
    %v2539 = vmul.f32 %v2535, %v2535
    %2540 = vadd.xlane.f32.xlu0 %v2536
    %v2541 = vpop.xlane.xlu0 %2540
    %2542 = vadd.xlane.f32.xlu0 %v2537
    %v2543 = vpop.xlane.xlu0 %2542
    %2544 = vadd.xlane.f32.xlu0 %v2538
    %v2545 = vpop.xlane.xlu0 %2544
    %2546 = vadd.xlane.f32.xlu0 %v2539
    %v2547 = vpop.xlane.xlu0 %2546
    %v2548 = vmul.f32 %v2541, %v95
    %v2549 = vmul.f32 %v2543, %v95
    %v2550 = vmul.f32 %v2545, %v95
    %v2551 = vmul.f32 %v2547, %v95
    %v2552 = vadd.f32 %v2548, 1e-12
    %v2553 = vadd.f32 %v2549, 1e-12
    %v2554 = vadd.f32 %v2550, 1e-12
    %v2555 = vadd.f32 %v2551, 1e-12
    %v2556 = vrsqrt.pop %v2552
    %v2557 = vrsqrt.pop %v2553
    %v2558 = vrsqrt.pop %v2554
    %v2559 = vrsqrt.pop %v2555
    %v2560 = vmul.f32 %v2532, %v2556
    %v2561 = vmul.f32 %v2533, %v2557
    %v2562 = vmul.f32 %v2534, %v2558
    %v2563 = vmul.f32 %v2535, %v2559
    %v2564 = vlaneseq
    %v2565 = vshrl.u32 %v2564, 7
    %v2566 = vsub.s32 0, %v2565
    %v2567 = vrot.slane %v2518, %v2566
    %v2568 = vmul.f32 %v2560, %v2567
    %v2569 = vmul.f32 %v2561, %v2567
    %v2570 = vmul.f32 %v2562, %v2567
    %v2571 = vmul.f32 %v2563, %v2567
    %v2572 = vlaneseq
    %v2573 = vshrl.u32 %v2572, 7
    %v2574 = vsub.s32 0, %v2573
    %v2575 = vrot.slane %v2519, %v2574
    %v2576 = vadd.f32 %v2568, %v2575
    %v2577 = vadd.f32 %v2569, %v2575
    %v2578 = vadd.f32 %v2570, %v2575
    %v2579 = vadd.f32 %v2571, %v2575
    %s2580 = scalar_lea.vmem %s4, 192
    %v2581 = vld [vmem:[%s2580] sm:$0xff]
    %v2582 = vld [vmem:[%s2580 + $0x8] sm:$0xf]
    %v2583 = vld [vmem:[%s2580 + $0xc] sm:$0xff]
    %v2584 = vld [vmem:[%s2580 + $0x14] sm:$0xf]
    %v2585 = vld [vmem:[%s2580 + $0x18] sm:$0xff]
    %v2586 = vld [vmem:[%s2580 + $0x20] sm:$0xf]
    %v2587 = vld [vmem:[%s2580 + $0x24] sm:$0xff]
    %v2588 = vld [vmem:[%s2580 + $0x2c] sm:$0xf]
    %v2589 = vld [vmem:[%s2580 + $0x30] sm:$0xff]
    %v2590 = vld [vmem:[%s2580 + $0x38] sm:$0xf]
    %v2591 = vld [vmem:[%s2580 + $0x3c] sm:$0xff]
    %v2592 = vld [vmem:[%s2580 + $0x44] sm:$0xf]
    %v2593 = vld [vmem:[%s2580 + $0x48] sm:$0xff]
    %v2594 = vld [vmem:[%s2580 + $0x50] sm:$0xf]
    %v2595 = vld [vmem:[%s2580 + $0x54] sm:$0xff]
    %v2596 = vld [vmem:[%s2580 + $0x5c] sm:$0xf]
    %v2597 = vld [vmem:[%s2580 + $0x60] sm:$0xff]
    %v2598 = vld [vmem:[%s2580 + $0x68] sm:$0xf]
    %v2599 = vld [vmem:[%s2580 + $0x6c] sm:$0xff]
    %v2600 = vld [vmem:[%s2580 + $0x74] sm:$0xf]
    %v2601 = vld [vmem:[%s2580 + $0x78] sm:$0xff]
    %v2602 = vld [vmem:[%s2580 + $0x80] sm:$0xf]
    %v2603 = vld [vmem:[%s2580 + $0x84] sm:$0xff]
    %v2604 = vld [vmem:[%s2580 + $0x8c] sm:$0xf]
    %v2605 = vld [vmem:[%s2580 + $0x90] sm:$0xff]
    %v2606 = vld [vmem:[%s2580 + $0x98] sm:$0xf]
    %v2607 = vld [vmem:[%s2580 + $0x9c] sm:$0xff]
    %v2608 = vld [vmem:[%s2580 + $0xa4] sm:$0xf]
    %v2609 = vld [vmem:[%s2580 + $0xa8] sm:$0xff]
    %v2610 = vld [vmem:[%s2580 + $0xb0] sm:$0xf]
    %v2611 = vld [vmem:[%s2580 + $0xb4] sm:$0xff]
    %v2612 = vld [vmem:[%s2580 + $0xbc] sm:$0xf]
    %s2613 = scalar_lea.vmem %s5, 1
    %v2614 = vld [vmem:[%s2613] ss:$2 sm:$0x7]
    %s2615 = scalar_lea.vmem %s6, 64
    %v2616 = vld [vmem:[%s2615] sm:$0xf]
    %v2617 = vld [vmem:[%s2615 + $0x4] sm:$0xf]
    %v2618 = vld [vmem:[%s2615 + $0x8] sm:$0xf]
    %v2619 = vld [vmem:[%s2615 + $0xc] sm:$0xf]
    %v2620 = vld [vmem:[%s2615 + $0x10] sm:$0xf]
    %v2621 = vld [vmem:[%s2615 + $0x14] sm:$0xf]
    %v2622 = vld [vmem:[%s2615 + $0x18] sm:$0xf]
    %v2623 = vld [vmem:[%s2615 + $0x1c] sm:$0xf]
    %v2624 = vld [vmem:[%s2615 + $0x20] sm:$0xf]
    %v2625 = vld [vmem:[%s2615 + $0x24] sm:$0xf]
    %v2626 = vld [vmem:[%s2615 + $0x28] sm:$0xf]
    %v2627 = vld [vmem:[%s2615 + $0x2c] sm:$0xf]
    %v2628 = vld [vmem:[%s2615 + $0x30] sm:$0xf]
    %v2629 = vld [vmem:[%s2615 + $0x34] sm:$0xf]
    %v2630 = vld [vmem:[%s2615 + $0x38] sm:$0xf]
    %v2631 = vld [vmem:[%s2615 + $0x3c] sm:$0xf]
    %v2632 = vld [vmem:[%s7 + $0x1] sm:$0x1]
    %v2633 = vpack.c.bf16 %v2577, %v2576
    %v2634 = vpack.c.bf16 %v2579, %v2578
    %v2636 = vlaneseq
    %v2637 = vshrl.u32 %v2636, 7
    %v2638 = vsub.s32 0, %v2637
    %v2639 = vrot.slane %v2614, %v2638
    %v2640 = vlaneseq
    %v2641 = vshrl.u32 %v2640, 7
    %v2642 = vsub.s32 1, %v2641
    %v2643 = vrot.slane %v2614, %v2642
    %v2644 = vlaneseq
    %v2645 = vshrl.u32 %v2644, 7
    %v2646 = vsub.s32 2, %v2645
    %v2647 = vrot.slane %v2614, %v2646
    %v2683 = vunpack.c.l.b16 %v2581
    %v2684 = vunpack.c.h.b16 %v2581
    %v2685 = vunpack.c.l.b16 %v2582
    %v2686 = vunpack.c.l.b16 %v2583
    %v2687 = vunpack.c.h.b16 %v2583
    %v2688 = vunpack.c.l.b16 %v2584
    %v2689 = vunpack.c.l.b16 %v2585
    %v2690 = vunpack.c.h.b16 %v2585
    %v2691 = vunpack.c.l.b16 %v2586
    %v2692 = vunpack.c.l.b16 %v2587
    %v2693 = vunpack.c.h.b16 %v2587
    %v2694 = vunpack.c.l.b16 %v2588
    %v2695 = vunpack.c.l.b16 %v2589
    %v2696 = vunpack.c.h.b16 %v2589
    %v2697 = vunpack.c.l.b16 %v2590
    %v2698 = vunpack.c.l.b16 %v2591
    %v2699 = vunpack.c.h.b16 %v2591
    %v2700 = vunpack.c.l.b16 %v2592
    %v2701 = vunpack.c.l.b16 %v2593
    %v2702 = vunpack.c.h.b16 %v2593
    %v2703 = vunpack.c.l.b16 %v2594
    %v2704 = vunpack.c.l.b16 %v2595
    %v2705 = vunpack.c.h.b16 %v2595
    %v2706 = vunpack.c.l.b16 %v2596
    %v2707 = vunpack.c.l.b16 %v2597
    %v2708 = vunpack.c.h.b16 %v2597
    %v2709 = vunpack.c.l.b16 %v2598
    %v2710 = vunpack.c.l.b16 %v2599
    %v2711 = vunpack.c.h.b16 %v2599
    %v2712 = vunpack.c.l.b16 %v2600
    %v2713 = vunpack.c.l.b16 %v2601
    %v2714 = vunpack.c.h.b16 %v2601
    %v2715 = vunpack.c.l.b16 %v2602
    %v2716 = vunpack.c.l.b16 %v2603
    %v2717 = vunpack.c.h.b16 %v2603
    %v2718 = vunpack.c.l.b16 %v2604
    %v2719 = vunpack.c.l.b16 %v2605
    %v2720 = vunpack.c.h.b16 %v2605
    %v2721 = vunpack.c.l.b16 %v2606
    %v2722 = vunpack.c.l.b16 %v2607
    %v2723 = vunpack.c.h.b16 %v2607
    %v2724 = vunpack.c.l.b16 %v2608
    %v2725 = vunpack.c.l.b16 %v2609
    %v2726 = vunpack.c.h.b16 %v2609
    %v2727 = vunpack.c.l.b16 %v2610
    %v2728 = vunpack.c.l.b16 %v2611
    %v2729 = vunpack.c.h.b16 %v2611
    %v2730 = vunpack.c.l.b16 %v2612
    %v2731 = vpack.c.b16 %v2686, %v2683
    %v2732 = vpack.c.b16 %v2687, %v2684
    %v2733 = vpack.c.b16 %v2688, %v2685
    %v2734 = vpack.c.b16 %v2692, %v2689
    %v2735 = vpack.c.b16 %v2693, %v2690
    %v2736 = vpack.c.b16 %v2694, %v2691
    %v2737 = vpack.c.b16 %v2698, %v2695
    %v2738 = vpack.c.b16 %v2699, %v2696
    %v2739 = vpack.c.b16 %v2700, %v2697
    %v2740 = vpack.c.b16 %v2704, %v2701
    %v2741 = vpack.c.b16 %v2705, %v2702
    %v2742 = vpack.c.b16 %v2706, %v2703
    %v2743 = vpack.c.b16 %v2710, %v2707
    %v2744 = vpack.c.b16 %v2711, %v2708
    %v2745 = vpack.c.b16 %v2712, %v2709
    %v2746 = vpack.c.b16 %v2716, %v2713
    %v2747 = vpack.c.b16 %v2717, %v2714
    %v2748 = vpack.c.b16 %v2718, %v2715
    %v2749 = vpack.c.b16 %v2722, %v2719
    %v2750 = vpack.c.b16 %v2723, %v2720
    %v2751 = vpack.c.b16 %v2724, %v2721
    %v2752 = vpack.c.b16 %v2728, %v2725
    %v2753 = vpack.c.b16 %v2729, %v2726
    %v2754 = vpack.c.b16 %v2730, %v2727
    %2779 = vmatprep.subr.bf16.mxu0 %v2732
    %2780 = vmatpush1.bf16.msra.mxu0 %v2731
    %2781 = vmatprep.subr.bf16.mxu0 %v2735
    %2782 = vmatpush1.bf16.msra.mxu0 %v2734
    %2783 = vmatprep.subr.bf16.mxu0 %v2738
    %2784 = vmatpush1.bf16.msra.mxu0 %v2737
    %2785 = vmatprep.subr.bf16.mxu0 %v2741
    %2786 = vmatpush1.bf16.msra.mxu0 %v2740
    %2787 = vmatprep.subr.bf16.mxu0 %v2744
    %2788 = vmatpush1.bf16.msra.mxu0 %v2743
    %2789 = vmatprep.subr.bf16.mxu0 %v2747
    %2790 = vmatpush1.bf16.msra.mxu0 %v2746
    %2791 = vmatprep.subr.bf16.mxu0 %v2750
    %2792 = vmatpush1.bf16.msra.mxu0 %v2749
    %2793 = vmatprep.subr.bf16.mxu0 %v2753
    %2794 = vmatpush1.bf16.msra.mxu0 %v2752
    %2795 = vmatprep.subr.bf16.mxu0 0
    %2796 = vmatpush1.bf16.msra.mxu0 0
    %2797 = vmatprep.subr.bf16.mxu0 0
    %2798 = vmatpush1.bf16.msra.mxu0 0
    %2799 = vmatprep.subr.bf16.mxu0 0
    %2800 = vmatpush1.bf16.msra.mxu0 0
    %2801 = vmatprep.subr.bf16.mxu0 0
    %2802 = vmatpush1.bf16.msra.mxu0 0
    %2803 = vmatprep.subr.bf16.mxu0 0
    %2804 = vmatpush1.bf16.msra.mxu0 0
    %2805 = vmatprep.subr.bf16.mxu0 0
    %2806 = vmatpush1.bf16.msra.mxu0 0
    %2807 = vmatprep.subr.bf16.mxu0 0
    %2808 = vmatpush1.bf16.msra.mxu0 0
    %2809 = vmatprep.subr.bf16.mxu0 0
    %2810 = vmatpush1.bf16.msra.mxu0 0
    %2811 = vmatprep.mubr.bf16.mxu0 0
    %2812 = vmatmul.mubr.bf16.gmra.mrb[0].mxu0 %v2633
    %v2813 = vpop.f32.mrb[0].mxu0
    %v2814 = vadd.f32 %v2639, %v2813
    %v2815 = vpop.f32.mrb[0].mxu0
    %v2816 = vadd.f32 %v2643, %v2815
    %v2817 = vpop.f32.mrb[0].mxu0
    %v2818 = vadd.f32 %v2639, %v2817
    %v2819 = vpop.f32.mrb[0].mxu0
    %v2820 = vadd.f32 %v2643, %v2819
    %2821 = vmatprep.mubr.bf16.mxu0 0
    %2822 = vmatmul.mubr.bf16.gmra.mrb[0].mxu0 %v2634
    %v2823 = vpop.f32.mrb[0].mxu0
    %v2824 = vadd.f32 %v2639, %v2823
    %v2825 = vpop.f32.mrb[0].mxu0
    %v2826 = vadd.f32 %v2643, %v2825
    %v2827 = vpop.f32.mrb[0].mxu0
    %v2828 = vadd.f32 %v2639, %v2827
    %v2829 = vpop.f32.mrb[0].mxu0
    %v2830 = vadd.f32 %v2643, %v2829
    %2831 = vdwg.mxu0
    %2832 = vmatprep.subr.bf16.mxu0 0
    %2833 = vmatpush1.bf16.msra.mxu0 %v2733
    %2834 = vmatprep.subr.bf16.mxu0 0
    %2835 = vmatpush1.bf16.msra.mxu0 %v2736
    %2836 = vmatprep.subr.bf16.mxu0 0
    %2837 = vmatpush1.bf16.msra.mxu0 %v2739
    %2838 = vmatprep.subr.bf16.mxu0 0
    %2839 = vmatpush1.bf16.msra.mxu0 %v2742
    %2840 = vmatprep.subr.bf16.mxu0 0
    %2841 = vmatpush1.bf16.msra.mxu0 %v2745
    %2842 = vmatprep.subr.bf16.mxu0 0
    %2843 = vmatpush1.bf16.msra.mxu0 %v2748
    %2844 = vmatprep.subr.bf16.mxu0 0
    %2845 = vmatpush1.bf16.msra.mxu0 %v2751
    %2846 = vmatprep.subr.bf16.mxu0 0
    %2847 = vmatpush1.bf16.msra.mxu0 %v2754
    %2848 = vmatprep.subr.bf16.mxu0 0
    %2849 = vmatpush1.bf16.msra.mxu0 0
    %2850 = vmatprep.subr.bf16.mxu0 0
    %2851 = vmatpush1.bf16.msra.mxu0 0
    %2852 = vmatprep.subr.bf16.mxu0 0
    %2853 = vmatpush1.bf16.msra.mxu0 0
    %2854 = vmatprep.subr.bf16.mxu0 0
    %2855 = vmatpush1.bf16.msra.mxu0 0
    %2856 = vmatprep.subr.bf16.mxu0 0
    %2857 = vmatpush1.bf16.msra.mxu0 0
    %2858 = vmatprep.subr.bf16.mxu0 0
    %2859 = vmatpush1.bf16.msra.mxu0 0
    %2860 = vmatprep.subr.bf16.mxu0 0
    %2861 = vmatpush1.bf16.msra.mxu0 0
    %2862 = vmatprep.subr.bf16.mxu0 0
    %2863 = vmatpush1.bf16.msra.mxu0 0
    %2864 = vmatprep.mubr.bf16.mxu0 0
    %2865 = vmatmul.mubr.bf16.gmra.mrb[0].mxu0 %v2633
    %v2866 = vpop.f32.mrb[0].mxu0
    %v2867 = vadd.f32 %v2647, %v2866
    %v2868 = vpop.f32.mrb[0].mxu0
    %v2869 = vpop.f32.mrb[0].mxu0
    %v2870 = vadd.f32 %v2647, %v2869
    %v2871 = vpop.f32.mrb[0].mxu0
    %2872 = vmatprep.mubr.bf16.mxu0 0
    %2873 = vmatmul.mubr.bf16.gmra.mrb[0].mxu0 %v2634
    %v2874 = vpop.f32.mrb[0].mxu0
    %v2875 = vadd.f32 %v2647, %v2874
    %v2876 = vpop.f32.mrb[0].mxu0
    %v2877 = vpop.f32.mrb[0].mxu0
    %v2878 = vadd.f32 %v2647, %v2877
    %v2879 = vpop.f32.mrb[0].mxu0
    %2880 = vdwg.mxu0
    %v2881 = vpack.c.bf16 %v2818, %v2814
    %v2882 = vpack.c.bf16 %v2820, %v2816
    %v2883 = vpack.c.bf16 %v2870, %v2867
    %v2885 = vsel %vm454, %v2881, 0
    %v2888 = vsel %vm454, %v2882, 0
    %2890 = vmatprep.subr.bf16.mxu0 0
    %2891 = vmatpush1.bf16.xpose.msra.mxu0 %v2888
    %2892 = vmatprep.subr.bf16.mxu0 0
    %2893 = vmatpush1.bf16.xpose.msra.mxu0 0
    %2894 = vmatprep.subr.bf16.mxu0 0
    %2895 = vmatpush1.bf16.xpose.msra.mxu0 0
    %2896 = vmatprep.subr.bf16.mxu0 0
    %2897 = vmatpush1.bf16.xpose.msra.mxu0 0
    %2898 = vmatprep.subr.bf16.mxu0 0
    %2899 = vmatpush1.bf16.xpose.msra.mxu0 0
    %2900 = vmatprep.subr.bf16.mxu0 0
    %2901 = vmatpush1.bf16.xpose.msra.mxu0 0
    %2902 = vmatprep.subr.bf16.mxu0 0
    %2903 = vmatpush1.bf16.xpose.msra.mxu0 0
    %2904 = vmatprep.subr.bf16.mxu0 0
    %2905 = vmatpush1.bf16.xpose.msra.mxu0 0
    %2906 = vmatprep.subr.bf16.mxu0 0
    %2907 = vmatpush1.bf16.xpose.msra.mxu0 0
    %2908 = vmatprep.subr.bf16.mxu0 0
    %2909 = vmatpush1.bf16.xpose.msra.mxu0 0
    %2910 = vmatprep.subr.bf16.mxu0 0
    %2911 = vmatpush1.bf16.xpose.msra.mxu0 0
    %2912 = vmatprep.subr.bf16.mxu0 0
    %2913 = vmatpush1.bf16.xpose.msra.mxu0 0
    %2914 = vmatprep.subr.bf16.mxu0 0
    %2915 = vmatpush1.bf16.xpose.msra.mxu0 0
    %2916 = vmatprep.subr.bf16.mxu0 0
    %2917 = vmatpush1.bf16.xpose.msra.mxu0 0
    %2918 = vmatprep.subr.bf16.mxu0 0
    %2919 = vmatpush1.bf16.xpose.msra.mxu0 0
    %2920 = vmatprep.subr.bf16.mxu0 0
    %2921 = vmatpush1.bf16.xpose.msra.mxu0 0
    %2922 = vmatprep.mubr.bf16.mxu0 0
    %2923 = vmatmul.mubr.bf16.gmra.mrb[0].mxu0 %v2885
    %v2924 = vpop.f32.mrb[0].mxu0
    %v2925 = vadd.f32 0.0, %v2924
    %v2926 = vpop.f32.mrb[0].mxu0
    %v2927 = vpop.f32.mrb[0].mxu0
    %v2928 = vadd.f32 0.0, %v2927
    %v2929 = vpop.f32.mrb[0].mxu0
    %2930 = vdwg.mxu0
    %v2931 = vmul.f32 %v2925, 0.17677669
    %v2932 = vmul.f32 %v2928, 0.17677669
    %v2933 = vadd.f32 %v2931, %v507
    %v2934 = vadd.f32 %v2932, %v507
    %v2935 = vsel %vm510, %v2933, -inf
    %2936 = vmax.xlane.f32.xlu0 %v2935
    %v2937 = vpop.xlane.xlu0 %2936
    %v2938 = vsel %vm510, %v2934, -inf
    %2939 = vmax.xlane.f32.xlu0 %v2938
    %v2940 = vpop.xlane.xlu0 %2939
    %v2941 = vsub.f32 %v2933, %v2937
    %v2942 = vsub.f32 %v2934, %v2940
    %v2943 = vmul.f32 %v2941, 1.442695
    %v2944 = vpow.pop %v2943
    %v2945 = vmul.f32 %v2942, 1.442695
    %v2946 = vpow.pop %v2945
    %v2947 = vsel %vm510, %v2944, 0.0
    %2948 = vadd.xlane.f32.xlu0 %v2947
    %v2949 = vpop.xlane.xlu0 %2948
    %v2950 = vsel %vm510, %v2946, 0.0
    %2951 = vadd.xlane.f32.xlu0 %v2950
    %v2952 = vpop.xlane.xlu0 %2951
    %v2953 = vrcp.pop %v2949
    %v2954 = vrcp.pop %v2952
    %v2955 = vmul.f32 %v2944, %v2953
    %v2956 = vmul.f32 %v2946, %v2954
    %v2957 = vpack.c.bf16 %v2956, %v2955
    %v2959 = vsel %vm510, %v2957, 0
    %2961 = vmatprep.subr.bf16.mxu0 0
    %2962 = vmatpush1.bf16.msra.mxu0 %v2883
    %2963 = vmatprep.subr.bf16.mxu0 0
    %2964 = vmatpush1.bf16.msra.mxu0 0
    %2965 = vmatprep.subr.bf16.mxu0 0
    %2966 = vmatpush1.bf16.msra.mxu0 0
    %2967 = vmatprep.subr.bf16.mxu0 0
    %2968 = vmatpush1.bf16.msra.mxu0 0
    %2969 = vmatprep.subr.bf16.mxu0 0
    %2970 = vmatpush1.bf16.msra.mxu0 0
    %2971 = vmatprep.subr.bf16.mxu0 0
    %2972 = vmatpush1.bf16.msra.mxu0 0
    %2973 = vmatprep.subr.bf16.mxu0 0
    %2974 = vmatpush1.bf16.msra.mxu0 0
    %2975 = vmatprep.subr.bf16.mxu0 0
    %2976 = vmatpush1.bf16.msra.mxu0 0
    %2977 = vmatprep.subr.bf16.mxu0 0
    %2978 = vmatpush1.bf16.msra.mxu0 0
    %2979 = vmatprep.subr.bf16.mxu0 0
    %2980 = vmatpush1.bf16.msra.mxu0 0
    %2981 = vmatprep.subr.bf16.mxu0 0
    %2982 = vmatpush1.bf16.msra.mxu0 0
    %2983 = vmatprep.subr.bf16.mxu0 0
    %2984 = vmatpush1.bf16.msra.mxu0 0
    %2985 = vmatprep.subr.bf16.mxu0 0
    %2986 = vmatpush1.bf16.msra.mxu0 0
    %2987 = vmatprep.subr.bf16.mxu0 0
    %2988 = vmatpush1.bf16.msra.mxu0 0
    %2989 = vmatprep.subr.bf16.mxu0 0
    %2990 = vmatpush1.bf16.msra.mxu0 0
    %2991 = vmatprep.subr.bf16.mxu0 0
    %2992 = vmatpush1.bf16.msra.mxu0 0
    %2993 = vmatprep.mubr.bf16.mxu0 0
    %2994 = vmatmul.mubr.bf16.gmra.mrb[0].mxu0 %v2959
    %v2995 = vpop.f32.mrb[0].mxu0
    %v2996 = vadd.f32 0.0, %v2995
    %v2997 = vpop.f32.mrb[0].mxu0
    %v2998 = vpop.f32.mrb[0].mxu0
    %v2999 = vadd.f32 0.0, %v2998
    %v3000 = vpop.f32.mrb[0].mxu0
    %3001 = vdwg.mxu0
    %v3002 = vpack.c.bf16 %v2999, %v2996
    %3004 = vrot.lane.b32.xlu0 %v2881, 96
    %v3005 = vpop.permute.xlu0 %3004
    %3007 = vrot.lane.b32.xlu0 %v2882, 96
    %v3008 = vpop.permute.xlu0 %3007
    %v3010 = vsel %vm454, %v3005, 0
    %v3013 = vsel %vm454, %v3008, 0
    %3015 = vmatprep.subr.bf16.mxu0 0
    %3016 = vmatpush1.bf16.xpose.msra.mxu0 %v3013
    %3017 = vmatprep.subr.bf16.mxu0 0
    %3018 = vmatpush1.bf16.xpose.msra.mxu0 0
    %3019 = vmatprep.subr.bf16.mxu0 0
    %3020 = vmatpush1.bf16.xpose.msra.mxu0 0
    %3021 = vmatprep.subr.bf16.mxu0 0
    %3022 = vmatpush1.bf16.xpose.msra.mxu0 0
    %3023 = vmatprep.subr.bf16.mxu0 0
    %3024 = vmatpush1.bf16.xpose.msra.mxu0 0
    %3025 = vmatprep.subr.bf16.mxu0 0
    %3026 = vmatpush1.bf16.xpose.msra.mxu0 0
    %3027 = vmatprep.subr.bf16.mxu0 0
    %3028 = vmatpush1.bf16.xpose.msra.mxu0 0
    %3029 = vmatprep.subr.bf16.mxu0 0
    %3030 = vmatpush1.bf16.xpose.msra.mxu0 0
    %3031 = vmatprep.subr.bf16.mxu0 0
    %3032 = vmatpush1.bf16.xpose.msra.mxu0 0
    %3033 = vmatprep.subr.bf16.mxu0 0
    %3034 = vmatpush1.bf16.xpose.msra.mxu0 0
    %3035 = vmatprep.subr.bf16.mxu0 0
    %3036 = vmatpush1.bf16.xpose.msra.mxu0 0
    %3037 = vmatprep.subr.bf16.mxu0 0
    %3038 = vmatpush1.bf16.xpose.msra.mxu0 0
    %3039 = vmatprep.subr.bf16.mxu0 0
    %3040 = vmatpush1.bf16.xpose.msra.mxu0 0
    %3041 = vmatprep.subr.bf16.mxu0 0
    %3042 = vmatpush1.bf16.xpose.msra.mxu0 0
    %3043 = vmatprep.subr.bf16.mxu0 0
    %3044 = vmatpush1.bf16.xpose.msra.mxu0 0
    %3045 = vmatprep.subr.bf16.mxu0 0
    %3046 = vmatpush1.bf16.xpose.msra.mxu0 0
    %3047 = vmatprep.mubr.bf16.mxu0 0
    %3048 = vmatmul.mubr.bf16.gmra.mrb[0].mxu0 %v3010
    %v3049 = vpop.f32.mrb[0].mxu0
    %v3050 = vadd.f32 0.0, %v3049
    %v3051 = vpop.f32.mrb[0].mxu0
    %v3052 = vpop.f32.mrb[0].mxu0
    %v3053 = vadd.f32 0.0, %v3052
    %v3054 = vpop.f32.mrb[0].mxu0
    %3055 = vdwg.mxu0
    %v3056 = vmul.f32 %v3050, 0.17677669
    %v3057 = vmul.f32 %v3053, 0.17677669
    %v3058 = vadd.f32 %v3056, %v507
    %v3059 = vadd.f32 %v3057, %v507
    %v3060 = vsel %vm510, %v3058, -inf
    %3061 = vmax.xlane.f32.xlu0 %v3060
    %v3062 = vpop.xlane.xlu0 %3061
    %v3063 = vsel %vm510, %v3059, -inf
    %3064 = vmax.xlane.f32.xlu0 %v3063
    %v3065 = vpop.xlane.xlu0 %3064
    %v3066 = vsub.f32 %v3058, %v3062
    %v3067 = vsub.f32 %v3059, %v3065
    %v3068 = vmul.f32 %v3066, 1.442695
    %v3069 = vpow.pop %v3068
    %v3070 = vmul.f32 %v3067, 1.442695
    %v3071 = vpow.pop %v3070
    %v3072 = vsel %vm510, %v3069, 0.0
    %3073 = vadd.xlane.f32.xlu0 %v3072
    %v3074 = vpop.xlane.xlu0 %3073
    %v3075 = vsel %vm510, %v3071, 0.0
    %3076 = vadd.xlane.f32.xlu0 %v3075
    %v3077 = vpop.xlane.xlu0 %3076
    %v3078 = vrcp.pop %v3074
    %v3079 = vrcp.pop %v3077
    %v3080 = vmul.f32 %v3069, %v3078
    %v3081 = vmul.f32 %v3071, %v3079
    %v3082 = vpack.c.bf16 %v3081, %v3080
    %3084 = vrot.lane.b32.xlu0 %v2883, 96
    %v3085 = vpop.permute.xlu0 %3084
    %v3088 = vsel %vm510, %v3082, 0
    %3090 = vmatprep.subr.bf16.mxu0 0
    %3091 = vmatpush1.bf16.msra.mxu0 %v3085
    %3092 = vmatprep.subr.bf16.mxu0 0
    %3093 = vmatpush1.bf16.msra.mxu0 0
    %3094 = vmatprep.subr.bf16.mxu0 0
    %3095 = vmatpush1.bf16.msra.mxu0 0
    %3096 = vmatprep.subr.bf16.mxu0 0
    %3097 = vmatpush1.bf16.msra.mxu0 0
    %3098 = vmatprep.subr.bf16.mxu0 0
    %3099 = vmatpush1.bf16.msra.mxu0 0
    %3100 = vmatprep.subr.bf16.mxu0 0
    %3101 = vmatpush1.bf16.msra.mxu0 0
    %3102 = vmatprep.subr.bf16.mxu0 0
    %3103 = vmatpush1.bf16.msra.mxu0 0
    %3104 = vmatprep.subr.bf16.mxu0 0
    %3105 = vmatpush1.bf16.msra.mxu0 0
    %3106 = vmatprep.subr.bf16.mxu0 0
    %3107 = vmatpush1.bf16.msra.mxu0 0
    %3108 = vmatprep.subr.bf16.mxu0 0
    %3109 = vmatpush1.bf16.msra.mxu0 0
    %3110 = vmatprep.subr.bf16.mxu0 0
    %3111 = vmatpush1.bf16.msra.mxu0 0
    %3112 = vmatprep.subr.bf16.mxu0 0
    %3113 = vmatpush1.bf16.msra.mxu0 0
    %3114 = vmatprep.subr.bf16.mxu0 0
    %3115 = vmatpush1.bf16.msra.mxu0 0
    %3116 = vmatprep.subr.bf16.mxu0 0
    %3117 = vmatpush1.bf16.msra.mxu0 0
    %3118 = vmatprep.subr.bf16.mxu0 0
    %3119 = vmatpush1.bf16.msra.mxu0 0
    %3120 = vmatprep.subr.bf16.mxu0 0
    %3121 = vmatpush1.bf16.msra.mxu0 0
    %3122 = vmatprep.mubr.bf16.mxu0 0
    %3123 = vmatmul.mubr.bf16.gmra.mrb[0].mxu0 %v3088
    %v3124 = vpop.f32.mrb[0].mxu0
    %v3125 = vadd.f32 0.0, %v3124
    %v3126 = vpop.f32.mrb[0].mxu0
    %v3127 = vpop.f32.mrb[0].mxu0
    %v3128 = vadd.f32 0.0, %v3127
    %v3129 = vpop.f32.mrb[0].mxu0
    %3130 = vdwg.mxu0
    %v3131 = vpack.c.bf16 %v3128, %v3125
    %v3136 = vunpack.c.l.b16 %v2620
    %v3137 = vunpack.c.l.b16 %v2621
    %v3138 = vunpack.c.l.b16 %v2622
    %v3139 = vunpack.c.l.b16 %v2623
    %v3140 = vpack.c.b16 %v3137, %v3136
    %v3141 = vpack.c.b16 %v3139, %v3138
    %v3145 = vsel %vm454, %v3131, 0
    %3147 = vmatprep.subr.bf16.mxu0 0
    %3148 = vmatpush1.bf16.msra.mxu0 %v3140
    %3149 = vmatprep.subr.bf16.mxu0 0
    %3150 = vmatpush1.bf16.msra.mxu0 %v3141
    %3151 = vmatprep.subr.bf16.mxu0 0
    %3152 = vmatpush1.bf16.msra.mxu0 0
    %3153 = vmatprep.subr.bf16.mxu0 0
    %3154 = vmatpush1.bf16.msra.mxu0 0
    %3155 = vmatprep.subr.bf16.mxu0 0
    %3156 = vmatpush1.bf16.msra.mxu0 0
    %3157 = vmatprep.subr.bf16.mxu0 0
    %3158 = vmatpush1.bf16.msra.mxu0 0
    %3159 = vmatprep.subr.bf16.mxu0 0
    %3160 = vmatpush1.bf16.msra.mxu0 0
    %3161 = vmatprep.subr.bf16.mxu0 0
    %3162 = vmatpush1.bf16.msra.mxu0 0
    %3163 = vmatprep.subr.bf16.mxu0 0
    %3164 = vmatpush1.bf16.msra.mxu0 0
    %3165 = vmatprep.subr.bf16.mxu0 0
    %3166 = vmatpush1.bf16.msra.mxu0 0
    %3167 = vmatprep.subr.bf16.mxu0 0
    %3168 = vmatpush1.bf16.msra.mxu0 0
    %3169 = vmatprep.subr.bf16.mxu0 0
    %3170 = vmatpush1.bf16.msra.mxu0 0
    %3171 = vmatprep.subr.bf16.mxu0 0
    %3172 = vmatpush1.bf16.msra.mxu0 0
    %3173 = vmatprep.subr.bf16.mxu0 0
    %3174 = vmatpush1.bf16.msra.mxu0 0
    %3175 = vmatprep.subr.bf16.mxu0 0
    %3176 = vmatpush1.bf16.msra.mxu0 0
    %3177 = vmatprep.subr.bf16.mxu0 0
    %3178 = vmatpush1.bf16.msra.mxu0 0
    %3179 = vmatprep.mubr.bf16.mxu0 0
    %3180 = vmatmul.mubr.bf16.gmra.mrb[0].mxu0 %v3145
    %v3181 = vpop.f32.mrb[0].mxu0
    %v3182 = vadd.f32 0.0, %v3181
    %v3183 = vpop.f32.mrb[0].mxu0
    %v3184 = vpop.f32.mrb[0].mxu0
    %v3185 = vadd.f32 0.0, %v3184
    %v3186 = vpop.f32.mrb[0].mxu0
    %3187 = vdwg.mxu0
    %v3192 = vunpack.c.l.b16 %v2616
    %v3193 = vunpack.c.l.b16 %v2617
    %v3194 = vunpack.c.l.b16 %v2618
    %v3195 = vunpack.c.l.b16 %v2619
    %v3196 = vpack.c.b16 %v3193, %v3192
    %v3197 = vpack.c.b16 %v3195, %v3194
    %v3201 = vsel %vm454, %v3002, 0
    %3203 = vmatprep.subr.bf16.mxu0 0
    %3204 = vmatpush1.bf16.msra.mxu0 %v3196
    %3205 = vmatprep.subr.bf16.mxu0 0
    %3206 = vmatpush1.bf16.msra.mxu0 %v3197
    %3207 = vmatprep.subr.bf16.mxu0 0
    %3208 = vmatpush1.bf16.msra.mxu0 0
    %3209 = vmatprep.subr.bf16.mxu0 0
    %3210 = vmatpush1.bf16.msra.mxu0 0
    %3211 = vmatprep.subr.bf16.mxu0 0
    %3212 = vmatpush1.bf16.msra.mxu0 0
    %3213 = vmatprep.subr.bf16.mxu0 0
    %3214 = vmatpush1.bf16.msra.mxu0 0
    %3215 = vmatprep.subr.bf16.mxu0 0
    %3216 = vmatpush1.bf16.msra.mxu0 0
    %3217 = vmatprep.subr.bf16.mxu0 0
    %3218 = vmatpush1.bf16.msra.mxu0 0
    %3219 = vmatprep.subr.bf16.mxu0 0
    %3220 = vmatpush1.bf16.msra.mxu0 0
    %3221 = vmatprep.subr.bf16.mxu0 0
    %3222 = vmatpush1.bf16.msra.mxu0 0
    %3223 = vmatprep.subr.bf16.mxu0 0
    %3224 = vmatpush1.bf16.msra.mxu0 0
    %3225 = vmatprep.subr.bf16.mxu0 0
    %3226 = vmatpush1.bf16.msra.mxu0 0
    %3227 = vmatprep.subr.bf16.mxu0 0
    %3228 = vmatpush1.bf16.msra.mxu0 0
    %3229 = vmatprep.subr.bf16.mxu0 0
    %3230 = vmatpush1.bf16.msra.mxu0 0
    %3231 = vmatprep.subr.bf16.mxu0 0
    %3232 = vmatpush1.bf16.msra.mxu0 0
    %3233 = vmatprep.subr.bf16.mxu0 0
    %3234 = vmatpush1.bf16.msra.mxu0 0
    %3235 = vmatprep.mubr.bf16.mxu0 0
    %3236 = vmatmul.mubr.bf16.gmra.mrb[0].mxu0 %v3201
    %v3237 = vpop.f32.mrb[0].mxu0
    %v3238 = vadd.f32 %v3182, %v3237
    %v3239 = vpop.f32.mrb[0].mxu0
    %v3240 = vpop.f32.mrb[0].mxu0
    %v3241 = vadd.f32 %v3185, %v3240
    %v3242 = vpop.f32.mrb[0].mxu0
    %3243 = vdwg.mxu0
    %3244 = vrot.lane.b32.xlu0 %v2881, 64
    %v3245 = vpop.permute.xlu0 %3244
    %3246 = vrot.lane.b32.xlu0 %v2882, 64
    %v3247 = vpop.permute.xlu0 %3246
    %v3249 = vsel %vm454, %v3245, 0
    %v3252 = vsel %vm454, %v3247, 0
    %3254 = vmatprep.subr.bf16.mxu0 0
    %3255 = vmatpush1.bf16.xpose.msra.mxu0 %v3252
    %3256 = vmatprep.subr.bf16.mxu0 0
    %3257 = vmatpush1.bf16.xpose.msra.mxu0 0
    %3258 = vmatprep.subr.bf16.mxu0 0
    %3259 = vmatpush1.bf16.xpose.msra.mxu0 0
    %3260 = vmatprep.subr.bf16.mxu0 0
    %3261 = vmatpush1.bf16.xpose.msra.mxu0 0
    %3262 = vmatprep.subr.bf16.mxu0 0
    %3263 = vmatpush1.bf16.xpose.msra.mxu0 0
    %3264 = vmatprep.subr.bf16.mxu0 0
    %3265 = vmatpush1.bf16.xpose.msra.mxu0 0
    %3266 = vmatprep.subr.bf16.mxu0 0
    %3267 = vmatpush1.bf16.xpose.msra.mxu0 0
    %3268 = vmatprep.subr.bf16.mxu0 0
    %3269 = vmatpush1.bf16.xpose.msra.mxu0 0
    %3270 = vmatprep.subr.bf16.mxu0 0
    %3271 = vmatpush1.bf16.xpose.msra.mxu0 0
    %3272 = vmatprep.subr.bf16.mxu0 0
    %3273 = vmatpush1.bf16.xpose.msra.mxu0 0
    %3274 = vmatprep.subr.bf16.mxu0 0
    %3275 = vmatpush1.bf16.xpose.msra.mxu0 0
    %3276 = vmatprep.subr.bf16.mxu0 0
    %3277 = vmatpush1.bf16.xpose.msra.mxu0 0
    %3278 = vmatprep.subr.bf16.mxu0 0
    %3279 = vmatpush1.bf16.xpose.msra.mxu0 0
    %3280 = vmatprep.subr.bf16.mxu0 0
    %3281 = vmatpush1.bf16.xpose.msra.mxu0 0
    %3282 = vmatprep.subr.bf16.mxu0 0
    %3283 = vmatpush1.bf16.xpose.msra.mxu0 0
    %3284 = vmatprep.subr.bf16.mxu0 0
    %3285 = vmatpush1.bf16.xpose.msra.mxu0 0
    %3286 = vmatprep.mubr.bf16.mxu0 0
    %3287 = vmatmul.mubr.bf16.gmra.mrb[0].mxu0 %v3249
    %v3288 = vpop.f32.mrb[0].mxu0
    %v3289 = vadd.f32 0.0, %v3288
    %v3290 = vpop.f32.mrb[0].mxu0
    %v3291 = vpop.f32.mrb[0].mxu0
    %v3292 = vadd.f32 0.0, %v3291
    %v3293 = vpop.f32.mrb[0].mxu0
    %3294 = vdwg.mxu0
    %v3295 = vmul.f32 %v3289, 0.17677669
    %v3296 = vmul.f32 %v3292, 0.17677669
    %v3297 = vadd.f32 %v3295, %v507
    %v3298 = vadd.f32 %v3296, %v507
    %v3299 = vsel %vm510, %v3297, -inf
    %3300 = vmax.xlane.f32.xlu0 %v3299
    %v3301 = vpop.xlane.xlu0 %3300
    %v3302 = vsel %vm510, %v3298, -inf
    %3303 = vmax.xlane.f32.xlu0 %v3302
    %v3304 = vpop.xlane.xlu0 %3303
    %v3305 = vsub.f32 %v3297, %v3301
    %v3306 = vsub.f32 %v3298, %v3304
    %v3307 = vmul.f32 %v3305, 1.442695
    %v3308 = vpow.pop %v3307
    %v3309 = vmul.f32 %v3306, 1.442695
    %v3310 = vpow.pop %v3309
    %v3311 = vsel %vm510, %v3308, 0.0
    %3312 = vadd.xlane.f32.xlu0 %v3311
    %v3313 = vpop.xlane.xlu0 %3312
    %v3314 = vsel %vm510, %v3310, 0.0
    %3315 = vadd.xlane.f32.xlu0 %v3314
    %v3316 = vpop.xlane.xlu0 %3315
    %v3317 = vrcp.pop %v3313
    %v3318 = vrcp.pop %v3316
    %v3319 = vmul.f32 %v3308, %v3317
    %v3320 = vmul.f32 %v3310, %v3318
    %v3321 = vpack.c.bf16 %v3320, %v3319
    %3322 = vrot.lane.b32.xlu0 %v2883, 64
    %v3323 = vpop.permute.xlu0 %3322
    %v3326 = vsel %vm510, %v3321, 0
    %3328 = vmatprep.subr.bf16.mxu0 0
    %3329 = vmatpush1.bf16.msra.mxu0 %v3323
    %3330 = vmatprep.subr.bf16.mxu0 0
    %3331 = vmatpush1.bf16.msra.mxu0 0
    %3332 = vmatprep.subr.bf16.mxu0 0
    %3333 = vmatpush1.bf16.msra.mxu0 0
    %3334 = vmatprep.subr.bf16.mxu0 0
    %3335 = vmatpush1.bf16.msra.mxu0 0
    %3336 = vmatprep.subr.bf16.mxu0 0
    %3337 = vmatpush1.bf16.msra.mxu0 0
    %3338 = vmatprep.subr.bf16.mxu0 0
    %3339 = vmatpush1.bf16.msra.mxu0 0
    %3340 = vmatprep.subr.bf16.mxu0 0
    %3341 = vmatpush1.bf16.msra.mxu0 0
    %3342 = vmatprep.subr.bf16.mxu0 0
    %3343 = vmatpush1.bf16.msra.mxu0 0
    %3344 = vmatprep.subr.bf16.mxu0 0
    %3345 = vmatpush1.bf16.msra.mxu0 0
    %3346 = vmatprep.subr.bf16.mxu0 0
    %3347 = vmatpush1.bf16.msra.mxu0 0
    %3348 = vmatprep.subr.bf16.mxu0 0
    %3349 = vmatpush1.bf16.msra.mxu0 0
    %3350 = vmatprep.subr.bf16.mxu0 0
    %3351 = vmatpush1.bf16.msra.mxu0 0
    %3352 = vmatprep.subr.bf16.mxu0 0
    %3353 = vmatpush1.bf16.msra.mxu0 0
    %3354 = vmatprep.subr.bf16.mxu0 0
    %3355 = vmatpush1.bf16.msra.mxu0 0
    %3356 = vmatprep.subr.bf16.mxu0 0
    %3357 = vmatpush1.bf16.msra.mxu0 0
    %3358 = vmatprep.subr.bf16.mxu0 0
    %3359 = vmatpush1.bf16.msra.mxu0 0
    %3360 = vmatprep.mubr.bf16.mxu0 0
    %3361 = vmatmul.mubr.bf16.gmra.mrb[0].mxu0 %v3326
    %v3362 = vpop.f32.mrb[0].mxu0
    %v3363 = vadd.f32 0.0, %v3362
    %v3364 = vpop.f32.mrb[0].mxu0
    %v3365 = vpop.f32.mrb[0].mxu0
    %v3366 = vadd.f32 0.0, %v3365
    %v3367 = vpop.f32.mrb[0].mxu0
    %3368 = vdwg.mxu0
    %v3369 = vpack.c.bf16 %v3366, %v3363
    %v3374 = vunpack.c.l.b16 %v2624
    %v3375 = vunpack.c.l.b16 %v2625
    %v3376 = vunpack.c.l.b16 %v2626
    %v3377 = vunpack.c.l.b16 %v2627
    %v3378 = vpack.c.b16 %v3375, %v3374
    %v3379 = vpack.c.b16 %v3377, %v3376
    %v3383 = vsel %vm454, %v3369, 0
    %3385 = vmatprep.subr.bf16.mxu0 0
    %3386 = vmatpush1.bf16.msra.mxu0 %v3378
    %3387 = vmatprep.subr.bf16.mxu0 0
    %3388 = vmatpush1.bf16.msra.mxu0 %v3379
    %3389 = vmatprep.subr.bf16.mxu0 0
    %3390 = vmatpush1.bf16.msra.mxu0 0
    %3391 = vmatprep.subr.bf16.mxu0 0
    %3392 = vmatpush1.bf16.msra.mxu0 0
    %3393 = vmatprep.subr.bf16.mxu0 0
    %3394 = vmatpush1.bf16.msra.mxu0 0
    %3395 = vmatprep.subr.bf16.mxu0 0
    %3396 = vmatpush1.bf16.msra.mxu0 0
    %3397 = vmatprep.subr.bf16.mxu0 0
    %3398 = vmatpush1.bf16.msra.mxu0 0
    %3399 = vmatprep.subr.bf16.mxu0 0
    %3400 = vmatpush1.bf16.msra.mxu0 0
    %3401 = vmatprep.subr.bf16.mxu0 0
    %3402 = vmatpush1.bf16.msra.mxu0 0
    %3403 = vmatprep.subr.bf16.mxu0 0
    %3404 = vmatpush1.bf16.msra.mxu0 0
    %3405 = vmatprep.subr.bf16.mxu0 0
    %3406 = vmatpush1.bf16.msra.mxu0 0
    %3407 = vmatprep.subr.bf16.mxu0 0
    %3408 = vmatpush1.bf16.msra.mxu0 0
    %3409 = vmatprep.subr.bf16.mxu0 0
    %3410 = vmatpush1.bf16.msra.mxu0 0
    %3411 = vmatprep.subr.bf16.mxu0 0
    %3412 = vmatpush1.bf16.msra.mxu0 0
    %3413 = vmatprep.subr.bf16.mxu0 0
    %3414 = vmatpush1.bf16.msra.mxu0 0
    %3415 = vmatprep.subr.bf16.mxu0 0
    %3416 = vmatpush1.bf16.msra.mxu0 0
    %3417 = vmatprep.mubr.bf16.mxu0 0
    %3418 = vmatmul.mubr.bf16.gmra.mrb[0].mxu0 %v3383
    %v3419 = vpop.f32.mrb[0].mxu0
    %v3420 = vadd.f32 0.0, %v3419
    %v3421 = vpop.f32.mrb[0].mxu0
    %v3422 = vpop.f32.mrb[0].mxu0
    %v3423 = vadd.f32 0.0, %v3422
    %v3424 = vpop.f32.mrb[0].mxu0
    %3425 = vdwg.mxu0
    %v3426 = vadd.f32 %v3238, %v3420
    %v3427 = vadd.f32 %v3241, %v3423
    %3428 = vrot.lane.b32.xlu0 %v2881, 32
    %v3429 = vpop.permute.xlu0 %3428
    %3430 = vrot.lane.b32.xlu0 %v2882, 32
    %v3431 = vpop.permute.xlu0 %3430
    %v3433 = vsel %vm454, %v3429, 0
    %v3436 = vsel %vm454, %v3431, 0
    %3438 = vmatprep.subr.bf16.mxu0 0
    %3439 = vmatpush1.bf16.xpose.msra.mxu0 %v3436
    %3440 = vmatprep.subr.bf16.mxu0 0
    %3441 = vmatpush1.bf16.xpose.msra.mxu0 0
    %3442 = vmatprep.subr.bf16.mxu0 0
    %3443 = vmatpush1.bf16.xpose.msra.mxu0 0
    %3444 = vmatprep.subr.bf16.mxu0 0
    %3445 = vmatpush1.bf16.xpose.msra.mxu0 0
    %3446 = vmatprep.subr.bf16.mxu0 0
    %3447 = vmatpush1.bf16.xpose.msra.mxu0 0
    %3448 = vmatprep.subr.bf16.mxu0 0
    %3449 = vmatpush1.bf16.xpose.msra.mxu0 0
    %3450 = vmatprep.subr.bf16.mxu0 0
    %3451 = vmatpush1.bf16.xpose.msra.mxu0 0
    %3452 = vmatprep.subr.bf16.mxu0 0
    %3453 = vmatpush1.bf16.xpose.msra.mxu0 0
    %3454 = vmatprep.subr.bf16.mxu0 0
    %3455 = vmatpush1.bf16.xpose.msra.mxu0 0
    %3456 = vmatprep.subr.bf16.mxu0 0
    %3457 = vmatpush1.bf16.xpose.msra.mxu0 0
    %3458 = vmatprep.subr.bf16.mxu0 0
    %3459 = vmatpush1.bf16.xpose.msra.mxu0 0
    %3460 = vmatprep.subr.bf16.mxu0 0
    %3461 = vmatpush1.bf16.xpose.msra.mxu0 0
    %3462 = vmatprep.subr.bf16.mxu0 0
    %3463 = vmatpush1.bf16.xpose.msra.mxu0 0
    %3464 = vmatprep.subr.bf16.mxu0 0
    %3465 = vmatpush1.bf16.xpose.msra.mxu0 0
    %3466 = vmatprep.subr.bf16.mxu0 0
    %3467 = vmatpush1.bf16.xpose.msra.mxu0 0
    %3468 = vmatprep.subr.bf16.mxu0 0
    %3469 = vmatpush1.bf16.xpose.msra.mxu0 0
    %3470 = vmatprep.mubr.bf16.mxu0 0
    %3471 = vmatmul.mubr.bf16.gmra.mrb[0].mxu0 %v3433
    %v3472 = vpop.f32.mrb[0].mxu0
    %v3473 = vadd.f32 0.0, %v3472
    %v3474 = vpop.f32.mrb[0].mxu0
    %v3475 = vpop.f32.mrb[0].mxu0
    %v3476 = vadd.f32 0.0, %v3475
    %v3477 = vpop.f32.mrb[0].mxu0
    %3478 = vdwg.mxu0
    %v3479 = vmul.f32 %v3473, 0.17677669
    %v3480 = vmul.f32 %v3476, 0.17677669
    %v3481 = vadd.f32 %v3479, %v507
    %v3482 = vadd.f32 %v3480, %v507
    %v3483 = vsel %vm510, %v3481, -inf
    %3484 = vmax.xlane.f32.xlu0 %v3483
    %v3485 = vpop.xlane.xlu0 %3484
    %v3486 = vsel %vm510, %v3482, -inf
    %3487 = vmax.xlane.f32.xlu0 %v3486
    %v3488 = vpop.xlane.xlu0 %3487
    %v3489 = vsub.f32 %v3481, %v3485
    %v3490 = vsub.f32 %v3482, %v3488
    %v3491 = vmul.f32 %v3489, 1.442695
    %v3492 = vpow.pop %v3491
    %v3493 = vmul.f32 %v3490, 1.442695
    %v3494 = vpow.pop %v3493
    %v3495 = vsel %vm510, %v3492, 0.0
    %3496 = vadd.xlane.f32.xlu0 %v3495
    %v3497 = vpop.xlane.xlu0 %3496
    %v3498 = vsel %vm510, %v3494, 0.0
    %3499 = vadd.xlane.f32.xlu0 %v3498
    %v3500 = vpop.xlane.xlu0 %3499
    %v3501 = vrcp.pop %v3497
    %v3502 = vrcp.pop %v3500
    %v3503 = vmul.f32 %v3492, %v3501
    %v3504 = vmul.f32 %v3494, %v3502
    %v3505 = vpack.c.bf16 %v3504, %v3503
    %3506 = vrot.lane.b32.xlu0 %v2883, 32
    %v3507 = vpop.permute.xlu0 %3506
    %v3510 = vsel %vm510, %v3505, 0
    %3512 = vmatprep.subr.bf16.mxu0 0
    %3513 = vmatpush1.bf16.msra.mxu0 %v3507
    %3514 = vmatprep.subr.bf16.mxu0 0
    %3515 = vmatpush1.bf16.msra.mxu0 0
    %3516 = vmatprep.subr.bf16.mxu0 0
    %3517 = vmatpush1.bf16.msra.mxu0 0
    %3518 = vmatprep.subr.bf16.mxu0 0
    %3519 = vmatpush1.bf16.msra.mxu0 0
    %3520 = vmatprep.subr.bf16.mxu0 0
    %3521 = vmatpush1.bf16.msra.mxu0 0
    %3522 = vmatprep.subr.bf16.mxu0 0
    %3523 = vmatpush1.bf16.msra.mxu0 0
    %3524 = vmatprep.subr.bf16.mxu0 0
    %3525 = vmatpush1.bf16.msra.mxu0 0
    %3526 = vmatprep.subr.bf16.mxu0 0
    %3527 = vmatpush1.bf16.msra.mxu0 0
    %3528 = vmatprep.subr.bf16.mxu0 0
    %3529 = vmatpush1.bf16.msra.mxu0 0
    %3530 = vmatprep.subr.bf16.mxu0 0
    %3531 = vmatpush1.bf16.msra.mxu0 0
    %3532 = vmatprep.subr.bf16.mxu0 0
    %3533 = vmatpush1.bf16.msra.mxu0 0
    %3534 = vmatprep.subr.bf16.mxu0 0
    %3535 = vmatpush1.bf16.msra.mxu0 0
    %3536 = vmatprep.subr.bf16.mxu0 0
    %3537 = vmatpush1.bf16.msra.mxu0 0
    %3538 = vmatprep.subr.bf16.mxu0 0
    %3539 = vmatpush1.bf16.msra.mxu0 0
    %3540 = vmatprep.subr.bf16.mxu0 0
    %3541 = vmatpush1.bf16.msra.mxu0 0
    %3542 = vmatprep.subr.bf16.mxu0 0
    %3543 = vmatpush1.bf16.msra.mxu0 0
    %3544 = vmatprep.mubr.bf16.mxu0 0
    %3545 = vmatmul.mubr.bf16.gmra.mrb[0].mxu0 %v3510
    %v3546 = vpop.f32.mrb[0].mxu0
    %v3547 = vadd.f32 0.0, %v3546
    %v3548 = vpop.f32.mrb[0].mxu0
    %v3549 = vpop.f32.mrb[0].mxu0
    %v3550 = vadd.f32 0.0, %v3549
    %v3551 = vpop.f32.mrb[0].mxu0
    %3552 = vdwg.mxu0
    %v3553 = vpack.c.bf16 %v3550, %v3547
    %v3558 = vunpack.c.l.b16 %v2628
    %v3559 = vunpack.c.l.b16 %v2629
    %v3560 = vunpack.c.l.b16 %v2630
    %v3561 = vunpack.c.l.b16 %v2631
    %v3562 = vpack.c.b16 %v3559, %v3558
    %v3563 = vpack.c.b16 %v3561, %v3560
    %v3567 = vsel %vm454, %v3553, 0
    %3569 = vmatprep.subr.bf16.mxu0 0
    %3570 = vmatpush1.bf16.msra.mxu0 %v3562
    %3571 = vmatprep.subr.bf16.mxu0 0
    %3572 = vmatpush1.bf16.msra.mxu0 %v3563
    %3573 = vmatprep.subr.bf16.mxu0 0
    %3574 = vmatpush1.bf16.msra.mxu0 0
    %3575 = vmatprep.subr.bf16.mxu0 0
    %3576 = vmatpush1.bf16.msra.mxu0 0
    %3577 = vmatprep.subr.bf16.mxu0 0
    %3578 = vmatpush1.bf16.msra.mxu0 0
    %3579 = vmatprep.subr.bf16.mxu0 0
    %3580 = vmatpush1.bf16.msra.mxu0 0
    %3581 = vmatprep.subr.bf16.mxu0 0
    %3582 = vmatpush1.bf16.msra.mxu0 0
    %3583 = vmatprep.subr.bf16.mxu0 0
    %3584 = vmatpush1.bf16.msra.mxu0 0
    %3585 = vmatprep.subr.bf16.mxu0 0
    %3586 = vmatpush1.bf16.msra.mxu0 0
    %3587 = vmatprep.subr.bf16.mxu0 0
    %3588 = vmatpush1.bf16.msra.mxu0 0
    %3589 = vmatprep.subr.bf16.mxu0 0
    %3590 = vmatpush1.bf16.msra.mxu0 0
    %3591 = vmatprep.subr.bf16.mxu0 0
    %3592 = vmatpush1.bf16.msra.mxu0 0
    %3593 = vmatprep.subr.bf16.mxu0 0
    %3594 = vmatpush1.bf16.msra.mxu0 0
    %3595 = vmatprep.subr.bf16.mxu0 0
    %3596 = vmatpush1.bf16.msra.mxu0 0
    %3597 = vmatprep.subr.bf16.mxu0 0
    %3598 = vmatpush1.bf16.msra.mxu0 0
    %3599 = vmatprep.subr.bf16.mxu0 0
    %3600 = vmatpush1.bf16.msra.mxu0 0
    %3601 = vmatprep.mubr.bf16.mxu0 0
    %3602 = vmatmul.mubr.bf16.gmra.mrb[0].mxu0 %v3567
    %v3603 = vpop.f32.mrb[0].mxu0
    %v3604 = vadd.f32 0.0, %v3603
    %v3605 = vpop.f32.mrb[0].mxu0
    %v3606 = vpop.f32.mrb[0].mxu0
    %v3607 = vadd.f32 0.0, %v3606
    %v3608 = vpop.f32.mrb[0].mxu0
    %3609 = vdwg.mxu0
    %v3610 = vadd.f32 %v3426, %v3604
    %v3611 = vadd.f32 %v3427, %v3607
    %v3612 = vpack.c.bf16 %v2828, %v2824
    %v3613 = vpack.c.bf16 %v2830, %v2826
    %v3614 = vpack.c.bf16 %v2878, %v2875
    %v3616 = vsel %vm454, %v3612, 0
    %v3619 = vsel %vm454, %v3613, 0
    %3621 = vmatprep.subr.bf16.mxu0 0
    %3622 = vmatpush1.bf16.xpose.msra.mxu0 %v3619
    %3623 = vmatprep.subr.bf16.mxu0 0
    %3624 = vmatpush1.bf16.xpose.msra.mxu0 0
    %3625 = vmatprep.subr.bf16.mxu0 0
    %3626 = vmatpush1.bf16.xpose.msra.mxu0 0
    %3627 = vmatprep.subr.bf16.mxu0 0
    %3628 = vmatpush1.bf16.xpose.msra.mxu0 0
    %3629 = vmatprep.subr.bf16.mxu0 0
    %3630 = vmatpush1.bf16.xpose.msra.mxu0 0
    %3631 = vmatprep.subr.bf16.mxu0 0
    %3632 = vmatpush1.bf16.xpose.msra.mxu0 0
    %3633 = vmatprep.subr.bf16.mxu0 0
    %3634 = vmatpush1.bf16.xpose.msra.mxu0 0
    %3635 = vmatprep.subr.bf16.mxu0 0
    %3636 = vmatpush1.bf16.xpose.msra.mxu0 0
    %3637 = vmatprep.subr.bf16.mxu0 0
    %3638 = vmatpush1.bf16.xpose.msra.mxu0 0
    %3639 = vmatprep.subr.bf16.mxu0 0
    %3640 = vmatpush1.bf16.xpose.msra.mxu0 0
    %3641 = vmatprep.subr.bf16.mxu0 0
    %3642 = vmatpush1.bf16.xpose.msra.mxu0 0
    %3643 = vmatprep.subr.bf16.mxu0 0
    %3644 = vmatpush1.bf16.xpose.msra.mxu0 0
    %3645 = vmatprep.subr.bf16.mxu0 0
    %3646 = vmatpush1.bf16.xpose.msra.mxu0 0
    %3647 = vmatprep.subr.bf16.mxu0 0
    %3648 = vmatpush1.bf16.xpose.msra.mxu0 0
    %3649 = vmatprep.subr.bf16.mxu0 0
    %3650 = vmatpush1.bf16.xpose.msra.mxu0 0
    %3651 = vmatprep.subr.bf16.mxu0 0
    %3652 = vmatpush1.bf16.xpose.msra.mxu0 0
    %3653 = vmatprep.mubr.bf16.mxu0 0
    %3654 = vmatmul.mubr.bf16.gmra.mrb[0].mxu0 %v3616
    %v3655 = vpop.f32.mrb[0].mxu0
    %v3656 = vadd.f32 0.0, %v3655
    %v3657 = vpop.f32.mrb[0].mxu0
    %v3658 = vpop.f32.mrb[0].mxu0
    %v3659 = vadd.f32 0.0, %v3658
    %v3660 = vpop.f32.mrb[0].mxu0
    %3661 = vdwg.mxu0
    %v3662 = vmul.f32 %v3656, 0.17677669
    %v3663 = vmul.f32 %v3659, 0.17677669
    %v3664 = vadd.f32 %v3662, %v1243
    %v3665 = vadd.f32 %v3663, %v1243
    %v3666 = vsel %vm510, %v3664, -inf
    %3667 = vmax.xlane.f32.xlu0 %v3666
    %v3668 = vpop.xlane.xlu0 %3667
    %v3669 = vsel %vm510, %v3665, -inf
    %3670 = vmax.xlane.f32.xlu0 %v3669
    %v3671 = vpop.xlane.xlu0 %3670
    %v3672 = vsub.f32 %v3664, %v3668
    %v3673 = vsub.f32 %v3665, %v3671
    %v3674 = vmul.f32 %v3672, 1.442695
    %v3675 = vpow.pop %v3674
    %v3676 = vmul.f32 %v3673, 1.442695
    %v3677 = vpow.pop %v3676
    %v3678 = vsel %vm510, %v3675, 0.0
    %3679 = vadd.xlane.f32.xlu0 %v3678
    %v3680 = vpop.xlane.xlu0 %3679
    %v3681 = vsel %vm510, %v3677, 0.0
    %3682 = vadd.xlane.f32.xlu0 %v3681
    %v3683 = vpop.xlane.xlu0 %3682
    %v3684 = vrcp.pop %v3680
    %v3685 = vrcp.pop %v3683
    %v3686 = vmul.f32 %v3675, %v3684
    %v3687 = vmul.f32 %v3677, %v3685
    %v3688 = vpack.c.bf16 %v3687, %v3686
    %v3690 = vsel %vm510, %v3688, 0
    %3692 = vmatprep.subr.bf16.mxu0 0
    %3693 = vmatpush1.bf16.msra.mxu0 %v3614
    %3694 = vmatprep.subr.bf16.mxu0 0
    %3695 = vmatpush1.bf16.msra.mxu0 0
    %3696 = vmatprep.subr.bf16.mxu0 0
    %3697 = vmatpush1.bf16.msra.mxu0 0
    %3698 = vmatprep.subr.bf16.mxu0 0
    %3699 = vmatpush1.bf16.msra.mxu0 0
    %3700 = vmatprep.subr.bf16.mxu0 0
    %3701 = vmatpush1.bf16.msra.mxu0 0
    %3702 = vmatprep.subr.bf16.mxu0 0
    %3703 = vmatpush1.bf16.msra.mxu0 0
    %3704 = vmatprep.subr.bf16.mxu0 0
    %3705 = vmatpush1.bf16.msra.mxu0 0
    %3706 = vmatprep.subr.bf16.mxu0 0
    %3707 = vmatpush1.bf16.msra.mxu0 0
    %3708 = vmatprep.subr.bf16.mxu0 0
    %3709 = vmatpush1.bf16.msra.mxu0 0
    %3710 = vmatprep.subr.bf16.mxu0 0
    %3711 = vmatpush1.bf16.msra.mxu0 0
    %3712 = vmatprep.subr.bf16.mxu0 0
    %3713 = vmatpush1.bf16.msra.mxu0 0
    %3714 = vmatprep.subr.bf16.mxu0 0
    %3715 = vmatpush1.bf16.msra.mxu0 0
    %3716 = vmatprep.subr.bf16.mxu0 0
    %3717 = vmatpush1.bf16.msra.mxu0 0
    %3718 = vmatprep.subr.bf16.mxu0 0
    %3719 = vmatpush1.bf16.msra.mxu0 0
    %3720 = vmatprep.subr.bf16.mxu0 0
    %3721 = vmatpush1.bf16.msra.mxu0 0
    %3722 = vmatprep.subr.bf16.mxu0 0
    %3723 = vmatpush1.bf16.msra.mxu0 0
    %3724 = vmatprep.mubr.bf16.mxu0 0
    %3725 = vmatmul.mubr.bf16.gmra.mrb[0].mxu0 %v3690
    %v3726 = vpop.f32.mrb[0].mxu0
    %v3727 = vadd.f32 0.0, %v3726
    %v3728 = vpop.f32.mrb[0].mxu0
    %v3729 = vpop.f32.mrb[0].mxu0
    %v3730 = vadd.f32 0.0, %v3729
    %v3731 = vpop.f32.mrb[0].mxu0
    %3732 = vdwg.mxu0
    %v3733 = vpack.c.bf16 %v3730, %v3727
    %3735 = vrot.lane.b32.xlu0 %v3612, 96
    %v3736 = vpop.permute.xlu0 %3735
    %3738 = vrot.lane.b32.xlu0 %v3613, 96
    %v3739 = vpop.permute.xlu0 %3738
    %v3741 = vsel %vm454, %v3736, 0
    %v3744 = vsel %vm454, %v3739, 0
    %3746 = vmatprep.subr.bf16.mxu0 0
    %3747 = vmatpush1.bf16.xpose.msra.mxu0 %v3744
    %3748 = vmatprep.subr.bf16.mxu0 0
    %3749 = vmatpush1.bf16.xpose.msra.mxu0 0
    %3750 = vmatprep.subr.bf16.mxu0 0
    %3751 = vmatpush1.bf16.xpose.msra.mxu0 0
    %3752 = vmatprep.subr.bf16.mxu0 0
    %3753 = vmatpush1.bf16.xpose.msra.mxu0 0
    %3754 = vmatprep.subr.bf16.mxu0 0
    %3755 = vmatpush1.bf16.xpose.msra.mxu0 0
    %3756 = vmatprep.subr.bf16.mxu0 0
    %3757 = vmatpush1.bf16.xpose.msra.mxu0 0
    %3758 = vmatprep.subr.bf16.mxu0 0
    %3759 = vmatpush1.bf16.xpose.msra.mxu0 0
    %3760 = vmatprep.subr.bf16.mxu0 0
    %3761 = vmatpush1.bf16.xpose.msra.mxu0 0
    %3762 = vmatprep.subr.bf16.mxu0 0
    %3763 = vmatpush1.bf16.xpose.msra.mxu0 0
    %3764 = vmatprep.subr.bf16.mxu0 0
    %3765 = vmatpush1.bf16.xpose.msra.mxu0 0
    %3766 = vmatprep.subr.bf16.mxu0 0
    %3767 = vmatpush1.bf16.xpose.msra.mxu0 0
    %3768 = vmatprep.subr.bf16.mxu0 0
    %3769 = vmatpush1.bf16.xpose.msra.mxu0 0
    %3770 = vmatprep.subr.bf16.mxu0 0
    %3771 = vmatpush1.bf16.xpose.msra.mxu0 0
    %3772 = vmatprep.subr.bf16.mxu0 0
    %3773 = vmatpush1.bf16.xpose.msra.mxu0 0
    %3774 = vmatprep.subr.bf16.mxu0 0
    %3775 = vmatpush1.bf16.xpose.msra.mxu0 0
    %3776 = vmatprep.subr.bf16.mxu0 0
    %3777 = vmatpush1.bf16.xpose.msra.mxu0 0
    %3778 = vmatprep.mubr.bf16.mxu0 0
    %3779 = vmatmul.mubr.bf16.gmra.mrb[0].mxu0 %v3741
    %v3780 = vpop.f32.mrb[0].mxu0
    %v3781 = vadd.f32 0.0, %v3780
    %v3782 = vpop.f32.mrb[0].mxu0
    %v3783 = vpop.f32.mrb[0].mxu0
    %v3784 = vadd.f32 0.0, %v3783
    %v3785 = vpop.f32.mrb[0].mxu0
    %3786 = vdwg.mxu0
    %v3787 = vmul.f32 %v3781, 0.17677669
    %v3788 = vmul.f32 %v3784, 0.17677669
    %v3789 = vadd.f32 %v3787, %v1243
    %v3790 = vadd.f32 %v3788, %v1243
    %v3791 = vsel %vm510, %v3789, -inf
    %3792 = vmax.xlane.f32.xlu0 %v3791
    %v3793 = vpop.xlane.xlu0 %3792
    %v3794 = vsel %vm510, %v3790, -inf
    %3795 = vmax.xlane.f32.xlu0 %v3794
    %v3796 = vpop.xlane.xlu0 %3795
    %v3797 = vsub.f32 %v3789, %v3793
    %v3798 = vsub.f32 %v3790, %v3796
    %v3799 = vmul.f32 %v3797, 1.442695
    %v3800 = vpow.pop %v3799
    %v3801 = vmul.f32 %v3798, 1.442695
    %v3802 = vpow.pop %v3801
    %v3803 = vsel %vm510, %v3800, 0.0
    %3804 = vadd.xlane.f32.xlu0 %v3803
    %v3805 = vpop.xlane.xlu0 %3804
    %v3806 = vsel %vm510, %v3802, 0.0
    %3807 = vadd.xlane.f32.xlu0 %v3806
    %v3808 = vpop.xlane.xlu0 %3807
    %v3809 = vrcp.pop %v3805
    %v3810 = vrcp.pop %v3808
    %v3811 = vmul.f32 %v3800, %v3809
    %v3812 = vmul.f32 %v3802, %v3810
    %v3813 = vpack.c.bf16 %v3812, %v3811
    %3815 = vrot.lane.b32.xlu0 %v3614, 96
    %v3816 = vpop.permute.xlu0 %3815
    %v3819 = vsel %vm510, %v3813, 0
    %3821 = vmatprep.subr.bf16.mxu0 0
    %3822 = vmatpush1.bf16.msra.mxu0 %v3816
    %3823 = vmatprep.subr.bf16.mxu0 0
    %3824 = vmatpush1.bf16.msra.mxu0 0
    %3825 = vmatprep.subr.bf16.mxu0 0
    %3826 = vmatpush1.bf16.msra.mxu0 0
    %3827 = vmatprep.subr.bf16.mxu0 0
    %3828 = vmatpush1.bf16.msra.mxu0 0
    %3829 = vmatprep.subr.bf16.mxu0 0
    %3830 = vmatpush1.bf16.msra.mxu0 0
    %3831 = vmatprep.subr.bf16.mxu0 0
    %3832 = vmatpush1.bf16.msra.mxu0 0
    %3833 = vmatprep.subr.bf16.mxu0 0
    %3834 = vmatpush1.bf16.msra.mxu0 0
    %3835 = vmatprep.subr.bf16.mxu0 0
    %3836 = vmatpush1.bf16.msra.mxu0 0
    %3837 = vmatprep.subr.bf16.mxu0 0
    %3838 = vmatpush1.bf16.msra.mxu0 0
    %3839 = vmatprep.subr.bf16.mxu0 0
    %3840 = vmatpush1.bf16.msra.mxu0 0
    %3841 = vmatprep.subr.bf16.mxu0 0
    %3842 = vmatpush1.bf16.msra.mxu0 0
    %3843 = vmatprep.subr.bf16.mxu0 0
    %3844 = vmatpush1.bf16.msra.mxu0 0
    %3845 = vmatprep.subr.bf16.mxu0 0
    %3846 = vmatpush1.bf16.msra.mxu0 0
    %3847 = vmatprep.subr.bf16.mxu0 0
    %3848 = vmatpush1.bf16.msra.mxu0 0
    %3849 = vmatprep.subr.bf16.mxu0 0
    %3850 = vmatpush1.bf16.msra.mxu0 0
    %3851 = vmatprep.subr.bf16.mxu0 0
    %3852 = vmatpush1.bf16.msra.mxu0 0
    %3853 = vmatprep.mubr.bf16.mxu0 0
    %3854 = vmatmul.mubr.bf16.gmra.mrb[0].mxu0 %v3819
    %v3855 = vpop.f32.mrb[0].mxu0
    %v3856 = vadd.f32 0.0, %v3855
    %v3857 = vpop.f32.mrb[0].mxu0
    %v3858 = vpop.f32.mrb[0].mxu0
    %v3859 = vadd.f32 0.0, %v3858
    %v3860 = vpop.f32.mrb[0].mxu0
    %3861 = vdwg.mxu0
    %v3862 = vpack.c.bf16 %v3859, %v3856
    %v3864 = vsel %vm454, %v3862, 0
    %3866 = vmatprep.subr.bf16.mxu0 0
    %3867 = vmatpush1.bf16.msra.mxu0 %v3140
    %3868 = vmatprep.subr.bf16.mxu0 0
    %3869 = vmatpush1.bf16.msra.mxu0 %v3141
    %3870 = vmatprep.subr.bf16.mxu0 0
    %3871 = vmatpush1.bf16.msra.mxu0 0
    %3872 = vmatprep.subr.bf16.mxu0 0
    %3873 = vmatpush1.bf16.msra.mxu0 0
    %3874 = vmatprep.subr.bf16.mxu0 0
    %3875 = vmatpush1.bf16.msra.mxu0 0
    %3876 = vmatprep.subr.bf16.mxu0 0
    %3877 = vmatpush1.bf16.msra.mxu0 0
    %3878 = vmatprep.subr.bf16.mxu0 0
    %3879 = vmatpush1.bf16.msra.mxu0 0
    %3880 = vmatprep.subr.bf16.mxu0 0
    %3881 = vmatpush1.bf16.msra.mxu0 0
    %3882 = vmatprep.subr.bf16.mxu0 0
    %3883 = vmatpush1.bf16.msra.mxu0 0
    %3884 = vmatprep.subr.bf16.mxu0 0
    %3885 = vmatpush1.bf16.msra.mxu0 0
    %3886 = vmatprep.subr.bf16.mxu0 0
    %3887 = vmatpush1.bf16.msra.mxu0 0
    %3888 = vmatprep.subr.bf16.mxu0 0
    %3889 = vmatpush1.bf16.msra.mxu0 0
    %3890 = vmatprep.subr.bf16.mxu0 0
    %3891 = vmatpush1.bf16.msra.mxu0 0
    %3892 = vmatprep.subr.bf16.mxu0 0
    %3893 = vmatpush1.bf16.msra.mxu0 0
    %3894 = vmatprep.subr.bf16.mxu0 0
    %3895 = vmatpush1.bf16.msra.mxu0 0
    %3896 = vmatprep.subr.bf16.mxu0 0
    %3897 = vmatpush1.bf16.msra.mxu0 0
    %3898 = vmatprep.mubr.bf16.mxu0 0
    %3899 = vmatmul.mubr.bf16.gmra.mrb[0].mxu0 %v3864
    %v3900 = vpop.f32.mrb[0].mxu0
    %v3901 = vadd.f32 0.0, %v3900
    %v3902 = vpop.f32.mrb[0].mxu0
    %v3903 = vpop.f32.mrb[0].mxu0
    %v3904 = vadd.f32 0.0, %v3903
    %v3905 = vpop.f32.mrb[0].mxu0
    %3906 = vdwg.mxu0
    %v3908 = vsel %vm454, %v3733, 0
    %3910 = vmatprep.subr.bf16.mxu0 0
    %3911 = vmatpush1.bf16.msra.mxu0 %v3196
    %3912 = vmatprep.subr.bf16.mxu0 0
    %3913 = vmatpush1.bf16.msra.mxu0 %v3197
    %3914 = vmatprep.subr.bf16.mxu0 0
    %3915 = vmatpush1.bf16.msra.mxu0 0
    %3916 = vmatprep.subr.bf16.mxu0 0
    %3917 = vmatpush1.bf16.msra.mxu0 0
    %3918 = vmatprep.subr.bf16.mxu0 0
    %3919 = vmatpush1.bf16.msra.mxu0 0
    %3920 = vmatprep.subr.bf16.mxu0 0
    %3921 = vmatpush1.bf16.msra.mxu0 0
    %3922 = vmatprep.subr.bf16.mxu0 0
    %3923 = vmatpush1.bf16.msra.mxu0 0
    %3924 = vmatprep.subr.bf16.mxu0 0
    %3925 = vmatpush1.bf16.msra.mxu0 0
    %3926 = vmatprep.subr.bf16.mxu0 0
    %3927 = vmatpush1.bf16.msra.mxu0 0
    %3928 = vmatprep.subr.bf16.mxu0 0
    %3929 = vmatpush1.bf16.msra.mxu0 0
    %3930 = vmatprep.subr.bf16.mxu0 0
    %3931 = vmatpush1.bf16.msra.mxu0 0
    %3932 = vmatprep.subr.bf16.mxu0 0
    %3933 = vmatpush1.bf16.msra.mxu0 0
    %3934 = vmatprep.subr.bf16.mxu0 0
    %3935 = vmatpush1.bf16.msra.mxu0 0
    %3936 = vmatprep.subr.bf16.mxu0 0
    %3937 = vmatpush1.bf16.msra.mxu0 0
    %3938 = vmatprep.subr.bf16.mxu0 0
    %3939 = vmatpush1.bf16.msra.mxu0 0
    %3940 = vmatprep.subr.bf16.mxu0 0
    %3941 = vmatpush1.bf16.msra.mxu0 0
    %3942 = vmatprep.mubr.bf16.mxu0 0
    %3943 = vmatmul.mubr.bf16.gmra.mrb[0].mxu0 %v3908
    %v3944 = vpop.f32.mrb[0].mxu0
    %v3945 = vadd.f32 %v3901, %v3944
    %v3946 = vpop.f32.mrb[0].mxu0
    %v3947 = vpop.f32.mrb[0].mxu0
    %v3948 = vadd.f32 %v3904, %v3947
    %v3949 = vpop.f32.mrb[0].mxu0
    %3950 = vdwg.mxu0
    %3951 = vrot.lane.b32.xlu0 %v3612, 64
    %v3952 = vpop.permute.xlu0 %3951
    %3953 = vrot.lane.b32.xlu0 %v3613, 64
    %v3954 = vpop.permute.xlu0 %3953
    %v3956 = vsel %vm454, %v3952, 0
    %v3959 = vsel %vm454, %v3954, 0
    %3961 = vmatprep.subr.bf16.mxu0 0
    %3962 = vmatpush1.bf16.xpose.msra.mxu0 %v3959
    %3963 = vmatprep.subr.bf16.mxu0 0
    %3964 = vmatpush1.bf16.xpose.msra.mxu0 0
    %3965 = vmatprep.subr.bf16.mxu0 0
    %3966 = vmatpush1.bf16.xpose.msra.mxu0 0
    %3967 = vmatprep.subr.bf16.mxu0 0
    %3968 = vmatpush1.bf16.xpose.msra.mxu0 0
    %3969 = vmatprep.subr.bf16.mxu0 0
    %3970 = vmatpush1.bf16.xpose.msra.mxu0 0
    %3971 = vmatprep.subr.bf16.mxu0 0
    %3972 = vmatpush1.bf16.xpose.msra.mxu0 0
    %3973 = vmatprep.subr.bf16.mxu0 0
    %3974 = vmatpush1.bf16.xpose.msra.mxu0 0
    %3975 = vmatprep.subr.bf16.mxu0 0
    %3976 = vmatpush1.bf16.xpose.msra.mxu0 0
    %3977 = vmatprep.subr.bf16.mxu0 0
    %3978 = vmatpush1.bf16.xpose.msra.mxu0 0
    %3979 = vmatprep.subr.bf16.mxu0 0
    %3980 = vmatpush1.bf16.xpose.msra.mxu0 0
    %3981 = vmatprep.subr.bf16.mxu0 0
    %3982 = vmatpush1.bf16.xpose.msra.mxu0 0
    %3983 = vmatprep.subr.bf16.mxu0 0
    %3984 = vmatpush1.bf16.xpose.msra.mxu0 0
    %3985 = vmatprep.subr.bf16.mxu0 0
    %3986 = vmatpush1.bf16.xpose.msra.mxu0 0
    %3987 = vmatprep.subr.bf16.mxu0 0
    %3988 = vmatpush1.bf16.xpose.msra.mxu0 0
    %3989 = vmatprep.subr.bf16.mxu0 0
    %3990 = vmatpush1.bf16.xpose.msra.mxu0 0
    %3991 = vmatprep.subr.bf16.mxu0 0
    %3992 = vmatpush1.bf16.xpose.msra.mxu0 0
    %3993 = vmatprep.mubr.bf16.mxu0 0
    %3994 = vmatmul.mubr.bf16.gmra.mrb[0].mxu0 %v3956
    %v3995 = vpop.f32.mrb[0].mxu0
    %v3996 = vadd.f32 0.0, %v3995
    %v3997 = vpop.f32.mrb[0].mxu0
    %v3998 = vpop.f32.mrb[0].mxu0
    %v3999 = vadd.f32 0.0, %v3998
    %v4000 = vpop.f32.mrb[0].mxu0
    %4001 = vdwg.mxu0
    %v4002 = vmul.f32 %v3996, 0.17677669
    %v4003 = vmul.f32 %v3999, 0.17677669
    %v4004 = vadd.f32 %v4002, %v1243
    %v4005 = vadd.f32 %v4003, %v1243
    %v4006 = vsel %vm510, %v4004, -inf
    %4007 = vmax.xlane.f32.xlu0 %v4006
    %v4008 = vpop.xlane.xlu0 %4007
    %v4009 = vsel %vm510, %v4005, -inf
    %4010 = vmax.xlane.f32.xlu0 %v4009
    %v4011 = vpop.xlane.xlu0 %4010
    %v4012 = vsub.f32 %v4004, %v4008
    %v4013 = vsub.f32 %v4005, %v4011
    %v4014 = vmul.f32 %v4012, 1.442695
    %v4015 = vpow.pop %v4014
    %v4016 = vmul.f32 %v4013, 1.442695
    %v4017 = vpow.pop %v4016
    %v4018 = vsel %vm510, %v4015, 0.0
    %4019 = vadd.xlane.f32.xlu0 %v4018
    %v4020 = vpop.xlane.xlu0 %4019
    %v4021 = vsel %vm510, %v4017, 0.0
    %4022 = vadd.xlane.f32.xlu0 %v4021
    %v4023 = vpop.xlane.xlu0 %4022
    %v4024 = vrcp.pop %v4020
    %v4025 = vrcp.pop %v4023
    %v4026 = vmul.f32 %v4015, %v4024
    %v4027 = vmul.f32 %v4017, %v4025
    %v4028 = vpack.c.bf16 %v4027, %v4026
    %4029 = vrot.lane.b32.xlu0 %v3614, 64
    %v4030 = vpop.permute.xlu0 %4029
    %v4033 = vsel %vm510, %v4028, 0
    %4035 = vmatprep.subr.bf16.mxu0 0
    %4036 = vmatpush1.bf16.msra.mxu0 %v4030
    %4037 = vmatprep.subr.bf16.mxu0 0
    %4038 = vmatpush1.bf16.msra.mxu0 0
    %4039 = vmatprep.subr.bf16.mxu0 0
    %4040 = vmatpush1.bf16.msra.mxu0 0
    %4041 = vmatprep.subr.bf16.mxu0 0
    %4042 = vmatpush1.bf16.msra.mxu0 0
    %4043 = vmatprep.subr.bf16.mxu0 0
    %4044 = vmatpush1.bf16.msra.mxu0 0
    %4045 = vmatprep.subr.bf16.mxu0 0
    %4046 = vmatpush1.bf16.msra.mxu0 0
    %4047 = vmatprep.subr.bf16.mxu0 0
    %4048 = vmatpush1.bf16.msra.mxu0 0
    %4049 = vmatprep.subr.bf16.mxu0 0
    %4050 = vmatpush1.bf16.msra.mxu0 0
    %4051 = vmatprep.subr.bf16.mxu0 0
    %4052 = vmatpush1.bf16.msra.mxu0 0
    %4053 = vmatprep.subr.bf16.mxu0 0
    %4054 = vmatpush1.bf16.msra.mxu0 0
    %4055 = vmatprep.subr.bf16.mxu0 0
    %4056 = vmatpush1.bf16.msra.mxu0 0
    %4057 = vmatprep.subr.bf16.mxu0 0
    %4058 = vmatpush1.bf16.msra.mxu0 0
    %4059 = vmatprep.subr.bf16.mxu0 0
    %4060 = vmatpush1.bf16.msra.mxu0 0
    %4061 = vmatprep.subr.bf16.mxu0 0
    %4062 = vmatpush1.bf16.msra.mxu0 0
    %4063 = vmatprep.subr.bf16.mxu0 0
    %4064 = vmatpush1.bf16.msra.mxu0 0
    %4065 = vmatprep.subr.bf16.mxu0 0
    %4066 = vmatpush1.bf16.msra.mxu0 0
    %4067 = vmatprep.mubr.bf16.mxu0 0
    %4068 = vmatmul.mubr.bf16.gmra.mrb[0].mxu0 %v4033
    %v4069 = vpop.f32.mrb[0].mxu0
    %v4070 = vadd.f32 0.0, %v4069
    %v4071 = vpop.f32.mrb[0].mxu0
    %v4072 = vpop.f32.mrb[0].mxu0
    %v4073 = vadd.f32 0.0, %v4072
    %v4074 = vpop.f32.mrb[0].mxu0
    %4075 = vdwg.mxu0
    %v4076 = vpack.c.bf16 %v4073, %v4070
    %v4078 = vsel %vm454, %v4076, 0
    %4080 = vmatprep.subr.bf16.mxu0 0
    %4081 = vmatpush1.bf16.msra.mxu0 %v3378
    %4082 = vmatprep.subr.bf16.mxu0 0
    %4083 = vmatpush1.bf16.msra.mxu0 %v3379
    %4084 = vmatprep.subr.bf16.mxu0 0
    %4085 = vmatpush1.bf16.msra.mxu0 0
    %4086 = vmatprep.subr.bf16.mxu0 0
    %4087 = vmatpush1.bf16.msra.mxu0 0
    %4088 = vmatprep.subr.bf16.mxu0 0
    %4089 = vmatpush1.bf16.msra.mxu0 0
    %4090 = vmatprep.subr.bf16.mxu0 0
    %4091 = vmatpush1.bf16.msra.mxu0 0
    %4092 = vmatprep.subr.bf16.mxu0 0
    %4093 = vmatpush1.bf16.msra.mxu0 0
    %4094 = vmatprep.subr.bf16.mxu0 0
    %4095 = vmatpush1.bf16.msra.mxu0 0
    %4096 = vmatprep.subr.bf16.mxu0 0
    %4097 = vmatpush1.bf16.msra.mxu0 0
    %4098 = vmatprep.subr.bf16.mxu0 0
    %4099 = vmatpush1.bf16.msra.mxu0 0
    %4100 = vmatprep.subr.bf16.mxu0 0
    %4101 = vmatpush1.bf16.msra.mxu0 0
    %4102 = vmatprep.subr.bf16.mxu0 0
    %4103 = vmatpush1.bf16.msra.mxu0 0
    %4104 = vmatprep.subr.bf16.mxu0 0
    %4105 = vmatpush1.bf16.msra.mxu0 0
    %4106 = vmatprep.subr.bf16.mxu0 0
    %4107 = vmatpush1.bf16.msra.mxu0 0
    %4108 = vmatprep.subr.bf16.mxu0 0
    %4109 = vmatpush1.bf16.msra.mxu0 0
    %4110 = vmatprep.subr.bf16.mxu0 0
    %4111 = vmatpush1.bf16.msra.mxu0 0
    %4112 = vmatprep.mubr.bf16.mxu0 0
    %4113 = vmatmul.mubr.bf16.gmra.mrb[0].mxu0 %v4078
    %v4114 = vpop.f32.mrb[0].mxu0
    %v4115 = vadd.f32 0.0, %v4114
    %v4116 = vpop.f32.mrb[0].mxu0
    %v4117 = vpop.f32.mrb[0].mxu0
    %v4118 = vadd.f32 0.0, %v4117
    %v4119 = vpop.f32.mrb[0].mxu0
    %4120 = vdwg.mxu0
    %v4121 = vadd.f32 %v3945, %v4115
    %v4122 = vadd.f32 %v3948, %v4118
    %4123 = vrot.lane.b32.xlu0 %v3612, 32
    %v4124 = vpop.permute.xlu0 %4123
    %4125 = vrot.lane.b32.xlu0 %v3613, 32
    %v4126 = vpop.permute.xlu0 %4125
    %v4128 = vsel %vm454, %v4124, 0
    %v4131 = vsel %vm454, %v4126, 0
    %4133 = vmatprep.subr.bf16.mxu0 0
    %4134 = vmatpush1.bf16.xpose.msra.mxu0 %v4131
    %4135 = vmatprep.subr.bf16.mxu0 0
    %4136 = vmatpush1.bf16.xpose.msra.mxu0 0
    %4137 = vmatprep.subr.bf16.mxu0 0
    %4138 = vmatpush1.bf16.xpose.msra.mxu0 0
    %4139 = vmatprep.subr.bf16.mxu0 0
    %4140 = vmatpush1.bf16.xpose.msra.mxu0 0
    %4141 = vmatprep.subr.bf16.mxu0 0
    %4142 = vmatpush1.bf16.xpose.msra.mxu0 0
    %4143 = vmatprep.subr.bf16.mxu0 0
    %4144 = vmatpush1.bf16.xpose.msra.mxu0 0
    %4145 = vmatprep.subr.bf16.mxu0 0
    %4146 = vmatpush1.bf16.xpose.msra.mxu0 0
    %4147 = vmatprep.subr.bf16.mxu0 0
    %4148 = vmatpush1.bf16.xpose.msra.mxu0 0
    %4149 = vmatprep.subr.bf16.mxu0 0
    %4150 = vmatpush1.bf16.xpose.msra.mxu0 0
    %4151 = vmatprep.subr.bf16.mxu0 0
    %4152 = vmatpush1.bf16.xpose.msra.mxu0 0
    %4153 = vmatprep.subr.bf16.mxu0 0
    %4154 = vmatpush1.bf16.xpose.msra.mxu0 0
    %4155 = vmatprep.subr.bf16.mxu0 0
    %4156 = vmatpush1.bf16.xpose.msra.mxu0 0
    %4157 = vmatprep.subr.bf16.mxu0 0
    %4158 = vmatpush1.bf16.xpose.msra.mxu0 0
    %4159 = vmatprep.subr.bf16.mxu0 0
    %4160 = vmatpush1.bf16.xpose.msra.mxu0 0
    %4161 = vmatprep.subr.bf16.mxu0 0
    %4162 = vmatpush1.bf16.xpose.msra.mxu0 0
    %4163 = vmatprep.subr.bf16.mxu0 0
    %4164 = vmatpush1.bf16.xpose.msra.mxu0 0
    %4165 = vmatprep.mubr.bf16.mxu0 0
    %4166 = vmatmul.mubr.bf16.gmra.mrb[0].mxu0 %v4128
    %v4167 = vpop.f32.mrb[0].mxu0
    %v4168 = vadd.f32 0.0, %v4167
    %v4169 = vpop.f32.mrb[0].mxu0
    %v4170 = vpop.f32.mrb[0].mxu0
    %v4171 = vadd.f32 0.0, %v4170
    %v4172 = vpop.f32.mrb[0].mxu0
    %4173 = vdwg.mxu0
    %v4174 = vmul.f32 %v4168, 0.17677669
    %v4175 = vmul.f32 %v4171, 0.17677669
    %v4176 = vadd.f32 %v4174, %v1243
    %v4177 = vadd.f32 %v4175, %v1243
    %v4178 = vsel %vm510, %v4176, -inf
    %4179 = vmax.xlane.f32.xlu0 %v4178
    %v4180 = vpop.xlane.xlu0 %4179
    %v4181 = vsel %vm510, %v4177, -inf
    %4182 = vmax.xlane.f32.xlu0 %v4181
    %v4183 = vpop.xlane.xlu0 %4182
    %v4184 = vsub.f32 %v4176, %v4180
    %v4185 = vsub.f32 %v4177, %v4183
    %v4186 = vmul.f32 %v4184, 1.442695
    %v4187 = vpow.pop %v4186
    %v4188 = vmul.f32 %v4185, 1.442695
    %v4189 = vpow.pop %v4188
    %v4190 = vsel %vm510, %v4187, 0.0
    %4191 = vadd.xlane.f32.xlu0 %v4190
    %v4192 = vpop.xlane.xlu0 %4191
    %v4193 = vsel %vm510, %v4189, 0.0
    %4194 = vadd.xlane.f32.xlu0 %v4193
    %v4195 = vpop.xlane.xlu0 %4194
    %v4196 = vrcp.pop %v4192
    %v4197 = vrcp.pop %v4195
    %v4198 = vmul.f32 %v4187, %v4196
    %v4199 = vmul.f32 %v4189, %v4197
    %v4200 = vpack.c.bf16 %v4199, %v4198
    %4201 = vrot.lane.b32.xlu0 %v3614, 32
    %v4202 = vpop.permute.xlu0 %4201
    %v4205 = vsel %vm510, %v4200, 0
    %4207 = vmatprep.subr.bf16.mxu0 0
    %4208 = vmatpush1.bf16.msra.mxu0 %v4202
    %4209 = vmatprep.subr.bf16.mxu0 0
    %4210 = vmatpush1.bf16.msra.mxu0 0
    %4211 = vmatprep.subr.bf16.mxu0 0
    %4212 = vmatpush1.bf16.msra.mxu0 0
    %4213 = vmatprep.subr.bf16.mxu0 0
    %4214 = vmatpush1.bf16.msra.mxu0 0
    %4215 = vmatprep.subr.bf16.mxu0 0
    %4216 = vmatpush1.bf16.msra.mxu0 0
    %4217 = vmatprep.subr.bf16.mxu0 0
    %4218 = vmatpush1.bf16.msra.mxu0 0
    %4219 = vmatprep.subr.bf16.mxu0 0
    %4220 = vmatpush1.bf16.msra.mxu0 0
    %4221 = vmatprep.subr.bf16.mxu0 0
    %4222 = vmatpush1.bf16.msra.mxu0 0
    %4223 = vmatprep.subr.bf16.mxu0 0
    %4224 = vmatpush1.bf16.msra.mxu0 0
    %4225 = vmatprep.subr.bf16.mxu0 0
    %4226 = vmatpush1.bf16.msra.mxu0 0
    %4227 = vmatprep.subr.bf16.mxu0 0
    %4228 = vmatpush1.bf16.msra.mxu0 0
    %4229 = vmatprep.subr.bf16.mxu0 0
    %4230 = vmatpush1.bf16.msra.mxu0 0
    %4231 = vmatprep.subr.bf16.mxu0 0
    %4232 = vmatpush1.bf16.msra.mxu0 0
    %4233 = vmatprep.subr.bf16.mxu0 0
    %4234 = vmatpush1.bf16.msra.mxu0 0
    %4235 = vmatprep.subr.bf16.mxu0 0
    %4236 = vmatpush1.bf16.msra.mxu0 0
    %4237 = vmatprep.subr.bf16.mxu0 0
    %4238 = vmatpush1.bf16.msra.mxu0 0
    %4239 = vmatprep.mubr.bf16.mxu0 0
    %4240 = vmatmul.mubr.bf16.gmra.mrb[0].mxu0 %v4205
    %v4241 = vpop.f32.mrb[0].mxu0
    %v4242 = vadd.f32 0.0, %v4241
    %v4243 = vpop.f32.mrb[0].mxu0
    %v4244 = vpop.f32.mrb[0].mxu0
    %v4245 = vadd.f32 0.0, %v4244
    %v4246 = vpop.f32.mrb[0].mxu0
    %4247 = vdwg.mxu0
    %v4248 = vpack.c.bf16 %v4245, %v4242
    %v4250 = vsel %vm454, %v4248, 0
    %4252 = vmatprep.subr.bf16.mxu0 0
    %4253 = vmatpush1.bf16.msra.mxu0 %v3562
    %4254 = vmatprep.subr.bf16.mxu0 0
    %4255 = vmatpush1.bf16.msra.mxu0 %v3563
    %4256 = vmatprep.subr.bf16.mxu0 0
    %4257 = vmatpush1.bf16.msra.mxu0 0
    %4258 = vmatprep.subr.bf16.mxu0 0
    %4259 = vmatpush1.bf16.msra.mxu0 0
    %4260 = vmatprep.subr.bf16.mxu0 0
    %4261 = vmatpush1.bf16.msra.mxu0 0
    %4262 = vmatprep.subr.bf16.mxu0 0
    %4263 = vmatpush1.bf16.msra.mxu0 0
    %4264 = vmatprep.subr.bf16.mxu0 0
    %4265 = vmatpush1.bf16.msra.mxu0 0
    %4266 = vmatprep.subr.bf16.mxu0 0
    %4267 = vmatpush1.bf16.msra.mxu0 0
    %4268 = vmatprep.subr.bf16.mxu0 0
    %4269 = vmatpush1.bf16.msra.mxu0 0
    %4270 = vmatprep.subr.bf16.mxu0 0
    %4271 = vmatpush1.bf16.msra.mxu0 0
    %4272 = vmatprep.subr.bf16.mxu0 0
    %4273 = vmatpush1.bf16.msra.mxu0 0
    %4274 = vmatprep.subr.bf16.mxu0 0
    %4275 = vmatpush1.bf16.msra.mxu0 0
    %4276 = vmatprep.subr.bf16.mxu0 0
    %4277 = vmatpush1.bf16.msra.mxu0 0
    %4278 = vmatprep.subr.bf16.mxu0 0
    %4279 = vmatpush1.bf16.msra.mxu0 0
    %4280 = vmatprep.subr.bf16.mxu0 0
    %4281 = vmatpush1.bf16.msra.mxu0 0
    %4282 = vmatprep.subr.bf16.mxu0 0
    %4283 = vmatpush1.bf16.msra.mxu0 0
    %4284 = vmatprep.mubr.bf16.mxu0 0
    %4285 = vmatmul.mubr.bf16.gmra.mrb[0].mxu0 %v4250
    %v4286 = vpop.f32.mrb[0].mxu0
    %v4287 = vadd.f32 0.0, %v4286
    %v4288 = vpop.f32.mrb[0].mxu0
    %v4289 = vpop.f32.mrb[0].mxu0
    %v4290 = vadd.f32 0.0, %v4289
    %v4291 = vpop.f32.mrb[0].mxu0
    %4292 = vdwg.mxu0
    %v4293 = vadd.f32 %v4121, %v4287
    %v4294 = vadd.f32 %v4122, %v4290
    %v4295 = vlaneseq
    %v4296 = vshrl.u32 %v4295, 7
    %v4297 = vsub.s32 0, %v4296
    %v4298 = vrot.slane %v2632, %v4297
    %v4299 = vadd.f32 %v3610, %v4298
    %v4300 = vadd.f32 %v3611, %v4298
    %v4301 = vadd.f32 %v4293, %v4298
    %v4302 = vadd.f32 %v4294, %v4298
    %v4303 = vadd.f32 %v2576, %v4299
    %v4304 = vadd.f32 %v2577, %v4300
    %v4305 = vadd.f32 %v2578, %v4301
    %v4306 = vadd.f32 %v2579, %v4302
    %v4307 = vld [vmem:[%s8 + $0x1] sm:$0x1]
    %v4308 = vld [vmem:[%s9 + $0x1] sm:$0x1]
    %4309 = vadd.xlane.f32.xlu0 %v4303
    %v4310 = vpop.xlane.xlu0 %4309
    %4311 = vadd.xlane.f32.xlu0 %v4304
    %v4312 = vpop.xlane.xlu0 %4311
    %4313 = vadd.xlane.f32.xlu0 %v4305
    %v4314 = vpop.xlane.xlu0 %4313
    %4315 = vadd.xlane.f32.xlu0 %v4306
    %v4316 = vpop.xlane.xlu0 %4315
    %v4317 = vmul.f32 %v4310, %v95
    %v4318 = vmul.f32 %v4312, %v95
    %v4319 = vmul.f32 %v4314, %v95
    %v4320 = vmul.f32 %v4316, %v95
    %v4321 = vsub.f32 %v4303, %v4317
    %v4322 = vsub.f32 %v4304, %v4318
    %v4323 = vsub.f32 %v4305, %v4319
    %v4324 = vsub.f32 %v4306, %v4320
    %v4325 = vmul.f32 %v4321, %v4321
    %v4326 = vmul.f32 %v4322, %v4322
    %v4327 = vmul.f32 %v4323, %v4323
    %v4328 = vmul.f32 %v4324, %v4324
    %4329 = vadd.xlane.f32.xlu0 %v4325
    %v4330 = vpop.xlane.xlu0 %4329
    %4331 = vadd.xlane.f32.xlu0 %v4326
    %v4332 = vpop.xlane.xlu0 %4331
    %4333 = vadd.xlane.f32.xlu0 %v4327
    %v4334 = vpop.xlane.xlu0 %4333
    %4335 = vadd.xlane.f32.xlu0 %v4328
    %v4336 = vpop.xlane.xlu0 %4335
    %v4337 = vmul.f32 %v4330, %v95
    %v4338 = vmul.f32 %v4332, %v95
    %v4339 = vmul.f32 %v4334, %v95
    %v4340 = vmul.f32 %v4336, %v95
    %v4341 = vadd.f32 %v4337, 1e-12
    %v4342 = vadd.f32 %v4338, 1e-12
    %v4343 = vadd.f32 %v4339, 1e-12
    %v4344 = vadd.f32 %v4340, 1e-12
    %v4345 = vrsqrt.pop %v4341
    %v4346 = vrsqrt.pop %v4342
    %v4347 = vrsqrt.pop %v4343
    %v4348 = vrsqrt.pop %v4344
    %v4349 = vmul.f32 %v4321, %v4345
    %v4350 = vmul.f32 %v4322, %v4346
    %v4351 = vmul.f32 %v4323, %v4347
    %v4352 = vmul.f32 %v4324, %v4348
    %v4353 = vlaneseq
    %v4354 = vshrl.u32 %v4353, 7
    %v4355 = vsub.s32 0, %v4354
    %v4356 = vrot.slane %v4307, %v4355
    %v4357 = vmul.f32 %v4349, %v4356
    %v4358 = vmul.f32 %v4350, %v4356
    %v4359 = vmul.f32 %v4351, %v4356
    %v4360 = vmul.f32 %v4352, %v4356
    %v4361 = vlaneseq
    %v4362 = vshrl.u32 %v4361, 7
    %v4363 = vsub.s32 0, %v4362
    %v4364 = vrot.slane %v4308, %v4363
    %v4365 = vadd.f32 %v4357, %v4364
    %v4366 = vadd.f32 %v4358, %v4364
    %v4367 = vadd.f32 %v4359, %v4364
    %v4368 = vadd.f32 %v4360, %v4364
    %s4369 = scalar_lea.vmem %s10, 128
    %v4370 = vld [vmem:[%s4369] sm:$0xff]
    %v4371 = vld [vmem:[%s4369 + $0x8] sm:$0xff]
    %v4372 = vld [vmem:[%s4369 + $0x10] sm:$0xff]
    %v4373 = vld [vmem:[%s4369 + $0x18] sm:$0xff]
    %v4374 = vld [vmem:[%s4369 + $0x20] sm:$0xff]
    %v4375 = vld [vmem:[%s4369 + $0x28] sm:$0xff]
    %v4376 = vld [vmem:[%s4369 + $0x30] sm:$0xff]
    %v4377 = vld [vmem:[%s4369 + $0x38] sm:$0xff]
    %v4378 = vld [vmem:[%s4369 + $0x40] sm:$0xff]
    %v4379 = vld [vmem:[%s4369 + $0x48] sm:$0xff]
    %v4380 = vld [vmem:[%s4369 + $0x50] sm:$0xff]
    %v4381 = vld [vmem:[%s4369 + $0x58] sm:$0xff]
    %v4382 = vld [vmem:[%s4369 + $0x60] sm:$0xff]
    %v4383 = vld [vmem:[%s4369 + $0x68] sm:$0xff]
    %v4384 = vld [vmem:[%s4369 + $0x70] sm:$0xff]
    %v4385 = vld [vmem:[%s4369 + $0x78] sm:$0xff]
    %v4386 = vpack.c.bf16 %v4366, %v4365
    %v4387 = vpack.c.bf16 %v4368, %v4367
    %s4388 = scalar_lea.vmem %s11, 1
    %v4389 = vld [vmem:[%s4388] ss:$2 sm:$0x3]
    %v4391 = vlaneseq
    %v4392 = vshrl.u32 %v4391, 7
    %v4393 = vsub.s32 0, %v4392
    %v4394 = vrot.slane %v4389, %v4393
    %v4395 = vlaneseq
    %v4396 = vshrl.u32 %v4395, 7
    %v4397 = vsub.s32 1, %v4396
    %v4398 = vrot.slane %v4389, %v4397
    %v4417 = vunpack.c.l.b16 %v4370
    %v4418 = vunpack.c.h.b16 %v4370
    %v4419 = vunpack.c.l.b16 %v4371
    %v4420 = vunpack.c.h.b16 %v4371
    %v4421 = vunpack.c.l.b16 %v4372
    %v4422 = vunpack.c.h.b16 %v4372
    %v4423 = vunpack.c.l.b16 %v4373
    %v4424 = vunpack.c.h.b16 %v4373
    %v4425 = vunpack.c.l.b16 %v4374
    %v4426 = vunpack.c.h.b16 %v4374
    %v4427 = vunpack.c.l.b16 %v4375
    %v4428 = vunpack.c.h.b16 %v4375
    %v4429 = vunpack.c.l.b16 %v4376
    %v4430 = vunpack.c.h.b16 %v4376
    %v4431 = vunpack.c.l.b16 %v4377
    %v4432 = vunpack.c.h.b16 %v4377
    %v4433 = vunpack.c.l.b16 %v4378
    %v4434 = vunpack.c.h.b16 %v4378
    %v4435 = vunpack.c.l.b16 %v4379
    %v4436 = vunpack.c.h.b16 %v4379
    %v4437 = vunpack.c.l.b16 %v4380
    %v4438 = vunpack.c.h.b16 %v4380
    %v4439 = vunpack.c.l.b16 %v4381
    %v4440 = vunpack.c.h.b16 %v4381
    %v4441 = vunpack.c.l.b16 %v4382
    %v4442 = vunpack.c.h.b16 %v4382
    %v4443 = vunpack.c.l.b16 %v4383
    %v4444 = vunpack.c.h.b16 %v4383
    %v4445 = vunpack.c.l.b16 %v4384
    %v4446 = vunpack.c.h.b16 %v4384
    %v4447 = vunpack.c.l.b16 %v4385
    %v4448 = vunpack.c.h.b16 %v4385
    %v4449 = vpack.c.b16 %v4419, %v4417
    %v4450 = vpack.c.b16 %v4420, %v4418
    %v4451 = vpack.c.b16 %v4423, %v4421
    %v4452 = vpack.c.b16 %v4424, %v4422
    %v4453 = vpack.c.b16 %v4427, %v4425
    %v4454 = vpack.c.b16 %v4428, %v4426
    %v4455 = vpack.c.b16 %v4431, %v4429
    %v4456 = vpack.c.b16 %v4432, %v4430
    %v4457 = vpack.c.b16 %v4435, %v4433
    %v4458 = vpack.c.b16 %v4436, %v4434
    %v4459 = vpack.c.b16 %v4439, %v4437
    %v4460 = vpack.c.b16 %v4440, %v4438
    %v4461 = vpack.c.b16 %v4443, %v4441
    %v4462 = vpack.c.b16 %v4444, %v4442
    %v4463 = vpack.c.b16 %v4447, %v4445
    %v4464 = vpack.c.b16 %v4448, %v4446
    %4481 = vmatprep.subr.bf16.mxu0 %v4450
    %4482 = vmatpush1.bf16.msra.mxu0 %v4449
    %4483 = vmatprep.subr.bf16.mxu0 %v4452
    %4484 = vmatpush1.bf16.msra.mxu0 %v4451
    %4485 = vmatprep.subr.bf16.mxu0 %v4454
    %4486 = vmatpush1.bf16.msra.mxu0 %v4453
    %4487 = vmatprep.subr.bf16.mxu0 %v4456
    %4488 = vmatpush1.bf16.msra.mxu0 %v4455
    %4489 = vmatprep.subr.bf16.mxu0 %v4458
    %4490 = vmatpush1.bf16.msra.mxu0 %v4457
    %4491 = vmatprep.subr.bf16.mxu0 %v4460
    %4492 = vmatpush1.bf16.msra.mxu0 %v4459
    %4493 = vmatprep.subr.bf16.mxu0 %v4462
    %4494 = vmatpush1.bf16.msra.mxu0 %v4461
    %4495 = vmatprep.subr.bf16.mxu0 %v4464
    %4496 = vmatpush1.bf16.msra.mxu0 %v4463
    %4497 = vmatprep.subr.bf16.mxu0 0
    %4498 = vmatpush1.bf16.msra.mxu0 0
    %4499 = vmatprep.subr.bf16.mxu0 0
    %4500 = vmatpush1.bf16.msra.mxu0 0
    %4501 = vmatprep.subr.bf16.mxu0 0
    %4502 = vmatpush1.bf16.msra.mxu0 0
    %4503 = vmatprep.subr.bf16.mxu0 0
    %4504 = vmatpush1.bf16.msra.mxu0 0
    %4505 = vmatprep.subr.bf16.mxu0 0
    %4506 = vmatpush1.bf16.msra.mxu0 0
    %4507 = vmatprep.subr.bf16.mxu0 0
    %4508 = vmatpush1.bf16.msra.mxu0 0
    %4509 = vmatprep.subr.bf16.mxu0 0
    %4510 = vmatpush1.bf16.msra.mxu0 0
    %4511 = vmatprep.subr.bf16.mxu0 0
    %4512 = vmatpush1.bf16.msra.mxu0 0
    %4513 = vmatprep.mubr.bf16.mxu0 0
    %4514 = vmatmul.mubr.bf16.gmra.mrb[0].mxu0 %v4386
    %v4515 = vpop.f32.mrb[0].mxu0
    %v4516 = vadd.f32 %v4394, %v4515
    %v4517 = vpop.f32.mrb[0].mxu0
    %v4518 = vadd.f32 %v4398, %v4517
    %v4519 = vpop.f32.mrb[0].mxu0
    %v4520 = vadd.f32 %v4394, %v4519
    %v4521 = vpop.f32.mrb[0].mxu0
    %v4522 = vadd.f32 %v4398, %v4521
    %4523 = vmatprep.mubr.bf16.mxu0 0
    %4524 = vmatmul.mubr.bf16.gmra.mrb[0].mxu0 %v4387
    %v4525 = vpop.f32.mrb[0].mxu0
    %v4526 = vadd.f32 %v4394, %v4525
    %v4527 = vpop.f32.mrb[0].mxu0
    %v4528 = vadd.f32 %v4398, %v4527
    %v4529 = vpop.f32.mrb[0].mxu0
    %v4530 = vadd.f32 %v4394, %v4529
    %v4531 = vpop.f32.mrb[0].mxu0
    %v4532 = vadd.f32 %v4398, %v4531
    %4533 = vdwg.mxu0
    %v4534 = vmul.f32 %v4516, 0.5
    %v4535 = vmul.f32 %v4518, 0.5
    %v4536 = vmul.f32 %v4520, 0.5
    %v4537 = vmul.f32 %v4522, 0.5
    %v4538 = vmul.f32 %v4526, 0.5
    %v4539 = vmul.f32 %v4528, 0.5
    %v4540 = vmul.f32 %v4530, 0.5
    %v4541 = vmul.f32 %v4532, 0.5
    %v4542 = vmul.f32 %v4516, 0.70710677
    %v4543 = vmul.f32 %v4518, 0.70710677
    %v4544 = vmul.f32 %v4520, 0.70710677
    %v4545 = vmul.f32 %v4522, 0.70710677
    %v4546 = vmul.f32 %v4526, 0.70710677
    %v4547 = vmul.f32 %v4528, 0.70710677
    %v4548 = vmul.f32 %v4530, 0.70710677
    %v4549 = vmul.f32 %v4532, 0.70710677
    %v4550 = vand.u32 2147483647, %v4542
    %v4551 = vand.u32 2147483647, %v4543
    %v4552 = vand.u32 2147483647, %v4544
    %v4553 = vand.u32 2147483647, %v4545
    %v4554 = vand.u32 2147483647, %v4546
    %v4555 = vand.u32 2147483647, %v4547
    %v4556 = vand.u32 2147483647, %v4548
    %v4557 = vand.u32 2147483647, %v4549
    %v4558 = vmul.f32 %v4550, 0.3275911
    %v4559 = vmul.f32 %v4551, 0.3275911
    %v4560 = vmul.f32 %v4552, 0.3275911
    %v4561 = vmul.f32 %v4553, 0.3275911
    %v4562 = vmul.f32 %v4554, 0.3275911
    %v4563 = vmul.f32 %v4555, 0.3275911
    %v4564 = vmul.f32 %v4556, 0.3275911
    %v4565 = vmul.f32 %v4557, 0.3275911
    %v4566 = vadd.f32 %v4558, 1.0
    %v4567 = vadd.f32 %v4559, 1.0
    %v4568 = vadd.f32 %v4560, 1.0
    %v4569 = vadd.f32 %v4561, 1.0
    %v4570 = vadd.f32 %v4562, 1.0
    %v4571 = vadd.f32 %v4563, 1.0
    %v4572 = vadd.f32 %v4564, 1.0
    %v4573 = vadd.f32 %v4565, 1.0
    %v4574 = vrcp.pop %v4566
    %v4575 = vmul.f32 1.0, %v4574
    %v4576 = vrcp.pop %v4567
    %v4577 = vmul.f32 1.0, %v4576
    %v4578 = vrcp.pop %v4568
    %v4579 = vmul.f32 1.0, %v4578
    %v4580 = vrcp.pop %v4569
    %v4581 = vmul.f32 1.0, %v4580
    %v4582 = vrcp.pop %v4570
    %v4583 = vmul.f32 1.0, %v4582
    %v4584 = vrcp.pop %v4571
    %v4585 = vmul.f32 1.0, %v4584
    %v4586 = vrcp.pop %v4572
    %v4587 = vmul.f32 1.0, %v4586
    %v4588 = vrcp.pop %v4573
    %v4589 = vmul.f32 1.0, %v4588
    %v4590 = vmul.f32 %v4575, 1.0614054
    %v4591 = vmul.f32 %v4577, 1.0614054
    %v4592 = vmul.f32 %v4579, 1.0614054
    %v4593 = vmul.f32 %v4581, 1.0614054
    %v4594 = vmul.f32 %v4583, 1.0614054
    %v4595 = vmul.f32 %v4585, 1.0614054
    %v4596 = vmul.f32 %v4587, 1.0614054
    %v4597 = vmul.f32 %v4589, 1.0614054
    %v4598 = vadd.f32 %v4590, -1.4531521
    %v4599 = vadd.f32 %v4591, -1.4531521
    %v4600 = vadd.f32 %v4592, -1.4531521
    %v4601 = vadd.f32 %v4593, -1.4531521
    %v4602 = vadd.f32 %v4594, -1.4531521
    %v4603 = vadd.f32 %v4595, -1.4531521
    %v4604 = vadd.f32 %v4596, -1.4531521
    %v4605 = vadd.f32 %v4597, -1.4531521
    %v4606 = vmul.f32 %v4598, %v4575
    %v4607 = vmul.f32 %v4599, %v4577
    %v4608 = vmul.f32 %v4600, %v4579
    %v4609 = vmul.f32 %v4601, %v4581
    %v4610 = vmul.f32 %v4602, %v4583
    %v4611 = vmul.f32 %v4603, %v4585
    %v4612 = vmul.f32 %v4604, %v4587
    %v4613 = vmul.f32 %v4605, %v4589
    %v4614 = vadd.f32 %v4606, 1.4214138
    %v4615 = vadd.f32 %v4607, 1.4214138
    %v4616 = vadd.f32 %v4608, 1.4214138
    %v4617 = vadd.f32 %v4609, 1.4214138
    %v4618 = vadd.f32 %v4610, 1.4214138
    %v4619 = vadd.f32 %v4611, 1.4214138
    %v4620 = vadd.f32 %v4612, 1.4214138
    %v4621 = vadd.f32 %v4613, 1.4214138
    %v4622 = vmul.f32 %v4614, %v4575
    %v4623 = vmul.f32 %v4615, %v4577
    %v4624 = vmul.f32 %v4616, %v4579
    %v4625 = vmul.f32 %v4617, %v4581
    %v4626 = vmul.f32 %v4618, %v4583
    %v4627 = vmul.f32 %v4619, %v4585
    %v4628 = vmul.f32 %v4620, %v4587
    %v4629 = vmul.f32 %v4621, %v4589
    %v4630 = vadd.f32 %v4622, -0.28449672
    %v4631 = vadd.f32 %v4623, -0.28449672
    %v4632 = vadd.f32 %v4624, -0.28449672
    %v4633 = vadd.f32 %v4625, -0.28449672
    %v4634 = vadd.f32 %v4626, -0.28449672
    %v4635 = vadd.f32 %v4627, -0.28449672
    %v4636 = vadd.f32 %v4628, -0.28449672
    %v4637 = vadd.f32 %v4629, -0.28449672
    %v4638 = vmul.f32 %v4630, %v4575
    %v4639 = vmul.f32 %v4631, %v4577
    %v4640 = vmul.f32 %v4632, %v4579
    %v4641 = vmul.f32 %v4633, %v4581
    %v4642 = vmul.f32 %v4634, %v4583
    %v4643 = vmul.f32 %v4635, %v4585
    %v4644 = vmul.f32 %v4636, %v4587
    %v4645 = vmul.f32 %v4637, %v4589
    %v4646 = vadd.f32 %v4638, 0.2548296
    %v4647 = vadd.f32 %v4639, 0.2548296
    %v4648 = vadd.f32 %v4640, 0.2548296
    %v4649 = vadd.f32 %v4641, 0.2548296
    %v4650 = vadd.f32 %v4642, 0.2548296
    %v4651 = vadd.f32 %v4643, 0.2548296
    %v4652 = vadd.f32 %v4644, 0.2548296
    %v4653 = vadd.f32 %v4645, 0.2548296
    %v4654 = vmul.f32 %v4646, %v4575
    %v4655 = vmul.f32 %v4647, %v4577
    %v4656 = vmul.f32 %v4648, %v4579
    %v4657 = vmul.f32 %v4649, %v4581
    %v4658 = vmul.f32 %v4650, %v4583
    %v4659 = vmul.f32 %v4651, %v4585
    %v4660 = vmul.f32 %v4652, %v4587
    %v4661 = vmul.f32 %v4653, %v4589
    %v4662 = vsub.f32 0.0, %v4550
    %v4663 = vsub.f32 0.0, %v4551
    %v4664 = vsub.f32 0.0, %v4552
    %v4665 = vsub.f32 0.0, %v4553
    %v4666 = vsub.f32 0.0, %v4554
    %v4667 = vsub.f32 0.0, %v4555
    %v4668 = vsub.f32 0.0, %v4556
    %v4669 = vsub.f32 0.0, %v4557
    %v4670 = vmul.f32 %v4662, %v4550
    %v4671 = vmul.f32 %v4663, %v4551
    %v4672 = vmul.f32 %v4664, %v4552
    %v4673 = vmul.f32 %v4665, %v4553
    %v4674 = vmul.f32 %v4666, %v4554
    %v4675 = vmul.f32 %v4667, %v4555
    %v4676 = vmul.f32 %v4668, %v4556
    %v4677 = vmul.f32 %v4669, %v4557
    %v4678 = vmul.f32 %v4670, 1.442695
    %v4679 = vpow.pop %v4678
    %v4680 = vmul.f32 %v4671, 1.442695
    %v4681 = vpow.pop %v4680
    %v4682 = vmul.f32 %v4672, 1.442695
    %v4683 = vpow.pop %v4682
    %v4684 = vmul.f32 %v4673, 1.442695
    %v4685 = vpow.pop %v4684
    %v4686 = vmul.f32 %v4674, 1.442695
    %v4687 = vpow.pop %v4686
    %v4688 = vmul.f32 %v4675, 1.442695
    %v4689 = vpow.pop %v4688
    %v4690 = vmul.f32 %v4676, 1.442695
    %v4691 = vpow.pop %v4690
    %v4692 = vmul.f32 %v4677, 1.442695
    %v4693 = vpow.pop %v4692
    %v4694 = vmul.f32 %v4654, %v4679
    %v4695 = vmul.f32 %v4655, %v4681
    %v4696 = vmul.f32 %v4656, %v4683
    %v4697 = vmul.f32 %v4657, %v4685
    %v4698 = vmul.f32 %v4658, %v4687
    %v4699 = vmul.f32 %v4659, %v4689
    %v4700 = vmul.f32 %v4660, %v4691
    %v4701 = vmul.f32 %v4661, %v4693
    %v4702 = vsub.f32 1.0, %v4694
    %v4703 = vsub.f32 1.0, %v4695
    %v4704 = vsub.f32 1.0, %v4696
    %v4705 = vsub.f32 1.0, %v4697
    %v4706 = vsub.f32 1.0, %v4698
    %v4707 = vsub.f32 1.0, %v4699
    %v4708 = vsub.f32 1.0, %v4700
    %v4709 = vsub.f32 1.0, %v4701
    %vm4710 = vcmp.lt.f32.partialorder %v4542, 0.0
    %vm4711 = vcmp.lt.f32.partialorder %v4543, 0.0
    %vm4712 = vcmp.lt.f32.partialorder %v4544, 0.0
    %vm4713 = vcmp.lt.f32.partialorder %v4545, 0.0
    %vm4714 = vcmp.lt.f32.partialorder %v4546, 0.0
    %vm4715 = vcmp.lt.f32.partialorder %v4547, 0.0
    %vm4716 = vcmp.lt.f32.partialorder %v4548, 0.0
    %vm4717 = vcmp.lt.f32.partialorder %v4549, 0.0
    %v4718 = vsub.f32 0.0, %v4702
    %v4719 = vsub.f32 0.0, %v4703
    %v4720 = vsub.f32 0.0, %v4704
    %v4721 = vsub.f32 0.0, %v4705
    %v4722 = vsub.f32 0.0, %v4706
    %v4723 = vsub.f32 0.0, %v4707
    %v4724 = vsub.f32 0.0, %v4708
    %v4725 = vsub.f32 0.0, %v4709
    %v4726 = vsel %vm4710, %v4718, %v4702
    %v4727 = vsel %vm4711, %v4719, %v4703
    %v4728 = vsel %vm4712, %v4720, %v4704
    %v4729 = vsel %vm4713, %v4721, %v4705
    %v4730 = vsel %vm4714, %v4722, %v4706
    %v4731 = vsel %vm4715, %v4723, %v4707
    %v4732 = vsel %vm4716, %v4724, %v4708
    %v4733 = vsel %vm4717, %v4725, %v4709
    %v4734 = vadd.f32 %v4726, 1.0
    %v4735 = vadd.f32 %v4727, 1.0
    %v4736 = vadd.f32 %v4728, 1.0
    %v4737 = vadd.f32 %v4729, 1.0
    %v4738 = vadd.f32 %v4730, 1.0
    %v4739 = vadd.f32 %v4731, 1.0
    %v4740 = vadd.f32 %v4732, 1.0
    %v4741 = vadd.f32 %v4733, 1.0
    %v4742 = vmul.f32 %v4534, %v4734
    %v4743 = vmul.f32 %v4535, %v4735
    %v4744 = vmul.f32 %v4536, %v4736
    %v4745 = vmul.f32 %v4537, %v4737
    %v4746 = vmul.f32 %v4538, %v4738
    %v4747 = vmul.f32 %v4539, %v4739
    %v4748 = vmul.f32 %v4540, %v4740
    %v4749 = vmul.f32 %v4541, %v4741
    %s4750 = scalar_lea.vmem %s12, 128
    %v4751 = vld [vmem:[%s4750] sm:$0xf]
    %v4752 = vld [vmem:[%s4750 + $0x4] sm:$0xf]
    %v4753 = vld [vmem:[%s4750 + $0x8] sm:$0xf]
    %v4754 = vld [vmem:[%s4750 + $0xc] sm:$0xf]
    %v4755 = vld [vmem:[%s4750 + $0x10] sm:$0xf]
    %v4756 = vld [vmem:[%s4750 + $0x14] sm:$0xf]
    %v4757 = vld [vmem:[%s4750 + $0x18] sm:$0xf]
    %v4758 = vld [vmem:[%s4750 + $0x1c] sm:$0xf]
    %v4759 = vld [vmem:[%s4750 + $0x20] sm:$0xf]
    %v4760 = vld [vmem:[%s4750 + $0x24] sm:$0xf]
    %v4761 = vld [vmem:[%s4750 + $0x28] sm:$0xf]
    %v4762 = vld [vmem:[%s4750 + $0x2c] sm:$0xf]
    %v4763 = vld [vmem:[%s4750 + $0x30] sm:$0xf]
    %v4764 = vld [vmem:[%s4750 + $0x34] sm:$0xf]
    %v4765 = vld [vmem:[%s4750 + $0x38] sm:$0xf]
    %v4766 = vld [vmem:[%s4750 + $0x3c] sm:$0xf]
    %v4767 = vld [vmem:[%s4750 + $0x40] sm:$0xf]
    %v4768 = vld [vmem:[%s4750 + $0x44] sm:$0xf]
    %v4769 = vld [vmem:[%s4750 + $0x48] sm:$0xf]
    %v4770 = vld [vmem:[%s4750 + $0x4c] sm:$0xf]
    %v4771 = vld [vmem:[%s4750 + $0x50] sm:$0xf]
    %v4772 = vld [vmem:[%s4750 + $0x54] sm:$0xf]
    %v4773 = vld [vmem:[%s4750 + $0x58] sm:$0xf]
    %v4774 = vld [vmem:[%s4750 + $0x5c] sm:$0xf]
    %v4775 = vld [vmem:[%s4750 + $0x60] sm:$0xf]
    %v4776 = vld [vmem:[%s4750 + $0x64] sm:$0xf]
    %v4777 = vld [vmem:[%s4750 + $0x68] sm:$0xf]
    %v4778 = vld [vmem:[%s4750 + $0x6c] sm:$0xf]
    %v4779 = vld [vmem:[%s4750 + $0x70] sm:$0xf]
    %v4780 = vld [vmem:[%s4750 + $0x74] sm:$0xf]
    %v4781 = vld [vmem:[%s4750 + $0x78] sm:$0xf]
    %v4782 = vld [vmem:[%s4750 + $0x7c] sm:$0xf]
    %v4783 = vpack.c.bf16 %v4744, %v4742
    %v4784 = vpack.c.bf16 %v4745, %v4743
    %v4785 = vpack.c.bf16 %v4748, %v4746
    %v4786 = vpack.c.bf16 %v4749, %v4747
    %v4787 = vld [vmem:[%s13 + $0x1] sm:$0x1]
    %v4788 = vlaneseq
    %v4789 = vshrl.u32 %v4788, 7
    %v4790 = vsub.s32 0, %v4789
    %v4791 = vrot.slane %v4787, %v4790
    %v4824 = vunpack.c.l.b16 %v4751
    %v4825 = vunpack.c.l.b16 %v4752
    %v4826 = vunpack.c.l.b16 %v4753
    %v4827 = vunpack.c.l.b16 %v4754
    %v4828 = vunpack.c.l.b16 %v4755
    %v4829 = vunpack.c.l.b16 %v4756
    %v4830 = vunpack.c.l.b16 %v4757
    %v4831 = vunpack.c.l.b16 %v4758
    %v4832 = vunpack.c.l.b16 %v4759
    %v4833 = vunpack.c.l.b16 %v4760
    %v4834 = vunpack.c.l.b16 %v4761
    %v4835 = vunpack.c.l.b16 %v4762
    %v4836 = vunpack.c.l.b16 %v4763
    %v4837 = vunpack.c.l.b16 %v4764
    %v4838 = vunpack.c.l.b16 %v4765
    %v4839 = vunpack.c.l.b16 %v4766
    %v4840 = vunpack.c.l.b16 %v4767
    %v4841 = vunpack.c.l.b16 %v4768
    %v4842 = vunpack.c.l.b16 %v4769
    %v4843 = vunpack.c.l.b16 %v4770
    %v4844 = vunpack.c.l.b16 %v4771
    %v4845 = vunpack.c.l.b16 %v4772
    %v4846 = vunpack.c.l.b16 %v4773
    %v4847 = vunpack.c.l.b16 %v4774
    %v4848 = vunpack.c.l.b16 %v4775
    %v4849 = vunpack.c.l.b16 %v4776
    %v4850 = vunpack.c.l.b16 %v4777
    %v4851 = vunpack.c.l.b16 %v4778
    %v4852 = vunpack.c.l.b16 %v4779
    %v4853 = vunpack.c.l.b16 %v4780
    %v4854 = vunpack.c.l.b16 %v4781
    %v4855 = vunpack.c.l.b16 %v4782
    %v4856 = vpack.c.b16 %v4825, %v4824
    %v4857 = vpack.c.b16 %v4827, %v4826
    %v4858 = vpack.c.b16 %v4829, %v4828
    %v4859 = vpack.c.b16 %v4831, %v4830
    %v4860 = vpack.c.b16 %v4833, %v4832
    %v4861 = vpack.c.b16 %v4835, %v4834
    %v4862 = vpack.c.b16 %v4837, %v4836
    %v4863 = vpack.c.b16 %v4839, %v4838
    %v4864 = vpack.c.b16 %v4841, %v4840
    %v4865 = vpack.c.b16 %v4843, %v4842
    %v4866 = vpack.c.b16 %v4845, %v4844
    %v4867 = vpack.c.b16 %v4847, %v4846
    %v4868 = vpack.c.b16 %v4849, %v4848
    %v4869 = vpack.c.b16 %v4851, %v4850
    %v4870 = vpack.c.b16 %v4853, %v4852
    %v4871 = vpack.c.b16 %v4855, %v4854
    %4888 = vmatprep.subr.bf16.mxu0 0
    %4889 = vmatpush1.bf16.msra.mxu0 %v4856
    %4890 = vmatprep.subr.bf16.mxu0 0
    %4891 = vmatpush1.bf16.msra.mxu0 %v4857
    %4892 = vmatprep.subr.bf16.mxu0 0
    %4893 = vmatpush1.bf16.msra.mxu0 %v4858
    %4894 = vmatprep.subr.bf16.mxu0 0
    %4895 = vmatpush1.bf16.msra.mxu0 %v4859
    %4896 = vmatprep.subr.bf16.mxu0 0
    %4897 = vmatpush1.bf16.msra.mxu0 %v4860
    %4898 = vmatprep.subr.bf16.mxu0 0
    %4899 = vmatpush1.bf16.msra.mxu0 %v4861
    %4900 = vmatprep.subr.bf16.mxu0 0
    %4901 = vmatpush1.bf16.msra.mxu0 %v4862
    %4902 = vmatprep.subr.bf16.mxu0 0
    %4903 = vmatpush1.bf16.msra.mxu0 %v4863
    %4904 = vmatprep.subr.bf16.mxu0 0
    %4905 = vmatpush1.bf16.msra.mxu0 %v4864
    %4906 = vmatprep.subr.bf16.mxu0 0
    %4907 = vmatpush1.bf16.msra.mxu0 %v4865
    %4908 = vmatprep.subr.bf16.mxu0 0
    %4909 = vmatpush1.bf16.msra.mxu0 %v4866
    %4910 = vmatprep.subr.bf16.mxu0 0
    %4911 = vmatpush1.bf16.msra.mxu0 %v4867
    %4912 = vmatprep.subr.bf16.mxu0 0
    %4913 = vmatpush1.bf16.msra.mxu0 %v4868
    %4914 = vmatprep.subr.bf16.mxu0 0
    %4915 = vmatpush1.bf16.msra.mxu0 %v4869
    %4916 = vmatprep.subr.bf16.mxu0 0
    %4917 = vmatpush1.bf16.msra.mxu0 %v4870
    %4918 = vmatprep.subr.bf16.mxu0 0
    %4919 = vmatpush1.bf16.msra.mxu0 %v4871
    %4920 = vmatprep.mubr.bf16.mxu0 %v4784
    %4921 = vmatmul.mubr.bf16.gmra.mrb[0].mxu0 %v4783
    %v4922 = vpop.f32.mrb[0].mxu0
    %v4923 = vadd.f32 %v4791, %v4922
    %v4924 = vpop.f32.mrb[0].mxu0
    %v4925 = vpop.f32.mrb[0].mxu0
    %v4926 = vadd.f32 %v4791, %v4925
    %v4927 = vpop.f32.mrb[0].mxu0
    %4928 = vmatprep.mubr.bf16.mxu0 %v4786
    %4929 = vmatmul.mubr.bf16.gmra.mrb[0].mxu0 %v4785
    %v4930 = vpop.f32.mrb[0].mxu0
    %v4931 = vadd.f32 %v4791, %v4930
    %v4932 = vpop.f32.mrb[0].mxu0
    %v4933 = vpop.f32.mrb[0].mxu0
    %v4934 = vadd.f32 %v4791, %v4933
    %v4935 = vpop.f32.mrb[0].mxu0
    %4936 = vdwg.mxu0
    %v4937 = vadd.f32 %v4365, %v4923
    %v4938 = vadd.f32 %v4366, %v4926
    %v4939 = vadd.f32 %v4367, %v4931
    %v4940 = vadd.f32 %v4368, %v4934
    %v4941 = vld [vmem:[%s14 + $0x1] sm:$0x1]
    %v4942 = vld [vmem:[%s15 + $0x1] sm:$0x1]
    %4943 = vadd.xlane.f32.xlu0 %v4937
    %v4944 = vpop.xlane.xlu0 %4943
    %4945 = vadd.xlane.f32.xlu0 %v4938
    %v4946 = vpop.xlane.xlu0 %4945
    %4947 = vadd.xlane.f32.xlu0 %v4939
    %v4948 = vpop.xlane.xlu0 %4947
    %4949 = vadd.xlane.f32.xlu0 %v4940
    %v4950 = vpop.xlane.xlu0 %4949
    %v4951 = vmul.f32 %v4944, %v95
    %v4952 = vmul.f32 %v4946, %v95
    %v4953 = vmul.f32 %v4948, %v95
    %v4954 = vmul.f32 %v4950, %v95
    %v4955 = vsub.f32 %v4937, %v4951
    %v4956 = vsub.f32 %v4938, %v4952
    %v4957 = vsub.f32 %v4939, %v4953
    %v4958 = vsub.f32 %v4940, %v4954
    %v4959 = vmul.f32 %v4955, %v4955
    %v4960 = vmul.f32 %v4956, %v4956
    %v4961 = vmul.f32 %v4957, %v4957
    %v4962 = vmul.f32 %v4958, %v4958
    %4963 = vadd.xlane.f32.xlu0 %v4959
    %v4964 = vpop.xlane.xlu0 %4963
    %4965 = vadd.xlane.f32.xlu0 %v4960
    %v4966 = vpop.xlane.xlu0 %4965
    %4967 = vadd.xlane.f32.xlu0 %v4961
    %v4968 = vpop.xlane.xlu0 %4967
    %4969 = vadd.xlane.f32.xlu0 %v4962
    %v4970 = vpop.xlane.xlu0 %4969
    %v4971 = vmul.f32 %v4964, %v95
    %v4972 = vmul.f32 %v4966, %v95
    %v4973 = vmul.f32 %v4968, %v95
    %v4974 = vmul.f32 %v4970, %v95
    %v4975 = vadd.f32 %v4971, 1e-12
    %v4976 = vadd.f32 %v4972, 1e-12
    %v4977 = vadd.f32 %v4973, 1e-12
    %v4978 = vadd.f32 %v4974, 1e-12
    %v4979 = vrsqrt.pop %v4975
    %v4980 = vrsqrt.pop %v4976
    %v4981 = vrsqrt.pop %v4977
    %v4982 = vrsqrt.pop %v4978
    %v4983 = vmul.f32 %v4955, %v4979
    %v4984 = vmul.f32 %v4956, %v4980
    %v4985 = vmul.f32 %v4957, %v4981
    %v4986 = vmul.f32 %v4958, %v4982
    %v4987 = vlaneseq
    %v4988 = vshrl.u32 %v4987, 7
    %v4989 = vsub.s32 0, %v4988
    %v4990 = vrot.slane %v4941, %v4989
    %v4991 = vmul.f32 %v4983, %v4990
    %v4992 = vmul.f32 %v4984, %v4990
    %v4993 = vmul.f32 %v4985, %v4990
    %v4994 = vmul.f32 %v4986, %v4990
    %v4995 = vlaneseq
    %v4996 = vshrl.u32 %v4995, 7
    %v4997 = vsub.s32 0, %v4996
    %v4998 = vrot.slane %v4942, %v4997
    %v4999 = vadd.f32 %v4991, %v4998
    %v5000 = vadd.f32 %v4992, %v4998
    %v5001 = vadd.f32 %v4993, %v4998
    %v5002 = vadd.f32 %v4994, %v4998
    %v5003 = vlaneseq
    %v5004 = vand.u32 %v5003, 127
    %v5005 = vlaneseq
    %v5006 = vshrl.u32 %v5005, 7
    %v5007 = vmul.u32 %v5006, 16
    %vm5008 = vcmp.eq.s32.totalorder %v5004, %v5007
    %v5009 = vsel %vm5008, 1, 0
    %v5010 = vcvt.s32.f32 %v5009
    %v5012 = vsel %vm454, %v5010, 0
    %5014 = vmatprep.subr.mxu0 0.0
    %5015 = vmatpush1.msra.mxu0 %v4999
    %5016 = vmatprep.subr.mxu0 0.0
    %5017 = vmatpush1.msra.mxu0 %v5000
    %5018 = vmatprep.subr.mxu0 0.0
    %5019 = vmatpush1.msra.mxu0 %v5001
    %5020 = vmatprep.subr.mxu0 0.0
    %5021 = vmatpush1.msra.mxu0 %v5002
    %5022 = vmatprep.subr.mxu0 0.0
    %5023 = vmatpush1.msra.mxu0 0.0
    %5024 = vmatprep.subr.mxu0 0.0
    %5025 = vmatpush1.msra.mxu0 0.0
    %5026 = vmatprep.subr.mxu0 0.0
    %5027 = vmatpush1.msra.mxu0 0.0
    %5028 = vmatprep.subr.mxu0 0.0
    %5029 = vmatpush1.msra.mxu0 0.0
    %5030 = vmatprep.subr.mxu0 0.0
    %5031 = vmatpush1.msra.mxu0 0.0
    %5032 = vmatprep.subr.mxu0 0.0
    %5033 = vmatpush1.msra.mxu0 0.0
    %5034 = vmatprep.subr.mxu0 0.0
    %5035 = vmatpush1.msra.mxu0 0.0
    %5036 = vmatprep.subr.mxu0 0.0
    %5037 = vmatpush1.msra.mxu0 0.0
    %5038 = vmatprep.subr.mxu0 0.0
    %5039 = vmatpush1.msra.mxu0 0.0
    %5040 = vmatprep.subr.mxu0 0.0
    %5041 = vmatpush1.msra.mxu0 0.0
    %5042 = vmatprep.subr.mxu0 0.0
    %5043 = vmatpush1.msra.mxu0 0.0
    %5044 = vmatprep.subr.mxu0 0.0
    %5045 = vmatpush1.msra.mxu0 0.0
    %5046 = vmatprep.subr.mxu0 0.0
    %5047 = vmatpush1.msra.mxu0 0.0
    %5048 = vmatprep.subr.mxu0 0.0
    %5049 = vmatpush1.msra.mxu0 0.0
    %5050 = vmatprep.subr.mxu0 0.0
    %5051 = vmatpush1.msra.mxu0 0.0
    %5052 = vmatprep.subr.mxu0 0.0
    %5053 = vmatpush1.msra.mxu0 0.0
    %5054 = vmatprep.subr.mxu0 0.0
    %5055 = vmatpush1.msra.mxu0 0.0
    %5056 = vmatprep.subr.mxu0 0.0
    %5057 = vmatpush1.msra.mxu0 0.0
    %5058 = vmatprep.subr.mxu0 0.0
    %5059 = vmatpush1.msra.mxu0 0.0
    %5060 = vmatprep.subr.mxu0 0.0
    %5061 = vmatpush1.msra.mxu0 0.0
    %5062 = vmatprep.subr.mxu0 0.0
    %5063 = vmatpush1.msra.mxu0 0.0
    %5064 = vmatprep.subr.mxu0 0.0
    %5065 = vmatpush1.msra.mxu0 0.0
    %5066 = vmatprep.subr.mxu0 0.0
    %5067 = vmatpush1.msra.mxu0 0.0
    %5068 = vmatprep.subr.mxu0 0.0
    %5069 = vmatpush1.msra.mxu0 0.0
    %5070 = vmatprep.subr.mxu0 0.0
    %5071 = vmatpush1.msra.mxu0 0.0
    %5072 = vmatprep.subr.mxu0 0.0
    %5073 = vmatpush1.msra.mxu0 0.0
    %5074 = vmatprep.subr.mxu0 0.0
    %5075 = vmatpush1.msra.mxu0 0.0
    %5076 = vmatprep.subr.mxu0 0.0
    %5077 = vmatpush1.msra.mxu0 0.0
    %5078 = vmatprep.mubr.f32.mxu0 0.0
    %5079 = vmatmul.mubr.f32.gmra.mrb[0].mxu0 %v5012
    %v5080 = vpop.f32.mrb[0].mxu0
    %v5081 = vadd.f32 0.0, %v5080
    %v5082 = vpop.f32.mrb[0].mxu0
    %5083 = vdwg.mxu0
    %v5084 = vld [vmem:[#allocation2] sm:$0xff]
    %v5085 = vld [vmem:[#allocation2 + $0x8] sm:$0xff]
    %v5086 = vld [vmem:[#allocation2 + $0x10] sm:$0xff]
    %v5087 = vld [vmem:[#allocation2 + $0x18] sm:$0xff]
    %v5088 = vld [vmem:[#allocation2 + $0x20] sm:$0xff]
    %v5089 = vld [vmem:[#allocation2 + $0x28] sm:$0xff]
    %v5090 = vld [vmem:[#allocation2 + $0x30] sm:$0xff]
    %v5091 = vld [vmem:[#allocation2 + $0x38] sm:$0xff]
    %v5092 = vld [vmem:[#allocation2 + $0x40] sm:$0xff]
    %v5093 = vld [vmem:[#allocation2 + $0x48] sm:$0xff]
    %v5094 = vld [vmem:[#allocation2 + $0x50] sm:$0xff]
    %v5095 = vld [vmem:[#allocation2 + $0x58] sm:$0xff]
    %v5096 = vld [vmem:[#allocation2 + $0x60] sm:$0xff]
    %v5097 = vld [vmem:[#allocation2 + $0x68] sm:$0xff]
    %v5098 = vld [vmem:[#allocation2 + $0x70] sm:$0xff]
    %v5099 = vld [vmem:[#allocation2 + $0x78] sm:$0xff]
    %v5100 = vld [vmem:[#allocation2 + $0x80] sm:$0xff]
    %v5101 = vld [vmem:[#allocation2 + $0x88] sm:$0xff]
    %v5102 = vld [vmem:[#allocation2 + $0x90] sm:$0xff]
    %v5103 = vld [vmem:[#allocation2 + $0x98] sm:$0xff]
    %v5104 = vld [vmem:[#allocation2 + $0xa0] sm:$0xff]
    %v5105 = vld [vmem:[#allocation2 + $0xa8] sm:$0xff]
    %v5106 = vld [vmem:[#allocation2 + $0xb0] sm:$0xff]
    %v5107 = vld [vmem:[#allocation2 + $0xb8] sm:$0xff]
    %v5108 = vld [vmem:[#allocation2 + $0xc0] sm:$0xff]
    %v5109 = vld [vmem:[#allocation2 + $0xc8] sm:$0xff]
    %v5110 = vld [vmem:[#allocation2 + $0xd0] sm:$0xff]
    %v5111 = vld [vmem:[#allocation2 + $0xd8] sm:$0xff]
    %v5112 = vld [vmem:[#allocation2 + $0xe0] sm:$0xff]
    %v5113 = vld [vmem:[#allocation2 + $0xe8] sm:$0xff]
    %v5114 = vld [vmem:[#allocation2 + $0xf0] sm:$0xff]
    %v5115 = vld [vmem:[#allocation2 + $0xf8] sm:$0xff]
    %v5116 = vpack.c.bf16 %v5081, %v5081
    %v5117 = vld [vmem:[%s17] sm:$0xf]
    %v5119 = vlaneseq
    %v5120 = vshrl.u32 %v5119, 7
    %v5121 = vsub.s32 0, %v5120
    %v5122 = vrot.slane %v5117, %v5121
    %v5123 = vlaneseq
    %v5124 = vshrl.u32 %v5123, 7
    %v5125 = vsub.s32 1, %v5124
    %v5126 = vrot.slane %v5117, %v5125
    %v5127 = vlaneseq
    %v5128 = vshrl.u32 %v5127, 7
    %v5129 = vsub.s32 2, %v5128
    %v5130 = vrot.slane %v5117, %v5129
    %v5131 = vlaneseq
    %v5132 = vshrl.u32 %v5131, 7
    %v5133 = vsub.s32 3, %v5132
    %v5134 = vrot.slane %v5117, %v5133
    %v5171 = vunpack.c.l.b16 %v5084
    %v5172 = vunpack.c.h.b16 %v5084
    %v5173 = vunpack.c.l.b16 %v5085
    %v5174 = vunpack.c.h.b16 %v5085
    %v5175 = vunpack.c.l.b16 %v5086
    %v5176 = vunpack.c.h.b16 %v5086
    %v5177 = vunpack.c.l.b16 %v5087
    %v5178 = vunpack.c.h.b16 %v5087
    %v5179 = vunpack.c.l.b16 %v5088
    %v5180 = vunpack.c.h.b16 %v5088
    %v5181 = vunpack.c.l.b16 %v5089
    %v5182 = vunpack.c.h.b16 %v5089
    %v5183 = vunpack.c.l.b16 %v5090
    %v5184 = vunpack.c.h.b16 %v5090
    %v5185 = vunpack.c.l.b16 %v5091
    %v5186 = vunpack.c.h.b16 %v5091
    %v5187 = vunpack.c.l.b16 %v5092
    %v5188 = vunpack.c.h.b16 %v5092
    %v5189 = vunpack.c.l.b16 %v5093
    %v5190 = vunpack.c.h.b16 %v5093
    %v5191 = vunpack.c.l.b16 %v5094
    %v5192 = vunpack.c.h.b16 %v5094
    %v5193 = vunpack.c.l.b16 %v5095
    %v5194 = vunpack.c.h.b16 %v5095
    %v5195 = vunpack.c.l.b16 %v5096
    %v5196 = vunpack.c.h.b16 %v5096
    %v5197 = vunpack.c.l.b16 %v5097
    %v5198 = vunpack.c.h.b16 %v5097
    %v5199 = vunpack.c.l.b16 %v5098
    %v5200 = vunpack.c.h.b16 %v5098
    %v5201 = vunpack.c.l.b16 %v5099
    %v5202 = vunpack.c.h.b16 %v5099
    %v5203 = vunpack.c.l.b16 %v5100
    %v5204 = vunpack.c.h.b16 %v5100
    %v5205 = vunpack.c.l.b16 %v5101
    %v5206 = vunpack.c.h.b16 %v5101
    %v5207 = vunpack.c.l.b16 %v5102
    %v5208 = vunpack.c.h.b16 %v5102
    %v5209 = vunpack.c.l.b16 %v5103
    %v5210 = vunpack.c.h.b16 %v5103
    %v5211 = vunpack.c.l.b16 %v5104
    %v5212 = vunpack.c.h.b16 %v5104
    %v5213 = vunpack.c.l.b16 %v5105
    %v5214 = vunpack.c.h.b16 %v5105
    %v5215 = vunpack.c.l.b16 %v5106
    %v5216 = vunpack.c.h.b16 %v5106
    %v5217 = vunpack.c.l.b16 %v5107
    %v5218 = vunpack.c.h.b16 %v5107
    %v5219 = vunpack.c.l.b16 %v5108
    %v5220 = vunpack.c.h.b16 %v5108
    %v5221 = vunpack.c.l.b16 %v5109
    %v5222 = vunpack.c.h.b16 %v5109
    %v5223 = vunpack.c.l.b16 %v5110
    %v5224 = vunpack.c.h.b16 %v5110
    %v5225 = vunpack.c.l.b16 %v5111
    %v5226 = vunpack.c.h.b16 %v5111
    %v5227 = vunpack.c.l.b16 %v5112
    %v5228 = vunpack.c.h.b16 %v5112
    %v5229 = vunpack.c.l.b16 %v5113
    %v5230 = vunpack.c.h.b16 %v5113
    %v5231 = vunpack.c.l.b16 %v5114
    %v5232 = vunpack.c.h.b16 %v5114
    %v5233 = vunpack.c.l.b16 %v5115
    %v5234 = vunpack.c.h.b16 %v5115
    %v5235 = vpack.c.b16 %v5175, %v5171
    %v5236 = vpack.c.b16 %v5176, %v5172
    %v5237 = vpack.c.b16 %v5177, %v5173
    %v5238 = vpack.c.b16 %v5178, %v5174
    %v5239 = vpack.c.b16 %v5183, %v5179
    %v5240 = vpack.c.b16 %v5184, %v5180
    %v5241 = vpack.c.b16 %v5185, %v5181
    %v5242 = vpack.c.b16 %v5186, %v5182
    %v5243 = vpack.c.b16 %v5191, %v5187
    %v5244 = vpack.c.b16 %v5192, %v5188
    %v5245 = vpack.c.b16 %v5193, %v5189
    %v5246 = vpack.c.b16 %v5194, %v5190
    %v5247 = vpack.c.b16 %v5199, %v5195
    %v5248 = vpack.c.b16 %v5200, %v5196
    %v5249 = vpack.c.b16 %v5201, %v5197
    %v5250 = vpack.c.b16 %v5202, %v5198
    %v5251 = vpack.c.b16 %v5207, %v5203
    %v5252 = vpack.c.b16 %v5208, %v5204
    %v5253 = vpack.c.b16 %v5209, %v5205
    %v5254 = vpack.c.b16 %v5210, %v5206
    %v5255 = vpack.c.b16 %v5215, %v5211
    %v5256 = vpack.c.b16 %v5216, %v5212
    %v5257 = vpack.c.b16 %v5217, %v5213
    %v5258 = vpack.c.b16 %v5218, %v5214
    %v5259 = vpack.c.b16 %v5223, %v5219
    %v5260 = vpack.c.b16 %v5224, %v5220
    %v5261 = vpack.c.b16 %v5225, %v5221
    %v5262 = vpack.c.b16 %v5226, %v5222
    %v5263 = vpack.c.b16 %v5231, %v5227
    %v5264 = vpack.c.b16 %v5232, %v5228
    %v5265 = vpack.c.b16 %v5233, %v5229
    %v5266 = vpack.c.b16 %v5234, %v5230
    %5299 = vmatprep.subr.bf16.mxu0 %v5236
    %5300 = vmatpush1.bf16.msra.mxu0 %v5235
    %5301 = vmatprep.subr.bf16.mxu0 %v5240
    %5302 = vmatpush1.bf16.msra.mxu0 %v5239
    %5303 = vmatprep.subr.bf16.mxu0 %v5244
    %5304 = vmatpush1.bf16.msra.mxu0 %v5243
    %5305 = vmatprep.subr.bf16.mxu0 %v5248
    %5306 = vmatpush1.bf16.msra.mxu0 %v5247
    %5307 = vmatprep.subr.bf16.mxu0 %v5252
    %5308 = vmatpush1.bf16.msra.mxu0 %v5251
    %5309 = vmatprep.subr.bf16.mxu0 %v5256
    %5310 = vmatpush1.bf16.msra.mxu0 %v5255
    %5311 = vmatprep.subr.bf16.mxu0 %v5260
    %5312 = vmatpush1.bf16.msra.mxu0 %v5259
    %5313 = vmatprep.subr.bf16.mxu0 %v5264
    %5314 = vmatpush1.bf16.msra.mxu0 %v5263
    %5315 = vmatprep.subr.bf16.mxu0 0
    %5316 = vmatpush1.bf16.msra.mxu0 0
    %5317 = vmatprep.subr.bf16.mxu0 0
    %5318 = vmatpush1.bf16.msra.mxu0 0
    %5319 = vmatprep.subr.bf16.mxu0 0
    %5320 = vmatpush1.bf16.msra.mxu0 0
    %5321 = vmatprep.subr.bf16.mxu0 0
    %5322 = vmatpush1.bf16.msra.mxu0 0
    %5323 = vmatprep.subr.bf16.mxu0 0
    %5324 = vmatpush1.bf16.msra.mxu0 0
    %5325 = vmatprep.subr.bf16.mxu0 0
    %5326 = vmatpush1.bf16.msra.mxu0 0
    %5327 = vmatprep.subr.bf16.mxu0 0
    %5328 = vmatpush1.bf16.msra.mxu0 0
    %5329 = vmatprep.subr.bf16.mxu0 0
    %5330 = vmatpush1.bf16.msra.mxu0 0
    %5331 = vmatprep.mubr.bf16.mxu0 0
    %5332 = vmatmul.mubr.bf16.gmra.mrb[0].mxu0 %v5116
    %v5333 = vpop.f32.mrb[0].mxu0
    %v5334 = vadd.f32 %v5122, %v5333
    %v5335 = vpop.f32.mrb[0].mxu0
    %v5336 = vadd.f32 %v5126, %v5335
    %v5337 = vpop.f32.mrb[0].mxu0
    %v5338 = vpop.f32.mrb[0].mxu0
    %5339 = vdwg.mxu0
    %5340 = vmatprep.subr.bf16.mxu0 %v5238
    %5341 = vmatpush1.bf16.msra.mxu0 %v5237
    %5342 = vmatprep.subr.bf16.mxu0 %v5242
    %5343 = vmatpush1.bf16.msra.mxu0 %v5241
    %5344 = vmatprep.subr.bf16.mxu0 %v5246
    %5345 = vmatpush1.bf16.msra.mxu0 %v5245
    %5346 = vmatprep.subr.bf16.mxu0 %v5250
    %5347 = vmatpush1.bf16.msra.mxu0 %v5249
    %5348 = vmatprep.subr.bf16.mxu0 %v5254
    %5349 = vmatpush1.bf16.msra.mxu0 %v5253
    %5350 = vmatprep.subr.bf16.mxu0 %v5258
    %5351 = vmatpush1.bf16.msra.mxu0 %v5257
    %5352 = vmatprep.subr.bf16.mxu0 %v5262
    %5353 = vmatpush1.bf16.msra.mxu0 %v5261
    %5354 = vmatprep.subr.bf16.mxu0 %v5266
    %5355 = vmatpush1.bf16.msra.mxu0 %v5265
    %5356 = vmatprep.subr.bf16.mxu0 0
    %5357 = vmatpush1.bf16.msra.mxu0 0
    %5358 = vmatprep.subr.bf16.mxu0 0
    %5359 = vmatpush1.bf16.msra.mxu0 0
    %5360 = vmatprep.subr.bf16.mxu0 0
    %5361 = vmatpush1.bf16.msra.mxu0 0
    %5362 = vmatprep.subr.bf16.mxu0 0
    %5363 = vmatpush1.bf16.msra.mxu0 0
    %5364 = vmatprep.subr.bf16.mxu0 0
    %5365 = vmatpush1.bf16.msra.mxu0 0
    %5366 = vmatprep.subr.bf16.mxu0 0
    %5367 = vmatpush1.bf16.msra.mxu0 0
    %5368 = vmatprep.subr.bf16.mxu0 0
    %5369 = vmatpush1.bf16.msra.mxu0 0
    %5370 = vmatprep.subr.bf16.mxu0 0
    %5371 = vmatpush1.bf16.msra.mxu0 0
    %5372 = vmatprep.mubr.bf16.mxu0 0
    %5373 = vmatmul.mubr.bf16.gmra.mrb[0].mxu0 %v5116
    %v5374 = vpop.f32.mrb[0].mxu0
    %v5375 = vadd.f32 %v5130, %v5374
    %v5376 = vpop.f32.mrb[0].mxu0
    %v5377 = vadd.f32 %v5134, %v5376
    %v5378 = vpop.f32.mrb[0].mxu0
    %v5379 = vpop.f32.mrb[0].mxu0
    %5380 = vdwg.mxu0
    %v5381 = vmax.f32 %v5334, 0.0
    %v5382 = vmax.f32 %v5336, 0.0
    %v5383 = vmax.f32 %v5375, 0.0
    %v5384 = vmax.f32 %v5377, 0.0
    %v5385 = vld [vmem:[%s18] sm:$0xf]
    %v5386 = vld [vmem:[%s18 + $0x4] sm:$0xf]
    %v5387 = vld [vmem:[%s18 + $0x8] sm:$0xf]
    %v5388 = vld [vmem:[%s18 + $0xc] sm:$0xf]
    %v5389 = vld [vmem:[%s18 + $0x10] sm:$0xf]
    %v5390 = vld [vmem:[%s18 + $0x14] sm:$0xf]
    %v5391 = vld [vmem:[%s18 + $0x18] sm:$0xf]
    %v5392 = vld [vmem:[%s18 + $0x1c] sm:$0xf]
    %v5393 = vld [vmem:[%s18 + $0x20] sm:$0xf]
    %v5394 = vld [vmem:[%s18 + $0x24] sm:$0xf]
    %v5395 = vld [vmem:[%s18 + $0x28] sm:$0xf]
    %v5396 = vld [vmem:[%s18 + $0x2c] sm:$0xf]
    %v5397 = vld [vmem:[%s18 + $0x30] sm:$0xf]
    %v5398 = vld [vmem:[%s18 + $0x34] sm:$0xf]
    %v5399 = vld [vmem:[%s18 + $0x38] sm:$0xf]
    %v5400 = vld [vmem:[%s18 + $0x3c] sm:$0xf]
    %v5401 = vld [vmem:[%s18 + $0x40] sm:$0xf]
    %v5402 = vld [vmem:[%s18 + $0x44] sm:$0xf]
    %v5403 = vld [vmem:[%s18 + $0x48] sm:$0xf]
    %v5404 = vld [vmem:[%s18 + $0x4c] sm:$0xf]
    %v5405 = vld [vmem:[%s18 + $0x50] sm:$0xf]
    %v5406 = vld [vmem:[%s18 + $0x54] sm:$0xf]
    %v5407 = vld [vmem:[%s18 + $0x58] sm:$0xf]
    %v5408 = vld [vmem:[%s18 + $0x5c] sm:$0xf]
    %v5409 = vld [vmem:[%s18 + $0x60] sm:$0xf]
    %v5410 = vld [vmem:[%s18 + $0x64] sm:$0xf]
    %v5411 = vld [vmem:[%s18 + $0x68] sm:$0xf]
    %v5412 = vld [vmem:[%s18 + $0x6c] sm:$0xf]
    %v5413 = vld [vmem:[%s18 + $0x70] sm:$0xf]
    %v5414 = vld [vmem:[%s18 + $0x74] sm:$0xf]
    %v5415 = vld [vmem:[%s18 + $0x78] sm:$0xf]
    %v5416 = vld [vmem:[%s18 + $0x7c] sm:$0xf]
    %v5417 = vld [vmem:[%s18 + $0x80] sm:$0xf]
    %v5418 = vld [vmem:[%s18 + $0x84] sm:$0xf]
    %v5419 = vld [vmem:[%s18 + $0x88] sm:$0xf]
    %v5420 = vld [vmem:[%s18 + $0x8c] sm:$0xf]
    %v5421 = vld [vmem:[%s18 + $0x90] sm:$0xf]
    %v5422 = vld [vmem:[%s18 + $0x94] sm:$0xf]
    %v5423 = vld [vmem:[%s18 + $0x98] sm:$0xf]
    %v5424 = vld [vmem:[%s18 + $0x9c] sm:$0xf]
    %v5425 = vld [vmem:[%s18 + $0xa0] sm:$0xf]
    %v5426 = vld [vmem:[%s18 + $0xa4] sm:$0xf]
    %v5427 = vld [vmem:[%s18 + $0xa8] sm:$0xf]
    %v5428 = vld [vmem:[%s18 + $0xac] sm:$0xf]
    %v5429 = vld [vmem:[%s18 + $0xb0] sm:$0xf]
    %v5430 = vld [vmem:[%s18 + $0xb4] sm:$0xf]
    %v5431 = vld [vmem:[%s18 + $0xb8] sm:$0xf]
    %v5432 = vld [vmem:[%s18 + $0xbc] sm:$0xf]
    %v5433 = vld [vmem:[%s18 + $0xc0] sm:$0xf]
    %v5434 = vld [vmem:[%s18 + $0xc4] sm:$0xf]
    %v5435 = vld [vmem:[%s18 + $0xc8] sm:$0xf]
    %v5436 = vld [vmem:[%s18 + $0xcc] sm:$0xf]
    %v5437 = vld [vmem:[%s18 + $0xd0] sm:$0xf]
    %v5438 = vld [vmem:[%s18 + $0xd4] sm:$0xf]
    %v5439 = vld [vmem:[%s18 + $0xd8] sm:$0xf]
    %v5440 = vld [vmem:[%s18 + $0xdc] sm:$0xf]
    %v5441 = vld [vmem:[%s18 + $0xe0] sm:$0xf]
    %v5442 = vld [vmem:[%s18 + $0xe4] sm:$0xf]
    %v5443 = vld [vmem:[%s18 + $0xe8] sm:$0xf]
    %v5444 = vld [vmem:[%s18 + $0xec] sm:$0xf]
    %v5445 = vld [vmem:[%s18 + $0xf0] sm:$0xf]
    %v5446 = vld [vmem:[%s18 + $0xf4] sm:$0xf]
    %v5447 = vld [vmem:[%s18 + $0xf8] sm:$0xf]
    %v5448 = vld [vmem:[%s18 + $0xfc] sm:$0xf]
    %v5449 = vpack.c.bf16 %v5381, %v5381
    %v5450 = vpack.c.bf16 %v5382, %v5382
    %v5451 = vpack.c.bf16 %v5383, %v5383
    %v5452 = vpack.c.bf16 %v5384, %v5384
    %v5453 = vld [vmem:[%s19] sm:$0x1]
    %v5455 = vlaneseq
    %v5456 = vshrl.u32 %v5455, 7
    %v5457 = vsub.s32 0, %v5456
    %v5458 = vrot.slane %v5453, %v5457
    %v5524 = vunpack.c.l.b16 %v5385
    %v5525 = vunpack.c.l.b16 %v5386
    %v5526 = vunpack.c.l.b16 %v5387
    %v5527 = vunpack.c.l.b16 %v5388
    %v5528 = vunpack.c.l.b16 %v5389
    %v5529 = vunpack.c.l.b16 %v5390
    %v5530 = vunpack.c.l.b16 %v5391
    %v5531 = vunpack.c.l.b16 %v5392
    %v5532 = vunpack.c.l.b16 %v5393
    %v5533 = vunpack.c.l.b16 %v5394
    %v5534 = vunpack.c.l.b16 %v5395
    %v5535 = vunpack.c.l.b16 %v5396
    %v5536 = vunpack.c.l.b16 %v5397
    %v5537 = vunpack.c.l.b16 %v5398
    %v5538 = vunpack.c.l.b16 %v5399
    %v5539 = vunpack.c.l.b16 %v5400
    %v5540 = vunpack.c.l.b16 %v5401
    %v5541 = vunpack.c.l.b16 %v5402
    %v5542 = vunpack.c.l.b16 %v5403
    %v5543 = vunpack.c.l.b16 %v5404
    %v5544 = vunpack.c.l.b16 %v5405
    %v5545 = vunpack.c.l.b16 %v5406
    %v5546 = vunpack.c.l.b16 %v5407
    %v5547 = vunpack.c.l.b16 %v5408
    %v5548 = vunpack.c.l.b16 %v5409
    %v5549 = vunpack.c.l.b16 %v5410
    %v5550 = vunpack.c.l.b16 %v5411
    %v5551 = vunpack.c.l.b16 %v5412
    %v5552 = vunpack.c.l.b16 %v5413
    %v5553 = vunpack.c.l.b16 %v5414
    %v5554 = vunpack.c.l.b16 %v5415
    %v5555 = vunpack.c.l.b16 %v5416
    %v5556 = vunpack.c.l.b16 %v5417
    %v5557 = vunpack.c.l.b16 %v5418
    %v5558 = vunpack.c.l.b16 %v5419
    %v5559 = vunpack.c.l.b16 %v5420
    %v5560 = vunpack.c.l.b16 %v5421
    %v5561 = vunpack.c.l.b16 %v5422
    %v5562 = vunpack.c.l.b16 %v5423
    %v5563 = vunpack.c.l.b16 %v5424
    %v5564 = vunpack.c.l.b16 %v5425
    %v5565 = vunpack.c.l.b16 %v5426
    %v5566 = vunpack.c.l.b16 %v5427
    %v5567 = vunpack.c.l.b16 %v5428
    %v5568 = vunpack.c.l.b16 %v5429
    %v5569 = vunpack.c.l.b16 %v5430
    %v5570 = vunpack.c.l.b16 %v5431
    %v5571 = vunpack.c.l.b16 %v5432
    %v5572 = vunpack.c.l.b16 %v5433
    %v5573 = vunpack.c.l.b16 %v5434
    %v5574 = vunpack.c.l.b16 %v5435
    %v5575 = vunpack.c.l.b16 %v5436
    %v5576 = vunpack.c.l.b16 %v5437
    %v5577 = vunpack.c.l.b16 %v5438
    %v5578 = vunpack.c.l.b16 %v5439
    %v5579 = vunpack.c.l.b16 %v5440
    %v5580 = vunpack.c.l.b16 %v5441
    %v5581 = vunpack.c.l.b16 %v5442
    %v5582 = vunpack.c.l.b16 %v5443
    %v5583 = vunpack.c.l.b16 %v5444
    %v5584 = vunpack.c.l.b16 %v5445
    %v5585 = vunpack.c.l.b16 %v5446
    %v5586 = vunpack.c.l.b16 %v5447
    %v5587 = vunpack.c.l.b16 %v5448
    %v5588 = vpack.c.b16 %v5525, %v5524
    %v5589 = vpack.c.b16 %v5527, %v5526
    %v5590 = vpack.c.b16 %v5529, %v5528
    %v5591 = vpack.c.b16 %v5531, %v5530
    %v5592 = vpack.c.b16 %v5533, %v5532
    %v5593 = vpack.c.b16 %v5535, %v5534
    %v5594 = vpack.c.b16 %v5537, %v5536
    %v5595 = vpack.c.b16 %v5539, %v5538
    %v5596 = vpack.c.b16 %v5541, %v5540
    %v5597 = vpack.c.b16 %v5543, %v5542
    %v5598 = vpack.c.b16 %v5545, %v5544
    %v5599 = vpack.c.b16 %v5547, %v5546
    %v5600 = vpack.c.b16 %v5549, %v5548
    %v5601 = vpack.c.b16 %v5551, %v5550
    %v5602 = vpack.c.b16 %v5553, %v5552
    %v5603 = vpack.c.b16 %v5555, %v5554
    %v5604 = vpack.c.b16 %v5557, %v5556
    %v5605 = vpack.c.b16 %v5559, %v5558
    %v5606 = vpack.c.b16 %v5561, %v5560
    %v5607 = vpack.c.b16 %v5563, %v5562
    %v5608 = vpack.c.b16 %v5565, %v5564
    %v5609 = vpack.c.b16 %v5567, %v5566
    %v5610 = vpack.c.b16 %v5569, %v5568
    %v5611 = vpack.c.b16 %v5571, %v5570
    %v5612 = vpack.c.b16 %v5573, %v5572
    %v5613 = vpack.c.b16 %v5575, %v5574
    %v5614 = vpack.c.b16 %v5577, %v5576
    %v5615 = vpack.c.b16 %v5579, %v5578
    %v5616 = vpack.c.b16 %v5581, %v5580
    %v5617 = vpack.c.b16 %v5583, %v5582
    %v5618 = vpack.c.b16 %v5585, %v5584
    %v5619 = vpack.c.b16 %v5587, %v5586
    %5652 = vmatprep.subr.bf16.mxu0 0
    %5653 = vmatpush1.bf16.msra.mxu0 %v5588
    %5654 = vmatprep.subr.bf16.mxu0 0
    %5655 = vmatpush1.bf16.msra.mxu0 %v5589
    %5656 = vmatprep.subr.bf16.mxu0 0
    %5657 = vmatpush1.bf16.msra.mxu0 %v5590
    %5658 = vmatprep.subr.bf16.mxu0 0
    %5659 = vmatpush1.bf16.msra.mxu0 %v5591
    %5660 = vmatprep.subr.bf16.mxu0 0
    %5661 = vmatpush1.bf16.msra.mxu0 %v5592
    %5662 = vmatprep.subr.bf16.mxu0 0
    %5663 = vmatpush1.bf16.msra.mxu0 %v5593
    %5664 = vmatprep.subr.bf16.mxu0 0
    %5665 = vmatpush1.bf16.msra.mxu0 %v5594
    %5666 = vmatprep.subr.bf16.mxu0 0
    %5667 = vmatpush1.bf16.msra.mxu0 %v5595
    %5668 = vmatprep.subr.bf16.mxu0 0
    %5669 = vmatpush1.bf16.msra.mxu0 %v5596
    %5670 = vmatprep.subr.bf16.mxu0 0
    %5671 = vmatpush1.bf16.msra.mxu0 %v5597
    %5672 = vmatprep.subr.bf16.mxu0 0
    %5673 = vmatpush1.bf16.msra.mxu0 %v5598
    %5674 = vmatprep.subr.bf16.mxu0 0
    %5675 = vmatpush1.bf16.msra.mxu0 %v5599
    %5676 = vmatprep.subr.bf16.mxu0 0
    %5677 = vmatpush1.bf16.msra.mxu0 %v5600
    %5678 = vmatprep.subr.bf16.mxu0 0
    %5679 = vmatpush1.bf16.msra.mxu0 %v5601
    %5680 = vmatprep.subr.bf16.mxu0 0
    %5681 = vmatpush1.bf16.msra.mxu0 %v5602
    %5682 = vmatprep.subr.bf16.mxu0 0
    %5683 = vmatpush1.bf16.msra.mxu0 %v5603
    %5684 = vmatprep.mubr.bf16.mxu0 %v5450
    %5685 = vmatmul.mubr.bf16.gmra.mrb[0].mxu0 %v5449
    %v5686 = vpop.f32.mrb[0].mxu0
    %v5687 = vadd.f32 %v5458, %v5686
    %v5688 = vpop.f32.mrb[0].mxu0
    %v5689 = vpop.f32.mrb[0].mxu0
    %v5690 = vpop.f32.mrb[0].mxu0
    %5691 = vdwg.mxu0
    %5692 = vmatprep.subr.bf16.mxu0 0
    %5693 = vmatpush1.bf16.msra.mxu0 %v5604
    %5694 = vmatprep.subr.bf16.mxu0 0
    %5695 = vmatpush1.bf16.msra.mxu0 %v5605
    %5696 = vmatprep.subr.bf16.mxu0 0
    %5697 = vmatpush1.bf16.msra.mxu0 %v5606
    %5698 = vmatprep.subr.bf16.mxu0 0
    %5699 = vmatpush1.bf16.msra.mxu0 %v5607
    %5700 = vmatprep.subr.bf16.mxu0 0
    %5701 = vmatpush1.bf16.msra.mxu0 %v5608
    %5702 = vmatprep.subr.bf16.mxu0 0
    %5703 = vmatpush1.bf16.msra.mxu0 %v5609
    %5704 = vmatprep.subr.bf16.mxu0 0
    %5705 = vmatpush1.bf16.msra.mxu0 %v5610
    %5706 = vmatprep.subr.bf16.mxu0 0
    %5707 = vmatpush1.bf16.msra.mxu0 %v5611
    %5708 = vmatprep.subr.bf16.mxu0 0
    %5709 = vmatpush1.bf16.msra.mxu0 %v5612
    %5710 = vmatprep.subr.bf16.mxu0 0
    %5711 = vmatpush1.bf16.msra.mxu0 %v5613
    %5712 = vmatprep.subr.bf16.mxu0 0
    %5713 = vmatpush1.bf16.msra.mxu0 %v5614
    %5714 = vmatprep.subr.bf16.mxu0 0
    %5715 = vmatpush1.bf16.msra.mxu0 %v5615
    %5716 = vmatprep.subr.bf16.mxu0 0
    %5717 = vmatpush1.bf16.msra.mxu0 %v5616
    %5718 = vmatprep.subr.bf16.mxu0 0
    %5719 = vmatpush1.bf16.msra.mxu0 %v5617
    %5720 = vmatprep.subr.bf16.mxu0 0
    %5721 = vmatpush1.bf16.msra.mxu0 %v5618
    %5722 = vmatprep.subr.bf16.mxu0 0
    %5723 = vmatpush1.bf16.msra.mxu0 %v5619
    %5724 = vmatprep.mubr.bf16.mxu0 %v5452
    %5725 = vmatmul.mubr.bf16.gmra.mrb[0].mxu0 %v5451
    %v5726 = vpop.f32.mrb[0].mxu0
    %v5727 = vadd.f32 %v5687, %v5726
    %v5728 = vpop.f32.mrb[0].mxu0
    %v5729 = vpop.f32.mrb[0].mxu0
    %v5730 = vpop.f32.mrb[0].mxu0
    %5731 = vdwg.mxu0
    %vm5732 = vcmask 9216
    %5733 = vst.msk [vmem:[#allocation5] sm:$0x3] %vm5732, %v5727
    // Predicated region
    $region86: #{bert_classifier_forward.1} parent=1 // pred_check
      _
    $region87: #{bert_classifier_forward.1} parent=1 // pred_check_branch
      %5735 = sbr.rel (0) target = $region89
    $region88: #{bert_classifier_forward.1} parent=1 // pred_region
      %s5737 = ssub.s32 32, 32
      %5738 = vsyncadd [#allocation4], %s5737
      %s5740 = sshll.u32 [#allocation5], 4
      %s5741 = int_to_ptr.vmem [resolvable:$true] %s5740
      %5743 = dma.vmem_to_hbm [thread:$0]  %s5741, 32, %s20, [#allocation4]
    $region89: #{bert_classifier_forward.1} parent=1 // pred_fallthru
      _
    // Predicated region
    $region90: #{bert_classifier_forward.1} parent=1 // pred_check
      _
    $region91: #{bert_classifier_forward.1} parent=1 // pred_check_branch
      %5745 = sbr.rel (0) target = $region93
    $region92: #{bert_classifier_forward.1} parent=1 // pred_region
      %5746 = dma.done [#allocation4], 32
    $region93: #{bert_classifier_forward.1} parent=1 // pred_fallthru
      _
    %5747 = vsyncpa [#allocation3], 1
    %5748 = vsyncpa [#allocation4], 1

</llo_original>
